<compile_context>
chip_gen: v6e
topology: v6e:2x2x1
jax: 0.10.0
libtpu: 0.0.40
codegen_flags: <defaults>
</compile_context>

<pallas_src>
import functools

import jax
import jax.numpy as jnp
from jax.experimental import pallas as pl
from jax.experimental.pallas import tpu as pltpu


def _cc_kernel(x_ref, wv_ref, wqk_ref, bv_ref, bqk_ref, o_ref,
               q_ref, krm_ref, kcm_ref, vrm_ref, vcm_ref, *,
               H, W, C, Cqk, th, approx_recip):
    """One tile of query rows of criss-cross attention for one batch element."""
    f32 = jnp.float32
    cdt = wv_ref.dtype                      # MXU compute dtype (bf16 / f32)

    # ---- Projection: exactly once per batch element (line-tile 0), results
    # kept resident in VMEM scratch for all subsequent tiles of this element.
    @pl.when(pl.program_id(1) == 0)
    def _project():
        x2 = x_ref[0].reshape(H * W, C)
        v = jnp.dot(x2, wv_ref[...], preferred_element_type=f32) + bv_ref[...]
        v = v.astype(cdt).reshape(H, W, C)
        vrm_ref[...] = v                                   # (H, W, C) row-major
        vcm_ref[...] = jnp.transpose(v, (1, 0, 2))         # (W, H, C) col-major
        # Stacked [Q | K], each padded to Cqk (multiple of 128) so both slices
        # below start on a 128-lane boundary; padded channels are exactly 0.
        qk = jnp.dot(x2, wqk_ref[...], preferred_element_type=f32) + bqk_ref[...]
        qk = qk.astype(cdt).reshape(H, W, 2 * Cqk)
        q_ref[...] = qk[:, :, :Cqk]                        # (H, W, Cqk)
        k = qk[:, :, Cqk:]
        krm_ref[...] = k                                   # (H, W, Cqk)
        kcm_ref[...] = jnp.transpose(k, (1, 0, 2))         # (W, H, Cqk)

    # ---- Attention for query rows [t0, t0 + th).
    t0 = pl.multiple_of(pl.program_id(1) * th, th)
    q_t = q_ref[pl.ds(t0, th)]              # (th, W, Cqk)
    k_t = krm_ref[pl.ds(t0, th)]            # (th, W, Cqk)
    v_t = vrm_ref[pl.ds(t0, th)]            # (th, W, C)

    # Criss-cross energies as batched MXU matmuls (canonical batch-leading,
    # contract-last forms).
    e_w = jnp.einsum('twc,tvc->twv', q_t, k_t,
                     preferred_element_type=f32)                     # (th, W, W)
    q_tc = jnp.transpose(q_t, (1, 0, 2))                             # (W, th, Cqk)
    e_h = jnp.einsum('wtc,wgc->wtg', q_tc, kcm_ref[...],
                     preferred_element_type=f32)                     # (W, th, H)

    # Finite large-negative sentinel on the g == (t0 + t) diagonal (no -inf).
    row = jax.lax.broadcasted_iota(jnp.int32, (th, H), 0) + t0
    col = jax.lax.broadcasted_iota(jnp.int32, (th, H), 1)
    e_h = jnp.where((row == col)[None, :, :], f32(-1e30), e_h)

    # Joint softmax over the (H + W) criss-cross neighbourhood without
    # concatenating: shared max and shared exp-sum across the two tensors.
    m = jnp.maximum(jnp.max(e_w, axis=-1), jnp.max(e_h, axis=-1).T)  # (th, W)
    m_t = m.T                                                        # (W, th)
    p_w = jnp.exp(e_w - m[:, :, None])
    p_h = jnp.exp(e_h - m_t[:, :, None])
    s = jnp.sum(p_w, axis=-1) + jnp.sum(p_h, axis=-1).T              # (th, W)

    # Keep entries strictly above the per-position mean.  Threshold the
    # UNnormalized p against s/(H+W) (== att > 1/(H+W)) so the decision does
    # not depend on the approximate reciprocal; normalize, mask and cast to
    # the MXU dtype in one fused pass (no separate f32 att tensors).
    thr = s * f32(1.0 / (H + W))
    inv = pl.reciprocal(s, approx=approx_recip)
    att_w = jnp.where(p_w > thr[:, :, None], p_w * inv[:, :, None],
                      f32(0.0)).astype(cdt)
    att_h = jnp.where(p_h > thr.T[:, :, None], p_h * inv.T[:, :, None],
                      f32(0.0)).astype(cdt)

    # Attention-weighted aggregation (batched MXU matmuls), single fused output.
    out_w = jnp.einsum('twv,tvc->twc', att_w, v_t,
                       preferred_element_type=f32)                   # (th, W, C)
    out_h = jnp.einsum('wtg,wgc->wtc', att_h, vcm_ref[...],
                       preferred_element_type=f32)                   # (W, th, C)
    o_ref[0] = (out_w + jnp.transpose(out_h, (1, 0, 2))).astype(o_ref.dtype)


def _row_tile(H, target):
    t = min(H, max(int(target), 1))
    while H % t:
        t -= 1
    return t


def _vmem_limit_bytes():
    # Per-generation budget: leave headroom for the compiler's own scratch.
    # v7x (64 MiB physical) -> 48 MiB; v5e/v6e (128 MiB) -> 96 MiB.
    try:
        cap = int(pltpu.get_tpu_info().vmem_capacity_bytes)
    except Exception:
        cap = 128 * 1024 * 1024
    return int(min(100 * 1024 * 1024, (cap * 3) // 4))


def cc_forward(x, wq, bq, wk, bk, wv, bv, *,
               compute_dtype=jnp.bfloat16, row_tile=8):
    """Criss-cross attention forward.  x: (B, C, H, W) NCHW."""
    B, C, H, W = x.shape
    Cq = wq.shape[0]
    Cqk = ((Cq + 127) // 128) * 128          # lane-aligned Q/K channel count
    padq = Cqk - Cq
    wq_p = jnp.pad(wq, ((0, padq), (0, 0)))
    wk_p = jnp.pad(wk, ((0, padq), (0, 0)))
    bq_p = jnp.pad(bq, ((0, padq),))
    bk_p = jnp.pad(bk, ((0, padq),))

    # Projection weights in "x @ W" form: V separate, [Q|K] stacked so every
    # slice starts on a 128-lane boundary.
    wv_m = wv.T.astype(compute_dtype)                                     # (C, C)
    wqk_m = jnp.concatenate([wq_p, wk_p], axis=0).T.astype(compute_dtype)  # (C, 2*Cqk)
    bv_m = bv.reshape(1, C).astype(jnp.float32)
    bqk_m = jnp.concatenate([bq_p, bk_p]).reshape(1, 2 * Cqk).astype(jnp.float32)

    # Channels-last presentation: the ONLY layout copy done outside the kernel
    # (the column-major orientation is derived in-kernel).
    x_cl = jnp.transpose(x, (0, 2, 3, 1)).astype(compute_dtype)           # (B, H, W, C)

    th = _row_tile(H, row_tile)
    nt = H // th

    kernel = functools.partial(
        _cc_kernel, H=H, W=W, C=C, Cqk=Cqk, th=th,
        approx_recip=(compute_dtype != jnp.float32))

    cdt = compute_dtype
    out = pl.pallas_call(
        kernel,
        out_shape=jax.ShapeDtypeStruct((B, H, W, C), x.dtype),
        grid=(B, nt),
        in_specs=[
            pl.BlockSpec((1, H, W, C), lambda b, t: (b, 0, 0, 0)),  # resident over t
            pl.BlockSpec((C, C), lambda b, t: (0, 0)),
            pl.BlockSpec((C, 2 * Cqk), lambda b, t: (0, 0)),
            pl.BlockSpec((1, C), lambda b, t: (0, 0)),
            pl.BlockSpec((1, 2 * Cqk), lambda b, t: (0, 0)),
        ],
        out_specs=pl.BlockSpec((1, th, W, C), lambda b, t: (b, t, 0, 0)),
        scratch_shapes=[
            pltpu.VMEM((H, W, Cqk), cdt),     # q, row-major
            pltpu.VMEM((H, W, Cqk), cdt),     # k, row-major
            pltpu.VMEM((W, H, Cqk), cdt),     # k, column-major
            pltpu.VMEM((H, W, C), cdt),       # v, row-major
            pltpu.VMEM((W, H, C), cdt),       # v, column-major
        ],
        compiler_params=pltpu.CompilerParams(
            # The line-tile axis must be "arbitrary": tile 0 projects into the
            # scratch used by later tiles of the same batch element.
            dimension_semantics=("parallel", "arbitrary"),
            vmem_limit_bytes=_vmem_limit_bytes()),
    )(x_cl, wv_m, wqk_m, bv_m, bqk_m)

    # Single layout-only NHWC -> NCHW transpose (branches already fused).
    return jnp.transpose(out, (0, 3, 1, 2)).astype(x.dtype)


def cc_reference(x, wq, bq, wk, bk, wv, bv):
    """Pure-JAX reference matching the PyTorch forward semantics."""
    B, C, H, W = x.shape

    def conv1x1(w, b, xx):
        return jnp.einsum('oc,bchw->bohw', w, xx) + b[None, :, None, None]

    q = conv1x1(wq, bq, x)
    k = conv1x1(wk, bk, x)
    v = conv1x1(wv, bv, x)

    e_h = jnp.einsum('bchw,bcgw->bhwg', q, k)
    eye = jnp.eye(H, dtype=bool)[None, :, None, :]
    e_h = jnp.where(eye, -jnp.inf, e_h)
    e_w = jnp.einsum('bchw,bchv->bhwv', q, k)

    energy = jnp.concatenate([e_h, e_w], axis=3)
    att = jax.nn.softmax(energy, axis=3)
    mean = jnp.mean(att, axis=3, keepdims=True)
    att = att * (att > mean).astype(att.dtype)

    out_h = jnp.einsum('bcgw,bhwg->bchw', v, att[..., :H])
    out_w = jnp.einsum('bchv,bhwv->bchw', v, att[..., H:])
    return out_h + out_w


if __name__ == "__main__":
    B, in_dim, H, W = 2, 8, 16, 16
    cq = max(in_dim // 8, 1)     # Conv2d(in_dim, in_dim // 8, kernel_size=1)

    key = jax.random.PRNGKey(0)
    kx, k1, k2, k3, k4, k5, k6 = jax.random.split(key, 7)

    x = jax.random.normal(kx, (B, in_dim, H, W), jnp.float32)
    wq = jax.random.normal(k1, (cq, in_dim), jnp.float32) * 0.2
    bq = jax.random.normal(k2, (cq,), jnp.float32) * 0.1
    wk = jax.random.normal(k3, (cq, in_dim), jnp.float32) * 0.2
    bk = jax.random.normal(k4, (cq,), jnp.float32) * 0.1
    wv = jax.random.normal(k5, (in_dim, in_dim), jnp.float32) * 0.2
    bv = jax.random.normal(k6, (in_dim,), jnp.float32) * 0.1

    ref = cc_reference(x, wq, bq, wk, bk, wv, bv)

    # f32 compute path (exercises 2 query-row tiles per batch element):
    # strict numerical validation against the reference.
    out_f32 = jax.block_until_ready(
        cc_forward(x, wq, bq, wk, bk, wv, bv, compute_dtype=jnp.float32))
    assert out_f32.shape == (B, in_dim, H, W)
    assert jnp.allclose(out_f32, ref, atol=1e-3, rtol=1e-3)

    # bf16 MXU fast path (default): finite + tolerance check vs the reference
    # (threshold decision is made on unnormalized p, so it does not depend on
    # the approximate reciprocal).
    out_bf16 = jax.block_until_ready(cc_forward(x, wq, bq, wk, bk, wv, bv))
    assert out_bf16.shape == (B, in_dim, H, W)
    assert bool(jnp.all(jnp.isfinite(out_bf16)))
    assert float(jnp.max(jnp.abs(out_bf16 - ref))) < 0.25

    print("KERNEL_OK")
</pallas_src>

<mosaic_0001>
module attributes {stable_mosaic.version = 11 : i64} {
  func.func @_cc_kernel(%arg0: i32, %arg1: i32, %arg2: memref<1x16x16x8xf32, #tpu.memory_space<vmem>>, %arg3: memref<8x8xf32, #tpu.memory_space<vmem>>, %arg4: memref<8x256xf32, #tpu.memory_space<vmem>>, %arg5: memref<1x8xf32, #tpu.memory_space<vmem>>, %arg6: memref<1x256xf32, #tpu.memory_space<vmem>>, %arg7: memref<1x8x16x8xf32, #tpu.memory_space<vmem>>, %arg8: memref<16x16x128xf32, #tpu.memory_space<vmem>>, %arg9: memref<16x16x128xf32, #tpu.memory_space<vmem>>, %arg10: memref<16x16x128xf32, #tpu.memory_space<vmem>>, %arg11: memref<16x16x8xf32, #tpu.memory_space<vmem>>, %arg12: memref<16x16x8xf32, #tpu.memory_space<vmem>>) attributes {dimension_semantics = [#tpu.dimension_semantics<parallel>, #tpu.dimension_semantics<arbitrary>], iteration_bounds = array<i64: 2, 2>, scalar_prefetch = 0 : i64, scratch_operands = 5 : i64, tpu.core_type = #tpu.core_type<tc>, window_params = [{transform_indices = @transform_0, window_bounds = array<i64: 1, 16, 16, 8>}, {pipeline_mode = #tpu.pipeline_mode<synchronous>, transform_indices = @transform_1, window_bounds = array<i64: 8, 8>}, {pipeline_mode = #tpu.pipeline_mode<synchronous>, transform_indices = @transform_2, window_bounds = array<i64: 8, 256>}, {pipeline_mode = #tpu.pipeline_mode<synchronous>, transform_indices = @transform_3, window_bounds = array<i64: 1, 8>}, {pipeline_mode = #tpu.pipeline_mode<synchronous>, transform_indices = @transform_4, window_bounds = array<i64: 1, 256>}, {transform_indices = @transform_5, window_bounds = array<i64: 1, 8, 16, 8>}]} {
    %c0_i32 = arith.constant 0 : i32
    %0 = arith.cmpi eq, %arg1, %c0_i32 : i32
    %1 = arith.extui %0 : i1 to i32
    %c0_i32_0 = arith.constant 0 : i32
    %2 = arith.cmpi ne, %1, %c0_i32_0 : i32
    scf.if %2 {
      %c0_27 = arith.constant 0 : index
      %c0_28 = arith.constant 0 : index
      %c0_29 = arith.constant 0 : index
      %c0_30 = arith.constant 0 : index
      %71 = vector.load %arg2[%c0_27, %c0_28, %c0_29, %c0_30] : memref<1x16x16x8xf32, #tpu.memory_space<vmem>>, vector<1x16x16x8xf32>
      %72 = vector.shape_cast %71 : vector<1x16x16x8xf32> to vector<16x16x8xf32>
      %73 = vector.shape_cast %72 : vector<16x16x8xf32> to vector<256x8xf32>
      %c0_31 = arith.constant 0 : index
      %c0_32 = arith.constant 0 : index
      %74 = vector.load %arg3[%c0_31, %c0_32] : memref<8x8xf32, #tpu.memory_space<vmem>>, vector<8x8xf32>
      %cst_33 = arith.constant dense<0.000000e+00> : vector<256x8xf32>
      %75 = tpu.matmul %73, %74, %cst_33 {dimension_numbers = #tpu.dot_dimension_numbers<[1], [0], [0], [1], [0, 0, 1, 1], [], []>} : vector<256x8xf32>, vector<8x8xf32>, vector<256x8xf32> -> vector<256x8xf32>
      %c0_34 = arith.constant 0 : index
      %c0_35 = arith.constant 0 : index
      %76 = vector.load %arg5[%c0_34, %c0_35] : memref<1x8xf32, #tpu.memory_space<vmem>>, vector<1x8xf32>
      %77 = vector.broadcast %76 : vector<1x8xf32> to vector<256x8xf32>
      %78 = arith.addf %75, %77 : vector<256x8xf32>
      %79 = vector.shape_cast %78 : vector<256x8xf32> to vector<16x16x8xf32>
      %c0_36 = arith.constant 0 : index
      %c0_37 = arith.constant 0 : index
      %c0_38 = arith.constant 0 : index
      %80 = vector.load %arg11[%c0_36, %c0_37, %c0_38] : memref<16x16x8xf32, #tpu.memory_space<vmem>>, vector<16x16x8xf32>
      tpu.vector_store %arg11[%c0_36, %c0_37, %c0_38], %79 {strides = array<i32>} : memref<16x16x8xf32, #tpu.memory_space<vmem>>, vector<16x16x8xf32>,
      %81 = tpu.transpose %79, [1, 0, 2] : vector<16x16x8xf32> -> vector<16x16x8xf32>
      %c0_39 = arith.constant 0 : index
      %c0_40 = arith.constant 0 : index
      %c0_41 = arith.constant 0 : index
      %82 = vector.load %arg12[%c0_39, %c0_40, %c0_41] : memref<16x16x8xf32, #tpu.memory_space<vmem>>, vector<16x16x8xf32>
      tpu.vector_store %arg12[%c0_39, %c0_40, %c0_41], %81 {strides = array<i32>} : memref<16x16x8xf32, #tpu.memory_space<vmem>>, vector<16x16x8xf32>,
      %c0_42 = arith.constant 0 : index
      %c0_43 = arith.constant 0 : index
      %83 = vector.load %arg4[%c0_42, %c0_43] : memref<8x256xf32, #tpu.memory_space<vmem>>, vector<8x256xf32>
      %cst_44 = arith.constant dense<0.000000e+00> : vector<256x256xf32>
      %84 = tpu.matmul %73, %83, %cst_44 {dimension_numbers = #tpu.dot_dimension_numbers<[1], [0], [0], [1], [0, 0, 1, 1], [], []>} : vector<256x8xf32>, vector<8x256xf32>, vector<256x256xf32> -> vector<256x256xf32>
      %c0_45 = arith.constant 0 : index
      %c0_46 = arith.constant 0 : index
      %85 = vector.load %arg6[%c0_45, %c0_46] : memref<1x256xf32, #tpu.memory_space<vmem>>, vector<1x256xf32>
      %86 = vector.broadcast %85 : vector<1x256xf32> to vector<256x256xf32>
      %87 = arith.addf %84, %86 : vector<256x256xf32>
      %88 = vector.shape_cast %87 : vector<256x256xf32> to vector<16x16x256xf32>
      %89 = vector.extract_strided_slice %88 {offsets = [0, 0, 0], sizes = [16, 16, 128], strides = [1, 1, 1]} : vector<16x16x256xf32> to vector<16x16x128xf32>
      %c0_47 = arith.constant 0 : index
      %c0_48 = arith.constant 0 : index
      %c0_49 = arith.constant 0 : index
      %90 = vector.load %arg8[%c0_47, %c0_48, %c0_49] : memref<16x16x128xf32, #tpu.memory_space<vmem>>, vector<16x16x128xf32>
      tpu.vector_store %arg8[%c0_47, %c0_48, %c0_49], %89 {strides = array<i32>} : memref<16x16x128xf32, #tpu.memory_space<vmem>>, vector<16x16x128xf32>,
      %91 = vector.extract_strided_slice %88 {offsets = [0, 0, 128], sizes = [16, 16, 128], strides = [1, 1, 1]} : vector<16x16x256xf32> to vector<16x16x128xf32>
      %c0_50 = arith.constant 0 : index
      %c0_51 = arith.constant 0 : index
      %c0_52 = arith.constant 0 : index
      %92 = vector.load %arg9[%c0_50, %c0_51, %c0_52] : memref<16x16x128xf32, #tpu.memory_space<vmem>>, vector<16x16x128xf32>
      tpu.vector_store %arg9[%c0_50, %c0_51, %c0_52], %91 {strides = array<i32>} : memref<16x16x128xf32, #tpu.memory_space<vmem>>, vector<16x16x128xf32>,
      %93 = tpu.transpose %91, [1, 0, 2] : vector<16x16x128xf32> -> vector<16x16x128xf32>
      %c0_53 = arith.constant 0 : index
      %c0_54 = arith.constant 0 : index
      %c0_55 = arith.constant 0 : index
      %94 = vector.load %arg10[%c0_53, %c0_54, %c0_55] : memref<16x16x128xf32, #tpu.memory_space<vmem>>, vector<16x16x128xf32>
      tpu.vector_store %arg10[%c0_53, %c0_54, %c0_55], %93 {strides = array<i32>} : memref<16x16x128xf32, #tpu.memory_space<vmem>>, vector<16x16x128xf32>,
    } else {
    }
    %c8_i32 = arith.constant 8 : i32
    %3 = arith.muli %arg1, %c8_i32 : i32
    %4 = tpu.assume_multiple %3, 8 : i32
    %5 = arith.index_cast %4 : i32 to index
    %c0 = arith.constant 0 : index
    %c0_1 = arith.constant 0 : index
    %6 = vector.load %arg8[%5, %c0, %c0_1] : memref<16x16x128xf32, #tpu.memory_space<vmem>>, vector<8x16x128xf32>
    %7 = arith.index_cast %4 : i32 to index
    %c0_2 = arith.constant 0 : index
    %c0_3 = arith.constant 0 : index
    %8 = vector.load %arg9[%7, %c0_2, %c0_3] : memref<16x16x128xf32, #tpu.memory_space<vmem>>, vector<8x16x128xf32>
    %9 = arith.index_cast %4 : i32 to index
    %c0_4 = arith.constant 0 : index
    %c0_5 = arith.constant 0 : index
    %10 = vector.load %arg11[%9, %c0_4, %c0_5] : memref<16x16x8xf32, #tpu.memory_space<vmem>>, vector<8x16x8xf32>
    "tpu.trace_start"() <{level = 10 : i32, message = "twc,tvc->twv"}> : () -> ()
    %cst = arith.constant dense<0.000000e+00> : vector<8x16x16xf32>
    %11 = tpu.matmul %6, %8, %cst {dimension_numbers = #tpu.dot_dimension_numbers<[2], [2], [1], [1], [0, 0, 0, 1, 1, 1], [0], [0]>} : vector<8x16x128xf32>, vector<8x16x128xf32>, vector<8x16x16xf32> -> vector<8x16x16xf32>
    "tpu.trace_stop"() : () -> ()
    %12 = tpu.transpose %6, [1, 0, 2] : vector<8x16x128xf32> -> vector<16x8x128xf32>
    %c0_6 = arith.constant 0 : index
    %c0_7 = arith.constant 0 : index
    %c0_8 = arith.constant 0 : index
    %13 = vector.load %arg10[%c0_6, %c0_7, %c0_8] : memref<16x16x128xf32, #tpu.memory_space<vmem>>, vector<16x16x128xf32>
    "tpu.trace_start"() <{level = 10 : i32, message = "wtc,wgc->wtg"}> : () -> ()
    %cst_9 = arith.constant dense<0.000000e+00> : vector<16x8x16xf32>
    %14 = tpu.matmul %12, %13, %cst_9 {dimension_numbers = #tpu.dot_dimension_numbers<[2], [2], [1], [1], [0, 0, 0, 1, 1, 1], [0], [0]>} : vector<16x8x128xf32>, vector<16x16x128xf32>, vector<16x8x16xf32> -> vector<16x8x16xf32>
    "tpu.trace_stop"() : () -> ()
    %15 = tpu.iota {dimensions = array<i32: 0>} : vector<8x16xi32>
    %16 = vector.broadcast %4 : i32 to vector<8x16xi32>
    %17 = arith.addi %15, %16 : vector<8x16xi32>
    %18 = tpu.iota {dimensions = array<i32: 1>} : vector<8x16xi32>
    %19 = arith.cmpi eq, %17, %18 : vector<8x16xi32>
    %20 = vector.shape_cast %19 : vector<8x16xi1> to vector<1x8x16xi1>
    %cst_10 = arith.constant -1.000000e+30 : f32
    %21 = vector.shape_cast %20 : vector<1x8x16xi1> to vector<1x8x16xi1>
    %22 = vector.broadcast %21 : vector<1x8x16xi1> to vector<16x8x16xi1>
    %23 = vector.broadcast %cst_10 : f32 to vector<16x8x16xf32>
    %24 = arith.select %22, %23, %14 : vector<16x8x16xi1>, vector<16x8x16xf32>
    %cst_11 = arith.constant dense<0xFF800000> : vector<8x16xf32>
    %25 = vector.multi_reduction <maximumf>, %11, %cst_11 [2] : vector<8x16x16xf32> to vector<8x16xf32>
    %cst_12 = arith.constant dense<0xFF800000> : vector<16x8xf32>
    %26 = vector.multi_reduction <maximumf>, %24, %cst_12 [2] : vector<16x8x16xf32> to vector<16x8xf32>
    %27 = tpu.transpose %26, [1, 0] : vector<16x8xf32> -> vector<8x16xf32>
    %28 = arith.maximumf %25, %27 : vector<8x16xf32>
    %29 = tpu.transpose %28, [1, 0] : vector<8x16xf32> -> vector<16x8xf32>
    %30 = vector.shape_cast %28 : vector<8x16xf32> to vector<8x16x1xf32>
    %31 = vector.broadcast %30 : vector<8x16x1xf32> to vector<8x16x16xf32>
    %32 = arith.subf %11, %31 : vector<8x16x16xf32>
    %33 = math.exp %32 : vector<8x16x16xf32>
    %34 = vector.shape_cast %29 : vector<16x8xf32> to vector<16x8x1xf32>
    %35 = vector.broadcast %34 : vector<16x8x1xf32> to vector<16x8x16xf32>
    %36 = arith.subf %24, %35 : vector<16x8x16xf32>
    %37 = math.exp %36 : vector<16x8x16xf32>
    %cst_13 = arith.constant dense<0.000000e+00> : vector<8x16xf32>
    %38 = vector.multi_reduction <add>, %33, %cst_13 [2] : vector<8x16x16xf32> to vector<8x16xf32>
    %cst_14 = arith.constant dense<0.000000e+00> : vector<16x8xf32>
    %39 = vector.multi_reduction <add>, %37, %cst_14 [2] : vector<16x8x16xf32> to vector<16x8xf32>
    %40 = tpu.transpose %39, [1, 0] : vector<16x8xf32> -> vector<8x16xf32>
    %41 = arith.addf %38, %40 : vector<8x16xf32>
    %cst_15 = arith.constant 3.125000e-02 : f32
    %42 = vector.broadcast %cst_15 : f32 to vector<8x16xf32>
    %43 = arith.mulf %41, %42 : vector<8x16xf32>
    %44 = tpu.reciprocal %41 : vector<8x16xf32> -> vector<8x16xf32>
    %45 = vector.shape_cast %43 : vector<8x16xf32> to vector<8x16x1xf32>
    %46 = vector.broadcast %45 : vector<8x16x1xf32> to vector<8x16x16xf32>
    %47 = arith.cmpf ogt, %33, %46 : vector<8x16x16xf32>
    %48 = vector.shape_cast %44 : vector<8x16xf32> to vector<8x16x1xf32>
    %49 = vector.broadcast %48 : vector<8x16x1xf32> to vector<8x16x16xf32>
    %50 = arith.mulf %33, %49 : vector<8x16x16xf32>
    %cst_16 = arith.constant 0.000000e+00 : f32
    %51 = vector.broadcast %cst_16 : f32 to vector<8x16x16xf32>
    %52 = arith.select %47, %50, %51 : vector<8x16x16xi1>, vector<8x16x16xf32>
    %53 = tpu.transpose %43, [1, 0] : vector<8x16xf32> -> vector<16x8xf32>
    %54 = vector.shape_cast %53 : vector<16x8xf32> to vector<16x8x1xf32>
    %55 = vector.broadcast %54 : vector<16x8x1xf32> to vector<16x8x16xf32>
    %56 = arith.cmpf ogt, %37, %55 : vector<16x8x16xf32>
    %57 = tpu.transpose %44, [1, 0] : vector<8x16xf32> -> vector<16x8xf32>
    %58 = vector.shape_cast %57 : vector<16x8xf32> to vector<16x8x1xf32>
    %59 = vector.broadcast %58 : vector<16x8x1xf32> to vector<16x8x16xf32>
    %60 = arith.mulf %37, %59 : vector<16x8x16xf32>
    %cst_17 = arith.constant 0.000000e+00 : f32
    %61 = vector.broadcast %cst_17 : f32 to vector<16x8x16xf32>
    %62 = arith.select %56, %60, %61 : vector<16x8x16xi1>, vector<16x8x16xf32>
    "tpu.trace_start"() <{level = 10 : i32, message = "twv,tvc->twc"}> : () -> ()
    %cst_18 = arith.constant dense<0.000000e+00> : vector<8x16x8xf32>
    %63 = tpu.matmul %52, %10, %cst_18 {dimension_numbers = #tpu.dot_dimension_numbers<[2], [1], [1], [2], [0, 0, 0, 1, 1, 2], [0], [0]>} : vector<8x16x16xf32>, vector<8x16x8xf32>, vector<8x16x8xf32> -> vector<8x16x8xf32>
    "tpu.trace_stop"() : () -> ()
    %c0_19 = arith.constant 0 : index
    %c0_20 = arith.constant 0 : index
    %c0_21 = arith.constant 0 : index
    %64 = vector.load %arg12[%c0_19, %c0_20, %c0_21] : memref<16x16x8xf32, #tpu.memory_space<vmem>>, vector<16x16x8xf32>
    "tpu.trace_start"() <{level = 10 : i32, message = "wtg,wgc->wtc"}> : () -> ()
    %cst_22 = arith.constant dense<0.000000e+00> : vector<16x8x8xf32>
    %65 = tpu.matmul %62, %64, %cst_22 {dimension_numbers = #tpu.dot_dimension_numbers<[2], [1], [1], [2], [0, 0, 0, 1, 1, 2], [0], [0]>} : vector<16x8x16xf32>, vector<16x16x8xf32>, vector<16x8x8xf32> -> vector<16x8x8xf32>
    "tpu.trace_stop"() : () -> ()
    %66 = tpu.transpose %65, [1, 0, 2] : vector<16x8x8xf32> -> vector<8x16x8xf32>
    %67 = arith.addf %63, %66 : vector<8x16x8xf32>
    %c0_23 = arith.constant 0 : index
    %c0_24 = arith.constant 0 : index
    %c0_25 = arith.constant 0 : index
    %c0_26 = arith.constant 0 : index
    %68 = vector.load %arg7[%c0_23, %c0_24, %c0_25, %c0_26] : memref<1x8x16x8xf32, #tpu.memory_space<vmem>>, vector<1x8x16x8xf32>
    %69 = vector.shape_cast %68 : vector<1x8x16x8xf32> to vector<8x16x8xf32>
    %70 = vector.shape_cast %67 : vector<8x16x8xf32> to vector<1x8x16x8xf32>
    tpu.vector_store %arg7[%c0_23, %c0_24, %c0_25, %c0_26], %70 {strides = array<i32>} : memref<1x8x16x8xf32, #tpu.memory_space<vmem>>, vector<1x8x16x8xf32>,
    return
  }
  func.func @transform_0(%arg0: i32, %arg1: i32) -> (i32, i32, i32, i32) {
    %c0_i32 = arith.constant 0 : i32
    %c0_i32_0 = arith.constant 0 : i32
    %c0_i32_1 = arith.constant 0 : i32
    %c0_i32_2 = arith.constant 0 : i32
    return %arg0, %c0_i32, %c0_i32_0, %c0_i32_1 : i32, i32, i32, i32
  }
  func.func @transform_1(%arg0: i32, %arg1: i32) -> (i32, i32) {
    %c0_i32 = arith.constant 0 : i32
    %c0_i32_0 = arith.constant 0 : i32
    %c0_i32_1 = arith.constant 0 : i32
    return %c0_i32, %c0_i32_0 : i32, i32
  }
  func.func @transform_2(%arg0: i32, %arg1: i32) -> (i32, i32) {
    %c0_i32 = arith.constant 0 : i32
    %c0_i32_0 = arith.constant 0 : i32
    %c0_i32_1 = arith.constant 0 : i32
    return %c0_i32, %c0_i32_0 : i32, i32
  }
  func.func @transform_3(%arg0: i32, %arg1: i32) -> (i32, i32) {
    %c0_i32 = arith.constant 0 : i32
    %c0_i32_0 = arith.constant 0 : i32
    %c0_i32_1 = arith.constant 0 : i32
    return %c0_i32, %c0_i32_0 : i32, i32
  }
  func.func @transform_4(%arg0: i32, %arg1: i32) -> (i32, i32) {
    %c0_i32 = arith.constant 0 : i32
    %c0_i32_0 = arith.constant 0 : i32
    %c0_i32_1 = arith.constant 0 : i32
    return %c0_i32, %c0_i32_0 : i32, i32
  }
  func.func @transform_5(%arg0: i32, %arg1: i32) -> (i32, i32, i32, i32) {
    %c0_i32 = arith.constant 0 : i32
    %c0_i32_0 = arith.constant 0 : i32
    %c0_i32_1 = arith.constant 0 : i32
    return %arg0, %arg1, %c0_i32, %c0_i32_0 : i32, i32, i32, i32
  }
}

</mosaic_0001>

<llo_original>
// kernel: tpu_custom_call.1
$region0: #{tpu_custom_call.1}
  #allocation0 [shape = 'u32[]', space=smem, size = 0x4, offset = 0x4, fixed_abs, tag = 'smem constant byte address 0x4 - core index']
  #allocation1 [shape = 'u32[144,128]{1,0:T(1,128)}', space=vmem, size = 0x12000, scoped, tag = 'internal scratch']
  #allocation2 [shape = 'f32[16,16,128]{2,1,0:T(8,128)}', space=vmem, size = 0x20000, scoped, tag = 'scratch operand']
  #allocation3 [shape = 'f32[16,16,128]{2,1,0:T(8,128)}', space=vmem, size = 0x20000, scoped, tag = 'scratch operand']
  #allocation4 [shape = 'f32[16,16,128]{2,1,0:T(8,128)}', space=vmem, size = 0x20000, scoped, tag = 'scratch operand']
  #allocation5 [shape = 'f32[16,16,8]{2,1,0:T(8,128)}', space=vmem, size = 0x20000, scoped, tag = 'scratch operand']
  #allocation6 [shape = 'f32[16,16,8]{2,1,0:T(8,128)}', space=vmem, size = 0x20000, scoped, tag = 'scratch operand']
  %s0 = inlined_call_operand.vmem [shape: f32[2,16,16,8], index: 0, kind: input, shape index: {}]
  %s1 = inlined_call_operand.vmem [shape: f32[8,8], index: 1, kind: input, shape index: {}]
  %s2 = inlined_call_operand.vmem [shape: f32[8,256], index: 2, kind: input, shape index: {}]
  %s3 = inlined_call_operand.vmem [shape: f32[1,8], index: 3, kind: input, shape index: {}]
  %s4 = inlined_call_operand.vmem [shape: f32[1,256], index: 4, kind: input, shape index: {}]
  %s5 = inlined_call_operand.vmem [shape: f32[2,16,16,8], index: 5, kind: output, shape index: {}]
  %s6 = sld [smem:[#allocation0]]
  $region57: #{tpu_custom_call.1} parent=0
    _
  %s8 = ssub.s32 1, %s6
  %s9 = scalar_select 0, %s8, %s6
  loop: start=0, step=1, limit=6
  $region2: #{tpu_custom_call.1} parent=0 // loop_pre_header
    _
  $region3: #{tpu_custom_call.1} parent=0 // loop_header
    %s11 = sphi 0, %s15
    %p12 = scmp.ge.s32.totalorder %s11, 6
    %s18 = sphi 0, %s30
    %s19 = sphi 0, %s26
    %s20 = sphi 0, %s18
    %s21 = sphi 0, %s19
    %s22 = sphi 0, %s20
    %s23 = sphi 0, %s21
    %s33 = sphi 0, %s35
    %s36 = sphi 0, %s33
    %s37 = sphi 0, %s36
    %s53 = sphi 0, %s37
    %s57 = sphi 0, %s57
    %s59 = sphi 0, %s57
    %s60 = sphi 0, %s59
    %s74 = sphi 0, %s60
    %s78 = sphi 0, %s78
    %s80 = sphi 0, %s78
    %s81 = sphi 0, %s80
    %s95 = sphi 0, %s81
    %s99 = sphi 0, %s99
    %s101 = sphi 0, %s99
    %s102 = sphi 0, %s101
    %s116 = sphi 0, %s102
    %s120 = sphi 0, %s120
    %s122 = sphi 0, %s120
    %s123 = sphi 0, %s122
    %s137 = sphi 0, %s123
    %s145 = sphi 0, %s147
    %s148 = sphi 0, %s145
    %s149 = sphi 0, %s148
    %s165 = sphi 0, %s149
  $region4: #{tpu_custom_call.1} parent=0 // loop_header_branch
    %14 = sbr.rel (%p12) target = $region8
  $region5: #{tpu_custom_call.1} parent=0 // loop_body
    %s16 = ssub.s32 %s11, 1
    %s17 = ssub.s32 %s11, 2
    %s24 = sadd.s32 1, %s19
    %p25 = scmp.ge.s32.totalorder %s24, 2
    %s26 = scalar_select %p25, 0, %s24
    %s27 = sadd.s32 1, %s18
    %s28 = scalar_select %p25, %s27, %s18
    %p29 = scmp.ge.s32.totalorder %s28, 2
    %s30 = scalar_select %p29, 0, %s28
    %s31 = ssub.s32 %s18, %s30
    %p32 = scmp.eq.s32.totalorder %s31, 0
    %s34 = sadd.s32 %s33, 1
    %s35 = scalar_select %p32, %s33, %s34
    %p38 = pneg %p32
    %p39 = scmp.eq.s32.totalorder %s11, 3
    %p40 = por %p38, %p39
    %p41 = scmp.ne.s32.totalorder %s33, %s36
    %p42 = scmp.eq.s32.totalorder %s11, 0
    %p43 = por %p41, %p42
    %p44 = scmp.ne.s32.totalorder %s33, %s36
    %p45 = scmp.eq.s32.totalorder %s16, 3
    %p46 = por %p44, %p45
    %p47 = scmp.ne.s32.totalorder %s36, %s37
    %p48 = scmp.eq.s32.totalorder %s16, 0
    %p49 = por %p47, %p48
    %p50 = scmp.ne.s32.totalorder %s36, %s37
    %p51 = scmp.eq.s32.totalorder %s17, 3
    %p52 = por %p50, %p51
    %p54 = scmp.ne.s32.totalorder %s37, %s53
    %p55 = scmp.eq.s32.totalorder %s17, 0
    %p56 = por %p54, %p55
    %s58 = sadd.s32 %s57, 1
    %p61 = scmp.eq.s32.totalorder %s11, 3
    %p62 = scmp.ne.s32.totalorder %s57, %s59
    %p63 = scmp.eq.s32.totalorder %s11, 0
    %p64 = por %p62, %p63
    %p65 = scmp.ne.s32.totalorder %s57, %s59
    %p66 = scmp.eq.s32.totalorder %s16, 3
    %p67 = por %p65, %p66
    %p68 = scmp.ne.s32.totalorder %s59, %s60
    %p69 = scmp.eq.s32.totalorder %s16, 0
    %p70 = por %p68, %p69
    %p71 = scmp.ne.s32.totalorder %s59, %s60
    %p72 = scmp.eq.s32.totalorder %s17, 3
    %p73 = por %p71, %p72
    %p75 = scmp.ne.s32.totalorder %s60, %s74
    %p76 = scmp.eq.s32.totalorder %s17, 0
    %p77 = por %p75, %p76
    %s79 = sadd.s32 %s78, 1
    %p82 = scmp.eq.s32.totalorder %s11, 3
    %p83 = scmp.ne.s32.totalorder %s78, %s80
    %p84 = scmp.eq.s32.totalorder %s11, 0
    %p85 = por %p83, %p84
    %p86 = scmp.ne.s32.totalorder %s78, %s80
    %p87 = scmp.eq.s32.totalorder %s16, 3
    %p88 = por %p86, %p87
    %p89 = scmp.ne.s32.totalorder %s80, %s81
    %p90 = scmp.eq.s32.totalorder %s16, 0
    %p91 = por %p89, %p90
    %p92 = scmp.ne.s32.totalorder %s80, %s81
    %p93 = scmp.eq.s32.totalorder %s17, 3
    %p94 = por %p92, %p93
    %p96 = scmp.ne.s32.totalorder %s81, %s95
    %p97 = scmp.eq.s32.totalorder %s17, 0
    %p98 = por %p96, %p97
    %s100 = sadd.s32 %s99, 1
    %p103 = scmp.eq.s32.totalorder %s11, 3
    %p104 = scmp.ne.s32.totalorder %s99, %s101
    %p105 = scmp.eq.s32.totalorder %s11, 0
    %p106 = por %p104, %p105
    %p107 = scmp.ne.s32.totalorder %s99, %s101
    %p108 = scmp.eq.s32.totalorder %s16, 3
    %p109 = por %p107, %p108
    %p110 = scmp.ne.s32.totalorder %s101, %s102
    %p111 = scmp.eq.s32.totalorder %s16, 0
    %p112 = por %p110, %p111
    %p113 = scmp.ne.s32.totalorder %s101, %s102
    %p114 = scmp.eq.s32.totalorder %s17, 3
    %p115 = por %p113, %p114
    %p117 = scmp.ne.s32.totalorder %s102, %s116
    %p118 = scmp.eq.s32.totalorder %s17, 0
    %p119 = por %p117, %p118
    %s121 = sadd.s32 %s120, 1
    %p124 = scmp.eq.s32.totalorder %s11, 3
    %p125 = scmp.ne.s32.totalorder %s120, %s122
    %p126 = scmp.eq.s32.totalorder %s11, 0
    %p127 = por %p125, %p126
    %p128 = scmp.ne.s32.totalorder %s120, %s122
    %p129 = scmp.eq.s32.totalorder %s16, 3
    %p130 = por %p128, %p129
    %p131 = scmp.ne.s32.totalorder %s122, %s123
    %p132 = scmp.eq.s32.totalorder %s16, 0
    %p133 = por %p131, %p132
    %p134 = scmp.ne.s32.totalorder %s122, %s123
    %p135 = scmp.eq.s32.totalorder %s17, 3
    %p136 = por %p134, %p135
    %p138 = scmp.ne.s32.totalorder %s123, %s137
    %p139 = scmp.eq.s32.totalorder %s17, 0
    %p140 = por %p138, %p139
    %s141 = ssub.s32 %s18, %s30
    %s142 = ssub.s32 %s19, %s26
    %s143 = sor.u32 %s141, %s142
    %p144 = scmp.eq.s32.totalorder %s143, 0
    %s146 = sadd.s32 %s145, 1
    %s147 = scalar_select %p144, %s145, %s146
    %p150 = pneg %p144
    %p151 = scmp.eq.s32.totalorder %s11, 3
    %p152 = por %p150, %p151
    %p153 = scmp.ne.s32.totalorder %s145, %s148
    %p154 = scmp.eq.s32.totalorder %s11, 0
    %p155 = por %p153, %p154
    %p156 = scmp.ne.s32.totalorder %s145, %s148
    %p157 = scmp.eq.s32.totalorder %s16, 3
    %p158 = por %p156, %p157
    %p159 = scmp.ne.s32.totalorder %s148, %s149
    %p160 = scmp.eq.s32.totalorder %s16, 0
    %p161 = por %p159, %p160
    %p162 = scmp.ne.s32.totalorder %s148, %s149
    %p163 = scmp.eq.s32.totalorder %s17, 3
    %p164 = por %p162, %p163
    %p166 = scmp.ne.s32.totalorder %s149, %s165
    %p167 = scmp.eq.s32.totalorder %s17, 0
    %p168 = por %p166, %p167
    %p169 = scmp.le.s32.totalorder 1, %s11
    %p170 = scmp.lt.s32.totalorder %s11, 5
    %p171 = pnand %p169, %p170
    %p172 = pneg %p171
    // Predicated region
    $region9: #{tpu_custom_call.1} parent=5 // pred_check
      _
    $region10: #{tpu_custom_call.1} parent=5 // pred_check_branch
      %174 = sbr.rel (%p171) target = $region12
    $region11: #{tpu_custom_call.1} parent=5 // pred_region
      %s175 = ssub.s32 %s11, 1
      // Predicated region
      $region13: #{tpu_custom_call.1} parent=11 // pred_check
        %p176 = pneg %p70
      $region14: #{tpu_custom_call.1} parent=11 // pred_check_branch
        %178 = sbr.rel (%p176) target = $region16
      $region15: #{tpu_custom_call.1} parent=11 // pred_region
        _
      $region16: #{tpu_custom_call.1} parent=11 // pred_fallthru
        _
      // Predicated region
      $region17: #{tpu_custom_call.1} parent=11 // pred_check
        %p179 = pneg %p91
      $region18: #{tpu_custom_call.1} parent=11 // pred_check_branch
        %181 = sbr.rel (%p179) target = $region20
      $region19: #{tpu_custom_call.1} parent=11 // pred_region
        _
      $region20: #{tpu_custom_call.1} parent=11 // pred_fallthru
        _
      // Predicated region
      $region21: #{tpu_custom_call.1} parent=11 // pred_check
        %p182 = pneg %p112
      $region22: #{tpu_custom_call.1} parent=11 // pred_check_branch
        %184 = sbr.rel (%p182) target = $region24
      $region23: #{tpu_custom_call.1} parent=11 // pred_region
        _
      $region24: #{tpu_custom_call.1} parent=11 // pred_fallthru
        _
      // Predicated region
      $region25: #{tpu_custom_call.1} parent=11 // pred_check
        %p185 = pneg %p133
      $region26: #{tpu_custom_call.1} parent=11 // pred_check_branch
        %187 = sbr.rel (%p185) target = $region28
      $region27: #{tpu_custom_call.1} parent=11 // pred_region
        _
      $region28: #{tpu_custom_call.1} parent=11 // pred_fallthru
        _
    $region12: #{tpu_custom_call.1} parent=5 // pred_fallthru
      _
    %p188 = scmp.lt.s32.totalorder %s11, 4
    // Predicated region
    $region29: #{tpu_custom_call.1} parent=5 // pred_check
      %p189 = pneg %p188
    $region30: #{tpu_custom_call.1} parent=5 // pred_check_branch
      %191 = sbr.rel (%p189) target = $region32
    $region31: #{tpu_custom_call.1} parent=5 // pred_region
      // Predicated region
      $region33: #{tpu_custom_call.1} parent=31 // pred_check
        %p192 = pneg %p43
      $region34: #{tpu_custom_call.1} parent=31 // pred_check_branch
        %194 = sbr.rel (%p192) target = $region36
      $region35: #{tpu_custom_call.1} parent=31 // pred_region
        %p195 = scmp.lt.s32.totalorder %s18, 1
        %s196 = scalar_select %p195, %s18, 1
        %s197 = smul.addr %s196, 32
        %s198 = smul.addr %s197, 8
        %s199 = scalar_lea.vmem %s0, %s198
      $region36: #{tpu_custom_call.1} parent=31 // pred_fallthru
        _
    $region32: #{tpu_custom_call.1} parent=5 // pred_fallthru
      _
    %p200 = scmp.le.s32.totalorder 1, %s11
    %p201 = scmp.lt.s32.totalorder %s11, 5
    %p202 = pnand %p200, %p201
    %p203 = pneg %p202
    // Predicated region
    $region37: #{tpu_custom_call.1} parent=5 // pred_check
      _
    $region38: #{tpu_custom_call.1} parent=5 // pred_check_branch
      %205 = sbr.rel (%p202) target = $region40
    $region39: #{tpu_custom_call.1} parent=5 // pred_region
      %s206 = ssub.s32 %s11, 1
      %p207 = scmp.lt.s32.totalorder %s20, 1
      %s208 = scalar_select %p207, %s20, 1
      %s209 = smul.addr %s208, 32
      %s210 = smul.addr %s209, 8
      %s211 = scalar_lea.vmem %s0, %s210
      %p212 = pneg %p49
      %p213 = pneg %p46
      %p214 = pneg %p70
      %p215 = pneg %p67
      %p216 = pneg %p91
      %p217 = pneg %p88
      %p218 = pneg %p112
      %p219 = pneg %p109
      %p220 = pneg %p133
      %p221 = pneg %p130
      %p222 = pneg %p161
      %p223 = pneg %p158
      %s224 = smul.u32 8, %s21
      %p225 = scmp.lt.s32.totalorder %s20, 1
      %s226 = scalar_select %p225, %s20, 1
      %p227 = scmp.lt.s32.totalorder %s224, 15
      %s228 = scalar_select %p227, %s224, 15
      %s229 = smul.addr %s228, 2
      %s230 = smul.addr %s226, 32
      %s231 = sadd.s32 %s229, %s230
      %s232 = smul.addr %s231, 8
      %s233 = scalar_lea.vmem %s5, %s232
      %p234 = scmp.lt.s32.totalorder %s20, 1
      %s235 = scalar_select %p234, %s20, 1
      %s236 = smul.addr %s235, 32
      %s237 = smul.addr %s236, 8
      %s238 = scalar_lea.vmem %s0, %s237
      %s239 = smul.u32 8, %s21
      %p240 = scmp.lt.s32.totalorder %s20, 1
      %s241 = scalar_select %p240, %s20, 1
      %p242 = scmp.lt.s32.totalorder %s239, 15
      %s243 = scalar_select %p242, %s239, 15
      %s244 = smul.addr %s243, 2
      %s245 = smul.addr %s241, 32
      %s246 = sadd.s32 %s244, %s245
      %s247 = smul.addr %s246, 8
      %s248 = scalar_lea.vmem %s5, %s247
      %s249 = smul.u32 8, %s21
      %p250 = scmp.eq.s32.totalorder %s21, 0
      // Predicated region
      $region41: #{tpu_custom_call.1} parent=39 // pred_check
        %p251 = pneg %p250
      $region42: #{tpu_custom_call.1} parent=39 // pred_check_branch
        %253 = sbr.rel (%p251) target = $region44
      $region43: #{tpu_custom_call.1} parent=39 // pred_region
        %v254 = vld [vmem:[%s238] sm:$0xff]
        %v255 = vld [vmem:[%s238 + $0x8] sm:$0xff]
        %v256 = vld [vmem:[%s238 + $0x10] sm:$0xff]
        %v257 = vld [vmem:[%s238 + $0x18] sm:$0xff]
        %v258 = vld [vmem:[%s238 + $0x20] sm:$0xff]
        %v259 = vld [vmem:[%s238 + $0x28] sm:$0xff]
        %v260 = vld [vmem:[%s238 + $0x30] sm:$0xff]
        %v261 = vld [vmem:[%s238 + $0x38] sm:$0xff]
        %v262 = vld [vmem:[%s238 + $0x40] sm:$0xff]
        %v263 = vld [vmem:[%s238 + $0x48] sm:$0xff]
        %v264 = vld [vmem:[%s238 + $0x50] sm:$0xff]
        %v265 = vld [vmem:[%s238 + $0x58] sm:$0xff]
        %v266 = vld [vmem:[%s238 + $0x60] sm:$0xff]
        %v267 = vld [vmem:[%s238 + $0x68] sm:$0xff]
        %v268 = vld [vmem:[%s238 + $0x70] sm:$0xff]
        %v269 = vld [vmem:[%s238 + $0x78] sm:$0xff]
        %v270 = vld [vmem:[%s238 + $0x80] sm:$0xff]
        %v271 = vld [vmem:[%s238 + $0x88] sm:$0xff]
        %v272 = vld [vmem:[%s238 + $0x90] sm:$0xff]
        %v273 = vld [vmem:[%s238 + $0x98] sm:$0xff]
        %v274 = vld [vmem:[%s238 + $0xa0] sm:$0xff]
        %v275 = vld [vmem:[%s238 + $0xa8] sm:$0xff]
        %v276 = vld [vmem:[%s238 + $0xb0] sm:$0xff]
        %v277 = vld [vmem:[%s238 + $0xb8] sm:$0xff]
        %v278 = vld [vmem:[%s238 + $0xc0] sm:$0xff]
        %v279 = vld [vmem:[%s238 + $0xc8] sm:$0xff]
        %v280 = vld [vmem:[%s238 + $0xd0] sm:$0xff]
        %v281 = vld [vmem:[%s238 + $0xd8] sm:$0xff]
        %v282 = vld [vmem:[%s238 + $0xe0] sm:$0xff]
        %v283 = vld [vmem:[%s238 + $0xe8] sm:$0xff]
        %v284 = vld [vmem:[%s238 + $0xf0] sm:$0xff]
        %v285 = vld [vmem:[%s238 + $0xf8] sm:$0xff]
        %v286 = vld [vmem:[%s1] sm:$0xff]
        %v287 = vld [vmem:[%s3] sm:$0x1]
        %v289 = vlaneseq
        %v290 = vshrl.u32 %v289, 7
        %v291 = vsub.s32 0, %v290
        %v292 = vrot.slane %v287, %v291
        %vm294 = vcmask 64512
        %v296 = vsel %vm294, %v254, 0
        %v299 = vsel %vm294, %v255, 0
        %v302 = vsel %vm294, %v256, 0
        %v305 = vsel %vm294, %v257, 0
        %v308 = vsel %vm294, %v258, 0
        %v311 = vsel %vm294, %v259, 0
        %v314 = vsel %vm294, %v260, 0
        %v317 = vsel %vm294, %v261, 0
        %v320 = vsel %vm294, %v262, 0
        %v323 = vsel %vm294, %v263, 0
        %v326 = vsel %vm294, %v264, 0
        %v329 = vsel %vm294, %v265, 0
        %v332 = vsel %vm294, %v266, 0
        %v335 = vsel %vm294, %v267, 0
        %v338 = vsel %vm294, %v268, 0
        %v341 = vsel %vm294, %v269, 0
        %v344 = vsel %vm294, %v270, 0
        %v347 = vsel %vm294, %v271, 0
        %v350 = vsel %vm294, %v272, 0
        %v353 = vsel %vm294, %v273, 0
        %v356 = vsel %vm294, %v274, 0
        %v359 = vsel %vm294, %v275, 0
        %v362 = vsel %vm294, %v276, 0
        %v365 = vsel %vm294, %v277, 0
        %v368 = vsel %vm294, %v278, 0
        %v371 = vsel %vm294, %v279, 0
        %v374 = vsel %vm294, %v280, 0
        %v377 = vsel %vm294, %v281, 0
        %v380 = vsel %vm294, %v282, 0
        %v383 = vsel %vm294, %v283, 0
        %v386 = vsel %vm294, %v284, 0
        %v389 = vsel %vm294, %v285, 0
        %391 = vmatprep.subr.mxu0 0.0
        %392 = vmatpush1.msra.mxu0 0.0
        %393 = vmatprep.subr.mxu0 0.0
        %394 = vmatpush1.msra.mxu0 0.0
        %395 = vmatprep.subr.mxu0 0.0
        %396 = vmatpush1.msra.mxu0 0.0
        %397 = vmatprep.subr.mxu0 0.0
        %398 = vmatpush1.msra.mxu0 0.0
        %399 = vmatprep.subr.mxu0 0.0
        %400 = vmatpush1.msra.mxu0 0.0
        %401 = vmatprep.subr.mxu0 0.0
        %402 = vmatpush1.msra.mxu0 0.0
        %403 = vmatprep.subr.mxu0 0.0
        %404 = vmatpush1.msra.mxu0 0.0
        %405 = vmatprep.subr.mxu0 0.0
        %406 = vmatpush1.msra.mxu0 0.0
        %407 = vmatprep.subr.mxu0 0.0
        %408 = vmatpush1.msra.mxu0 0.0
        %409 = vmatprep.subr.mxu0 0.0
        %410 = vmatpush1.msra.mxu0 0.0
        %411 = vmatprep.subr.mxu0 0.0
        %412 = vmatpush1.msra.mxu0 0.0
        %413 = vmatprep.subr.mxu0 0.0
        %414 = vmatpush1.msra.mxu0 0.0
        %415 = vmatprep.subr.mxu0 0.0
        %416 = vmatpush1.msra.mxu0 0.0
        %417 = vmatprep.subr.mxu0 0.0
        %418 = vmatpush1.msra.mxu0 0.0
        %419 = vmatprep.subr.mxu0 0.0
        %420 = vmatpush1.msra.mxu0 0.0
        %421 = vmatprep.subr.mxu0 0.0
        %422 = vmatpush1.msra.mxu0 %v286
        %423 = vmatprep.subr.mxu0 0.0
        %424 = vmatpush2.msra.mxu0 0.0
        %425 = vmatprep.subr.mxu0 0.0
        %426 = vmatpush2.msra.mxu0 0.0
        %427 = vmatprep.subr.mxu0 0.0
        %428 = vmatpush2.msra.mxu0 0.0
        %429 = vmatprep.subr.mxu0 0.0
        %430 = vmatpush2.msra.mxu0 0.0
        %431 = vmatprep.subr.mxu0 0.0
        %432 = vmatpush2.msra.mxu0 0.0
        %433 = vmatprep.subr.mxu0 0.0
        %434 = vmatpush2.msra.mxu0 0.0
        %435 = vmatprep.subr.mxu0 0.0
        %436 = vmatpush2.msra.mxu0 0.0
        %437 = vmatprep.subr.mxu0 0.0
        %438 = vmatpush2.msra.mxu0 0.0
        %439 = vmatprep.subr.mxu0 0.0
        %440 = vmatpush2.msra.mxu0 0.0
        %441 = vmatprep.subr.mxu0 0.0
        %442 = vmatpush2.msra.mxu0 0.0
        %443 = vmatprep.subr.mxu0 0.0
        %444 = vmatpush2.msra.mxu0 0.0
        %445 = vmatprep.subr.mxu0 0.0
        %446 = vmatpush2.msra.mxu0 0.0
        %447 = vmatprep.subr.mxu0 0.0
        %448 = vmatpush2.msra.mxu0 0.0
        %449 = vmatprep.subr.mxu0 0.0
        %450 = vmatpush2.msra.mxu0 0.0
        %451 = vmatprep.subr.mxu0 0.0
        %452 = vmatpush2.msra.mxu0 0.0
        %453 = vmatprep.subr.mxu0 0.0
        %454 = vmatpush2.msra.mxu0 0.0
        %455 = vmatprep.mubr.f32.mxu0 0.0
        %456 = vmatmul.mubr.f32.gmra.mxu0 %v296
        %v457 = vpop.f32.mrf.mxu0
        %v458 = vadd.f32 %v292, %v457
        %v459 = vpop.f32.mrf.mxu0
        %460 = vmatprep.mubr.f32.mxu0 0.0
        %461 = vmatmul.mubr.f32.gmra.mxu0 %v299
        %v462 = vpop.f32.mrf.mxu0
        %v463 = vadd.f32 %v292, %v462
        %v464 = vpop.f32.mrf.mxu0
        %465 = vmatprep.mubr.f32.mxu0 0.0
        %466 = vmatmul.mubr.f32.gmra.mxu0 %v302
        %v467 = vpop.f32.mrf.mxu0
        %v468 = vadd.f32 %v292, %v467
        %v469 = vpop.f32.mrf.mxu0
        %470 = vmatprep.mubr.f32.mxu0 0.0
        %471 = vmatmul.mubr.f32.gmra.mxu0 %v305
        %v472 = vpop.f32.mrf.mxu0
        %v473 = vadd.f32 %v292, %v472
        %v474 = vpop.f32.mrf.mxu0
        %475 = vmatprep.mubr.f32.mxu0 0.0
        %476 = vmatmul.mubr.f32.gmra.mxu0 %v308
        %v477 = vpop.f32.mrf.mxu0
        %v478 = vadd.f32 %v292, %v477
        %v479 = vpop.f32.mrf.mxu0
        %480 = vmatprep.mubr.f32.mxu0 0.0
        %481 = vmatmul.mubr.f32.gmra.mxu0 %v311
        %v482 = vpop.f32.mrf.mxu0
        %v483 = vadd.f32 %v292, %v482
        %v484 = vpop.f32.mrf.mxu0
        %485 = vmatprep.mubr.f32.mxu0 0.0
        %486 = vmatmul.mubr.f32.gmra.mxu0 %v314
        %v487 = vpop.f32.mrf.mxu0
        %v488 = vadd.f32 %v292, %v487
        %v489 = vpop.f32.mrf.mxu0
        %490 = vmatprep.mubr.f32.mxu0 0.0
        %491 = vmatmul.mubr.f32.gmra.mxu0 %v317
        %v492 = vpop.f32.mrf.mxu0
        %v493 = vadd.f32 %v292, %v492
        %v494 = vpop.f32.mrf.mxu0
        %495 = vmatprep.mubr.f32.mxu0 0.0
        %496 = vmatmul.mubr.f32.gmra.mxu0 %v320
        %v497 = vpop.f32.mrf.mxu0
        %v498 = vadd.f32 %v292, %v497
        %v499 = vpop.f32.mrf.mxu0
        %500 = vmatprep.mubr.f32.mxu0 0.0
        %501 = vmatmul.mubr.f32.gmra.mxu0 %v323
        %v502 = vpop.f32.mrf.mxu0
        %v503 = vadd.f32 %v292, %v502
        %v504 = vpop.f32.mrf.mxu0
        %505 = vmatprep.mubr.f32.mxu0 0.0
        %506 = vmatmul.mubr.f32.gmra.mxu0 %v326
        %v507 = vpop.f32.mrf.mxu0
        %v508 = vadd.f32 %v292, %v507
        %v509 = vpop.f32.mrf.mxu0
        %510 = vmatprep.mubr.f32.mxu0 0.0
        %511 = vmatmul.mubr.f32.gmra.mxu0 %v329
        %v512 = vpop.f32.mrf.mxu0
        %v513 = vadd.f32 %v292, %v512
        %v514 = vpop.f32.mrf.mxu0
        %515 = vmatprep.mubr.f32.mxu0 0.0
        %516 = vmatmul.mubr.f32.gmra.mxu0 %v332
        %v517 = vpop.f32.mrf.mxu0
        %v518 = vadd.f32 %v292, %v517
        %v519 = vpop.f32.mrf.mxu0
        %520 = vmatprep.mubr.f32.mxu0 0.0
        %521 = vmatmul.mubr.f32.gmra.mxu0 %v335
        %v522 = vpop.f32.mrf.mxu0
        %v523 = vadd.f32 %v292, %v522
        %v524 = vpop.f32.mrf.mxu0
        %525 = vmatprep.mubr.f32.mxu0 0.0
        %526 = vmatmul.mubr.f32.gmra.mxu0 %v338
        %v527 = vpop.f32.mrf.mxu0
        %v528 = vadd.f32 %v292, %v527
        %v529 = vpop.f32.mrf.mxu0
        %530 = vmatprep.mubr.f32.mxu0 0.0
        %531 = vmatmul.mubr.f32.gmra.mxu0 %v341
        %v532 = vpop.f32.mrf.mxu0
        %v533 = vadd.f32 %v292, %v532
        %v534 = vpop.f32.mrf.mxu0
        %535 = vmatprep.mubr.f32.mxu0 0.0
        %536 = vmatmul.mubr.f32.gmra.mxu0 %v344
        %v537 = vpop.f32.mrf.mxu0
        %v538 = vadd.f32 %v292, %v537
        %v539 = vpop.f32.mrf.mxu0
        %540 = vmatprep.mubr.f32.mxu0 0.0
        %541 = vmatmul.mubr.f32.gmra.mxu0 %v347
        %v542 = vpop.f32.mrf.mxu0
        %v543 = vadd.f32 %v292, %v542
        %v544 = vpop.f32.mrf.mxu0
        %545 = vmatprep.mubr.f32.mxu0 0.0
        %546 = vmatmul.mubr.f32.gmra.mxu0 %v350
        %v547 = vpop.f32.mrf.mxu0
        %v548 = vadd.f32 %v292, %v547
        %v549 = vpop.f32.mrf.mxu0
        %550 = vmatprep.mubr.f32.mxu0 0.0
        %551 = vmatmul.mubr.f32.gmra.mxu0 %v353
        %v552 = vpop.f32.mrf.mxu0
        %v553 = vadd.f32 %v292, %v552
        %v554 = vpop.f32.mrf.mxu0
        %555 = vmatprep.mubr.f32.mxu0 0.0
        %556 = vmatmul.mubr.f32.gmra.mxu0 %v356
        %v557 = vpop.f32.mrf.mxu0
        %v558 = vadd.f32 %v292, %v557
        %v559 = vpop.f32.mrf.mxu0
        %560 = vmatprep.mubr.f32.mxu0 0.0
        %561 = vmatmul.mubr.f32.gmra.mxu0 %v359
        %v562 = vpop.f32.mrf.mxu0
        %v563 = vadd.f32 %v292, %v562
        %v564 = vpop.f32.mrf.mxu0
        %565 = vmatprep.mubr.f32.mxu0 0.0
        %566 = vmatmul.mubr.f32.gmra.mxu0 %v362
        %v567 = vpop.f32.mrf.mxu0
        %v568 = vadd.f32 %v292, %v567
        %v569 = vpop.f32.mrf.mxu0
        %570 = vmatprep.mubr.f32.mxu0 0.0
        %571 = vmatmul.mubr.f32.gmra.mxu0 %v365
        %v572 = vpop.f32.mrf.mxu0
        %v573 = vadd.f32 %v292, %v572
        %v574 = vpop.f32.mrf.mxu0
        %575 = vmatprep.mubr.f32.mxu0 0.0
        %576 = vmatmul.mubr.f32.gmra.mxu0 %v368
        %v577 = vpop.f32.mrf.mxu0
        %v578 = vadd.f32 %v292, %v577
        %v579 = vpop.f32.mrf.mxu0
        %580 = vmatprep.mubr.f32.mxu0 0.0
        %581 = vmatmul.mubr.f32.gmra.mxu0 %v371
        %v582 = vpop.f32.mrf.mxu0
        %v583 = vadd.f32 %v292, %v582
        %v584 = vpop.f32.mrf.mxu0
        %585 = vmatprep.mubr.f32.mxu0 0.0
        %586 = vmatmul.mubr.f32.gmra.mxu0 %v374
        %v587 = vpop.f32.mrf.mxu0
        %v588 = vadd.f32 %v292, %v587
        %v589 = vpop.f32.mrf.mxu0
        %590 = vmatprep.mubr.f32.mxu0 0.0
        %591 = vmatmul.mubr.f32.gmra.mxu0 %v377
        %v592 = vpop.f32.mrf.mxu0
        %v593 = vadd.f32 %v292, %v592
        %v594 = vpop.f32.mrf.mxu0
        %595 = vmatprep.mubr.f32.mxu0 0.0
        %596 = vmatmul.mubr.f32.gmra.mxu0 %v380
        %v597 = vpop.f32.mrf.mxu0
        %v598 = vadd.f32 %v292, %v597
        %v599 = vpop.f32.mrf.mxu0
        %600 = vmatprep.mubr.f32.mxu0 0.0
        %601 = vmatmul.mubr.f32.gmra.mxu0 %v383
        %v602 = vpop.f32.mrf.mxu0
        %v603 = vadd.f32 %v292, %v602
        %v604 = vpop.f32.mrf.mxu0
        %605 = vmatprep.mubr.f32.mxu0 0.0
        %606 = vmatmul.mubr.f32.gmra.mxu0 %v386
        %v607 = vpop.f32.mrf.mxu0
        %v608 = vadd.f32 %v292, %v607
        %v609 = vpop.f32.mrf.mxu0
        %610 = vmatprep.mubr.f32.mxu0 0.0
        %611 = vmatmul.mubr.f32.gmra.mxu0 %v389
        %v612 = vpop.f32.mrf.mxu0
        %v613 = vadd.f32 %v292, %v612
        %v614 = vpop.f32.mrf.mxu0
        %615 = vdwg.mxu0
        %616 = vst.msk [vmem:[#allocation5] sm:$0xff] %vm294, %v458
        %617 = vst.msk [vmem:[#allocation5 + $0x8] sm:$0xff] %vm294, %v463
        %618 = vst.msk [vmem:[#allocation5 + $0x10] sm:$0xff] %vm294, %v468
        %619 = vst.msk [vmem:[#allocation5 + $0x18] sm:$0xff] %vm294, %v473
        %620 = vst.msk [vmem:[#allocation5 + $0x20] sm:$0xff] %vm294, %v478
        %621 = vst.msk [vmem:[#allocation5 + $0x28] sm:$0xff] %vm294, %v483
        %622 = vst.msk [vmem:[#allocation5 + $0x30] sm:$0xff] %vm294, %v488
        %623 = vst.msk [vmem:[#allocation5 + $0x38] sm:$0xff] %vm294, %v493
        %624 = vst.msk [vmem:[#allocation5 + $0x40] sm:$0xff] %vm294, %v498
        %625 = vst.msk [vmem:[#allocation5 + $0x48] sm:$0xff] %vm294, %v503
        %626 = vst.msk [vmem:[#allocation5 + $0x50] sm:$0xff] %vm294, %v508
        %627 = vst.msk [vmem:[#allocation5 + $0x58] sm:$0xff] %vm294, %v513
        %628 = vst.msk [vmem:[#allocation5 + $0x60] sm:$0xff] %vm294, %v518
        %629 = vst.msk [vmem:[#allocation5 + $0x68] sm:$0xff] %vm294, %v523
        %630 = vst.msk [vmem:[#allocation5 + $0x70] sm:$0xff] %vm294, %v528
        %631 = vst.msk [vmem:[#allocation5 + $0x78] sm:$0xff] %vm294, %v533
        %632 = vst.msk [vmem:[#allocation5 + $0x80] sm:$0xff] %vm294, %v538
        %633 = vst.msk [vmem:[#allocation5 + $0x88] sm:$0xff] %vm294, %v543
        %634 = vst.msk [vmem:[#allocation5 + $0x90] sm:$0xff] %vm294, %v548
        %635 = vst.msk [vmem:[#allocation5 + $0x98] sm:$0xff] %vm294, %v553
        %636 = vst.msk [vmem:[#allocation5 + $0xa0] sm:$0xff] %vm294, %v558
        %637 = vst.msk [vmem:[#allocation5 + $0xa8] sm:$0xff] %vm294, %v563
        %638 = vst.msk [vmem:[#allocation5 + $0xb0] sm:$0xff] %vm294, %v568
        %639 = vst.msk [vmem:[#allocation5 + $0xb8] sm:$0xff] %vm294, %v573
        %640 = vst.msk [vmem:[#allocation5 + $0xc0] sm:$0xff] %vm294, %v578
        %641 = vst.msk [vmem:[#allocation5 + $0xc8] sm:$0xff] %vm294, %v583
        %642 = vst.msk [vmem:[#allocation5 + $0xd0] sm:$0xff] %vm294, %v588
        %643 = vst.msk [vmem:[#allocation5 + $0xd8] sm:$0xff] %vm294, %v593
        %644 = vst.msk [vmem:[#allocation5 + $0xe0] sm:$0xff] %vm294, %v598
        %645 = vst.msk [vmem:[#allocation5 + $0xe8] sm:$0xff] %vm294, %v603
        %646 = vst.msk [vmem:[#allocation5 + $0xf0] sm:$0xff] %vm294, %v608
        %647 = vst.msk [vmem:[#allocation5 + $0xf8] sm:$0xff] %vm294, %v613
        %v648 = vcombine.low %v458, %v478
        %v649 = vcombine.high %v458, %v478
        %v651 = vunpack.c.l.s4 1983009808
        %v652 = vunpack.c.0.s8 %v651
        %v653 = vlaneseq
        %v654 = vshrl.u32 %v653, 7
        %v655 = vsub.s32 %v652, %v654
        %v656 = vrot.slane %v648, %v655
        %v658 = vunpack.c.l.s4 1983009808
        %v659 = vunpack.c.0.s8 %v658
        %v660 = vlaneseq
        %v661 = vshrl.u32 %v660, 7
        %v662 = vsub.s32 %v659, %v661
        %v663 = vrot.slane %v649, %v662
        %v664 = vcombine.low %v468, %v488
        %v665 = vcombine.high %v468, %v488
        %v667 = vunpack.c.l.s4 1983009808
        %v668 = vunpack.c.0.s8 %v667
        %v669 = vlaneseq
        %v670 = vshrl.u32 %v669, 7
        %v671 = vsub.s32 %v668, %v670
        %v672 = vrot.slane %v664, %v671
        %v674 = vunpack.c.l.s4 1983009808
        %v675 = vunpack.c.0.s8 %v674
        %v676 = vlaneseq
        %v677 = vshrl.u32 %v676, 7
        %v678 = vsub.s32 %v675, %v677
        %v679 = vrot.slane %v665, %v678
        %v680 = vcombine.low %v498, %v518
        %v681 = vcombine.high %v498, %v518
        %v683 = vunpack.c.l.s4 1983009808
        %v684 = vunpack.c.0.s8 %v683
        %v685 = vlaneseq
        %v686 = vshrl.u32 %v685, 7
        %v687 = vsub.s32 %v684, %v686
        %v688 = vrot.slane %v680, %v687
        %v690 = vunpack.c.l.s4 1983009808
        %v691 = vunpack.c.0.s8 %v690
        %v692 = vlaneseq
        %v693 = vshrl.u32 %v692, 7
        %v694 = vsub.s32 %v691, %v693
        %v695 = vrot.slane %v681, %v694
        %v696 = vcombine.low %v508, %v528
        %v697 = vcombine.high %v508, %v528
        %v699 = vunpack.c.l.s4 1983009808
        %v700 = vunpack.c.0.s8 %v699
        %v701 = vlaneseq
        %v702 = vshrl.u32 %v701, 7
        %v703 = vsub.s32 %v700, %v702
        %v704 = vrot.slane %v696, %v703
        %v706 = vunpack.c.l.s4 1983009808
        %v707 = vunpack.c.0.s8 %v706
        %v708 = vlaneseq
        %v709 = vshrl.u32 %v708, 7
        %v710 = vsub.s32 %v707, %v709
        %v711 = vrot.slane %v697, %v710
        %v712 = vcombine.low %v656, %v672
        %v713 = vcombine.high %v656, %v672
        %v715 = vunpack.c.l.s4 1934713408
        %v716 = vunpack.c.0.s8 %v715
        %v717 = vlaneseq
        %v718 = vshrl.u32 %v717, 7
        %v719 = vsub.s32 %v716, %v718
        %v720 = vrot.slane %v712, %v719
        %v722 = vunpack.c.l.s4 1934713408
        %v723 = vunpack.c.0.s8 %v722
        %v724 = vlaneseq
        %v725 = vshrl.u32 %v724, 7
        %v726 = vsub.s32 %v723, %v725
        %v727 = vrot.slane %v713, %v726
        %v728 = vcombine.low %v663, %v679
        %v729 = vcombine.high %v663, %v679
        %v731 = vunpack.c.l.s4 1934713408
        %v732 = vunpack.c.0.s8 %v731
        %v733 = vlaneseq
        %v734 = vshrl.u32 %v733, 7
        %v735 = vsub.s32 %v732, %v734
        %v736 = vrot.slane %v728, %v735
        %v738 = vunpack.c.l.s4 1934713408
        %v739 = vunpack.c.0.s8 %v738
        %v740 = vlaneseq
        %v741 = vshrl.u32 %v740, 7
        %v742 = vsub.s32 %v739, %v741
        %v743 = vrot.slane %v729, %v742
        %v744 = vcombine.low %v688, %v704
        %v745 = vcombine.high %v688, %v704
        %v747 = vunpack.c.l.s4 1934713408
        %v748 = vunpack.c.0.s8 %v747
        %v749 = vlaneseq
        %v750 = vshrl.u32 %v749, 7
        %v751 = vsub.s32 %v748, %v750
        %v752 = vrot.slane %v744, %v751
        %v754 = vunpack.c.l.s4 1934713408
        %v755 = vunpack.c.0.s8 %v754
        %v756 = vlaneseq
        %v757 = vshrl.u32 %v756, 7
        %v758 = vsub.s32 %v755, %v757
        %v759 = vrot.slane %v745, %v758
        %v760 = vcombine.low %v695, %v711
        %v761 = vcombine.high %v695, %v711
        %v763 = vunpack.c.l.s4 1934713408
        %v764 = vunpack.c.0.s8 %v763
        %v765 = vlaneseq
        %v766 = vshrl.u32 %v765, 7
        %v767 = vsub.s32 %v764, %v766
        %v768 = vrot.slane %v760, %v767
        %v770 = vunpack.c.l.s4 1934713408
        %v771 = vunpack.c.0.s8 %v770
        %v772 = vlaneseq
        %v773 = vshrl.u32 %v772, 7
        %v774 = vsub.s32 %v771, %v773
        %v775 = vrot.slane %v761, %v774
        %v776 = vcombine.low %v720, %v752
        %v777 = vcombine.high %v720, %v752
        %v778 = vcombine.low %v727, %v759
        %v779 = vcombine.high %v727, %v759
        %v780 = vcombine.low %v736, %v768
        %v781 = vcombine.high %v736, %v768
        %v782 = vcombine.low %v743, %v775
        %v783 = vcombine.high %v743, %v775
        %v784 = vcombine.low %v538, %v558
        %v785 = vcombine.high %v538, %v558
        %v787 = vunpack.c.l.s4 1983009808
        %v788 = vunpack.c.0.s8 %v787
        %v789 = vlaneseq
        %v790 = vshrl.u32 %v789, 7
        %v791 = vsub.s32 %v788, %v790
        %v792 = vrot.slane %v784, %v791
        %v794 = vunpack.c.l.s4 1983009808
        %v795 = vunpack.c.0.s8 %v794
        %v796 = vlaneseq
        %v797 = vshrl.u32 %v796, 7
        %v798 = vsub.s32 %v795, %v797
        %v799 = vrot.slane %v785, %v798
        %v800 = vcombine.low %v548, %v568
        %v801 = vcombine.high %v548, %v568
        %v803 = vunpack.c.l.s4 1983009808
        %v804 = vunpack.c.0.s8 %v803
        %v805 = vlaneseq
        %v806 = vshrl.u32 %v805, 7
        %v807 = vsub.s32 %v804, %v806
        %v808 = vrot.slane %v800, %v807
        %v810 = vunpack.c.l.s4 1983009808
        %v811 = vunpack.c.0.s8 %v810
        %v812 = vlaneseq
        %v813 = vshrl.u32 %v812, 7
        %v814 = vsub.s32 %v811, %v813
        %v815 = vrot.slane %v801, %v814
        %v816 = vcombine.low %v578, %v598
        %v817 = vcombine.high %v578, %v598
        %v819 = vunpack.c.l.s4 1983009808
        %v820 = vunpack.c.0.s8 %v819
        %v821 = vlaneseq
        %v822 = vshrl.u32 %v821, 7
        %v823 = vsub.s32 %v820, %v822
        %v824 = vrot.slane %v816, %v823
        %v826 = vunpack.c.l.s4 1983009808
        %v827 = vunpack.c.0.s8 %v826
        %v828 = vlaneseq
        %v829 = vshrl.u32 %v828, 7
        %v830 = vsub.s32 %v827, %v829
        %v831 = vrot.slane %v817, %v830
        %v832 = vcombine.low %v588, %v608
        %v833 = vcombine.high %v588, %v608
        %v835 = vunpack.c.l.s4 1983009808
        %v836 = vunpack.c.0.s8 %v835
        %v837 = vlaneseq
        %v838 = vshrl.u32 %v837, 7
        %v839 = vsub.s32 %v836, %v838
        %v840 = vrot.slane %v832, %v839
        %v842 = vunpack.c.l.s4 1983009808
        %v843 = vunpack.c.0.s8 %v842
        %v844 = vlaneseq
        %v845 = vshrl.u32 %v844, 7
        %v846 = vsub.s32 %v843, %v845
        %v847 = vrot.slane %v833, %v846
        %v848 = vcombine.low %v792, %v808
        %v849 = vcombine.high %v792, %v808
        %v851 = vunpack.c.l.s4 1934713408
        %v852 = vunpack.c.0.s8 %v851
        %v853 = vlaneseq
        %v854 = vshrl.u32 %v853, 7
        %v855 = vsub.s32 %v852, %v854
        %v856 = vrot.slane %v848, %v855
        %v858 = vunpack.c.l.s4 1934713408
        %v859 = vunpack.c.0.s8 %v858
        %v860 = vlaneseq
        %v861 = vshrl.u32 %v860, 7
        %v862 = vsub.s32 %v859, %v861
        %v863 = vrot.slane %v849, %v862
        %v864 = vcombine.low %v799, %v815
        %v865 = vcombine.high %v799, %v815
        %v867 = vunpack.c.l.s4 1934713408
        %v868 = vunpack.c.0.s8 %v867
        %v869 = vlaneseq
        %v870 = vshrl.u32 %v869, 7
        %v871 = vsub.s32 %v868, %v870
        %v872 = vrot.slane %v864, %v871
        %v874 = vunpack.c.l.s4 1934713408
        %v875 = vunpack.c.0.s8 %v874
        %v876 = vlaneseq
        %v877 = vshrl.u32 %v876, 7
        %v878 = vsub.s32 %v875, %v877
        %v879 = vrot.slane %v865, %v878
        %v880 = vcombine.low %v824, %v840
        %v881 = vcombine.high %v824, %v840
        %v883 = vunpack.c.l.s4 1934713408
        %v884 = vunpack.c.0.s8 %v883
        %v885 = vlaneseq
        %v886 = vshrl.u32 %v885, 7
        %v887 = vsub.s32 %v884, %v886
        %v888 = vrot.slane %v880, %v887
        %v890 = vunpack.c.l.s4 1934713408
        %v891 = vunpack.c.0.s8 %v890
        %v892 = vlaneseq
        %v893 = vshrl.u32 %v892, 7
        %v894 = vsub.s32 %v891, %v893
        %v895 = vrot.slane %v881, %v894
        %v896 = vcombine.low %v831, %v847
        %v897 = vcombine.high %v831, %v847
        %v899 = vunpack.c.l.s4 1934713408
        %v900 = vunpack.c.0.s8 %v899
        %v901 = vlaneseq
        %v902 = vshrl.u32 %v901, 7
        %v903 = vsub.s32 %v900, %v902
        %v904 = vrot.slane %v896, %v903
        %v906 = vunpack.c.l.s4 1934713408
        %v907 = vunpack.c.0.s8 %v906
        %v908 = vlaneseq
        %v909 = vshrl.u32 %v908, 7
        %v910 = vsub.s32 %v907, %v909
        %v911 = vrot.slane %v897, %v910
        %v912 = vcombine.low %v856, %v888
        %v913 = vcombine.high %v856, %v888
        %v914 = vcombine.low %v863, %v895
        %v915 = vcombine.high %v863, %v895
        %v916 = vcombine.low %v872, %v904
        %v917 = vcombine.high %v872, %v904
        %v918 = vcombine.low %v879, %v911
        %v919 = vcombine.high %v879, %v911
        %v920 = vcombine.low %v463, %v483
        %v921 = vcombine.high %v463, %v483
        %v923 = vunpack.c.l.s4 1983009808
        %v924 = vunpack.c.0.s8 %v923
        %v925 = vlaneseq
        %v926 = vshrl.u32 %v925, 7
        %v927 = vsub.s32 %v924, %v926
        %v928 = vrot.slane %v920, %v927
        %v930 = vunpack.c.l.s4 1983009808
        %v931 = vunpack.c.0.s8 %v930
        %v932 = vlaneseq
        %v933 = vshrl.u32 %v932, 7
        %v934 = vsub.s32 %v931, %v933
        %v935 = vrot.slane %v921, %v934
        %v936 = vcombine.low %v473, %v493
        %v937 = vcombine.high %v473, %v493
        %v939 = vunpack.c.l.s4 1983009808
        %v940 = vunpack.c.0.s8 %v939
        %v941 = vlaneseq
        %v942 = vshrl.u32 %v941, 7
        %v943 = vsub.s32 %v940, %v942
        %v944 = vrot.slane %v936, %v943
        %v946 = vunpack.c.l.s4 1983009808
        %v947 = vunpack.c.0.s8 %v946
        %v948 = vlaneseq
        %v949 = vshrl.u32 %v948, 7
        %v950 = vsub.s32 %v947, %v949
        %v951 = vrot.slane %v937, %v950
        %v952 = vcombine.low %v503, %v523
        %v953 = vcombine.high %v503, %v523
        %v955 = vunpack.c.l.s4 1983009808
        %v956 = vunpack.c.0.s8 %v955
        %v957 = vlaneseq
        %v958 = vshrl.u32 %v957, 7
        %v959 = vsub.s32 %v956, %v958
        %v960 = vrot.slane %v952, %v959
        %v962 = vunpack.c.l.s4 1983009808
        %v963 = vunpack.c.0.s8 %v962
        %v964 = vlaneseq
        %v965 = vshrl.u32 %v964, 7
        %v966 = vsub.s32 %v963, %v965
        %v967 = vrot.slane %v953, %v966
        %v968 = vcombine.low %v513, %v533
        %v969 = vcombine.high %v513, %v533
        %v971 = vunpack.c.l.s4 1983009808
        %v972 = vunpack.c.0.s8 %v971
        %v973 = vlaneseq
        %v974 = vshrl.u32 %v973, 7
        %v975 = vsub.s32 %v972, %v974
        %v976 = vrot.slane %v968, %v975
        %v978 = vunpack.c.l.s4 1983009808
        %v979 = vunpack.c.0.s8 %v978
        %v980 = vlaneseq
        %v981 = vshrl.u32 %v980, 7
        %v982 = vsub.s32 %v979, %v981
        %v983 = vrot.slane %v969, %v982
        %v984 = vcombine.low %v928, %v944
        %v985 = vcombine.high %v928, %v944
        %v987 = vunpack.c.l.s4 1934713408
        %v988 = vunpack.c.0.s8 %v987
        %v989 = vlaneseq
        %v990 = vshrl.u32 %v989, 7
        %v991 = vsub.s32 %v988, %v990
        %v992 = vrot.slane %v984, %v991
        %v994 = vunpack.c.l.s4 1934713408
        %v995 = vunpack.c.0.s8 %v994
        %v996 = vlaneseq
        %v997 = vshrl.u32 %v996, 7
        %v998 = vsub.s32 %v995, %v997
        %v999 = vrot.slane %v985, %v998
        %v1000 = vcombine.low %v935, %v951
        %v1001 = vcombine.high %v935, %v951
        %v1003 = vunpack.c.l.s4 1934713408
        %v1004 = vunpack.c.0.s8 %v1003
        %v1005 = vlaneseq
        %v1006 = vshrl.u32 %v1005, 7
        %v1007 = vsub.s32 %v1004, %v1006
        %v1008 = vrot.slane %v1000, %v1007
        %v1010 = vunpack.c.l.s4 1934713408
        %v1011 = vunpack.c.0.s8 %v1010
        %v1012 = vlaneseq
        %v1013 = vshrl.u32 %v1012, 7
        %v1014 = vsub.s32 %v1011, %v1013
        %v1015 = vrot.slane %v1001, %v1014
        %v1016 = vcombine.low %v960, %v976
        %v1017 = vcombine.high %v960, %v976
        %v1019 = vunpack.c.l.s4 1934713408
        %v1020 = vunpack.c.0.s8 %v1019
        %v1021 = vlaneseq
        %v1022 = vshrl.u32 %v1021, 7
        %v1023 = vsub.s32 %v1020, %v1022
        %v1024 = vrot.slane %v1016, %v1023
        %v1026 = vunpack.c.l.s4 1934713408
        %v1027 = vunpack.c.0.s8 %v1026
        %v1028 = vlaneseq
        %v1029 = vshrl.u32 %v1028, 7
        %v1030 = vsub.s32 %v1027, %v1029
        %v1031 = vrot.slane %v1017, %v1030
        %v1032 = vcombine.low %v967, %v983
        %v1033 = vcombine.high %v967, %v983
        %v1035 = vunpack.c.l.s4 1934713408
        %v1036 = vunpack.c.0.s8 %v1035
        %v1037 = vlaneseq
        %v1038 = vshrl.u32 %v1037, 7
        %v1039 = vsub.s32 %v1036, %v1038
        %v1040 = vrot.slane %v1032, %v1039
        %v1042 = vunpack.c.l.s4 1934713408
        %v1043 = vunpack.c.0.s8 %v1042
        %v1044 = vlaneseq
        %v1045 = vshrl.u32 %v1044, 7
        %v1046 = vsub.s32 %v1043, %v1045
        %v1047 = vrot.slane %v1033, %v1046
        %v1048 = vcombine.low %v992, %v1024
        %v1049 = vcombine.high %v992, %v1024
        %v1050 = vcombine.low %v999, %v1031
        %v1051 = vcombine.high %v999, %v1031
        %v1052 = vcombine.low %v1008, %v1040
        %v1053 = vcombine.high %v1008, %v1040
        %v1054 = vcombine.low %v1015, %v1047
        %v1055 = vcombine.high %v1015, %v1047
        %v1056 = vcombine.low %v543, %v563
        %v1057 = vcombine.high %v543, %v563
        %v1059 = vunpack.c.l.s4 1983009808
        %v1060 = vunpack.c.0.s8 %v1059
        %v1061 = vlaneseq
        %v1062 = vshrl.u32 %v1061, 7
        %v1063 = vsub.s32 %v1060, %v1062
        %v1064 = vrot.slane %v1056, %v1063
        %v1066 = vunpack.c.l.s4 1983009808
        %v1067 = vunpack.c.0.s8 %v1066
        %v1068 = vlaneseq
        %v1069 = vshrl.u32 %v1068, 7
        %v1070 = vsub.s32 %v1067, %v1069
        %v1071 = vrot.slane %v1057, %v1070
        %v1072 = vcombine.low %v553, %v573
        %v1073 = vcombine.high %v553, %v573
        %v1075 = vunpack.c.l.s4 1983009808
        %v1076 = vunpack.c.0.s8 %v1075
        %v1077 = vlaneseq
        %v1078 = vshrl.u32 %v1077, 7
        %v1079 = vsub.s32 %v1076, %v1078
        %v1080 = vrot.slane %v1072, %v1079
        %v1082 = vunpack.c.l.s4 1983009808
        %v1083 = vunpack.c.0.s8 %v1082
        %v1084 = vlaneseq
        %v1085 = vshrl.u32 %v1084, 7
        %v1086 = vsub.s32 %v1083, %v1085
        %v1087 = vrot.slane %v1073, %v1086
        %v1088 = vcombine.low %v583, %v603
        %v1089 = vcombine.high %v583, %v603
        %v1091 = vunpack.c.l.s4 1983009808
        %v1092 = vunpack.c.0.s8 %v1091
        %v1093 = vlaneseq
        %v1094 = vshrl.u32 %v1093, 7
        %v1095 = vsub.s32 %v1092, %v1094
        %v1096 = vrot.slane %v1088, %v1095
        %v1098 = vunpack.c.l.s4 1983009808
        %v1099 = vunpack.c.0.s8 %v1098
        %v1100 = vlaneseq
        %v1101 = vshrl.u32 %v1100, 7
        %v1102 = vsub.s32 %v1099, %v1101
        %v1103 = vrot.slane %v1089, %v1102
        %v1104 = vcombine.low %v593, %v613
        %v1105 = vcombine.high %v593, %v613
        %v1107 = vunpack.c.l.s4 1983009808
        %v1108 = vunpack.c.0.s8 %v1107
        %v1109 = vlaneseq
        %v1110 = vshrl.u32 %v1109, 7
        %v1111 = vsub.s32 %v1108, %v1110
        %v1112 = vrot.slane %v1104, %v1111
        %v1114 = vunpack.c.l.s4 1983009808
        %v1115 = vunpack.c.0.s8 %v1114
        %v1116 = vlaneseq
        %v1117 = vshrl.u32 %v1116, 7
        %v1118 = vsub.s32 %v1115, %v1117
        %v1119 = vrot.slane %v1105, %v1118
        %v1120 = vcombine.low %v1064, %v1080
        %v1121 = vcombine.high %v1064, %v1080
        %v1123 = vunpack.c.l.s4 1934713408
        %v1124 = vunpack.c.0.s8 %v1123
        %v1125 = vlaneseq
        %v1126 = vshrl.u32 %v1125, 7
        %v1127 = vsub.s32 %v1124, %v1126
        %v1128 = vrot.slane %v1120, %v1127
        %v1130 = vunpack.c.l.s4 1934713408
        %v1131 = vunpack.c.0.s8 %v1130
        %v1132 = vlaneseq
        %v1133 = vshrl.u32 %v1132, 7
        %v1134 = vsub.s32 %v1131, %v1133
        %v1135 = vrot.slane %v1121, %v1134
        %v1136 = vcombine.low %v1071, %v1087
        %v1137 = vcombine.high %v1071, %v1087
        %v1139 = vunpack.c.l.s4 1934713408
        %v1140 = vunpack.c.0.s8 %v1139
        %v1141 = vlaneseq
        %v1142 = vshrl.u32 %v1141, 7
        %v1143 = vsub.s32 %v1140, %v1142
        %v1144 = vrot.slane %v1136, %v1143
        %v1146 = vunpack.c.l.s4 1934713408
        %v1147 = vunpack.c.0.s8 %v1146
        %v1148 = vlaneseq
        %v1149 = vshrl.u32 %v1148, 7
        %v1150 = vsub.s32 %v1147, %v1149
        %v1151 = vrot.slane %v1137, %v1150
        %v1152 = vcombine.low %v1096, %v1112
        %v1153 = vcombine.high %v1096, %v1112
        %v1155 = vunpack.c.l.s4 1934713408
        %v1156 = vunpack.c.0.s8 %v1155
        %v1157 = vlaneseq
        %v1158 = vshrl.u32 %v1157, 7
        %v1159 = vsub.s32 %v1156, %v1158
        %v1160 = vrot.slane %v1152, %v1159
        %v1162 = vunpack.c.l.s4 1934713408
        %v1163 = vunpack.c.0.s8 %v1162
        %v1164 = vlaneseq
        %v1165 = vshrl.u32 %v1164, 7
        %v1166 = vsub.s32 %v1163, %v1165
        %v1167 = vrot.slane %v1153, %v1166
        %v1168 = vcombine.low %v1103, %v1119
        %v1169 = vcombine.high %v1103, %v1119
        %v1171 = vunpack.c.l.s4 1934713408
        %v1172 = vunpack.c.0.s8 %v1171
        %v1173 = vlaneseq
        %v1174 = vshrl.u32 %v1173, 7
        %v1175 = vsub.s32 %v1172, %v1174
        %v1176 = vrot.slane %v1168, %v1175
        %v1178 = vunpack.c.l.s4 1934713408
        %v1179 = vunpack.c.0.s8 %v1178
        %v1180 = vlaneseq
        %v1181 = vshrl.u32 %v1180, 7
        %v1182 = vsub.s32 %v1179, %v1181
        %v1183 = vrot.slane %v1169, %v1182
        %v1184 = vcombine.low %v1128, %v1160
        %v1185 = vcombine.high %v1128, %v1160
        %v1186 = vcombine.low %v1135, %v1167
        %v1187 = vcombine.high %v1135, %v1167
        %v1188 = vcombine.low %v1144, %v1176
        %v1189 = vcombine.high %v1144, %v1176
        %v1190 = vcombine.low %v1151, %v1183
        %v1191 = vcombine.high %v1151, %v1183
        %1192 = vst.msk [vmem:[#allocation6] sm:$0xff] %vm294, %v776
        %1193 = vst.msk [vmem:[#allocation6 + $0x8] sm:$0xff] %vm294, %v912
        %1194 = vst.msk [vmem:[#allocation6 + $0x10] sm:$0xff] %vm294, %v777
        %1195 = vst.msk [vmem:[#allocation6 + $0x18] sm:$0xff] %vm294, %v913
        %1196 = vst.msk [vmem:[#allocation6 + $0x20] sm:$0xff] %vm294, %v778
        %1197 = vst.msk [vmem:[#allocation6 + $0x28] sm:$0xff] %vm294, %v914
        %1198 = vst.msk [vmem:[#allocation6 + $0x30] sm:$0xff] %vm294, %v779
        %1199 = vst.msk [vmem:[#allocation6 + $0x38] sm:$0xff] %vm294, %v915
        %1200 = vst.msk [vmem:[#allocation6 + $0x40] sm:$0xff] %vm294, %v780
        %1201 = vst.msk [vmem:[#allocation6 + $0x48] sm:$0xff] %vm294, %v916
        %1202 = vst.msk [vmem:[#allocation6 + $0x50] sm:$0xff] %vm294, %v781
        %1203 = vst.msk [vmem:[#allocation6 + $0x58] sm:$0xff] %vm294, %v917
        %1204 = vst.msk [vmem:[#allocation6 + $0x60] sm:$0xff] %vm294, %v782
        %1205 = vst.msk [vmem:[#allocation6 + $0x68] sm:$0xff] %vm294, %v918
        %1206 = vst.msk [vmem:[#allocation6 + $0x70] sm:$0xff] %vm294, %v783
        %1207 = vst.msk [vmem:[#allocation6 + $0x78] sm:$0xff] %vm294, %v919
        %1208 = vst.msk [vmem:[#allocation6 + $0x80] sm:$0xff] %vm294, %v1048
        %1209 = vst.msk [vmem:[#allocation6 + $0x88] sm:$0xff] %vm294, %v1184
        %1210 = vst.msk [vmem:[#allocation6 + $0x90] sm:$0xff] %vm294, %v1049
        %1211 = vst.msk [vmem:[#allocation6 + $0x98] sm:$0xff] %vm294, %v1185
        %1212 = vst.msk [vmem:[#allocation6 + $0xa0] sm:$0xff] %vm294, %v1050
        %1213 = vst.msk [vmem:[#allocation6 + $0xa8] sm:$0xff] %vm294, %v1186
        %1214 = vst.msk [vmem:[#allocation6 + $0xb0] sm:$0xff] %vm294, %v1051
        %1215 = vst.msk [vmem:[#allocation6 + $0xb8] sm:$0xff] %vm294, %v1187
        %1216 = vst.msk [vmem:[#allocation6 + $0xc0] sm:$0xff] %vm294, %v1052
        %1217 = vst.msk [vmem:[#allocation6 + $0xc8] sm:$0xff] %vm294, %v1188
        %1218 = vst.msk [vmem:[#allocation6 + $0xd0] sm:$0xff] %vm294, %v1053
        %1219 = vst.msk [vmem:[#allocation6 + $0xd8] sm:$0xff] %vm294, %v1189
        %1220 = vst.msk [vmem:[#allocation6 + $0xe0] sm:$0xff] %vm294, %v1054
        %1221 = vst.msk [vmem:[#allocation6 + $0xe8] sm:$0xff] %vm294, %v1190
        %1222 = vst.msk [vmem:[#allocation6 + $0xf0] sm:$0xff] %vm294, %v1055
        %1223 = vst.msk [vmem:[#allocation6 + $0xf8] sm:$0xff] %vm294, %v1191
        %v1224 = vld [vmem:[%s2] sm:$0xff]
        %v1225 = vld [vmem:[%s2 + $0x8] sm:$0xff]
        %v1226 = vld [vmem:[%s4] sm:$0x3]
        %v1228 = vlaneseq
        %v1229 = vshrl.u32 %v1228, 7
        %v1230 = vsub.s32 0, %v1229
        %v1231 = vrot.slane %v1226, %v1230
        %v1232 = vlaneseq
        %v1233 = vshrl.u32 %v1232, 7
        %v1234 = vsub.s32 1, %v1233
        %v1235 = vrot.slane %v1226, %v1234
        %1238 = vmatprep.subr.mxu0 0.0
        %1239 = vmatpush1.msra.mxu0 0.0
        %1240 = vmatprep.subr.mxu0 0.0
        %1241 = vmatpush1.msra.mxu0 0.0
        %1242 = vmatprep.subr.mxu0 0.0
        %1243 = vmatpush1.msra.mxu0 0.0
        %1244 = vmatprep.subr.mxu0 0.0
        %1245 = vmatpush1.msra.mxu0 0.0
        %1246 = vmatprep.subr.mxu0 0.0
        %1247 = vmatpush1.msra.mxu0 0.0
        %1248 = vmatprep.subr.mxu0 0.0
        %1249 = vmatpush1.msra.mxu0 0.0
        %1250 = vmatprep.subr.mxu0 0.0
        %1251 = vmatpush1.msra.mxu0 0.0
        %1252 = vmatprep.subr.mxu0 0.0
        %1253 = vmatpush1.msra.mxu0 0.0
        %1254 = vmatprep.subr.mxu0 0.0
        %1255 = vmatpush1.msra.mxu0 0.0
        %1256 = vmatprep.subr.mxu0 0.0
        %1257 = vmatpush1.msra.mxu0 0.0
        %1258 = vmatprep.subr.mxu0 0.0
        %1259 = vmatpush1.msra.mxu0 0.0
        %1260 = vmatprep.subr.mxu0 0.0
        %1261 = vmatpush1.msra.mxu0 0.0
        %1262 = vmatprep.subr.mxu0 0.0
        %1263 = vmatpush1.msra.mxu0 0.0
        %1264 = vmatprep.subr.mxu0 0.0
        %1265 = vmatpush1.msra.mxu0 0.0
        %1266 = vmatprep.subr.mxu0 0.0
        %1267 = vmatpush1.msra.mxu0 0.0
        %1268 = vmatprep.subr.mxu0 %v1225
        %1269 = vmatpush1.msra.mxu0 %v1224
        %1270 = vmatprep.subr.mxu0 0.0
        %1271 = vmatpush2.msra.mxu0 0.0
        %1272 = vmatprep.subr.mxu0 0.0
        %1273 = vmatpush2.msra.mxu0 0.0
        %1274 = vmatprep.subr.mxu0 0.0
        %1275 = vmatpush2.msra.mxu0 0.0
        %1276 = vmatprep.subr.mxu0 0.0
        %1277 = vmatpush2.msra.mxu0 0.0
        %1278 = vmatprep.subr.mxu0 0.0
        %1279 = vmatpush2.msra.mxu0 0.0
        %1280 = vmatprep.subr.mxu0 0.0
        %1281 = vmatpush2.msra.mxu0 0.0
        %1282 = vmatprep.subr.mxu0 0.0
        %1283 = vmatpush2.msra.mxu0 0.0
        %1284 = vmatprep.subr.mxu0 0.0
        %1285 = vmatpush2.msra.mxu0 0.0
        %1286 = vmatprep.subr.mxu0 0.0
        %1287 = vmatpush2.msra.mxu0 0.0
        %1288 = vmatprep.subr.mxu0 0.0
        %1289 = vmatpush2.msra.mxu0 0.0
        %1290 = vmatprep.subr.mxu0 0.0
        %1291 = vmatpush2.msra.mxu0 0.0
        %1292 = vmatprep.subr.mxu0 0.0
        %1293 = vmatpush2.msra.mxu0 0.0
        %1294 = vmatprep.subr.mxu0 0.0
        %1295 = vmatpush2.msra.mxu0 0.0
        %1296 = vmatprep.subr.mxu0 0.0
        %1297 = vmatpush2.msra.mxu0 0.0
        %1298 = vmatprep.subr.mxu0 0.0
        %1299 = vmatpush2.msra.mxu0 0.0
        %1300 = vmatprep.subr.mxu0 0.0
        %1301 = vmatpush2.msra.mxu0 0.0
        %1302 = vmatprep.mubr.f32.mxu0 0.0
        %1303 = vmatmul.mubr.f32.gmra.mxu0 %v296
        %v1304 = vpop.f32.mrf.mxu0
        %v1305 = vadd.f32 %v1231, %v1304
        %v1306 = vpop.f32.mrf.mxu0
        %v1307 = vadd.f32 %v1235, %v1306
        %1308 = vmatprep.mubr.f32.mxu0 0.0
        %1309 = vmatmul.mubr.f32.gmra.mxu0 %v299
        %v1310 = vpop.f32.mrf.mxu0
        %v1311 = vadd.f32 %v1231, %v1310
        %v1312 = vpop.f32.mrf.mxu0
        %v1313 = vadd.f32 %v1235, %v1312
        %1314 = vmatprep.mubr.f32.mxu0 0.0
        %1315 = vmatmul.mubr.f32.gmra.mxu0 %v302
        %v1316 = vpop.f32.mrf.mxu0
        %v1317 = vadd.f32 %v1231, %v1316
        %v1318 = vpop.f32.mrf.mxu0
        %v1319 = vadd.f32 %v1235, %v1318
        %1320 = vmatprep.mubr.f32.mxu0 0.0
        %1321 = vmatmul.mubr.f32.gmra.mxu0 %v305
        %v1322 = vpop.f32.mrf.mxu0
        %v1323 = vadd.f32 %v1231, %v1322
        %v1324 = vpop.f32.mrf.mxu0
        %v1325 = vadd.f32 %v1235, %v1324
        %1326 = vmatprep.mubr.f32.mxu0 0.0
        %1327 = vmatmul.mubr.f32.gmra.mxu0 %v308
        %v1328 = vpop.f32.mrf.mxu0
        %v1329 = vadd.f32 %v1231, %v1328
        %v1330 = vpop.f32.mrf.mxu0
        %v1331 = vadd.f32 %v1235, %v1330
        %1332 = vmatprep.mubr.f32.mxu0 0.0
        %1333 = vmatmul.mubr.f32.gmra.mxu0 %v311
        %v1334 = vpop.f32.mrf.mxu0
        %v1335 = vadd.f32 %v1231, %v1334
        %v1336 = vpop.f32.mrf.mxu0
        %v1337 = vadd.f32 %v1235, %v1336
        %1338 = vmatprep.mubr.f32.mxu0 0.0
        %1339 = vmatmul.mubr.f32.gmra.mxu0 %v314
        %v1340 = vpop.f32.mrf.mxu0
        %v1341 = vadd.f32 %v1231, %v1340
        %v1342 = vpop.f32.mrf.mxu0
        %v1343 = vadd.f32 %v1235, %v1342
        %1344 = vmatprep.mubr.f32.mxu0 0.0
        %1345 = vmatmul.mubr.f32.gmra.mxu0 %v317
        %v1346 = vpop.f32.mrf.mxu0
        %v1347 = vadd.f32 %v1231, %v1346
        %v1348 = vpop.f32.mrf.mxu0
        %v1349 = vadd.f32 %v1235, %v1348
        %1350 = vmatprep.mubr.f32.mxu0 0.0
        %1351 = vmatmul.mubr.f32.gmra.mxu0 %v320
        %v1352 = vpop.f32.mrf.mxu0
        %v1353 = vadd.f32 %v1231, %v1352
        %v1354 = vpop.f32.mrf.mxu0
        %v1355 = vadd.f32 %v1235, %v1354
        %1356 = vmatprep.mubr.f32.mxu0 0.0
        %1357 = vmatmul.mubr.f32.gmra.mxu0 %v323
        %v1358 = vpop.f32.mrf.mxu0
        %v1359 = vadd.f32 %v1231, %v1358
        %v1360 = vpop.f32.mrf.mxu0
        %v1361 = vadd.f32 %v1235, %v1360
        %1362 = vmatprep.mubr.f32.mxu0 0.0
        %1363 = vmatmul.mubr.f32.gmra.mxu0 %v326
        %v1364 = vpop.f32.mrf.mxu0
        %v1365 = vadd.f32 %v1231, %v1364
        %v1366 = vpop.f32.mrf.mxu0
        %v1367 = vadd.f32 %v1235, %v1366
        %1368 = vmatprep.mubr.f32.mxu0 0.0
        %1369 = vmatmul.mubr.f32.gmra.mxu0 %v329
        %v1370 = vpop.f32.mrf.mxu0
        %v1371 = vadd.f32 %v1231, %v1370
        %v1372 = vpop.f32.mrf.mxu0
        %v1373 = vadd.f32 %v1235, %v1372
        %1374 = vmatprep.mubr.f32.mxu0 0.0
        %1375 = vmatmul.mubr.f32.gmra.mxu0 %v332
        %v1376 = vpop.f32.mrf.mxu0
        %v1377 = vadd.f32 %v1231, %v1376
        %v1378 = vpop.f32.mrf.mxu0
        %v1379 = vadd.f32 %v1235, %v1378
        %1380 = vmatprep.mubr.f32.mxu0 0.0
        %1381 = vmatmul.mubr.f32.gmra.mxu0 %v335
        %v1382 = vpop.f32.mrf.mxu0
        %v1383 = vadd.f32 %v1231, %v1382
        %v1384 = vpop.f32.mrf.mxu0
        %v1385 = vadd.f32 %v1235, %v1384
        %1386 = vmatprep.mubr.f32.mxu0 0.0
        %1387 = vmatmul.mubr.f32.gmra.mxu0 %v338
        %v1388 = vpop.f32.mrf.mxu0
        %v1389 = vadd.f32 %v1231, %v1388
        %v1390 = vpop.f32.mrf.mxu0
        %v1391 = vadd.f32 %v1235, %v1390
        %1392 = vmatprep.mubr.f32.mxu0 0.0
        %1393 = vmatmul.mubr.f32.gmra.mxu0 %v341
        %v1394 = vpop.f32.mrf.mxu0
        %v1395 = vadd.f32 %v1231, %v1394
        %v1396 = vpop.f32.mrf.mxu0
        %v1397 = vadd.f32 %v1235, %v1396
        %1398 = vmatprep.mubr.f32.mxu0 0.0
        %1399 = vmatmul.mubr.f32.gmra.mxu0 %v344
        %v1400 = vpop.f32.mrf.mxu0
        %v1401 = vadd.f32 %v1231, %v1400
        %v1402 = vpop.f32.mrf.mxu0
        %v1403 = vadd.f32 %v1235, %v1402
        %1404 = vmatprep.mubr.f32.mxu0 0.0
        %1405 = vmatmul.mubr.f32.gmra.mxu0 %v347
        %v1406 = vpop.f32.mrf.mxu0
        %v1407 = vadd.f32 %v1231, %v1406
        %v1408 = vpop.f32.mrf.mxu0
        %v1409 = vadd.f32 %v1235, %v1408
        %1410 = vmatprep.mubr.f32.mxu0 0.0
        %1411 = vmatmul.mubr.f32.gmra.mxu0 %v350
        %v1412 = vpop.f32.mrf.mxu0
        %v1413 = vadd.f32 %v1231, %v1412
        %v1414 = vpop.f32.mrf.mxu0
        %v1415 = vadd.f32 %v1235, %v1414
        %1416 = vmatprep.mubr.f32.mxu0 0.0
        %1417 = vmatmul.mubr.f32.gmra.mxu0 %v353
        %v1418 = vpop.f32.mrf.mxu0
        %v1419 = vadd.f32 %v1231, %v1418
        %v1420 = vpop.f32.mrf.mxu0
        %v1421 = vadd.f32 %v1235, %v1420
        %1422 = vmatprep.mubr.f32.mxu0 0.0
        %1423 = vmatmul.mubr.f32.gmra.mxu0 %v356
        %v1424 = vpop.f32.mrf.mxu0
        %v1425 = vadd.f32 %v1231, %v1424
        %v1426 = vpop.f32.mrf.mxu0
        %v1427 = vadd.f32 %v1235, %v1426
        %1428 = vmatprep.mubr.f32.mxu0 0.0
        %1429 = vmatmul.mubr.f32.gmra.mxu0 %v359
        %v1430 = vpop.f32.mrf.mxu0
        %v1431 = vadd.f32 %v1231, %v1430
        %v1432 = vpop.f32.mrf.mxu0
        %v1433 = vadd.f32 %v1235, %v1432
        %1434 = vmatprep.mubr.f32.mxu0 0.0
        %1435 = vmatmul.mubr.f32.gmra.mxu0 %v362
        %v1436 = vpop.f32.mrf.mxu0
        %v1437 = vadd.f32 %v1231, %v1436
        %v1438 = vpop.f32.mrf.mxu0
        %v1439 = vadd.f32 %v1235, %v1438
        %1440 = vmatprep.mubr.f32.mxu0 0.0
        %1441 = vmatmul.mubr.f32.gmra.mxu0 %v365
        %v1442 = vpop.f32.mrf.mxu0
        %v1443 = vadd.f32 %v1231, %v1442
        %v1444 = vpop.f32.mrf.mxu0
        %v1445 = vadd.f32 %v1235, %v1444
        %1446 = vmatprep.mubr.f32.mxu0 0.0
        %1447 = vmatmul.mubr.f32.gmra.mxu0 %v368
        %v1448 = vpop.f32.mrf.mxu0
        %v1449 = vadd.f32 %v1231, %v1448
        %v1450 = vpop.f32.mrf.mxu0
        %v1451 = vadd.f32 %v1235, %v1450
        %1452 = vmatprep.mubr.f32.mxu0 0.0
        %1453 = vmatmul.mubr.f32.gmra.mxu0 %v371
        %v1454 = vpop.f32.mrf.mxu0
        %v1455 = vadd.f32 %v1231, %v1454
        %v1456 = vpop.f32.mrf.mxu0
        %v1457 = vadd.f32 %v1235, %v1456
        %1458 = vmatprep.mubr.f32.mxu0 0.0
        %1459 = vmatmul.mubr.f32.gmra.mxu0 %v374
        %v1460 = vpop.f32.mrf.mxu0
        %v1461 = vadd.f32 %v1231, %v1460
        %v1462 = vpop.f32.mrf.mxu0
        %v1463 = vadd.f32 %v1235, %v1462
        %1464 = vmatprep.mubr.f32.mxu0 0.0
        %1465 = vmatmul.mubr.f32.gmra.mxu0 %v377
        %v1466 = vpop.f32.mrf.mxu0
        %v1467 = vadd.f32 %v1231, %v1466
        %v1468 = vpop.f32.mrf.mxu0
        %v1469 = vadd.f32 %v1235, %v1468
        %1470 = vmatprep.mubr.f32.mxu0 0.0
        %1471 = vmatmul.mubr.f32.gmra.mxu0 %v380
        %v1472 = vpop.f32.mrf.mxu0
        %v1473 = vadd.f32 %v1231, %v1472
        %v1474 = vpop.f32.mrf.mxu0
        %v1475 = vadd.f32 %v1235, %v1474
        %1476 = vmatprep.mubr.f32.mxu0 0.0
        %1477 = vmatmul.mubr.f32.gmra.mxu0 %v383
        %v1478 = vpop.f32.mrf.mxu0
        %v1479 = vadd.f32 %v1231, %v1478
        %v1480 = vpop.f32.mrf.mxu0
        %v1481 = vadd.f32 %v1235, %v1480
        %1482 = vmatprep.mubr.f32.mxu0 0.0
        %1483 = vmatmul.mubr.f32.gmra.mxu0 %v386
        %v1484 = vpop.f32.mrf.mxu0
        %v1485 = vadd.f32 %v1231, %v1484
        %v1486 = vpop.f32.mrf.mxu0
        %v1487 = vadd.f32 %v1235, %v1486
        %1488 = vmatprep.mubr.f32.mxu0 0.0
        %1489 = vmatmul.mubr.f32.gmra.mxu0 %v389
        %v1490 = vpop.f32.mrf.mxu0
        %v1491 = vadd.f32 %v1231, %v1490
        %v1492 = vpop.f32.mrf.mxu0
        %v1493 = vadd.f32 %v1235, %v1492
        %1494 = vdwg.mxu0
        %1495 = vst [vmem:[#allocation2] sm:$0xff] %v1305
        %1496 = vst [vmem:[#allocation2 + $0x8] sm:$0xff] %v1311
        %1497 = vst [vmem:[#allocation2 + $0x10] sm:$0xff] %v1317
        %1498 = vst [vmem:[#allocation2 + $0x18] sm:$0xff] %v1323
        %1499 = vst [vmem:[#allocation2 + $0x20] sm:$0xff] %v1329
        %1500 = vst [vmem:[#allocation2 + $0x28] sm:$0xff] %v1335
        %1501 = vst [vmem:[#allocation2 + $0x30] sm:$0xff] %v1341
        %1502 = vst [vmem:[#allocation2 + $0x38] sm:$0xff] %v1347
        %1503 = vst [vmem:[#allocation2 + $0x40] sm:$0xff] %v1353
        %1504 = vst [vmem:[#allocation2 + $0x48] sm:$0xff] %v1359
        %1505 = vst [vmem:[#allocation2 + $0x50] sm:$0xff] %v1365
        %1506 = vst [vmem:[#allocation2 + $0x58] sm:$0xff] %v1371
        %1507 = vst [vmem:[#allocation2 + $0x60] sm:$0xff] %v1377
        %1508 = vst [vmem:[#allocation2 + $0x68] sm:$0xff] %v1383
        %1509 = vst [vmem:[#allocation2 + $0x70] sm:$0xff] %v1389
        %1510 = vst [vmem:[#allocation2 + $0x78] sm:$0xff] %v1395
        %1511 = vst [vmem:[#allocation2 + $0x80] sm:$0xff] %v1401
        %1512 = vst [vmem:[#allocation2 + $0x88] sm:$0xff] %v1407
        %1513 = vst [vmem:[#allocation2 + $0x90] sm:$0xff] %v1413
        %1514 = vst [vmem:[#allocation2 + $0x98] sm:$0xff] %v1419
        %1515 = vst [vmem:[#allocation2 + $0xa0] sm:$0xff] %v1425
        %1516 = vst [vmem:[#allocation2 + $0xa8] sm:$0xff] %v1431
        %1517 = vst [vmem:[#allocation2 + $0xb0] sm:$0xff] %v1437
        %1518 = vst [vmem:[#allocation2 + $0xb8] sm:$0xff] %v1443
        %1519 = vst [vmem:[#allocation2 + $0xc0] sm:$0xff] %v1449
        %1520 = vst [vmem:[#allocation2 + $0xc8] sm:$0xff] %v1455
        %1521 = vst [vmem:[#allocation2 + $0xd0] sm:$0xff] %v1461
        %1522 = vst [vmem:[#allocation2 + $0xd8] sm:$0xff] %v1467
        %1523 = vst [vmem:[#allocation2 + $0xe0] sm:$0xff] %v1473
        %1524 = vst [vmem:[#allocation2 + $0xe8] sm:$0xff] %v1479
        %1525 = vst [vmem:[#allocation2 + $0xf0] sm:$0xff] %v1485
        %1526 = vst [vmem:[#allocation2 + $0xf8] sm:$0xff] %v1491
        %1527 = vst [vmem:[#allocation3] sm:$0xff] %v1307
        %1528 = vst [vmem:[#allocation3 + $0x8] sm:$0xff] %v1313
        %1529 = vst [vmem:[#allocation3 + $0x10] sm:$0xff] %v1319
        %1530 = vst [vmem:[#allocation3 + $0x18] sm:$0xff] %v1325
        %1531 = vst [vmem:[#allocation3 + $0x20] sm:$0xff] %v1331
        %1532 = vst [vmem:[#allocation3 + $0x28] sm:$0xff] %v1337
        %1533 = vst [vmem:[#allocation3 + $0x30] sm:$0xff] %v1343
        %1534 = vst [vmem:[#allocation3 + $0x38] sm:$0xff] %v1349
        %1535 = vst [vmem:[#allocation3 + $0x40] sm:$0xff] %v1355
        %1536 = vst [vmem:[#allocation3 + $0x48] sm:$0xff] %v1361
        %1537 = vst [vmem:[#allocation3 + $0x50] sm:$0xff] %v1367
        %1538 = vst [vmem:[#allocation3 + $0x58] sm:$0xff] %v1373
        %1539 = vst [vmem:[#allocation3 + $0x60] sm:$0xff] %v1379
        %1540 = vst [vmem:[#allocation3 + $0x68] sm:$0xff] %v1385
        %1541 = vst [vmem:[#allocation3 + $0x70] sm:$0xff] %v1391
        %1542 = vst [vmem:[#allocation3 + $0x78] sm:$0xff] %v1397
        %1543 = vst [vmem:[#allocation3 + $0x80] sm:$0xff] %v1403
        %1544 = vst [vmem:[#allocation3 + $0x88] sm:$0xff] %v1409
        %1545 = vst [vmem:[#allocation3 + $0x90] sm:$0xff] %v1415
        %1546 = vst [vmem:[#allocation3 + $0x98] sm:$0xff] %v1421
        %1547 = vst [vmem:[#allocation3 + $0xa0] sm:$0xff] %v1427
        %1548 = vst [vmem:[#allocation3 + $0xa8] sm:$0xff] %v1433
        %1549 = vst [vmem:[#allocation3 + $0xb0] sm:$0xff] %v1439
        %1550 = vst [vmem:[#allocation3 + $0xb8] sm:$0xff] %v1445
        %1551 = vst [vmem:[#allocation3 + $0xc0] sm:$0xff] %v1451
        %1552 = vst [vmem:[#allocation3 + $0xc8] sm:$0xff] %v1457
        %1553 = vst [vmem:[#allocation3 + $0xd0] sm:$0xff] %v1463
        %1554 = vst [vmem:[#allocation3 + $0xd8] sm:$0xff] %v1469
        %1555 = vst [vmem:[#allocation3 + $0xe0] sm:$0xff] %v1475
        %1556 = vst [vmem:[#allocation3 + $0xe8] sm:$0xff] %v1481
        %1557 = vst [vmem:[#allocation3 + $0xf0] sm:$0xff] %v1487
        %1558 = vst [vmem:[#allocation3 + $0xf8] sm:$0xff] %v1493
        %v1559 = vcombine.low %v1307, %v1331
        %v1560 = vcombine.high %v1307, %v1331
        %v1562 = vunpack.c.l.s4 1983009808
        %v1563 = vunpack.c.0.s8 %v1562
        %v1564 = vlaneseq
        %v1565 = vshrl.u32 %v1564, 7
        %v1566 = vsub.s32 %v1563, %v1565
        %v1567 = vrot.slane %v1559, %v1566
        %v1569 = vunpack.c.l.s4 1983009808
        %v1570 = vunpack.c.0.s8 %v1569
        %v1571 = vlaneseq
        %v1572 = vshrl.u32 %v1571, 7
        %v1573 = vsub.s32 %v1570, %v1572
        %v1574 = vrot.slane %v1560, %v1573
        %v1575 = vcombine.low %v1319, %v1343
        %v1576 = vcombine.high %v1319, %v1343
        %v1578 = vunpack.c.l.s4 1983009808
        %v1579 = vunpack.c.0.s8 %v1578
        %v1580 = vlaneseq
        %v1581 = vshrl.u32 %v1580, 7
        %v1582 = vsub.s32 %v1579, %v1581
        %v1583 = vrot.slane %v1575, %v1582
        %v1585 = vunpack.c.l.s4 1983009808
        %v1586 = vunpack.c.0.s8 %v1585
        %v1587 = vlaneseq
        %v1588 = vshrl.u32 %v1587, 7
        %v1589 = vsub.s32 %v1586, %v1588
        %v1590 = vrot.slane %v1576, %v1589
        %v1591 = vcombine.low %v1355, %v1379
        %v1592 = vcombine.high %v1355, %v1379
        %v1594 = vunpack.c.l.s4 1983009808
        %v1595 = vunpack.c.0.s8 %v1594
        %v1596 = vlaneseq
        %v1597 = vshrl.u32 %v1596, 7
        %v1598 = vsub.s32 %v1595, %v1597
        %v1599 = vrot.slane %v1591, %v1598
        %v1601 = vunpack.c.l.s4 1983009808
        %v1602 = vunpack.c.0.s8 %v1601
        %v1603 = vlaneseq
        %v1604 = vshrl.u32 %v1603, 7
        %v1605 = vsub.s32 %v1602, %v1604
        %v1606 = vrot.slane %v1592, %v1605
        %v1607 = vcombine.low %v1367, %v1391
        %v1608 = vcombine.high %v1367, %v1391
        %v1610 = vunpack.c.l.s4 1983009808
        %v1611 = vunpack.c.0.s8 %v1610
        %v1612 = vlaneseq
        %v1613 = vshrl.u32 %v1612, 7
        %v1614 = vsub.s32 %v1611, %v1613
        %v1615 = vrot.slane %v1607, %v1614
        %v1617 = vunpack.c.l.s4 1983009808
        %v1618 = vunpack.c.0.s8 %v1617
        %v1619 = vlaneseq
        %v1620 = vshrl.u32 %v1619, 7
        %v1621 = vsub.s32 %v1618, %v1620
        %v1622 = vrot.slane %v1608, %v1621
        %v1623 = vcombine.low %v1567, %v1583
        %v1624 = vcombine.high %v1567, %v1583
        %v1626 = vunpack.c.l.s4 1934713408
        %v1627 = vunpack.c.0.s8 %v1626
        %v1628 = vlaneseq
        %v1629 = vshrl.u32 %v1628, 7
        %v1630 = vsub.s32 %v1627, %v1629
        %v1631 = vrot.slane %v1623, %v1630
        %v1633 = vunpack.c.l.s4 1934713408
        %v1634 = vunpack.c.0.s8 %v1633
        %v1635 = vlaneseq
        %v1636 = vshrl.u32 %v1635, 7
        %v1637 = vsub.s32 %v1634, %v1636
        %v1638 = vrot.slane %v1624, %v1637
        %v1639 = vcombine.low %v1574, %v1590
        %v1640 = vcombine.high %v1574, %v1590
        %v1642 = vunpack.c.l.s4 1934713408
        %v1643 = vunpack.c.0.s8 %v1642
        %v1644 = vlaneseq
        %v1645 = vshrl.u32 %v1644, 7
        %v1646 = vsub.s32 %v1643, %v1645
        %v1647 = vrot.slane %v1639, %v1646
        %v1649 = vunpack.c.l.s4 1934713408
        %v1650 = vunpack.c.0.s8 %v1649
        %v1651 = vlaneseq
        %v1652 = vshrl.u32 %v1651, 7
        %v1653 = vsub.s32 %v1650, %v1652
        %v1654 = vrot.slane %v1640, %v1653
        %v1655 = vcombine.low %v1599, %v1615
        %v1656 = vcombine.high %v1599, %v1615
        %v1658 = vunpack.c.l.s4 1934713408
        %v1659 = vunpack.c.0.s8 %v1658
        %v1660 = vlaneseq
        %v1661 = vshrl.u32 %v1660, 7
        %v1662 = vsub.s32 %v1659, %v1661
        %v1663 = vrot.slane %v1655, %v1662
        %v1665 = vunpack.c.l.s4 1934713408
        %v1666 = vunpack.c.0.s8 %v1665
        %v1667 = vlaneseq
        %v1668 = vshrl.u32 %v1667, 7
        %v1669 = vsub.s32 %v1666, %v1668
        %v1670 = vrot.slane %v1656, %v1669
        %v1671 = vcombine.low %v1606, %v1622
        %v1672 = vcombine.high %v1606, %v1622
        %v1674 = vunpack.c.l.s4 1934713408
        %v1675 = vunpack.c.0.s8 %v1674
        %v1676 = vlaneseq
        %v1677 = vshrl.u32 %v1676, 7
        %v1678 = vsub.s32 %v1675, %v1677
        %v1679 = vrot.slane %v1671, %v1678
        %v1681 = vunpack.c.l.s4 1934713408
        %v1682 = vunpack.c.0.s8 %v1681
        %v1683 = vlaneseq
        %v1684 = vshrl.u32 %v1683, 7
        %v1685 = vsub.s32 %v1682, %v1684
        %v1686 = vrot.slane %v1672, %v1685
        %v1687 = vcombine.low %v1631, %v1663
        %v1688 = vcombine.high %v1631, %v1663
        %v1689 = vcombine.low %v1638, %v1670
        %v1690 = vcombine.high %v1638, %v1670
        %v1691 = vcombine.low %v1647, %v1679
        %v1692 = vcombine.high %v1647, %v1679
        %v1693 = vcombine.low %v1654, %v1686
        %v1694 = vcombine.high %v1654, %v1686
        %v1695 = vcombine.low %v1403, %v1427
        %v1696 = vcombine.high %v1403, %v1427
        %v1698 = vunpack.c.l.s4 1983009808
        %v1699 = vunpack.c.0.s8 %v1698
        %v1700 = vlaneseq
        %v1701 = vshrl.u32 %v1700, 7
        %v1702 = vsub.s32 %v1699, %v1701
        %v1703 = vrot.slane %v1695, %v1702
        %v1705 = vunpack.c.l.s4 1983009808
        %v1706 = vunpack.c.0.s8 %v1705
        %v1707 = vlaneseq
        %v1708 = vshrl.u32 %v1707, 7
        %v1709 = vsub.s32 %v1706, %v1708
        %v1710 = vrot.slane %v1696, %v1709
        %v1711 = vcombine.low %v1415, %v1439
        %v1712 = vcombine.high %v1415, %v1439
        %v1714 = vunpack.c.l.s4 1983009808
        %v1715 = vunpack.c.0.s8 %v1714
        %v1716 = vlaneseq
        %v1717 = vshrl.u32 %v1716, 7
        %v1718 = vsub.s32 %v1715, %v1717
        %v1719 = vrot.slane %v1711, %v1718
        %v1721 = vunpack.c.l.s4 1983009808
        %v1722 = vunpack.c.0.s8 %v1721
        %v1723 = vlaneseq
        %v1724 = vshrl.u32 %v1723, 7
        %v1725 = vsub.s32 %v1722, %v1724
        %v1726 = vrot.slane %v1712, %v1725
        %v1727 = vcombine.low %v1451, %v1475
        %v1728 = vcombine.high %v1451, %v1475
        %v1730 = vunpack.c.l.s4 1983009808
        %v1731 = vunpack.c.0.s8 %v1730
        %v1732 = vlaneseq
        %v1733 = vshrl.u32 %v1732, 7
        %v1734 = vsub.s32 %v1731, %v1733
        %v1735 = vrot.slane %v1727, %v1734
        %v1737 = vunpack.c.l.s4 1983009808
        %v1738 = vunpack.c.0.s8 %v1737
        %v1739 = vlaneseq
        %v1740 = vshrl.u32 %v1739, 7
        %v1741 = vsub.s32 %v1738, %v1740
        %v1742 = vrot.slane %v1728, %v1741
        %v1743 = vcombine.low %v1463, %v1487
        %v1744 = vcombine.high %v1463, %v1487
        %v1746 = vunpack.c.l.s4 1983009808
        %v1747 = vunpack.c.0.s8 %v1746
        %v1748 = vlaneseq
        %v1749 = vshrl.u32 %v1748, 7
        %v1750 = vsub.s32 %v1747, %v1749
        %v1751 = vrot.slane %v1743, %v1750
        %v1753 = vunpack.c.l.s4 1983009808
        %v1754 = vunpack.c.0.s8 %v1753
        %v1755 = vlaneseq
        %v1756 = vshrl.u32 %v1755, 7
        %v1757 = vsub.s32 %v1754, %v1756
        %v1758 = vrot.slane %v1744, %v1757
        %v1759 = vcombine.low %v1703, %v1719
        %v1760 = vcombine.high %v1703, %v1719
        %v1762 = vunpack.c.l.s4 1934713408
        %v1763 = vunpack.c.0.s8 %v1762
        %v1764 = vlaneseq
        %v1765 = vshrl.u32 %v1764, 7
        %v1766 = vsub.s32 %v1763, %v1765
        %v1767 = vrot.slane %v1759, %v1766
        %v1769 = vunpack.c.l.s4 1934713408
        %v1770 = vunpack.c.0.s8 %v1769
        %v1771 = vlaneseq
        %v1772 = vshrl.u32 %v1771, 7
        %v1773 = vsub.s32 %v1770, %v1772
        %v1774 = vrot.slane %v1760, %v1773
        %v1775 = vcombine.low %v1710, %v1726
        %v1776 = vcombine.high %v1710, %v1726
        %v1778 = vunpack.c.l.s4 1934713408
        %v1779 = vunpack.c.0.s8 %v1778
        %v1780 = vlaneseq
        %v1781 = vshrl.u32 %v1780, 7
        %v1782 = vsub.s32 %v1779, %v1781
        %v1783 = vrot.slane %v1775, %v1782
        %v1785 = vunpack.c.l.s4 1934713408
        %v1786 = vunpack.c.0.s8 %v1785
        %v1787 = vlaneseq
        %v1788 = vshrl.u32 %v1787, 7
        %v1789 = vsub.s32 %v1786, %v1788
        %v1790 = vrot.slane %v1776, %v1789
        %v1791 = vcombine.low %v1735, %v1751
        %v1792 = vcombine.high %v1735, %v1751
        %v1794 = vunpack.c.l.s4 1934713408
        %v1795 = vunpack.c.0.s8 %v1794
        %v1796 = vlaneseq
        %v1797 = vshrl.u32 %v1796, 7
        %v1798 = vsub.s32 %v1795, %v1797
        %v1799 = vrot.slane %v1791, %v1798
        %v1801 = vunpack.c.l.s4 1934713408
        %v1802 = vunpack.c.0.s8 %v1801
        %v1803 = vlaneseq
        %v1804 = vshrl.u32 %v1803, 7
        %v1805 = vsub.s32 %v1802, %v1804
        %v1806 = vrot.slane %v1792, %v1805
        %v1807 = vcombine.low %v1742, %v1758
        %v1808 = vcombine.high %v1742, %v1758
        %v1810 = vunpack.c.l.s4 1934713408
        %v1811 = vunpack.c.0.s8 %v1810
        %v1812 = vlaneseq
        %v1813 = vshrl.u32 %v1812, 7
        %v1814 = vsub.s32 %v1811, %v1813
        %v1815 = vrot.slane %v1807, %v1814
        %v1817 = vunpack.c.l.s4 1934713408
        %v1818 = vunpack.c.0.s8 %v1817
        %v1819 = vlaneseq
        %v1820 = vshrl.u32 %v1819, 7
        %v1821 = vsub.s32 %v1818, %v1820
        %v1822 = vrot.slane %v1808, %v1821
        %v1823 = vcombine.low %v1767, %v1799
        %v1824 = vcombine.high %v1767, %v1799
        %v1825 = vcombine.low %v1774, %v1806
        %v1826 = vcombine.high %v1774, %v1806
        %v1827 = vcombine.low %v1783, %v1815
        %v1828 = vcombine.high %v1783, %v1815
        %v1829 = vcombine.low %v1790, %v1822
        %v1830 = vcombine.high %v1790, %v1822
        %v1831 = vcombine.low %v1313, %v1337
        %v1832 = vcombine.high %v1313, %v1337
        %v1834 = vunpack.c.l.s4 1983009808
        %v1835 = vunpack.c.0.s8 %v1834
        %v1836 = vlaneseq
        %v1837 = vshrl.u32 %v1836, 7
        %v1838 = vsub.s32 %v1835, %v1837
        %v1839 = vrot.slane %v1831, %v1838
        %v1841 = vunpack.c.l.s4 1983009808
        %v1842 = vunpack.c.0.s8 %v1841
        %v1843 = vlaneseq
        %v1844 = vshrl.u32 %v1843, 7
        %v1845 = vsub.s32 %v1842, %v1844
        %v1846 = vrot.slane %v1832, %v1845
        %v1847 = vcombine.low %v1325, %v1349
        %v1848 = vcombine.high %v1325, %v1349
        %v1850 = vunpack.c.l.s4 1983009808
        %v1851 = vunpack.c.0.s8 %v1850
        %v1852 = vlaneseq
        %v1853 = vshrl.u32 %v1852, 7
        %v1854 = vsub.s32 %v1851, %v1853
        %v1855 = vrot.slane %v1847, %v1854
        %v1857 = vunpack.c.l.s4 1983009808
        %v1858 = vunpack.c.0.s8 %v1857
        %v1859 = vlaneseq
        %v1860 = vshrl.u32 %v1859, 7
        %v1861 = vsub.s32 %v1858, %v1860
        %v1862 = vrot.slane %v1848, %v1861
        %v1863 = vcombine.low %v1361, %v1385
        %v1864 = vcombine.high %v1361, %v1385
        %v1866 = vunpack.c.l.s4 1983009808
        %v1867 = vunpack.c.0.s8 %v1866
        %v1868 = vlaneseq
        %v1869 = vshrl.u32 %v1868, 7
        %v1870 = vsub.s32 %v1867, %v1869
        %v1871 = vrot.slane %v1863, %v1870
        %v1873 = vunpack.c.l.s4 1983009808
        %v1874 = vunpack.c.0.s8 %v1873
        %v1875 = vlaneseq
        %v1876 = vshrl.u32 %v1875, 7
        %v1877 = vsub.s32 %v1874, %v1876
        %v1878 = vrot.slane %v1864, %v1877
        %v1879 = vcombine.low %v1373, %v1397
        %v1880 = vcombine.high %v1373, %v1397
        %v1882 = vunpack.c.l.s4 1983009808
        %v1883 = vunpack.c.0.s8 %v1882
        %v1884 = vlaneseq
        %v1885 = vshrl.u32 %v1884, 7
        %v1886 = vsub.s32 %v1883, %v1885
        %v1887 = vrot.slane %v1879, %v1886
        %v1889 = vunpack.c.l.s4 1983009808
        %v1890 = vunpack.c.0.s8 %v1889
        %v1891 = vlaneseq
        %v1892 = vshrl.u32 %v1891, 7
        %v1893 = vsub.s32 %v1890, %v1892
        %v1894 = vrot.slane %v1880, %v1893
        %v1895 = vcombine.low %v1839, %v1855
        %v1896 = vcombine.high %v1839, %v1855
        %v1898 = vunpack.c.l.s4 1934713408
        %v1899 = vunpack.c.0.s8 %v1898
        %v1900 = vlaneseq
        %v1901 = vshrl.u32 %v1900, 7
        %v1902 = vsub.s32 %v1899, %v1901
        %v1903 = vrot.slane %v1895, %v1902
        %v1905 = vunpack.c.l.s4 1934713408
        %v1906 = vunpack.c.0.s8 %v1905
        %v1907 = vlaneseq
        %v1908 = vshrl.u32 %v1907, 7
        %v1909 = vsub.s32 %v1906, %v1908
        %v1910 = vrot.slane %v1896, %v1909
        %v1911 = vcombine.low %v1846, %v1862
        %v1912 = vcombine.high %v1846, %v1862
        %v1914 = vunpack.c.l.s4 1934713408
        %v1915 = vunpack.c.0.s8 %v1914
        %v1916 = vlaneseq
        %v1917 = vshrl.u32 %v1916, 7
        %v1918 = vsub.s32 %v1915, %v1917
        %v1919 = vrot.slane %v1911, %v1918
        %v1921 = vunpack.c.l.s4 1934713408
        %v1922 = vunpack.c.0.s8 %v1921
        %v1923 = vlaneseq
        %v1924 = vshrl.u32 %v1923, 7
        %v1925 = vsub.s32 %v1922, %v1924
        %v1926 = vrot.slane %v1912, %v1925
        %v1927 = vcombine.low %v1871, %v1887
        %v1928 = vcombine.high %v1871, %v1887
        %v1930 = vunpack.c.l.s4 1934713408
        %v1931 = vunpack.c.0.s8 %v1930
        %v1932 = vlaneseq
        %v1933 = vshrl.u32 %v1932, 7
        %v1934 = vsub.s32 %v1931, %v1933
        %v1935 = vrot.slane %v1927, %v1934
        %v1937 = vunpack.c.l.s4 1934713408
        %v1938 = vunpack.c.0.s8 %v1937
        %v1939 = vlaneseq
        %v1940 = vshrl.u32 %v1939, 7
        %v1941 = vsub.s32 %v1938, %v1940
        %v1942 = vrot.slane %v1928, %v1941
        %v1943 = vcombine.low %v1878, %v1894
        %v1944 = vcombine.high %v1878, %v1894
        %v1946 = vunpack.c.l.s4 1934713408
        %v1947 = vunpack.c.0.s8 %v1946
        %v1948 = vlaneseq
        %v1949 = vshrl.u32 %v1948, 7
        %v1950 = vsub.s32 %v1947, %v1949
        %v1951 = vrot.slane %v1943, %v1950
        %v1953 = vunpack.c.l.s4 1934713408
        %v1954 = vunpack.c.0.s8 %v1953
        %v1955 = vlaneseq
        %v1956 = vshrl.u32 %v1955, 7
        %v1957 = vsub.s32 %v1954, %v1956
        %v1958 = vrot.slane %v1944, %v1957
        %v1959 = vcombine.low %v1903, %v1935
        %v1960 = vcombine.high %v1903, %v1935
        %v1961 = vcombine.low %v1910, %v1942
        %v1962 = vcombine.high %v1910, %v1942
        %v1963 = vcombine.low %v1919, %v1951
        %v1964 = vcombine.high %v1919, %v1951
        %v1965 = vcombine.low %v1926, %v1958
        %v1966 = vcombine.high %v1926, %v1958
        %v1967 = vcombine.low %v1409, %v1433
        %v1968 = vcombine.high %v1409, %v1433
        %v1970 = vunpack.c.l.s4 1983009808
        %v1971 = vunpack.c.0.s8 %v1970
        %v1972 = vlaneseq
        %v1973 = vshrl.u32 %v1972, 7
        %v1974 = vsub.s32 %v1971, %v1973
        %v1975 = vrot.slane %v1967, %v1974
        %v1977 = vunpack.c.l.s4 1983009808
        %v1978 = vunpack.c.0.s8 %v1977
        %v1979 = vlaneseq
        %v1980 = vshrl.u32 %v1979, 7
        %v1981 = vsub.s32 %v1978, %v1980
        %v1982 = vrot.slane %v1968, %v1981
        %v1983 = vcombine.low %v1421, %v1445
        %v1984 = vcombine.high %v1421, %v1445
        %v1986 = vunpack.c.l.s4 1983009808
        %v1987 = vunpack.c.0.s8 %v1986
        %v1988 = vlaneseq
        %v1989 = vshrl.u32 %v1988, 7
        %v1990 = vsub.s32 %v1987, %v1989
        %v1991 = vrot.slane %v1983, %v1990
        %v1993 = vunpack.c.l.s4 1983009808
        %v1994 = vunpack.c.0.s8 %v1993
        %v1995 = vlaneseq
        %v1996 = vshrl.u32 %v1995, 7
        %v1997 = vsub.s32 %v1994, %v1996
        %v1998 = vrot.slane %v1984, %v1997
        %v1999 = vcombine.low %v1457, %v1481
        %v2000 = vcombine.high %v1457, %v1481
        %v2002 = vunpack.c.l.s4 1983009808
        %v2003 = vunpack.c.0.s8 %v2002
        %v2004 = vlaneseq
        %v2005 = vshrl.u32 %v2004, 7
        %v2006 = vsub.s32 %v2003, %v2005
        %v2007 = vrot.slane %v1999, %v2006
        %v2009 = vunpack.c.l.s4 1983009808
        %v2010 = vunpack.c.0.s8 %v2009
        %v2011 = vlaneseq
        %v2012 = vshrl.u32 %v2011, 7
        %v2013 = vsub.s32 %v2010, %v2012
        %v2014 = vrot.slane %v2000, %v2013
        %v2015 = vcombine.low %v1469, %v1493
        %v2016 = vcombine.high %v1469, %v1493
        %v2018 = vunpack.c.l.s4 1983009808
        %v2019 = vunpack.c.0.s8 %v2018
        %v2020 = vlaneseq
        %v2021 = vshrl.u32 %v2020, 7
        %v2022 = vsub.s32 %v2019, %v2021
        %v2023 = vrot.slane %v2015, %v2022
        %v2025 = vunpack.c.l.s4 1983009808
        %v2026 = vunpack.c.0.s8 %v2025
        %v2027 = vlaneseq
        %v2028 = vshrl.u32 %v2027, 7
        %v2029 = vsub.s32 %v2026, %v2028
        %v2030 = vrot.slane %v2016, %v2029
        %v2031 = vcombine.low %v1975, %v1991
        %v2032 = vcombine.high %v1975, %v1991
        %v2034 = vunpack.c.l.s4 1934713408
        %v2035 = vunpack.c.0.s8 %v2034
        %v2036 = vlaneseq
        %v2037 = vshrl.u32 %v2036, 7
        %v2038 = vsub.s32 %v2035, %v2037
        %v2039 = vrot.slane %v2031, %v2038
        %v2041 = vunpack.c.l.s4 1934713408
        %v2042 = vunpack.c.0.s8 %v2041
        %v2043 = vlaneseq
        %v2044 = vshrl.u32 %v2043, 7
        %v2045 = vsub.s32 %v2042, %v2044
        %v2046 = vrot.slane %v2032, %v2045
        %v2047 = vcombine.low %v1982, %v1998
        %v2048 = vcombine.high %v1982, %v1998
        %v2050 = vunpack.c.l.s4 1934713408
        %v2051 = vunpack.c.0.s8 %v2050
        %v2052 = vlaneseq
        %v2053 = vshrl.u32 %v2052, 7
        %v2054 = vsub.s32 %v2051, %v2053
        %v2055 = vrot.slane %v2047, %v2054
        %v2057 = vunpack.c.l.s4 1934713408
        %v2058 = vunpack.c.0.s8 %v2057
        %v2059 = vlaneseq
        %v2060 = vshrl.u32 %v2059, 7
        %v2061 = vsub.s32 %v2058, %v2060
        %v2062 = vrot.slane %v2048, %v2061
        %v2063 = vcombine.low %v2007, %v2023
        %v2064 = vcombine.high %v2007, %v2023
        %v2066 = vunpack.c.l.s4 1934713408
        %v2067 = vunpack.c.0.s8 %v2066
        %v2068 = vlaneseq
        %v2069 = vshrl.u32 %v2068, 7
        %v2070 = vsub.s32 %v2067, %v2069
        %v2071 = vrot.slane %v2063, %v2070
        %v2073 = vunpack.c.l.s4 1934713408
        %v2074 = vunpack.c.0.s8 %v2073
        %v2075 = vlaneseq
        %v2076 = vshrl.u32 %v2075, 7
        %v2077 = vsub.s32 %v2074, %v2076
        %v2078 = vrot.slane %v2064, %v2077
        %v2079 = vcombine.low %v2014, %v2030
        %v2080 = vcombine.high %v2014, %v2030
        %v2082 = vunpack.c.l.s4 1934713408
        %v2083 = vunpack.c.0.s8 %v2082
        %v2084 = vlaneseq
        %v2085 = vshrl.u32 %v2084, 7
        %v2086 = vsub.s32 %v2083, %v2085
        %v2087 = vrot.slane %v2079, %v2086
        %v2089 = vunpack.c.l.s4 1934713408
        %v2090 = vunpack.c.0.s8 %v2089
        %v2091 = vlaneseq
        %v2092 = vshrl.u32 %v2091, 7
        %v2093 = vsub.s32 %v2090, %v2092
        %v2094 = vrot.slane %v2080, %v2093
        %v2095 = vcombine.low %v2039, %v2071
        %v2096 = vcombine.high %v2039, %v2071
        %v2097 = vcombine.low %v2046, %v2078
        %v2098 = vcombine.high %v2046, %v2078
        %v2099 = vcombine.low %v2055, %v2087
        %v2100 = vcombine.high %v2055, %v2087
        %v2101 = vcombine.low %v2062, %v2094
        %v2102 = vcombine.high %v2062, %v2094
        %2103 = vst [vmem:[#allocation4] sm:$0xff] %v1687
        %2104 = vst [vmem:[#allocation4 + $0x8] sm:$0xff] %v1823
        %2105 = vst [vmem:[#allocation4 + $0x10] sm:$0xff] %v1688
        %2106 = vst [vmem:[#allocation4 + $0x18] sm:$0xff] %v1824
        %2107 = vst [vmem:[#allocation4 + $0x20] sm:$0xff] %v1689
        %2108 = vst [vmem:[#allocation4 + $0x28] sm:$0xff] %v1825
        %2109 = vst [vmem:[#allocation4 + $0x30] sm:$0xff] %v1690
        %2110 = vst [vmem:[#allocation4 + $0x38] sm:$0xff] %v1826
        %2111 = vst [vmem:[#allocation4 + $0x40] sm:$0xff] %v1691
        %2112 = vst [vmem:[#allocation4 + $0x48] sm:$0xff] %v1827
        %2113 = vst [vmem:[#allocation4 + $0x50] sm:$0xff] %v1692
        %2114 = vst [vmem:[#allocation4 + $0x58] sm:$0xff] %v1828
        %2115 = vst [vmem:[#allocation4 + $0x60] sm:$0xff] %v1693
        %2116 = vst [vmem:[#allocation4 + $0x68] sm:$0xff] %v1829
        %2117 = vst [vmem:[#allocation4 + $0x70] sm:$0xff] %v1694
        %2118 = vst [vmem:[#allocation4 + $0x78] sm:$0xff] %v1830
        %2119 = vst [vmem:[#allocation4 + $0x80] sm:$0xff] %v1959
        %2120 = vst [vmem:[#allocation4 + $0x88] sm:$0xff] %v2095
        %2121 = vst [vmem:[#allocation4 + $0x90] sm:$0xff] %v1960
        %2122 = vst [vmem:[#allocation4 + $0x98] sm:$0xff] %v2096
        %2123 = vst [vmem:[#allocation4 + $0xa0] sm:$0xff] %v1961
        %2124 = vst [vmem:[#allocation4 + $0xa8] sm:$0xff] %v2097
        %2125 = vst [vmem:[#allocation4 + $0xb0] sm:$0xff] %v1962
        %2126 = vst [vmem:[#allocation4 + $0xb8] sm:$0xff] %v2098
        %2127 = vst [vmem:[#allocation4 + $0xc0] sm:$0xff] %v1963
        %2128 = vst [vmem:[#allocation4 + $0xc8] sm:$0xff] %v2099
        %2129 = vst [vmem:[#allocation4 + $0xd0] sm:$0xff] %v1964
        %2130 = vst [vmem:[#allocation4 + $0xd8] sm:$0xff] %v2100
        %2131 = vst [vmem:[#allocation4 + $0xe0] sm:$0xff] %v1965
        %2132 = vst [vmem:[#allocation4 + $0xe8] sm:$0xff] %v2101
        %2133 = vst [vmem:[#allocation4 + $0xf0] sm:$0xff] %v1966
        %2134 = vst [vmem:[#allocation4 + $0xf8] sm:$0xff] %v2102
      $region44: #{tpu_custom_call.1} parent=39 // pred_fallthru
        _
      %s2135 = smul.u32 %s21, 8
      %s2136 = smul.u32 %s2135, 16
      %s2137 = scalar_lea.vmem [#allocation2], %s2136
      %v2138 = vld [vmem:[%s2137] sm:$0xff]
      %v2139 = vld [vmem:[%s2137 + $0x8] sm:$0xff]
      %v2140 = vld [vmem:[%s2137 + $0x10] sm:$0xff]
      %v2141 = vld [vmem:[%s2137 + $0x18] sm:$0xff]
      %v2142 = vld [vmem:[%s2137 + $0x20] sm:$0xff]
      %v2143 = vld [vmem:[%s2137 + $0x28] sm:$0xff]
      %v2144 = vld [vmem:[%s2137 + $0x30] sm:$0xff]
      %v2145 = vld [vmem:[%s2137 + $0x38] sm:$0xff]
      %v2146 = vld [vmem:[%s2137 + $0x40] sm:$0xff]
      %v2147 = vld [vmem:[%s2137 + $0x48] sm:$0xff]
      %v2148 = vld [vmem:[%s2137 + $0x50] sm:$0xff]
      %v2149 = vld [vmem:[%s2137 + $0x58] sm:$0xff]
      %v2150 = vld [vmem:[%s2137 + $0x60] sm:$0xff]
      %v2151 = vld [vmem:[%s2137 + $0x68] sm:$0xff]
      %v2152 = vld [vmem:[%s2137 + $0x70] sm:$0xff]
      %v2153 = vld [vmem:[%s2137 + $0x78] sm:$0xff]
      %s2154 = scalar_lea.vmem [#allocation3], %s2136
      %v2155 = vld [vmem:[%s2154] sm:$0xff]
      %v2156 = vld [vmem:[%s2154 + $0x8] sm:$0xff]
      %v2157 = vld [vmem:[%s2154 + $0x10] sm:$0xff]
      %v2158 = vld [vmem:[%s2154 + $0x18] sm:$0xff]
      %v2159 = vld [vmem:[%s2154 + $0x20] sm:$0xff]
      %v2160 = vld [vmem:[%s2154 + $0x28] sm:$0xff]
      %v2161 = vld [vmem:[%s2154 + $0x30] sm:$0xff]
      %v2162 = vld [vmem:[%s2154 + $0x38] sm:$0xff]
      %v2163 = vld [vmem:[%s2154 + $0x40] sm:$0xff]
      %v2164 = vld [vmem:[%s2154 + $0x48] sm:$0xff]
      %v2165 = vld [vmem:[%s2154 + $0x50] sm:$0xff]
      %v2166 = vld [vmem:[%s2154 + $0x58] sm:$0xff]
      %v2167 = vld [vmem:[%s2154 + $0x60] sm:$0xff]
      %v2168 = vld [vmem:[%s2154 + $0x68] sm:$0xff]
      %v2169 = vld [vmem:[%s2154 + $0x70] sm:$0xff]
      %v2170 = vld [vmem:[%s2154 + $0x78] sm:$0xff]
      %s2171 = scalar_lea.vmem [#allocation5], %s2136
      %v2172 = vld [vmem:[%s2171] sm:$0xff]
      %v2173 = vld [vmem:[%s2171 + $0x8] sm:$0xff]
      %v2174 = vld [vmem:[%s2171 + $0x10] sm:$0xff]
      %v2175 = vld [vmem:[%s2171 + $0x18] sm:$0xff]
      %v2176 = vld [vmem:[%s2171 + $0x20] sm:$0xff]
      %v2177 = vld [vmem:[%s2171 + $0x28] sm:$0xff]
      %v2178 = vld [vmem:[%s2171 + $0x30] sm:$0xff]
      %v2179 = vld [vmem:[%s2171 + $0x38] sm:$0xff]
      %v2180 = vld [vmem:[%s2171 + $0x40] sm:$0xff]
      %v2181 = vld [vmem:[%s2171 + $0x48] sm:$0xff]
      %v2182 = vld [vmem:[%s2171 + $0x50] sm:$0xff]
      %v2183 = vld [vmem:[%s2171 + $0x58] sm:$0xff]
      %v2184 = vld [vmem:[%s2171 + $0x60] sm:$0xff]
      %v2185 = vld [vmem:[%s2171 + $0x68] sm:$0xff]
      %v2186 = vld [vmem:[%s2171 + $0x70] sm:$0xff]
      %v2187 = vld [vmem:[%s2171 + $0x78] sm:$0xff]
      %2188 = vmatprep.subr.mxu0 0.0
      %2189 = vmatpush1.xpose.msra.mxu0 0.0
      %2190 = vmatprep.subr.mxu0 0.0
      %2191 = vmatpush1.xpose.msra.mxu0 0.0
      %2192 = vmatprep.subr.mxu0 0.0
      %2193 = vmatpush1.xpose.msra.mxu0 0.0
      %2194 = vmatprep.subr.mxu0 0.0
      %2195 = vmatpush1.xpose.msra.mxu0 0.0
      %2196 = vmatprep.subr.mxu0 0.0
      %2197 = vmatpush1.xpose.msra.mxu0 0.0
      %2198 = vmatprep.subr.mxu0 0.0
      %2199 = vmatpush1.xpose.msra.mxu0 0.0
      %2200 = vmatprep.subr.mxu0 0.0
      %2201 = vmatpush1.xpose.msra.mxu0 0.0
      %2202 = vmatprep.subr.mxu0 0.0
      %2203 = vmatpush1.xpose.msra.mxu0 0.0
      %2204 = vmatprep.subr.mxu0 0.0
      %2205 = vmatpush1.xpose.msra.mxu0 0.0
      %2206 = vmatprep.subr.mxu0 0.0
      %2207 = vmatpush1.xpose.msra.mxu0 0.0
      %2208 = vmatprep.subr.mxu0 0.0
      %2209 = vmatpush1.xpose.msra.mxu0 0.0
      %2210 = vmatprep.subr.mxu0 0.0
      %2211 = vmatpush1.xpose.msra.mxu0 0.0
      %2212 = vmatprep.subr.mxu0 0.0
      %2213 = vmatpush1.xpose.msra.mxu0 0.0
      %2214 = vmatprep.subr.mxu0 0.0
      %2215 = vmatpush1.xpose.msra.mxu0 0.0
      %2216 = vmatprep.subr.mxu0 0.0
      %2217 = vmatpush1.xpose.msra.mxu0 %v2156
      %2218 = vmatprep.subr.mxu0 0.0
      %2219 = vmatpush1.xpose.msra.mxu0 %v2155
      %2220 = vmatprep.subr.mxu0 0.0
      %2221 = vmatpush2.xpose.msra.mxu0 0.0
      %2222 = vmatprep.subr.mxu0 0.0
      %2223 = vmatpush2.xpose.msra.mxu0 0.0
      %2224 = vmatprep.subr.mxu0 0.0
      %2225 = vmatpush2.xpose.msra.mxu0 0.0
      %2226 = vmatprep.subr.mxu0 0.0
      %2227 = vmatpush2.xpose.msra.mxu0 0.0
      %2228 = vmatprep.subr.mxu0 0.0
      %2229 = vmatpush2.xpose.msra.mxu0 0.0
      %2230 = vmatprep.subr.mxu0 0.0
      %2231 = vmatpush2.xpose.msra.mxu0 0.0
      %2232 = vmatprep.subr.mxu0 0.0
      %2233 = vmatpush2.xpose.msra.mxu0 0.0
      %2234 = vmatprep.subr.mxu0 0.0
      %2235 = vmatpush2.xpose.msra.mxu0 0.0
      %2236 = vmatprep.subr.mxu0 0.0
      %2237 = vmatpush2.xpose.msra.mxu0 0.0
      %2238 = vmatprep.subr.mxu0 0.0
      %2239 = vmatpush2.xpose.msra.mxu0 0.0
      %2240 = vmatprep.subr.mxu0 0.0
      %2241 = vmatpush2.xpose.msra.mxu0 0.0
      %2242 = vmatprep.subr.mxu0 0.0
      %2243 = vmatpush2.xpose.msra.mxu0 0.0
      %2244 = vmatprep.subr.mxu0 0.0
      %2245 = vmatpush2.xpose.msra.mxu0 0.0
      %2246 = vmatprep.subr.mxu0 0.0
      %2247 = vmatpush2.xpose.msra.mxu0 0.0
      %2248 = vmatprep.subr.mxu0 0.0
      %2249 = vmatpush2.xpose.msra.mxu0 0.0
      %2250 = vmatprep.subr.mxu0 0.0
      %2251 = vmatpush2.xpose.msra.mxu0 0.0
      %2252 = vmatprep.mubr.f32.mxu0 0.0
      %2253 = vmatmul.mubr.f32.gmra.mxu0 %v2138
      %v2254 = vpop.f32.mrf.mxu0
      %v2255 = vadd.f32 0.0, %v2254
      %v2256 = vpop.f32.mrf.mxu0
      %2257 = vmatprep.mubr.f32.mxu0 0.0
      %2258 = vmatmul.mubr.f32.gmra.mxu0 %v2139
      %v2259 = vpop.f32.mrf.mxu0
      %v2260 = vadd.f32 0.0, %v2259
      %v2261 = vpop.f32.mrf.mxu0
      %2262 = vdwg.mxu0
      %2263 = vmatprep.subr.mxu0 0.0
      %2264 = vmatpush1.xpose.msra.mxu0 0.0
      %2265 = vmatprep.subr.mxu0 0.0
      %2266 = vmatpush1.xpose.msra.mxu0 0.0
      %2267 = vmatprep.subr.mxu0 0.0
      %2268 = vmatpush1.xpose.msra.mxu0 0.0
      %2269 = vmatprep.subr.mxu0 0.0
      %2270 = vmatpush1.xpose.msra.mxu0 0.0
      %2271 = vmatprep.subr.mxu0 0.0
      %2272 = vmatpush1.xpose.msra.mxu0 0.0
      %2273 = vmatprep.subr.mxu0 0.0
      %2274 = vmatpush1.xpose.msra.mxu0 0.0
      %2275 = vmatprep.subr.mxu0 0.0
      %2276 = vmatpush1.xpose.msra.mxu0 0.0
      %2277 = vmatprep.subr.mxu0 0.0
      %2278 = vmatpush1.xpose.msra.mxu0 0.0
      %2279 = vmatprep.subr.mxu0 0.0
      %2280 = vmatpush1.xpose.msra.mxu0 0.0
      %2281 = vmatprep.subr.mxu0 0.0
      %2282 = vmatpush1.xpose.msra.mxu0 0.0
      %2283 = vmatprep.subr.mxu0 0.0
      %2284 = vmatpush1.xpose.msra.mxu0 0.0
      %2285 = vmatprep.subr.mxu0 0.0
      %2286 = vmatpush1.xpose.msra.mxu0 0.0
      %2287 = vmatprep.subr.mxu0 0.0
      %2288 = vmatpush1.xpose.msra.mxu0 0.0
      %2289 = vmatprep.subr.mxu0 0.0
      %2290 = vmatpush1.xpose.msra.mxu0 0.0
      %2291 = vmatprep.subr.mxu0 0.0
      %2292 = vmatpush1.xpose.msra.mxu0 %v2158
      %2293 = vmatprep.subr.mxu0 0.0
      %2294 = vmatpush1.xpose.msra.mxu0 %v2157
      %2295 = vmatprep.subr.mxu0 0.0
      %2296 = vmatpush2.xpose.msra.mxu0 0.0
      %2297 = vmatprep.subr.mxu0 0.0
      %2298 = vmatpush2.xpose.msra.mxu0 0.0
      %2299 = vmatprep.subr.mxu0 0.0
      %2300 = vmatpush2.xpose.msra.mxu0 0.0
      %2301 = vmatprep.subr.mxu0 0.0
      %2302 = vmatpush2.xpose.msra.mxu0 0.0
      %2303 = vmatprep.subr.mxu0 0.0
      %2304 = vmatpush2.xpose.msra.mxu0 0.0
      %2305 = vmatprep.subr.mxu0 0.0
      %2306 = vmatpush2.xpose.msra.mxu0 0.0
      %2307 = vmatprep.subr.mxu0 0.0
      %2308 = vmatpush2.xpose.msra.mxu0 0.0
      %2309 = vmatprep.subr.mxu0 0.0
      %2310 = vmatpush2.xpose.msra.mxu0 0.0
      %2311 = vmatprep.subr.mxu0 0.0
      %2312 = vmatpush2.xpose.msra.mxu0 0.0
      %2313 = vmatprep.subr.mxu0 0.0
      %2314 = vmatpush2.xpose.msra.mxu0 0.0
      %2315 = vmatprep.subr.mxu0 0.0
      %2316 = vmatpush2.xpose.msra.mxu0 0.0
      %2317 = vmatprep.subr.mxu0 0.0
      %2318 = vmatpush2.xpose.msra.mxu0 0.0
      %2319 = vmatprep.subr.mxu0 0.0
      %2320 = vmatpush2.xpose.msra.mxu0 0.0
      %2321 = vmatprep.subr.mxu0 0.0
      %2322 = vmatpush2.xpose.msra.mxu0 0.0
      %2323 = vmatprep.subr.mxu0 0.0
      %2324 = vmatpush2.xpose.msra.mxu0 0.0
      %2325 = vmatprep.subr.mxu0 0.0
      %2326 = vmatpush2.xpose.msra.mxu0 0.0
      %2327 = vmatprep.mubr.f32.mxu0 0.0
      %2328 = vmatmul.mubr.f32.gmra.mxu0 %v2140
      %v2329 = vpop.f32.mrf.mxu0
      %v2330 = vadd.f32 0.0, %v2329
      %v2331 = vpop.f32.mrf.mxu0
      %2332 = vmatprep.mubr.f32.mxu0 0.0
      %2333 = vmatmul.mubr.f32.gmra.mxu0 %v2141
      %v2334 = vpop.f32.mrf.mxu0
      %v2335 = vadd.f32 0.0, %v2334
      %v2336 = vpop.f32.mrf.mxu0
      %2337 = vdwg.mxu0
      %2338 = vmatprep.subr.mxu0 0.0
      %2339 = vmatpush1.xpose.msra.mxu0 0.0
      %2340 = vmatprep.subr.mxu0 0.0
      %2341 = vmatpush1.xpose.msra.mxu0 0.0
      %2342 = vmatprep.subr.mxu0 0.0
      %2343 = vmatpush1.xpose.msra.mxu0 0.0
      %2344 = vmatprep.subr.mxu0 0.0
      %2345 = vmatpush1.xpose.msra.mxu0 0.0
      %2346 = vmatprep.subr.mxu0 0.0
      %2347 = vmatpush1.xpose.msra.mxu0 0.0
      %2348 = vmatprep.subr.mxu0 0.0
      %2349 = vmatpush1.xpose.msra.mxu0 0.0
      %2350 = vmatprep.subr.mxu0 0.0
      %2351 = vmatpush1.xpose.msra.mxu0 0.0
      %2352 = vmatprep.subr.mxu0 0.0
      %2353 = vmatpush1.xpose.msra.mxu0 0.0
      %2354 = vmatprep.subr.mxu0 0.0
      %2355 = vmatpush1.xpose.msra.mxu0 0.0
      %2356 = vmatprep.subr.mxu0 0.0
      %2357 = vmatpush1.xpose.msra.mxu0 0.0
      %2358 = vmatprep.subr.mxu0 0.0
      %2359 = vmatpush1.xpose.msra.mxu0 0.0
      %2360 = vmatprep.subr.mxu0 0.0
      %2361 = vmatpush1.xpose.msra.mxu0 0.0
      %2362 = vmatprep.subr.mxu0 0.0
      %2363 = vmatpush1.xpose.msra.mxu0 0.0
      %2364 = vmatprep.subr.mxu0 0.0
      %2365 = vmatpush1.xpose.msra.mxu0 0.0
      %2366 = vmatprep.subr.mxu0 0.0
      %2367 = vmatpush1.xpose.msra.mxu0 %v2160
      %2368 = vmatprep.subr.mxu0 0.0
      %2369 = vmatpush1.xpose.msra.mxu0 %v2159
      %2370 = vmatprep.subr.mxu0 0.0
      %2371 = vmatpush2.xpose.msra.mxu0 0.0
      %2372 = vmatprep.subr.mxu0 0.0
      %2373 = vmatpush2.xpose.msra.mxu0 0.0
      %2374 = vmatprep.subr.mxu0 0.0
      %2375 = vmatpush2.xpose.msra.mxu0 0.0
      %2376 = vmatprep.subr.mxu0 0.0
      %2377 = vmatpush2.xpose.msra.mxu0 0.0
      %2378 = vmatprep.subr.mxu0 0.0
      %2379 = vmatpush2.xpose.msra.mxu0 0.0
      %2380 = vmatprep.subr.mxu0 0.0
      %2381 = vmatpush2.xpose.msra.mxu0 0.0
      %2382 = vmatprep.subr.mxu0 0.0
      %2383 = vmatpush2.xpose.msra.mxu0 0.0
      %2384 = vmatprep.subr.mxu0 0.0
      %2385 = vmatpush2.xpose.msra.mxu0 0.0
      %2386 = vmatprep.subr.mxu0 0.0
      %2387 = vmatpush2.xpose.msra.mxu0 0.0
      %2388 = vmatprep.subr.mxu0 0.0
      %2389 = vmatpush2.xpose.msra.mxu0 0.0
      %2390 = vmatprep.subr.mxu0 0.0
      %2391 = vmatpush2.xpose.msra.mxu0 0.0
      %2392 = vmatprep.subr.mxu0 0.0
      %2393 = vmatpush2.xpose.msra.mxu0 0.0
      %2394 = vmatprep.subr.mxu0 0.0
      %2395 = vmatpush2.xpose.msra.mxu0 0.0
      %2396 = vmatprep.subr.mxu0 0.0
      %2397 = vmatpush2.xpose.msra.mxu0 0.0
      %2398 = vmatprep.subr.mxu0 0.0
      %2399 = vmatpush2.xpose.msra.mxu0 0.0
      %2400 = vmatprep.subr.mxu0 0.0
      %2401 = vmatpush2.xpose.msra.mxu0 0.0
      %2402 = vmatprep.mubr.f32.mxu0 0.0
      %2403 = vmatmul.mubr.f32.gmra.mxu0 %v2142
      %v2404 = vpop.f32.mrf.mxu0
      %v2405 = vadd.f32 0.0, %v2404
      %v2406 = vpop.f32.mrf.mxu0
      %2407 = vmatprep.mubr.f32.mxu0 0.0
      %2408 = vmatmul.mubr.f32.gmra.mxu0 %v2143
      %v2409 = vpop.f32.mrf.mxu0
      %v2410 = vadd.f32 0.0, %v2409
      %v2411 = vpop.f32.mrf.mxu0
      %2412 = vdwg.mxu0
      %2413 = vmatprep.subr.mxu0 0.0
      %2414 = vmatpush1.xpose.msra.mxu0 0.0
      %2415 = vmatprep.subr.mxu0 0.0
      %2416 = vmatpush1.xpose.msra.mxu0 0.0
      %2417 = vmatprep.subr.mxu0 0.0
      %2418 = vmatpush1.xpose.msra.mxu0 0.0
      %2419 = vmatprep.subr.mxu0 0.0
      %2420 = vmatpush1.xpose.msra.mxu0 0.0
      %2421 = vmatprep.subr.mxu0 0.0
      %2422 = vmatpush1.xpose.msra.mxu0 0.0
      %2423 = vmatprep.subr.mxu0 0.0
      %2424 = vmatpush1.xpose.msra.mxu0 0.0
      %2425 = vmatprep.subr.mxu0 0.0
      %2426 = vmatpush1.xpose.msra.mxu0 0.0
      %2427 = vmatprep.subr.mxu0 0.0
      %2428 = vmatpush1.xpose.msra.mxu0 0.0
      %2429 = vmatprep.subr.mxu0 0.0
      %2430 = vmatpush1.xpose.msra.mxu0 0.0
      %2431 = vmatprep.subr.mxu0 0.0
      %2432 = vmatpush1.xpose.msra.mxu0 0.0
      %2433 = vmatprep.subr.mxu0 0.0
      %2434 = vmatpush1.xpose.msra.mxu0 0.0
      %2435 = vmatprep.subr.mxu0 0.0
      %2436 = vmatpush1.xpose.msra.mxu0 0.0
      %2437 = vmatprep.subr.mxu0 0.0
      %2438 = vmatpush1.xpose.msra.mxu0 0.0
      %2439 = vmatprep.subr.mxu0 0.0
      %2440 = vmatpush1.xpose.msra.mxu0 0.0
      %2441 = vmatprep.subr.mxu0 0.0
      %2442 = vmatpush1.xpose.msra.mxu0 %v2162
      %2443 = vmatprep.subr.mxu0 0.0
      %2444 = vmatpush1.xpose.msra.mxu0 %v2161
      %2445 = vmatprep.subr.mxu0 0.0
      %2446 = vmatpush2.xpose.msra.mxu0 0.0
      %2447 = vmatprep.subr.mxu0 0.0
      %2448 = vmatpush2.xpose.msra.mxu0 0.0
      %2449 = vmatprep.subr.mxu0 0.0
      %2450 = vmatpush2.xpose.msra.mxu0 0.0
      %2451 = vmatprep.subr.mxu0 0.0
      %2452 = vmatpush2.xpose.msra.mxu0 0.0
      %2453 = vmatprep.subr.mxu0 0.0
      %2454 = vmatpush2.xpose.msra.mxu0 0.0
      %2455 = vmatprep.subr.mxu0 0.0
      %2456 = vmatpush2.xpose.msra.mxu0 0.0
      %2457 = vmatprep.subr.mxu0 0.0
      %2458 = vmatpush2.xpose.msra.mxu0 0.0
      %2459 = vmatprep.subr.mxu0 0.0
      %2460 = vmatpush2.xpose.msra.mxu0 0.0
      %2461 = vmatprep.subr.mxu0 0.0
      %2462 = vmatpush2.xpose.msra.mxu0 0.0
      %2463 = vmatprep.subr.mxu0 0.0
      %2464 = vmatpush2.xpose.msra.mxu0 0.0
      %2465 = vmatprep.subr.mxu0 0.0
      %2466 = vmatpush2.xpose.msra.mxu0 0.0
      %2467 = vmatprep.subr.mxu0 0.0
      %2468 = vmatpush2.xpose.msra.mxu0 0.0
      %2469 = vmatprep.subr.mxu0 0.0
      %2470 = vmatpush2.xpose.msra.mxu0 0.0
      %2471 = vmatprep.subr.mxu0 0.0
      %2472 = vmatpush2.xpose.msra.mxu0 0.0
      %2473 = vmatprep.subr.mxu0 0.0
      %2474 = vmatpush2.xpose.msra.mxu0 0.0
      %2475 = vmatprep.subr.mxu0 0.0
      %2476 = vmatpush2.xpose.msra.mxu0 0.0
      %2477 = vmatprep.mubr.f32.mxu0 0.0
      %2478 = vmatmul.mubr.f32.gmra.mxu0 %v2144
      %v2479 = vpop.f32.mrf.mxu0
      %v2480 = vadd.f32 0.0, %v2479
      %v2481 = vpop.f32.mrf.mxu0
      %2482 = vmatprep.mubr.f32.mxu0 0.0
      %2483 = vmatmul.mubr.f32.gmra.mxu0 %v2145
      %v2484 = vpop.f32.mrf.mxu0
      %v2485 = vadd.f32 0.0, %v2484
      %v2486 = vpop.f32.mrf.mxu0
      %2487 = vdwg.mxu0
      %2488 = vmatprep.subr.mxu0 0.0
      %2489 = vmatpush1.xpose.msra.mxu0 0.0
      %2490 = vmatprep.subr.mxu0 0.0
      %2491 = vmatpush1.xpose.msra.mxu0 0.0
      %2492 = vmatprep.subr.mxu0 0.0
      %2493 = vmatpush1.xpose.msra.mxu0 0.0
      %2494 = vmatprep.subr.mxu0 0.0
      %2495 = vmatpush1.xpose.msra.mxu0 0.0
      %2496 = vmatprep.subr.mxu0 0.0
      %2497 = vmatpush1.xpose.msra.mxu0 0.0
      %2498 = vmatprep.subr.mxu0 0.0
      %2499 = vmatpush1.xpose.msra.mxu0 0.0
      %2500 = vmatprep.subr.mxu0 0.0
      %2501 = vmatpush1.xpose.msra.mxu0 0.0
      %2502 = vmatprep.subr.mxu0 0.0
      %2503 = vmatpush1.xpose.msra.mxu0 0.0
      %2504 = vmatprep.subr.mxu0 0.0
      %2505 = vmatpush1.xpose.msra.mxu0 0.0
      %2506 = vmatprep.subr.mxu0 0.0
      %2507 = vmatpush1.xpose.msra.mxu0 0.0
      %2508 = vmatprep.subr.mxu0 0.0
      %2509 = vmatpush1.xpose.msra.mxu0 0.0
      %2510 = vmatprep.subr.mxu0 0.0
      %2511 = vmatpush1.xpose.msra.mxu0 0.0
      %2512 = vmatprep.subr.mxu0 0.0
      %2513 = vmatpush1.xpose.msra.mxu0 0.0
      %2514 = vmatprep.subr.mxu0 0.0
      %2515 = vmatpush1.xpose.msra.mxu0 0.0
      %2516 = vmatprep.subr.mxu0 0.0
      %2517 = vmatpush1.xpose.msra.mxu0 %v2164
      %2518 = vmatprep.subr.mxu0 0.0
      %2519 = vmatpush1.xpose.msra.mxu0 %v2163
      %2520 = vmatprep.subr.mxu0 0.0
      %2521 = vmatpush2.xpose.msra.mxu0 0.0
      %2522 = vmatprep.subr.mxu0 0.0
      %2523 = vmatpush2.xpose.msra.mxu0 0.0
      %2524 = vmatprep.subr.mxu0 0.0
      %2525 = vmatpush2.xpose.msra.mxu0 0.0
      %2526 = vmatprep.subr.mxu0 0.0
      %2527 = vmatpush2.xpose.msra.mxu0 0.0
      %2528 = vmatprep.subr.mxu0 0.0
      %2529 = vmatpush2.xpose.msra.mxu0 0.0
      %2530 = vmatprep.subr.mxu0 0.0
      %2531 = vmatpush2.xpose.msra.mxu0 0.0
      %2532 = vmatprep.subr.mxu0 0.0
      %2533 = vmatpush2.xpose.msra.mxu0 0.0
      %2534 = vmatprep.subr.mxu0 0.0
      %2535 = vmatpush2.xpose.msra.mxu0 0.0
      %2536 = vmatprep.subr.mxu0 0.0
      %2537 = vmatpush2.xpose.msra.mxu0 0.0
      %2538 = vmatprep.subr.mxu0 0.0
      %2539 = vmatpush2.xpose.msra.mxu0 0.0
      %2540 = vmatprep.subr.mxu0 0.0
      %2541 = vmatpush2.xpose.msra.mxu0 0.0
      %2542 = vmatprep.subr.mxu0 0.0
      %2543 = vmatpush2.xpose.msra.mxu0 0.0
      %2544 = vmatprep.subr.mxu0 0.0
      %2545 = vmatpush2.xpose.msra.mxu0 0.0
      %2546 = vmatprep.subr.mxu0 0.0
      %2547 = vmatpush2.xpose.msra.mxu0 0.0
      %2548 = vmatprep.subr.mxu0 0.0
      %2549 = vmatpush2.xpose.msra.mxu0 0.0
      %2550 = vmatprep.subr.mxu0 0.0
      %2551 = vmatpush2.xpose.msra.mxu0 0.0
      %2552 = vmatprep.mubr.f32.mxu0 0.0
      %2553 = vmatmul.mubr.f32.gmra.mxu0 %v2146
      %v2554 = vpop.f32.mrf.mxu0
      %v2555 = vadd.f32 0.0, %v2554
      %v2556 = vpop.f32.mrf.mxu0
      %2557 = vmatprep.mubr.f32.mxu0 0.0
      %2558 = vmatmul.mubr.f32.gmra.mxu0 %v2147
      %v2559 = vpop.f32.mrf.mxu0
      %v2560 = vadd.f32 0.0, %v2559
      %v2561 = vpop.f32.mrf.mxu0
      %2562 = vdwg.mxu0
      %2563 = vmatprep.subr.mxu0 0.0
      %2564 = vmatpush1.xpose.msra.mxu0 0.0
      %2565 = vmatprep.subr.mxu0 0.0
      %2566 = vmatpush1.xpose.msra.mxu0 0.0
      %2567 = vmatprep.subr.mxu0 0.0
      %2568 = vmatpush1.xpose.msra.mxu0 0.0
      %2569 = vmatprep.subr.mxu0 0.0
      %2570 = vmatpush1.xpose.msra.mxu0 0.0
      %2571 = vmatprep.subr.mxu0 0.0
      %2572 = vmatpush1.xpose.msra.mxu0 0.0
      %2573 = vmatprep.subr.mxu0 0.0
      %2574 = vmatpush1.xpose.msra.mxu0 0.0
      %2575 = vmatprep.subr.mxu0 0.0
      %2576 = vmatpush1.xpose.msra.mxu0 0.0
      %2577 = vmatprep.subr.mxu0 0.0
      %2578 = vmatpush1.xpose.msra.mxu0 0.0
      %2579 = vmatprep.subr.mxu0 0.0
      %2580 = vmatpush1.xpose.msra.mxu0 0.0
      %2581 = vmatprep.subr.mxu0 0.0
      %2582 = vmatpush1.xpose.msra.mxu0 0.0
      %2583 = vmatprep.subr.mxu0 0.0
      %2584 = vmatpush1.xpose.msra.mxu0 0.0
      %2585 = vmatprep.subr.mxu0 0.0
      %2586 = vmatpush1.xpose.msra.mxu0 0.0
      %2587 = vmatprep.subr.mxu0 0.0
      %2588 = vmatpush1.xpose.msra.mxu0 0.0
      %2589 = vmatprep.subr.mxu0 0.0
      %2590 = vmatpush1.xpose.msra.mxu0 0.0
      %2591 = vmatprep.subr.mxu0 0.0
      %2592 = vmatpush1.xpose.msra.mxu0 %v2166
      %2593 = vmatprep.subr.mxu0 0.0
      %2594 = vmatpush1.xpose.msra.mxu0 %v2165
      %2595 = vmatprep.subr.mxu0 0.0
      %2596 = vmatpush2.xpose.msra.mxu0 0.0
      %2597 = vmatprep.subr.mxu0 0.0
      %2598 = vmatpush2.xpose.msra.mxu0 0.0
      %2599 = vmatprep.subr.mxu0 0.0
      %2600 = vmatpush2.xpose.msra.mxu0 0.0
      %2601 = vmatprep.subr.mxu0 0.0
      %2602 = vmatpush2.xpose.msra.mxu0 0.0
      %2603 = vmatprep.subr.mxu0 0.0
      %2604 = vmatpush2.xpose.msra.mxu0 0.0
      %2605 = vmatprep.subr.mxu0 0.0
      %2606 = vmatpush2.xpose.msra.mxu0 0.0
      %2607 = vmatprep.subr.mxu0 0.0
      %2608 = vmatpush2.xpose.msra.mxu0 0.0
      %2609 = vmatprep.subr.mxu0 0.0
      %2610 = vmatpush2.xpose.msra.mxu0 0.0
      %2611 = vmatprep.subr.mxu0 0.0
      %2612 = vmatpush2.xpose.msra.mxu0 0.0
      %2613 = vmatprep.subr.mxu0 0.0
      %2614 = vmatpush2.xpose.msra.mxu0 0.0
      %2615 = vmatprep.subr.mxu0 0.0
      %2616 = vmatpush2.xpose.msra.mxu0 0.0
      %2617 = vmatprep.subr.mxu0 0.0
      %2618 = vmatpush2.xpose.msra.mxu0 0.0
      %2619 = vmatprep.subr.mxu0 0.0
      %2620 = vmatpush2.xpose.msra.mxu0 0.0
      %2621 = vmatprep.subr.mxu0 0.0
      %2622 = vmatpush2.xpose.msra.mxu0 0.0
      %2623 = vmatprep.subr.mxu0 0.0
      %2624 = vmatpush2.xpose.msra.mxu0 0.0
      %2625 = vmatprep.subr.mxu0 0.0
      %2626 = vmatpush2.xpose.msra.mxu0 0.0
      %2627 = vmatprep.mubr.f32.mxu0 0.0
      %2628 = vmatmul.mubr.f32.gmra.mxu0 %v2148
      %v2629 = vpop.f32.mrf.mxu0
      %v2630 = vadd.f32 0.0, %v2629
      %v2631 = vpop.f32.mrf.mxu0
      %2632 = vmatprep.mubr.f32.mxu0 0.0
      %2633 = vmatmul.mubr.f32.gmra.mxu0 %v2149
      %v2634 = vpop.f32.mrf.mxu0
      %v2635 = vadd.f32 0.0, %v2634
      %v2636 = vpop.f32.mrf.mxu0
      %2637 = vdwg.mxu0
      %2638 = vmatprep.subr.mxu0 0.0
      %2639 = vmatpush1.xpose.msra.mxu0 0.0
      %2640 = vmatprep.subr.mxu0 0.0
      %2641 = vmatpush1.xpose.msra.mxu0 0.0
      %2642 = vmatprep.subr.mxu0 0.0
      %2643 = vmatpush1.xpose.msra.mxu0 0.0
      %2644 = vmatprep.subr.mxu0 0.0
      %2645 = vmatpush1.xpose.msra.mxu0 0.0
      %2646 = vmatprep.subr.mxu0 0.0
      %2647 = vmatpush1.xpose.msra.mxu0 0.0
      %2648 = vmatprep.subr.mxu0 0.0
      %2649 = vmatpush1.xpose.msra.mxu0 0.0
      %2650 = vmatprep.subr.mxu0 0.0
      %2651 = vmatpush1.xpose.msra.mxu0 0.0
      %2652 = vmatprep.subr.mxu0 0.0
      %2653 = vmatpush1.xpose.msra.mxu0 0.0
      %2654 = vmatprep.subr.mxu0 0.0
      %2655 = vmatpush1.xpose.msra.mxu0 0.0
      %2656 = vmatprep.subr.mxu0 0.0
      %2657 = vmatpush1.xpose.msra.mxu0 0.0
      %2658 = vmatprep.subr.mxu0 0.0
      %2659 = vmatpush1.xpose.msra.mxu0 0.0
      %2660 = vmatprep.subr.mxu0 0.0
      %2661 = vmatpush1.xpose.msra.mxu0 0.0
      %2662 = vmatprep.subr.mxu0 0.0
      %2663 = vmatpush1.xpose.msra.mxu0 0.0
      %2664 = vmatprep.subr.mxu0 0.0
      %2665 = vmatpush1.xpose.msra.mxu0 0.0
      %2666 = vmatprep.subr.mxu0 0.0
      %2667 = vmatpush1.xpose.msra.mxu0 %v2168
      %2668 = vmatprep.subr.mxu0 0.0
      %2669 = vmatpush1.xpose.msra.mxu0 %v2167
      %2670 = vmatprep.subr.mxu0 0.0
      %2671 = vmatpush2.xpose.msra.mxu0 0.0
      %2672 = vmatprep.subr.mxu0 0.0
      %2673 = vmatpush2.xpose.msra.mxu0 0.0
      %2674 = vmatprep.subr.mxu0 0.0
      %2675 = vmatpush2.xpose.msra.mxu0 0.0
      %2676 = vmatprep.subr.mxu0 0.0
      %2677 = vmatpush2.xpose.msra.mxu0 0.0
      %2678 = vmatprep.subr.mxu0 0.0
      %2679 = vmatpush2.xpose.msra.mxu0 0.0
      %2680 = vmatprep.subr.mxu0 0.0
      %2681 = vmatpush2.xpose.msra.mxu0 0.0
      %2682 = vmatprep.subr.mxu0 0.0
      %2683 = vmatpush2.xpose.msra.mxu0 0.0
      %2684 = vmatprep.subr.mxu0 0.0
      %2685 = vmatpush2.xpose.msra.mxu0 0.0
      %2686 = vmatprep.subr.mxu0 0.0
      %2687 = vmatpush2.xpose.msra.mxu0 0.0
      %2688 = vmatprep.subr.mxu0 0.0
      %2689 = vmatpush2.xpose.msra.mxu0 0.0
      %2690 = vmatprep.subr.mxu0 0.0
      %2691 = vmatpush2.xpose.msra.mxu0 0.0
      %2692 = vmatprep.subr.mxu0 0.0
      %2693 = vmatpush2.xpose.msra.mxu0 0.0
      %2694 = vmatprep.subr.mxu0 0.0
      %2695 = vmatpush2.xpose.msra.mxu0 0.0
      %2696 = vmatprep.subr.mxu0 0.0
      %2697 = vmatpush2.xpose.msra.mxu0 0.0
      %2698 = vmatprep.subr.mxu0 0.0
      %2699 = vmatpush2.xpose.msra.mxu0 0.0
      %2700 = vmatprep.subr.mxu0 0.0
      %2701 = vmatpush2.xpose.msra.mxu0 0.0
      %2702 = vmatprep.mubr.f32.mxu0 0.0
      %2703 = vmatmul.mubr.f32.gmra.mxu0 %v2150
      %v2704 = vpop.f32.mrf.mxu0
      %v2705 = vadd.f32 0.0, %v2704
      %v2706 = vpop.f32.mrf.mxu0
      %2707 = vmatprep.mubr.f32.mxu0 0.0
      %2708 = vmatmul.mubr.f32.gmra.mxu0 %v2151
      %v2709 = vpop.f32.mrf.mxu0
      %v2710 = vadd.f32 0.0, %v2709
      %v2711 = vpop.f32.mrf.mxu0
      %2712 = vdwg.mxu0
      %2713 = vmatprep.subr.mxu0 0.0
      %2714 = vmatpush1.xpose.msra.mxu0 0.0
      %2715 = vmatprep.subr.mxu0 0.0
      %2716 = vmatpush1.xpose.msra.mxu0 0.0
      %2717 = vmatprep.subr.mxu0 0.0
      %2718 = vmatpush1.xpose.msra.mxu0 0.0
      %2719 = vmatprep.subr.mxu0 0.0
      %2720 = vmatpush1.xpose.msra.mxu0 0.0
      %2721 = vmatprep.subr.mxu0 0.0
      %2722 = vmatpush1.xpose.msra.mxu0 0.0
      %2723 = vmatprep.subr.mxu0 0.0
      %2724 = vmatpush1.xpose.msra.mxu0 0.0
      %2725 = vmatprep.subr.mxu0 0.0
      %2726 = vmatpush1.xpose.msra.mxu0 0.0
      %2727 = vmatprep.subr.mxu0 0.0
      %2728 = vmatpush1.xpose.msra.mxu0 0.0
      %2729 = vmatprep.subr.mxu0 0.0
      %2730 = vmatpush1.xpose.msra.mxu0 0.0
      %2731 = vmatprep.subr.mxu0 0.0
      %2732 = vmatpush1.xpose.msra.mxu0 0.0
      %2733 = vmatprep.subr.mxu0 0.0
      %2734 = vmatpush1.xpose.msra.mxu0 0.0
      %2735 = vmatprep.subr.mxu0 0.0
      %2736 = vmatpush1.xpose.msra.mxu0 0.0
      %2737 = vmatprep.subr.mxu0 0.0
      %2738 = vmatpush1.xpose.msra.mxu0 0.0
      %2739 = vmatprep.subr.mxu0 0.0
      %2740 = vmatpush1.xpose.msra.mxu0 0.0
      %2741 = vmatprep.subr.mxu0 0.0
      %2742 = vmatpush1.xpose.msra.mxu0 %v2170
      %2743 = vmatprep.subr.mxu0 0.0
      %2744 = vmatpush1.xpose.msra.mxu0 %v2169
      %2745 = vmatprep.subr.mxu0 0.0
      %2746 = vmatpush2.xpose.msra.mxu0 0.0
      %2747 = vmatprep.subr.mxu0 0.0
      %2748 = vmatpush2.xpose.msra.mxu0 0.0
      %2749 = vmatprep.subr.mxu0 0.0
      %2750 = vmatpush2.xpose.msra.mxu0 0.0
      %2751 = vmatprep.subr.mxu0 0.0
      %2752 = vmatpush2.xpose.msra.mxu0 0.0
      %2753 = vmatprep.subr.mxu0 0.0
      %2754 = vmatpush2.xpose.msra.mxu0 0.0
      %2755 = vmatprep.subr.mxu0 0.0
      %2756 = vmatpush2.xpose.msra.mxu0 0.0
      %2757 = vmatprep.subr.mxu0 0.0
      %2758 = vmatpush2.xpose.msra.mxu0 0.0
      %2759 = vmatprep.subr.mxu0 0.0
      %2760 = vmatpush2.xpose.msra.mxu0 0.0
      %2761 = vmatprep.subr.mxu0 0.0
      %2762 = vmatpush2.xpose.msra.mxu0 0.0
      %2763 = vmatprep.subr.mxu0 0.0
      %2764 = vmatpush2.xpose.msra.mxu0 0.0
      %2765 = vmatprep.subr.mxu0 0.0
      %2766 = vmatpush2.xpose.msra.mxu0 0.0
      %2767 = vmatprep.subr.mxu0 0.0
      %2768 = vmatpush2.xpose.msra.mxu0 0.0
      %2769 = vmatprep.subr.mxu0 0.0
      %2770 = vmatpush2.xpose.msra.mxu0 0.0
      %2771 = vmatprep.subr.mxu0 0.0
      %2772 = vmatpush2.xpose.msra.mxu0 0.0
      %2773 = vmatprep.subr.mxu0 0.0
      %2774 = vmatpush2.xpose.msra.mxu0 0.0
      %2775 = vmatprep.subr.mxu0 0.0
      %2776 = vmatpush2.xpose.msra.mxu0 0.0
      %2777 = vmatprep.mubr.f32.mxu0 0.0
      %2778 = vmatmul.mubr.f32.gmra.mxu0 %v2152
      %v2779 = vpop.f32.mrf.mxu0
      %v2780 = vadd.f32 0.0, %v2779
      %v2781 = vpop.f32.mrf.mxu0
      %2782 = vmatprep.mubr.f32.mxu0 0.0
      %2783 = vmatmul.mubr.f32.gmra.mxu0 %v2153
      %v2784 = vpop.f32.mrf.mxu0
      %v2785 = vadd.f32 0.0, %v2784
      %v2786 = vpop.f32.mrf.mxu0
      %2787 = vdwg.mxu0
      %v2788 = vcombine.low %v2138, %v2142
      %v2789 = vcombine.high %v2138, %v2142
      %v2791 = vunpack.c.l.s4 1983009808
      %v2792 = vunpack.c.0.s8 %v2791
      %v2793 = vlaneseq
      %v2794 = vshrl.u32 %v2793, 7
      %v2795 = vsub.s32 %v2792, %v2794
      %v2796 = vrot.slane %v2788, %v2795
      %v2798 = vunpack.c.l.s4 1983009808
      %v2799 = vunpack.c.0.s8 %v2798
      %v2800 = vlaneseq
      %v2801 = vshrl.u32 %v2800, 7
      %v2802 = vsub.s32 %v2799, %v2801
      %v2803 = vrot.slane %v2789, %v2802
      %v2804 = vcombine.low %v2140, %v2144
      %v2805 = vcombine.high %v2140, %v2144
      %v2807 = vunpack.c.l.s4 1983009808
      %v2808 = vunpack.c.0.s8 %v2807
      %v2809 = vlaneseq
      %v2810 = vshrl.u32 %v2809, 7
      %v2811 = vsub.s32 %v2808, %v2810
      %v2812 = vrot.slane %v2804, %v2811
      %v2814 = vunpack.c.l.s4 1983009808
      %v2815 = vunpack.c.0.s8 %v2814
      %v2816 = vlaneseq
      %v2817 = vshrl.u32 %v2816, 7
      %v2818 = vsub.s32 %v2815, %v2817
      %v2819 = vrot.slane %v2805, %v2818
      %v2820 = vcombine.low %v2146, %v2150
      %v2821 = vcombine.high %v2146, %v2150
      %v2823 = vunpack.c.l.s4 1983009808
      %v2824 = vunpack.c.0.s8 %v2823
      %v2825 = vlaneseq
      %v2826 = vshrl.u32 %v2825, 7
      %v2827 = vsub.s32 %v2824, %v2826
      %v2828 = vrot.slane %v2820, %v2827
      %v2830 = vunpack.c.l.s4 1983009808
      %v2831 = vunpack.c.0.s8 %v2830
      %v2832 = vlaneseq
      %v2833 = vshrl.u32 %v2832, 7
      %v2834 = vsub.s32 %v2831, %v2833
      %v2835 = vrot.slane %v2821, %v2834
      %v2836 = vcombine.low %v2148, %v2152
      %v2837 = vcombine.high %v2148, %v2152
      %v2839 = vunpack.c.l.s4 1983009808
      %v2840 = vunpack.c.0.s8 %v2839
      %v2841 = vlaneseq
      %v2842 = vshrl.u32 %v2841, 7
      %v2843 = vsub.s32 %v2840, %v2842
      %v2844 = vrot.slane %v2836, %v2843
      %v2846 = vunpack.c.l.s4 1983009808
      %v2847 = vunpack.c.0.s8 %v2846
      %v2848 = vlaneseq
      %v2849 = vshrl.u32 %v2848, 7
      %v2850 = vsub.s32 %v2847, %v2849
      %v2851 = vrot.slane %v2837, %v2850
      %v2852 = vcombine.low %v2796, %v2812
      %v2853 = vcombine.high %v2796, %v2812
      %v2855 = vunpack.c.l.s4 1934713408
      %v2856 = vunpack.c.0.s8 %v2855
      %v2857 = vlaneseq
      %v2858 = vshrl.u32 %v2857, 7
      %v2859 = vsub.s32 %v2856, %v2858
      %v2860 = vrot.slane %v2852, %v2859
      %v2862 = vunpack.c.l.s4 1934713408
      %v2863 = vunpack.c.0.s8 %v2862
      %v2864 = vlaneseq
      %v2865 = vshrl.u32 %v2864, 7
      %v2866 = vsub.s32 %v2863, %v2865
      %v2867 = vrot.slane %v2853, %v2866
      %v2868 = vcombine.low %v2803, %v2819
      %v2869 = vcombine.high %v2803, %v2819
      %v2871 = vunpack.c.l.s4 1934713408
      %v2872 = vunpack.c.0.s8 %v2871
      %v2873 = vlaneseq
      %v2874 = vshrl.u32 %v2873, 7
      %v2875 = vsub.s32 %v2872, %v2874
      %v2876 = vrot.slane %v2868, %v2875
      %v2878 = vunpack.c.l.s4 1934713408
      %v2879 = vunpack.c.0.s8 %v2878
      %v2880 = vlaneseq
      %v2881 = vshrl.u32 %v2880, 7
      %v2882 = vsub.s32 %v2879, %v2881
      %v2883 = vrot.slane %v2869, %v2882
      %v2884 = vcombine.low %v2828, %v2844
      %v2885 = vcombine.high %v2828, %v2844
      %v2887 = vunpack.c.l.s4 1934713408
      %v2888 = vunpack.c.0.s8 %v2887
      %v2889 = vlaneseq
      %v2890 = vshrl.u32 %v2889, 7
      %v2891 = vsub.s32 %v2888, %v2890
      %v2892 = vrot.slane %v2884, %v2891
      %v2894 = vunpack.c.l.s4 1934713408
      %v2895 = vunpack.c.0.s8 %v2894
      %v2896 = vlaneseq
      %v2897 = vshrl.u32 %v2896, 7
      %v2898 = vsub.s32 %v2895, %v2897
      %v2899 = vrot.slane %v2885, %v2898
      %v2900 = vcombine.low %v2835, %v2851
      %v2901 = vcombine.high %v2835, %v2851
      %v2903 = vunpack.c.l.s4 1934713408
      %v2904 = vunpack.c.0.s8 %v2903
      %v2905 = vlaneseq
      %v2906 = vshrl.u32 %v2905, 7
      %v2907 = vsub.s32 %v2904, %v2906
      %v2908 = vrot.slane %v2900, %v2907
      %v2910 = vunpack.c.l.s4 1934713408
      %v2911 = vunpack.c.0.s8 %v2910
      %v2912 = vlaneseq
      %v2913 = vshrl.u32 %v2912, 7
      %v2914 = vsub.s32 %v2911, %v2913
      %v2915 = vrot.slane %v2901, %v2914
      %v2916 = vcombine.low %v2860, %v2892
      %v2917 = vcombine.high %v2860, %v2892
      %v2918 = vcombine.low %v2867, %v2899
      %v2919 = vcombine.high %v2867, %v2899
      %v2920 = vcombine.low %v2876, %v2908
      %v2921 = vcombine.high %v2876, %v2908
      %v2922 = vcombine.low %v2883, %v2915
      %v2923 = vcombine.high %v2883, %v2915
      %v2924 = vcombine.low %v2139, %v2143
      %v2925 = vcombine.high %v2139, %v2143
      %v2927 = vunpack.c.l.s4 1983009808
      %v2928 = vunpack.c.0.s8 %v2927
      %v2929 = vlaneseq
      %v2930 = vshrl.u32 %v2929, 7
      %v2931 = vsub.s32 %v2928, %v2930
      %v2932 = vrot.slane %v2924, %v2931
      %v2934 = vunpack.c.l.s4 1983009808
      %v2935 = vunpack.c.0.s8 %v2934
      %v2936 = vlaneseq
      %v2937 = vshrl.u32 %v2936, 7
      %v2938 = vsub.s32 %v2935, %v2937
      %v2939 = vrot.slane %v2925, %v2938
      %v2940 = vcombine.low %v2141, %v2145
      %v2941 = vcombine.high %v2141, %v2145
      %v2943 = vunpack.c.l.s4 1983009808
      %v2944 = vunpack.c.0.s8 %v2943
      %v2945 = vlaneseq
      %v2946 = vshrl.u32 %v2945, 7
      %v2947 = vsub.s32 %v2944, %v2946
      %v2948 = vrot.slane %v2940, %v2947
      %v2950 = vunpack.c.l.s4 1983009808
      %v2951 = vunpack.c.0.s8 %v2950
      %v2952 = vlaneseq
      %v2953 = vshrl.u32 %v2952, 7
      %v2954 = vsub.s32 %v2951, %v2953
      %v2955 = vrot.slane %v2941, %v2954
      %v2956 = vcombine.low %v2147, %v2151
      %v2957 = vcombine.high %v2147, %v2151
      %v2959 = vunpack.c.l.s4 1983009808
      %v2960 = vunpack.c.0.s8 %v2959
      %v2961 = vlaneseq
      %v2962 = vshrl.u32 %v2961, 7
      %v2963 = vsub.s32 %v2960, %v2962
      %v2964 = vrot.slane %v2956, %v2963
      %v2966 = vunpack.c.l.s4 1983009808
      %v2967 = vunpack.c.0.s8 %v2966
      %v2968 = vlaneseq
      %v2969 = vshrl.u32 %v2968, 7
      %v2970 = vsub.s32 %v2967, %v2969
      %v2971 = vrot.slane %v2957, %v2970
      %v2972 = vcombine.low %v2149, %v2153
      %v2973 = vcombine.high %v2149, %v2153
      %v2975 = vunpack.c.l.s4 1983009808
      %v2976 = vunpack.c.0.s8 %v2975
      %v2977 = vlaneseq
      %v2978 = vshrl.u32 %v2977, 7
      %v2979 = vsub.s32 %v2976, %v2978
      %v2980 = vrot.slane %v2972, %v2979
      %v2982 = vunpack.c.l.s4 1983009808
      %v2983 = vunpack.c.0.s8 %v2982
      %v2984 = vlaneseq
      %v2985 = vshrl.u32 %v2984, 7
      %v2986 = vsub.s32 %v2983, %v2985
      %v2987 = vrot.slane %v2973, %v2986
      %v2988 = vcombine.low %v2932, %v2948
      %v2989 = vcombine.high %v2932, %v2948
      %v2991 = vunpack.c.l.s4 1934713408
      %v2992 = vunpack.c.0.s8 %v2991
      %v2993 = vlaneseq
      %v2994 = vshrl.u32 %v2993, 7
      %v2995 = vsub.s32 %v2992, %v2994
      %v2996 = vrot.slane %v2988, %v2995
      %v2998 = vunpack.c.l.s4 1934713408
      %v2999 = vunpack.c.0.s8 %v2998
      %v3000 = vlaneseq
      %v3001 = vshrl.u32 %v3000, 7
      %v3002 = vsub.s32 %v2999, %v3001
      %v3003 = vrot.slane %v2989, %v3002
      %v3004 = vcombine.low %v2939, %v2955
      %v3005 = vcombine.high %v2939, %v2955
      %v3007 = vunpack.c.l.s4 1934713408
      %v3008 = vunpack.c.0.s8 %v3007
      %v3009 = vlaneseq
      %v3010 = vshrl.u32 %v3009, 7
      %v3011 = vsub.s32 %v3008, %v3010
      %v3012 = vrot.slane %v3004, %v3011
      %v3014 = vunpack.c.l.s4 1934713408
      %v3015 = vunpack.c.0.s8 %v3014
      %v3016 = vlaneseq
      %v3017 = vshrl.u32 %v3016, 7
      %v3018 = vsub.s32 %v3015, %v3017
      %v3019 = vrot.slane %v3005, %v3018
      %v3020 = vcombine.low %v2964, %v2980
      %v3021 = vcombine.high %v2964, %v2980
      %v3023 = vunpack.c.l.s4 1934713408
      %v3024 = vunpack.c.0.s8 %v3023
      %v3025 = vlaneseq
      %v3026 = vshrl.u32 %v3025, 7
      %v3027 = vsub.s32 %v3024, %v3026
      %v3028 = vrot.slane %v3020, %v3027
      %v3030 = vunpack.c.l.s4 1934713408
      %v3031 = vunpack.c.0.s8 %v3030
      %v3032 = vlaneseq
      %v3033 = vshrl.u32 %v3032, 7
      %v3034 = vsub.s32 %v3031, %v3033
      %v3035 = vrot.slane %v3021, %v3034
      %v3036 = vcombine.low %v2971, %v2987
      %v3037 = vcombine.high %v2971, %v2987
      %v3039 = vunpack.c.l.s4 1934713408
      %v3040 = vunpack.c.0.s8 %v3039
      %v3041 = vlaneseq
      %v3042 = vshrl.u32 %v3041, 7
      %v3043 = vsub.s32 %v3040, %v3042
      %v3044 = vrot.slane %v3036, %v3043
      %v3046 = vunpack.c.l.s4 1934713408
      %v3047 = vunpack.c.0.s8 %v3046
      %v3048 = vlaneseq
      %v3049 = vshrl.u32 %v3048, 7
      %v3050 = vsub.s32 %v3047, %v3049
      %v3051 = vrot.slane %v3037, %v3050
      %v3052 = vcombine.low %v2996, %v3028
      %v3053 = vcombine.high %v2996, %v3028
      %v3054 = vcombine.low %v3003, %v3035
      %v3055 = vcombine.high %v3003, %v3035
      %v3056 = vcombine.low %v3012, %v3044
      %v3057 = vcombine.high %v3012, %v3044
      %v3058 = vcombine.low %v3019, %v3051
      %v3059 = vcombine.high %v3019, %v3051
      %v3060 = vld [vmem:[#allocation4] sm:$0xff]
      %v3061 = vld [vmem:[#allocation4 + $0x8] sm:$0xff]
      %v3062 = vld [vmem:[#allocation4 + $0x10] sm:$0xff]
      %v3063 = vld [vmem:[#allocation4 + $0x18] sm:$0xff]
      %v3064 = vld [vmem:[#allocation4 + $0x20] sm:$0xff]
      %v3065 = vld [vmem:[#allocation4 + $0x28] sm:$0xff]
      %v3066 = vld [vmem:[#allocation4 + $0x30] sm:$0xff]
      %v3067 = vld [vmem:[#allocation4 + $0x38] sm:$0xff]
      %v3068 = vld [vmem:[#allocation4 + $0x40] sm:$0xff]
      %v3069 = vld [vmem:[#allocation4 + $0x48] sm:$0xff]
      %v3070 = vld [vmem:[#allocation4 + $0x50] sm:$0xff]
      %v3071 = vld [vmem:[#allocation4 + $0x58] sm:$0xff]
      %v3072 = vld [vmem:[#allocation4 + $0x60] sm:$0xff]
      %v3073 = vld [vmem:[#allocation4 + $0x68] sm:$0xff]
      %v3074 = vld [vmem:[#allocation4 + $0x70] sm:$0xff]
      %v3075 = vld [vmem:[#allocation4 + $0x78] sm:$0xff]
      %v3076 = vld [vmem:[#allocation4 + $0x80] sm:$0xff]
      %v3077 = vld [vmem:[#allocation4 + $0x88] sm:$0xff]
      %v3078 = vld [vmem:[#allocation4 + $0x90] sm:$0xff]
      %v3079 = vld [vmem:[#allocation4 + $0x98] sm:$0xff]
      %v3080 = vld [vmem:[#allocation4 + $0xa0] sm:$0xff]
      %v3081 = vld [vmem:[#allocation4 + $0xa8] sm:$0xff]
      %v3082 = vld [vmem:[#allocation4 + $0xb0] sm:$0xff]
      %v3083 = vld [vmem:[#allocation4 + $0xb8] sm:$0xff]
      %v3084 = vld [vmem:[#allocation4 + $0xc0] sm:$0xff]
      %v3085 = vld [vmem:[#allocation4 + $0xc8] sm:$0xff]
      %v3086 = vld [vmem:[#allocation4 + $0xd0] sm:$0xff]
      %v3087 = vld [vmem:[#allocation4 + $0xd8] sm:$0xff]
      %v3088 = vld [vmem:[#allocation4 + $0xe0] sm:$0xff]
      %v3089 = vld [vmem:[#allocation4 + $0xe8] sm:$0xff]
      %v3090 = vld [vmem:[#allocation4 + $0xf0] sm:$0xff]
      %v3091 = vld [vmem:[#allocation4 + $0xf8] sm:$0xff]
      %3092 = vmatprep.subr.mxu0 0.0
      %3093 = vmatpush1.xpose.msra.mxu0 0.0
      %3094 = vmatprep.subr.mxu0 0.0
      %3095 = vmatpush1.xpose.msra.mxu0 0.0
      %3096 = vmatprep.subr.mxu0 0.0
      %3097 = vmatpush1.xpose.msra.mxu0 0.0
      %3098 = vmatprep.subr.mxu0 0.0
      %3099 = vmatpush1.xpose.msra.mxu0 0.0
      %3100 = vmatprep.subr.mxu0 0.0
      %3101 = vmatpush1.xpose.msra.mxu0 0.0
      %3102 = vmatprep.subr.mxu0 0.0
      %3103 = vmatpush1.xpose.msra.mxu0 0.0
      %3104 = vmatprep.subr.mxu0 0.0
      %3105 = vmatpush1.xpose.msra.mxu0 0.0
      %3106 = vmatprep.subr.mxu0 0.0
      %3107 = vmatpush1.xpose.msra.mxu0 0.0
      %3108 = vmatprep.subr.mxu0 0.0
      %3109 = vmatpush1.xpose.msra.mxu0 0.0
      %3110 = vmatprep.subr.mxu0 0.0
      %3111 = vmatpush1.xpose.msra.mxu0 0.0
      %3112 = vmatprep.subr.mxu0 0.0
      %3113 = vmatpush1.xpose.msra.mxu0 0.0
      %3114 = vmatprep.subr.mxu0 0.0
      %3115 = vmatpush1.xpose.msra.mxu0 0.0
      %3116 = vmatprep.subr.mxu0 0.0
      %3117 = vmatpush1.xpose.msra.mxu0 0.0
      %3118 = vmatprep.subr.mxu0 0.0
      %3119 = vmatpush1.xpose.msra.mxu0 0.0
      %3120 = vmatprep.subr.mxu0 0.0
      %3121 = vmatpush1.xpose.msra.mxu0 %v3061
      %3122 = vmatprep.subr.mxu0 0.0
      %3123 = vmatpush1.xpose.msra.mxu0 %v3060
      %3124 = vmatprep.subr.mxu0 0.0
      %3125 = vmatpush2.xpose.msra.mxu0 0.0
      %3126 = vmatprep.subr.mxu0 0.0
      %3127 = vmatpush2.xpose.msra.mxu0 0.0
      %3128 = vmatprep.subr.mxu0 0.0
      %3129 = vmatpush2.xpose.msra.mxu0 0.0
      %3130 = vmatprep.subr.mxu0 0.0
      %3131 = vmatpush2.xpose.msra.mxu0 0.0
      %3132 = vmatprep.subr.mxu0 0.0
      %3133 = vmatpush2.xpose.msra.mxu0 0.0
      %3134 = vmatprep.subr.mxu0 0.0
      %3135 = vmatpush2.xpose.msra.mxu0 0.0
      %3136 = vmatprep.subr.mxu0 0.0
      %3137 = vmatpush2.xpose.msra.mxu0 0.0
      %3138 = vmatprep.subr.mxu0 0.0
      %3139 = vmatpush2.xpose.msra.mxu0 0.0
      %3140 = vmatprep.subr.mxu0 0.0
      %3141 = vmatpush2.xpose.msra.mxu0 0.0
      %3142 = vmatprep.subr.mxu0 0.0
      %3143 = vmatpush2.xpose.msra.mxu0 0.0
      %3144 = vmatprep.subr.mxu0 0.0
      %3145 = vmatpush2.xpose.msra.mxu0 0.0
      %3146 = vmatprep.subr.mxu0 0.0
      %3147 = vmatpush2.xpose.msra.mxu0 0.0
      %3148 = vmatprep.subr.mxu0 0.0
      %3149 = vmatpush2.xpose.msra.mxu0 0.0
      %3150 = vmatprep.subr.mxu0 0.0
      %3151 = vmatpush2.xpose.msra.mxu0 0.0
      %3152 = vmatprep.subr.mxu0 0.0
      %3153 = vmatpush2.xpose.msra.mxu0 0.0
      %3154 = vmatprep.subr.mxu0 0.0
      %3155 = vmatpush2.xpose.msra.mxu0 0.0
      %3156 = vmatprep.mubr.f32.mxu0 0.0
      %3157 = vmatmul.mubr.f32.gmra.mxu0 %v2916
      %v3158 = vpop.f32.mrf.mxu0
      %v3159 = vadd.f32 0.0, %v3158
      %v3160 = vpop.f32.mrf.mxu0
      %3161 = vdwg.mxu0
      %3162 = vmatprep.subr.mxu0 0.0
      %3163 = vmatpush1.xpose.msra.mxu0 0.0
      %3164 = vmatprep.subr.mxu0 0.0
      %3165 = vmatpush1.xpose.msra.mxu0 0.0
      %3166 = vmatprep.subr.mxu0 0.0
      %3167 = vmatpush1.xpose.msra.mxu0 0.0
      %3168 = vmatprep.subr.mxu0 0.0
      %3169 = vmatpush1.xpose.msra.mxu0 0.0
      %3170 = vmatprep.subr.mxu0 0.0
      %3171 = vmatpush1.xpose.msra.mxu0 0.0
      %3172 = vmatprep.subr.mxu0 0.0
      %3173 = vmatpush1.xpose.msra.mxu0 0.0
      %3174 = vmatprep.subr.mxu0 0.0
      %3175 = vmatpush1.xpose.msra.mxu0 0.0
      %3176 = vmatprep.subr.mxu0 0.0
      %3177 = vmatpush1.xpose.msra.mxu0 0.0
      %3178 = vmatprep.subr.mxu0 0.0
      %3179 = vmatpush1.xpose.msra.mxu0 0.0
      %3180 = vmatprep.subr.mxu0 0.0
      %3181 = vmatpush1.xpose.msra.mxu0 0.0
      %3182 = vmatprep.subr.mxu0 0.0
      %3183 = vmatpush1.xpose.msra.mxu0 0.0
      %3184 = vmatprep.subr.mxu0 0.0
      %3185 = vmatpush1.xpose.msra.mxu0 0.0
      %3186 = vmatprep.subr.mxu0 0.0
      %3187 = vmatpush1.xpose.msra.mxu0 0.0
      %3188 = vmatprep.subr.mxu0 0.0
      %3189 = vmatpush1.xpose.msra.mxu0 0.0
      %3190 = vmatprep.subr.mxu0 0.0
      %3191 = vmatpush1.xpose.msra.mxu0 %v3063
      %3192 = vmatprep.subr.mxu0 0.0
      %3193 = vmatpush1.xpose.msra.mxu0 %v3062
      %3194 = vmatprep.subr.mxu0 0.0
      %3195 = vmatpush2.xpose.msra.mxu0 0.0
      %3196 = vmatprep.subr.mxu0 0.0
      %3197 = vmatpush2.xpose.msra.mxu0 0.0
      %3198 = vmatprep.subr.mxu0 0.0
      %3199 = vmatpush2.xpose.msra.mxu0 0.0
      %3200 = vmatprep.subr.mxu0 0.0
      %3201 = vmatpush2.xpose.msra.mxu0 0.0
      %3202 = vmatprep.subr.mxu0 0.0
      %3203 = vmatpush2.xpose.msra.mxu0 0.0
      %3204 = vmatprep.subr.mxu0 0.0
      %3205 = vmatpush2.xpose.msra.mxu0 0.0
      %3206 = vmatprep.subr.mxu0 0.0
      %3207 = vmatpush2.xpose.msra.mxu0 0.0
      %3208 = vmatprep.subr.mxu0 0.0
      %3209 = vmatpush2.xpose.msra.mxu0 0.0
      %3210 = vmatprep.subr.mxu0 0.0
      %3211 = vmatpush2.xpose.msra.mxu0 0.0
      %3212 = vmatprep.subr.mxu0 0.0
      %3213 = vmatpush2.xpose.msra.mxu0 0.0
      %3214 = vmatprep.subr.mxu0 0.0
      %3215 = vmatpush2.xpose.msra.mxu0 0.0
      %3216 = vmatprep.subr.mxu0 0.0
      %3217 = vmatpush2.xpose.msra.mxu0 0.0
      %3218 = vmatprep.subr.mxu0 0.0
      %3219 = vmatpush2.xpose.msra.mxu0 0.0
      %3220 = vmatprep.subr.mxu0 0.0
      %3221 = vmatpush2.xpose.msra.mxu0 0.0
      %3222 = vmatprep.subr.mxu0 0.0
      %3223 = vmatpush2.xpose.msra.mxu0 0.0
      %3224 = vmatprep.subr.mxu0 0.0
      %3225 = vmatpush2.xpose.msra.mxu0 0.0
      %3226 = vmatprep.mubr.f32.mxu0 0.0
      %3227 = vmatmul.mubr.f32.gmra.mxu0 %v2917
      %v3228 = vpop.f32.mrf.mxu0
      %v3229 = vadd.f32 0.0, %v3228
      %v3230 = vpop.f32.mrf.mxu0
      %3231 = vdwg.mxu0
      %3232 = vmatprep.subr.mxu0 0.0
      %3233 = vmatpush1.xpose.msra.mxu0 0.0
      %3234 = vmatprep.subr.mxu0 0.0
      %3235 = vmatpush1.xpose.msra.mxu0 0.0
      %3236 = vmatprep.subr.mxu0 0.0
      %3237 = vmatpush1.xpose.msra.mxu0 0.0
      %3238 = vmatprep.subr.mxu0 0.0
      %3239 = vmatpush1.xpose.msra.mxu0 0.0
      %3240 = vmatprep.subr.mxu0 0.0
      %3241 = vmatpush1.xpose.msra.mxu0 0.0
      %3242 = vmatprep.subr.mxu0 0.0
      %3243 = vmatpush1.xpose.msra.mxu0 0.0
      %3244 = vmatprep.subr.mxu0 0.0
      %3245 = vmatpush1.xpose.msra.mxu0 0.0
      %3246 = vmatprep.subr.mxu0 0.0
      %3247 = vmatpush1.xpose.msra.mxu0 0.0
      %3248 = vmatprep.subr.mxu0 0.0
      %3249 = vmatpush1.xpose.msra.mxu0 0.0
      %3250 = vmatprep.subr.mxu0 0.0
      %3251 = vmatpush1.xpose.msra.mxu0 0.0
      %3252 = vmatprep.subr.mxu0 0.0
      %3253 = vmatpush1.xpose.msra.mxu0 0.0
      %3254 = vmatprep.subr.mxu0 0.0
      %3255 = vmatpush1.xpose.msra.mxu0 0.0
      %3256 = vmatprep.subr.mxu0 0.0
      %3257 = vmatpush1.xpose.msra.mxu0 0.0
      %3258 = vmatprep.subr.mxu0 0.0
      %3259 = vmatpush1.xpose.msra.mxu0 0.0
      %3260 = vmatprep.subr.mxu0 0.0
      %3261 = vmatpush1.xpose.msra.mxu0 %v3065
      %3262 = vmatprep.subr.mxu0 0.0
      %3263 = vmatpush1.xpose.msra.mxu0 %v3064
      %3264 = vmatprep.subr.mxu0 0.0
      %3265 = vmatpush2.xpose.msra.mxu0 0.0
      %3266 = vmatprep.subr.mxu0 0.0
      %3267 = vmatpush2.xpose.msra.mxu0 0.0
      %3268 = vmatprep.subr.mxu0 0.0
      %3269 = vmatpush2.xpose.msra.mxu0 0.0
      %3270 = vmatprep.subr.mxu0 0.0
      %3271 = vmatpush2.xpose.msra.mxu0 0.0
      %3272 = vmatprep.subr.mxu0 0.0
      %3273 = vmatpush2.xpose.msra.mxu0 0.0
      %3274 = vmatprep.subr.mxu0 0.0
      %3275 = vmatpush2.xpose.msra.mxu0 0.0
      %3276 = vmatprep.subr.mxu0 0.0
      %3277 = vmatpush2.xpose.msra.mxu0 0.0
      %3278 = vmatprep.subr.mxu0 0.0
      %3279 = vmatpush2.xpose.msra.mxu0 0.0
      %3280 = vmatprep.subr.mxu0 0.0
      %3281 = vmatpush2.xpose.msra.mxu0 0.0
      %3282 = vmatprep.subr.mxu0 0.0
      %3283 = vmatpush2.xpose.msra.mxu0 0.0
      %3284 = vmatprep.subr.mxu0 0.0
      %3285 = vmatpush2.xpose.msra.mxu0 0.0
      %3286 = vmatprep.subr.mxu0 0.0
      %3287 = vmatpush2.xpose.msra.mxu0 0.0
      %3288 = vmatprep.subr.mxu0 0.0
      %3289 = vmatpush2.xpose.msra.mxu0 0.0
      %3290 = vmatprep.subr.mxu0 0.0
      %3291 = vmatpush2.xpose.msra.mxu0 0.0
      %3292 = vmatprep.subr.mxu0 0.0
      %3293 = vmatpush2.xpose.msra.mxu0 0.0
      %3294 = vmatprep.subr.mxu0 0.0
      %3295 = vmatpush2.xpose.msra.mxu0 0.0
      %3296 = vmatprep.mubr.f32.mxu0 0.0
      %3297 = vmatmul.mubr.f32.gmra.mxu0 %v2918
      %v3298 = vpop.f32.mrf.mxu0
      %v3299 = vadd.f32 0.0, %v3298
      %v3300 = vpop.f32.mrf.mxu0
      %3301 = vdwg.mxu0
      %3302 = vmatprep.subr.mxu0 0.0
      %3303 = vmatpush1.xpose.msra.mxu0 0.0
      %3304 = vmatprep.subr.mxu0 0.0
      %3305 = vmatpush1.xpose.msra.mxu0 0.0
      %3306 = vmatprep.subr.mxu0 0.0
      %3307 = vmatpush1.xpose.msra.mxu0 0.0
      %3308 = vmatprep.subr.mxu0 0.0
      %3309 = vmatpush1.xpose.msra.mxu0 0.0
      %3310 = vmatprep.subr.mxu0 0.0
      %3311 = vmatpush1.xpose.msra.mxu0 0.0
      %3312 = vmatprep.subr.mxu0 0.0
      %3313 = vmatpush1.xpose.msra.mxu0 0.0
      %3314 = vmatprep.subr.mxu0 0.0
      %3315 = vmatpush1.xpose.msra.mxu0 0.0
      %3316 = vmatprep.subr.mxu0 0.0
      %3317 = vmatpush1.xpose.msra.mxu0 0.0
      %3318 = vmatprep.subr.mxu0 0.0
      %3319 = vmatpush1.xpose.msra.mxu0 0.0
      %3320 = vmatprep.subr.mxu0 0.0
      %3321 = vmatpush1.xpose.msra.mxu0 0.0
      %3322 = vmatprep.subr.mxu0 0.0
      %3323 = vmatpush1.xpose.msra.mxu0 0.0
      %3324 = vmatprep.subr.mxu0 0.0
      %3325 = vmatpush1.xpose.msra.mxu0 0.0
      %3326 = vmatprep.subr.mxu0 0.0
      %3327 = vmatpush1.xpose.msra.mxu0 0.0
      %3328 = vmatprep.subr.mxu0 0.0
      %3329 = vmatpush1.xpose.msra.mxu0 0.0
      %3330 = vmatprep.subr.mxu0 0.0
      %3331 = vmatpush1.xpose.msra.mxu0 %v3067
      %3332 = vmatprep.subr.mxu0 0.0
      %3333 = vmatpush1.xpose.msra.mxu0 %v3066
      %3334 = vmatprep.subr.mxu0 0.0
      %3335 = vmatpush2.xpose.msra.mxu0 0.0
      %3336 = vmatprep.subr.mxu0 0.0
      %3337 = vmatpush2.xpose.msra.mxu0 0.0
      %3338 = vmatprep.subr.mxu0 0.0
      %3339 = vmatpush2.xpose.msra.mxu0 0.0
      %3340 = vmatprep.subr.mxu0 0.0
      %3341 = vmatpush2.xpose.msra.mxu0 0.0
      %3342 = vmatprep.subr.mxu0 0.0
      %3343 = vmatpush2.xpose.msra.mxu0 0.0
      %3344 = vmatprep.subr.mxu0 0.0
      %3345 = vmatpush2.xpose.msra.mxu0 0.0
      %3346 = vmatprep.subr.mxu0 0.0
      %3347 = vmatpush2.xpose.msra.mxu0 0.0
      %3348 = vmatprep.subr.mxu0 0.0
      %3349 = vmatpush2.xpose.msra.mxu0 0.0
      %3350 = vmatprep.subr.mxu0 0.0
      %3351 = vmatpush2.xpose.msra.mxu0 0.0
      %3352 = vmatprep.subr.mxu0 0.0
      %3353 = vmatpush2.xpose.msra.mxu0 0.0
      %3354 = vmatprep.subr.mxu0 0.0
      %3355 = vmatpush2.xpose.msra.mxu0 0.0
      %3356 = vmatprep.subr.mxu0 0.0
      %3357 = vmatpush2.xpose.msra.mxu0 0.0
      %3358 = vmatprep.subr.mxu0 0.0
      %3359 = vmatpush2.xpose.msra.mxu0 0.0
      %3360 = vmatprep.subr.mxu0 0.0
      %3361 = vmatpush2.xpose.msra.mxu0 0.0
      %3362 = vmatprep.subr.mxu0 0.0
      %3363 = vmatpush2.xpose.msra.mxu0 0.0
      %3364 = vmatprep.subr.mxu0 0.0
      %3365 = vmatpush2.xpose.msra.mxu0 0.0
      %3366 = vmatprep.mubr.f32.mxu0 0.0
      %3367 = vmatmul.mubr.f32.gmra.mxu0 %v2919
      %v3368 = vpop.f32.mrf.mxu0
      %v3369 = vadd.f32 0.0, %v3368
      %v3370 = vpop.f32.mrf.mxu0
      %3371 = vdwg.mxu0
      %3372 = vmatprep.subr.mxu0 0.0
      %3373 = vmatpush1.xpose.msra.mxu0 0.0
      %3374 = vmatprep.subr.mxu0 0.0
      %3375 = vmatpush1.xpose.msra.mxu0 0.0
      %3376 = vmatprep.subr.mxu0 0.0
      %3377 = vmatpush1.xpose.msra.mxu0 0.0
      %3378 = vmatprep.subr.mxu0 0.0
      %3379 = vmatpush1.xpose.msra.mxu0 0.0
      %3380 = vmatprep.subr.mxu0 0.0
      %3381 = vmatpush1.xpose.msra.mxu0 0.0
      %3382 = vmatprep.subr.mxu0 0.0
      %3383 = vmatpush1.xpose.msra.mxu0 0.0
      %3384 = vmatprep.subr.mxu0 0.0
      %3385 = vmatpush1.xpose.msra.mxu0 0.0
      %3386 = vmatprep.subr.mxu0 0.0
      %3387 = vmatpush1.xpose.msra.mxu0 0.0
      %3388 = vmatprep.subr.mxu0 0.0
      %3389 = vmatpush1.xpose.msra.mxu0 0.0
      %3390 = vmatprep.subr.mxu0 0.0
      %3391 = vmatpush1.xpose.msra.mxu0 0.0
      %3392 = vmatprep.subr.mxu0 0.0
      %3393 = vmatpush1.xpose.msra.mxu0 0.0
      %3394 = vmatprep.subr.mxu0 0.0
      %3395 = vmatpush1.xpose.msra.mxu0 0.0
      %3396 = vmatprep.subr.mxu0 0.0
      %3397 = vmatpush1.xpose.msra.mxu0 0.0
      %3398 = vmatprep.subr.mxu0 0.0
      %3399 = vmatpush1.xpose.msra.mxu0 0.0
      %3400 = vmatprep.subr.mxu0 0.0
      %3401 = vmatpush1.xpose.msra.mxu0 %v3069
      %3402 = vmatprep.subr.mxu0 0.0
      %3403 = vmatpush1.xpose.msra.mxu0 %v3068
      %3404 = vmatprep.subr.mxu0 0.0
      %3405 = vmatpush2.xpose.msra.mxu0 0.0
      %3406 = vmatprep.subr.mxu0 0.0
      %3407 = vmatpush2.xpose.msra.mxu0 0.0
      %3408 = vmatprep.subr.mxu0 0.0
      %3409 = vmatpush2.xpose.msra.mxu0 0.0
      %3410 = vmatprep.subr.mxu0 0.0
      %3411 = vmatpush2.xpose.msra.mxu0 0.0
      %3412 = vmatprep.subr.mxu0 0.0
      %3413 = vmatpush2.xpose.msra.mxu0 0.0
      %3414 = vmatprep.subr.mxu0 0.0
      %3415 = vmatpush2.xpose.msra.mxu0 0.0
      %3416 = vmatprep.subr.mxu0 0.0
      %3417 = vmatpush2.xpose.msra.mxu0 0.0
      %3418 = vmatprep.subr.mxu0 0.0
      %3419 = vmatpush2.xpose.msra.mxu0 0.0
      %3420 = vmatprep.subr.mxu0 0.0
      %3421 = vmatpush2.xpose.msra.mxu0 0.0
      %3422 = vmatprep.subr.mxu0 0.0
      %3423 = vmatpush2.xpose.msra.mxu0 0.0
      %3424 = vmatprep.subr.mxu0 0.0
      %3425 = vmatpush2.xpose.msra.mxu0 0.0
      %3426 = vmatprep.subr.mxu0 0.0
      %3427 = vmatpush2.xpose.msra.mxu0 0.0
      %3428 = vmatprep.subr.mxu0 0.0
      %3429 = vmatpush2.xpose.msra.mxu0 0.0
      %3430 = vmatprep.subr.mxu0 0.0
      %3431 = vmatpush2.xpose.msra.mxu0 0.0
      %3432 = vmatprep.subr.mxu0 0.0
      %3433 = vmatpush2.xpose.msra.mxu0 0.0
      %3434 = vmatprep.subr.mxu0 0.0
      %3435 = vmatpush2.xpose.msra.mxu0 0.0
      %3436 = vmatprep.mubr.f32.mxu0 0.0
      %3437 = vmatmul.mubr.f32.gmra.mxu0 %v2920
      %v3438 = vpop.f32.mrf.mxu0
      %v3439 = vadd.f32 0.0, %v3438
      %v3440 = vpop.f32.mrf.mxu0
      %3441 = vdwg.mxu0
      %3442 = vmatprep.subr.mxu0 0.0
      %3443 = vmatpush1.xpose.msra.mxu0 0.0
      %3444 = vmatprep.subr.mxu0 0.0
      %3445 = vmatpush1.xpose.msra.mxu0 0.0
      %3446 = vmatprep.subr.mxu0 0.0
      %3447 = vmatpush1.xpose.msra.mxu0 0.0
      %3448 = vmatprep.subr.mxu0 0.0
      %3449 = vmatpush1.xpose.msra.mxu0 0.0
      %3450 = vmatprep.subr.mxu0 0.0
      %3451 = vmatpush1.xpose.msra.mxu0 0.0
      %3452 = vmatprep.subr.mxu0 0.0
      %3453 = vmatpush1.xpose.msra.mxu0 0.0
      %3454 = vmatprep.subr.mxu0 0.0
      %3455 = vmatpush1.xpose.msra.mxu0 0.0
      %3456 = vmatprep.subr.mxu0 0.0
      %3457 = vmatpush1.xpose.msra.mxu0 0.0
      %3458 = vmatprep.subr.mxu0 0.0
      %3459 = vmatpush1.xpose.msra.mxu0 0.0
      %3460 = vmatprep.subr.mxu0 0.0
      %3461 = vmatpush1.xpose.msra.mxu0 0.0
      %3462 = vmatprep.subr.mxu0 0.0
      %3463 = vmatpush1.xpose.msra.mxu0 0.0
      %3464 = vmatprep.subr.mxu0 0.0
      %3465 = vmatpush1.xpose.msra.mxu0 0.0
      %3466 = vmatprep.subr.mxu0 0.0
      %3467 = vmatpush1.xpose.msra.mxu0 0.0
      %3468 = vmatprep.subr.mxu0 0.0
      %3469 = vmatpush1.xpose.msra.mxu0 0.0
      %3470 = vmatprep.subr.mxu0 0.0
      %3471 = vmatpush1.xpose.msra.mxu0 %v3071
      %3472 = vmatprep.subr.mxu0 0.0
      %3473 = vmatpush1.xpose.msra.mxu0 %v3070
      %3474 = vmatprep.subr.mxu0 0.0
      %3475 = vmatpush2.xpose.msra.mxu0 0.0
      %3476 = vmatprep.subr.mxu0 0.0
      %3477 = vmatpush2.xpose.msra.mxu0 0.0
      %3478 = vmatprep.subr.mxu0 0.0
      %3479 = vmatpush2.xpose.msra.mxu0 0.0
      %3480 = vmatprep.subr.mxu0 0.0
      %3481 = vmatpush2.xpose.msra.mxu0 0.0
      %3482 = vmatprep.subr.mxu0 0.0
      %3483 = vmatpush2.xpose.msra.mxu0 0.0
      %3484 = vmatprep.subr.mxu0 0.0
      %3485 = vmatpush2.xpose.msra.mxu0 0.0
      %3486 = vmatprep.subr.mxu0 0.0
      %3487 = vmatpush2.xpose.msra.mxu0 0.0
      %3488 = vmatprep.subr.mxu0 0.0
      %3489 = vmatpush2.xpose.msra.mxu0 0.0
      %3490 = vmatprep.subr.mxu0 0.0
      %3491 = vmatpush2.xpose.msra.mxu0 0.0
      %3492 = vmatprep.subr.mxu0 0.0
      %3493 = vmatpush2.xpose.msra.mxu0 0.0
      %3494 = vmatprep.subr.mxu0 0.0
      %3495 = vmatpush2.xpose.msra.mxu0 0.0
      %3496 = vmatprep.subr.mxu0 0.0
      %3497 = vmatpush2.xpose.msra.mxu0 0.0
      %3498 = vmatprep.subr.mxu0 0.0
      %3499 = vmatpush2.xpose.msra.mxu0 0.0
      %3500 = vmatprep.subr.mxu0 0.0
      %3501 = vmatpush2.xpose.msra.mxu0 0.0
      %3502 = vmatprep.subr.mxu0 0.0
      %3503 = vmatpush2.xpose.msra.mxu0 0.0
      %3504 = vmatprep.subr.mxu0 0.0
      %3505 = vmatpush2.xpose.msra.mxu0 0.0
      %3506 = vmatprep.mubr.f32.mxu0 0.0
      %3507 = vmatmul.mubr.f32.gmra.mxu0 %v2921
      %v3508 = vpop.f32.mrf.mxu0
      %v3509 = vadd.f32 0.0, %v3508
      %v3510 = vpop.f32.mrf.mxu0
      %3511 = vdwg.mxu0
      %3512 = vmatprep.subr.mxu0 0.0
      %3513 = vmatpush1.xpose.msra.mxu0 0.0
      %3514 = vmatprep.subr.mxu0 0.0
      %3515 = vmatpush1.xpose.msra.mxu0 0.0
      %3516 = vmatprep.subr.mxu0 0.0
      %3517 = vmatpush1.xpose.msra.mxu0 0.0
      %3518 = vmatprep.subr.mxu0 0.0
      %3519 = vmatpush1.xpose.msra.mxu0 0.0
      %3520 = vmatprep.subr.mxu0 0.0
      %3521 = vmatpush1.xpose.msra.mxu0 0.0
      %3522 = vmatprep.subr.mxu0 0.0
      %3523 = vmatpush1.xpose.msra.mxu0 0.0
      %3524 = vmatprep.subr.mxu0 0.0
      %3525 = vmatpush1.xpose.msra.mxu0 0.0
      %3526 = vmatprep.subr.mxu0 0.0
      %3527 = vmatpush1.xpose.msra.mxu0 0.0
      %3528 = vmatprep.subr.mxu0 0.0
      %3529 = vmatpush1.xpose.msra.mxu0 0.0
      %3530 = vmatprep.subr.mxu0 0.0
      %3531 = vmatpush1.xpose.msra.mxu0 0.0
      %3532 = vmatprep.subr.mxu0 0.0
      %3533 = vmatpush1.xpose.msra.mxu0 0.0
      %3534 = vmatprep.subr.mxu0 0.0
      %3535 = vmatpush1.xpose.msra.mxu0 0.0
      %3536 = vmatprep.subr.mxu0 0.0
      %3537 = vmatpush1.xpose.msra.mxu0 0.0
      %3538 = vmatprep.subr.mxu0 0.0
      %3539 = vmatpush1.xpose.msra.mxu0 0.0
      %3540 = vmatprep.subr.mxu0 0.0
      %3541 = vmatpush1.xpose.msra.mxu0 %v3073
      %3542 = vmatprep.subr.mxu0 0.0
      %3543 = vmatpush1.xpose.msra.mxu0 %v3072
      %3544 = vmatprep.subr.mxu0 0.0
      %3545 = vmatpush2.xpose.msra.mxu0 0.0
      %3546 = vmatprep.subr.mxu0 0.0
      %3547 = vmatpush2.xpose.msra.mxu0 0.0
      %3548 = vmatprep.subr.mxu0 0.0
      %3549 = vmatpush2.xpose.msra.mxu0 0.0
      %3550 = vmatprep.subr.mxu0 0.0
      %3551 = vmatpush2.xpose.msra.mxu0 0.0
      %3552 = vmatprep.subr.mxu0 0.0
      %3553 = vmatpush2.xpose.msra.mxu0 0.0
      %3554 = vmatprep.subr.mxu0 0.0
      %3555 = vmatpush2.xpose.msra.mxu0 0.0
      %3556 = vmatprep.subr.mxu0 0.0
      %3557 = vmatpush2.xpose.msra.mxu0 0.0
      %3558 = vmatprep.subr.mxu0 0.0
      %3559 = vmatpush2.xpose.msra.mxu0 0.0
      %3560 = vmatprep.subr.mxu0 0.0
      %3561 = vmatpush2.xpose.msra.mxu0 0.0
      %3562 = vmatprep.subr.mxu0 0.0
      %3563 = vmatpush2.xpose.msra.mxu0 0.0
      %3564 = vmatprep.subr.mxu0 0.0
      %3565 = vmatpush2.xpose.msra.mxu0 0.0
      %3566 = vmatprep.subr.mxu0 0.0
      %3567 = vmatpush2.xpose.msra.mxu0 0.0
      %3568 = vmatprep.subr.mxu0 0.0
      %3569 = vmatpush2.xpose.msra.mxu0 0.0
      %3570 = vmatprep.subr.mxu0 0.0
      %3571 = vmatpush2.xpose.msra.mxu0 0.0
      %3572 = vmatprep.subr.mxu0 0.0
      %3573 = vmatpush2.xpose.msra.mxu0 0.0
      %3574 = vmatprep.subr.mxu0 0.0
      %3575 = vmatpush2.xpose.msra.mxu0 0.0
      %3576 = vmatprep.mubr.f32.mxu0 0.0
      %3577 = vmatmul.mubr.f32.gmra.mxu0 %v2922
      %v3578 = vpop.f32.mrf.mxu0
      %v3579 = vadd.f32 0.0, %v3578
      %v3580 = vpop.f32.mrf.mxu0
      %3581 = vdwg.mxu0
      %3582 = vmatprep.subr.mxu0 0.0
      %3583 = vmatpush1.xpose.msra.mxu0 0.0
      %3584 = vmatprep.subr.mxu0 0.0
      %3585 = vmatpush1.xpose.msra.mxu0 0.0
      %3586 = vmatprep.subr.mxu0 0.0
      %3587 = vmatpush1.xpose.msra.mxu0 0.0
      %3588 = vmatprep.subr.mxu0 0.0
      %3589 = vmatpush1.xpose.msra.mxu0 0.0
      %3590 = vmatprep.subr.mxu0 0.0
      %3591 = vmatpush1.xpose.msra.mxu0 0.0
      %3592 = vmatprep.subr.mxu0 0.0
      %3593 = vmatpush1.xpose.msra.mxu0 0.0
      %3594 = vmatprep.subr.mxu0 0.0
      %3595 = vmatpush1.xpose.msra.mxu0 0.0
      %3596 = vmatprep.subr.mxu0 0.0
      %3597 = vmatpush1.xpose.msra.mxu0 0.0
      %3598 = vmatprep.subr.mxu0 0.0
      %3599 = vmatpush1.xpose.msra.mxu0 0.0
      %3600 = vmatprep.subr.mxu0 0.0
      %3601 = vmatpush1.xpose.msra.mxu0 0.0
      %3602 = vmatprep.subr.mxu0 0.0
      %3603 = vmatpush1.xpose.msra.mxu0 0.0
      %3604 = vmatprep.subr.mxu0 0.0
      %3605 = vmatpush1.xpose.msra.mxu0 0.0
      %3606 = vmatprep.subr.mxu0 0.0
      %3607 = vmatpush1.xpose.msra.mxu0 0.0
      %3608 = vmatprep.subr.mxu0 0.0
      %3609 = vmatpush1.xpose.msra.mxu0 0.0
      %3610 = vmatprep.subr.mxu0 0.0
      %3611 = vmatpush1.xpose.msra.mxu0 %v3075
      %3612 = vmatprep.subr.mxu0 0.0
      %3613 = vmatpush1.xpose.msra.mxu0 %v3074
      %3614 = vmatprep.subr.mxu0 0.0
      %3615 = vmatpush2.xpose.msra.mxu0 0.0
      %3616 = vmatprep.subr.mxu0 0.0
      %3617 = vmatpush2.xpose.msra.mxu0 0.0
      %3618 = vmatprep.subr.mxu0 0.0
      %3619 = vmatpush2.xpose.msra.mxu0 0.0
      %3620 = vmatprep.subr.mxu0 0.0
      %3621 = vmatpush2.xpose.msra.mxu0 0.0
      %3622 = vmatprep.subr.mxu0 0.0
      %3623 = vmatpush2.xpose.msra.mxu0 0.0
      %3624 = vmatprep.subr.mxu0 0.0
      %3625 = vmatpush2.xpose.msra.mxu0 0.0
      %3626 = vmatprep.subr.mxu0 0.0
      %3627 = vmatpush2.xpose.msra.mxu0 0.0
      %3628 = vmatprep.subr.mxu0 0.0
      %3629 = vmatpush2.xpose.msra.mxu0 0.0
      %3630 = vmatprep.subr.mxu0 0.0
      %3631 = vmatpush2.xpose.msra.mxu0 0.0
      %3632 = vmatprep.subr.mxu0 0.0
      %3633 = vmatpush2.xpose.msra.mxu0 0.0
      %3634 = vmatprep.subr.mxu0 0.0
      %3635 = vmatpush2.xpose.msra.mxu0 0.0
      %3636 = vmatprep.subr.mxu0 0.0
      %3637 = vmatpush2.xpose.msra.mxu0 0.0
      %3638 = vmatprep.subr.mxu0 0.0
      %3639 = vmatpush2.xpose.msra.mxu0 0.0
      %3640 = vmatprep.subr.mxu0 0.0
      %3641 = vmatpush2.xpose.msra.mxu0 0.0
      %3642 = vmatprep.subr.mxu0 0.0
      %3643 = vmatpush2.xpose.msra.mxu0 0.0
      %3644 = vmatprep.subr.mxu0 0.0
      %3645 = vmatpush2.xpose.msra.mxu0 0.0
      %3646 = vmatprep.mubr.f32.mxu0 0.0
      %3647 = vmatmul.mubr.f32.gmra.mxu0 %v2923
      %v3648 = vpop.f32.mrf.mxu0
      %v3649 = vadd.f32 0.0, %v3648
      %v3650 = vpop.f32.mrf.mxu0
      %3651 = vdwg.mxu0
      %3652 = vmatprep.subr.mxu0 0.0
      %3653 = vmatpush1.xpose.msra.mxu0 0.0
      %3654 = vmatprep.subr.mxu0 0.0
      %3655 = vmatpush1.xpose.msra.mxu0 0.0
      %3656 = vmatprep.subr.mxu0 0.0
      %3657 = vmatpush1.xpose.msra.mxu0 0.0
      %3658 = vmatprep.subr.mxu0 0.0
      %3659 = vmatpush1.xpose.msra.mxu0 0.0
      %3660 = vmatprep.subr.mxu0 0.0
      %3661 = vmatpush1.xpose.msra.mxu0 0.0
      %3662 = vmatprep.subr.mxu0 0.0
      %3663 = vmatpush1.xpose.msra.mxu0 0.0
      %3664 = vmatprep.subr.mxu0 0.0
      %3665 = vmatpush1.xpose.msra.mxu0 0.0
      %3666 = vmatprep.subr.mxu0 0.0
      %3667 = vmatpush1.xpose.msra.mxu0 0.0
      %3668 = vmatprep.subr.mxu0 0.0
      %3669 = vmatpush1.xpose.msra.mxu0 0.0
      %3670 = vmatprep.subr.mxu0 0.0
      %3671 = vmatpush1.xpose.msra.mxu0 0.0
      %3672 = vmatprep.subr.mxu0 0.0
      %3673 = vmatpush1.xpose.msra.mxu0 0.0
      %3674 = vmatprep.subr.mxu0 0.0
      %3675 = vmatpush1.xpose.msra.mxu0 0.0
      %3676 = vmatprep.subr.mxu0 0.0
      %3677 = vmatpush1.xpose.msra.mxu0 0.0
      %3678 = vmatprep.subr.mxu0 0.0
      %3679 = vmatpush1.xpose.msra.mxu0 0.0
      %3680 = vmatprep.subr.mxu0 0.0
      %3681 = vmatpush1.xpose.msra.mxu0 %v3077
      %3682 = vmatprep.subr.mxu0 0.0
      %3683 = vmatpush1.xpose.msra.mxu0 %v3076
      %3684 = vmatprep.subr.mxu0 0.0
      %3685 = vmatpush2.xpose.msra.mxu0 0.0
      %3686 = vmatprep.subr.mxu0 0.0
      %3687 = vmatpush2.xpose.msra.mxu0 0.0
      %3688 = vmatprep.subr.mxu0 0.0
      %3689 = vmatpush2.xpose.msra.mxu0 0.0
      %3690 = vmatprep.subr.mxu0 0.0
      %3691 = vmatpush2.xpose.msra.mxu0 0.0
      %3692 = vmatprep.subr.mxu0 0.0
      %3693 = vmatpush2.xpose.msra.mxu0 0.0
      %3694 = vmatprep.subr.mxu0 0.0
      %3695 = vmatpush2.xpose.msra.mxu0 0.0
      %3696 = vmatprep.subr.mxu0 0.0
      %3697 = vmatpush2.xpose.msra.mxu0 0.0
      %3698 = vmatprep.subr.mxu0 0.0
      %3699 = vmatpush2.xpose.msra.mxu0 0.0
      %3700 = vmatprep.subr.mxu0 0.0
      %3701 = vmatpush2.xpose.msra.mxu0 0.0
      %3702 = vmatprep.subr.mxu0 0.0
      %3703 = vmatpush2.xpose.msra.mxu0 0.0
      %3704 = vmatprep.subr.mxu0 0.0
      %3705 = vmatpush2.xpose.msra.mxu0 0.0
      %3706 = vmatprep.subr.mxu0 0.0
      %3707 = vmatpush2.xpose.msra.mxu0 0.0
      %3708 = vmatprep.subr.mxu0 0.0
      %3709 = vmatpush2.xpose.msra.mxu0 0.0
      %3710 = vmatprep.subr.mxu0 0.0
      %3711 = vmatpush2.xpose.msra.mxu0 0.0
      %3712 = vmatprep.subr.mxu0 0.0
      %3713 = vmatpush2.xpose.msra.mxu0 0.0
      %3714 = vmatprep.subr.mxu0 0.0
      %3715 = vmatpush2.xpose.msra.mxu0 0.0
      %3716 = vmatprep.mubr.f32.mxu0 0.0
      %3717 = vmatmul.mubr.f32.gmra.mxu0 %v3052
      %v3718 = vpop.f32.mrf.mxu0
      %v3719 = vadd.f32 0.0, %v3718
      %v3720 = vpop.f32.mrf.mxu0
      %3721 = vdwg.mxu0
      %3722 = vmatprep.subr.mxu0 0.0
      %3723 = vmatpush1.xpose.msra.mxu0 0.0
      %3724 = vmatprep.subr.mxu0 0.0
      %3725 = vmatpush1.xpose.msra.mxu0 0.0
      %3726 = vmatprep.subr.mxu0 0.0
      %3727 = vmatpush1.xpose.msra.mxu0 0.0
      %3728 = vmatprep.subr.mxu0 0.0
      %3729 = vmatpush1.xpose.msra.mxu0 0.0
      %3730 = vmatprep.subr.mxu0 0.0
      %3731 = vmatpush1.xpose.msra.mxu0 0.0
      %3732 = vmatprep.subr.mxu0 0.0
      %3733 = vmatpush1.xpose.msra.mxu0 0.0
      %3734 = vmatprep.subr.mxu0 0.0
      %3735 = vmatpush1.xpose.msra.mxu0 0.0
      %3736 = vmatprep.subr.mxu0 0.0
      %3737 = vmatpush1.xpose.msra.mxu0 0.0
      %3738 = vmatprep.subr.mxu0 0.0
      %3739 = vmatpush1.xpose.msra.mxu0 0.0
      %3740 = vmatprep.subr.mxu0 0.0
      %3741 = vmatpush1.xpose.msra.mxu0 0.0
      %3742 = vmatprep.subr.mxu0 0.0
      %3743 = vmatpush1.xpose.msra.mxu0 0.0
      %3744 = vmatprep.subr.mxu0 0.0
      %3745 = vmatpush1.xpose.msra.mxu0 0.0
      %3746 = vmatprep.subr.mxu0 0.0
      %3747 = vmatpush1.xpose.msra.mxu0 0.0
      %3748 = vmatprep.subr.mxu0 0.0
      %3749 = vmatpush1.xpose.msra.mxu0 0.0
      %3750 = vmatprep.subr.mxu0 0.0
      %3751 = vmatpush1.xpose.msra.mxu0 %v3079
      %3752 = vmatprep.subr.mxu0 0.0
      %3753 = vmatpush1.xpose.msra.mxu0 %v3078
      %3754 = vmatprep.subr.mxu0 0.0
      %3755 = vmatpush2.xpose.msra.mxu0 0.0
      %3756 = vmatprep.subr.mxu0 0.0
      %3757 = vmatpush2.xpose.msra.mxu0 0.0
      %3758 = vmatprep.subr.mxu0 0.0
      %3759 = vmatpush2.xpose.msra.mxu0 0.0
      %3760 = vmatprep.subr.mxu0 0.0
      %3761 = vmatpush2.xpose.msra.mxu0 0.0
      %3762 = vmatprep.subr.mxu0 0.0
      %3763 = vmatpush2.xpose.msra.mxu0 0.0
      %3764 = vmatprep.subr.mxu0 0.0
      %3765 = vmatpush2.xpose.msra.mxu0 0.0
      %3766 = vmatprep.subr.mxu0 0.0
      %3767 = vmatpush2.xpose.msra.mxu0 0.0
      %3768 = vmatprep.subr.mxu0 0.0
      %3769 = vmatpush2.xpose.msra.mxu0 0.0
      %3770 = vmatprep.subr.mxu0 0.0
      %3771 = vmatpush2.xpose.msra.mxu0 0.0
      %3772 = vmatprep.subr.mxu0 0.0
      %3773 = vmatpush2.xpose.msra.mxu0 0.0
      %3774 = vmatprep.subr.mxu0 0.0
      %3775 = vmatpush2.xpose.msra.mxu0 0.0
      %3776 = vmatprep.subr.mxu0 0.0
      %3777 = vmatpush2.xpose.msra.mxu0 0.0
      %3778 = vmatprep.subr.mxu0 0.0
      %3779 = vmatpush2.xpose.msra.mxu0 0.0
      %3780 = vmatprep.subr.mxu0 0.0
      %3781 = vmatpush2.xpose.msra.mxu0 0.0
      %3782 = vmatprep.subr.mxu0 0.0
      %3783 = vmatpush2.xpose.msra.mxu0 0.0
      %3784 = vmatprep.subr.mxu0 0.0
      %3785 = vmatpush2.xpose.msra.mxu0 0.0
      %3786 = vmatprep.mubr.f32.mxu0 0.0
      %3787 = vmatmul.mubr.f32.gmra.mxu0 %v3053
      %v3788 = vpop.f32.mrf.mxu0
      %v3789 = vadd.f32 0.0, %v3788
      %v3790 = vpop.f32.mrf.mxu0
      %3791 = vdwg.mxu0
      %3792 = vmatprep.subr.mxu0 0.0
      %3793 = vmatpush1.xpose.msra.mxu0 0.0
      %3794 = vmatprep.subr.mxu0 0.0
      %3795 = vmatpush1.xpose.msra.mxu0 0.0
      %3796 = vmatprep.subr.mxu0 0.0
      %3797 = vmatpush1.xpose.msra.mxu0 0.0
      %3798 = vmatprep.subr.mxu0 0.0
      %3799 = vmatpush1.xpose.msra.mxu0 0.0
      %3800 = vmatprep.subr.mxu0 0.0
      %3801 = vmatpush1.xpose.msra.mxu0 0.0
      %3802 = vmatprep.subr.mxu0 0.0
      %3803 = vmatpush1.xpose.msra.mxu0 0.0
      %3804 = vmatprep.subr.mxu0 0.0
      %3805 = vmatpush1.xpose.msra.mxu0 0.0
      %3806 = vmatprep.subr.mxu0 0.0
      %3807 = vmatpush1.xpose.msra.mxu0 0.0
      %3808 = vmatprep.subr.mxu0 0.0
      %3809 = vmatpush1.xpose.msra.mxu0 0.0
      %3810 = vmatprep.subr.mxu0 0.0
      %3811 = vmatpush1.xpose.msra.mxu0 0.0
      %3812 = vmatprep.subr.mxu0 0.0
      %3813 = vmatpush1.xpose.msra.mxu0 0.0
      %3814 = vmatprep.subr.mxu0 0.0
      %3815 = vmatpush1.xpose.msra.mxu0 0.0
      %3816 = vmatprep.subr.mxu0 0.0
      %3817 = vmatpush1.xpose.msra.mxu0 0.0
      %3818 = vmatprep.subr.mxu0 0.0
      %3819 = vmatpush1.xpose.msra.mxu0 0.0
      %3820 = vmatprep.subr.mxu0 0.0
      %3821 = vmatpush1.xpose.msra.mxu0 %v3081
      %3822 = vmatprep.subr.mxu0 0.0
      %3823 = vmatpush1.xpose.msra.mxu0 %v3080
      %3824 = vmatprep.subr.mxu0 0.0
      %3825 = vmatpush2.xpose.msra.mxu0 0.0
      %3826 = vmatprep.subr.mxu0 0.0
      %3827 = vmatpush2.xpose.msra.mxu0 0.0
      %3828 = vmatprep.subr.mxu0 0.0
      %3829 = vmatpush2.xpose.msra.mxu0 0.0
      %3830 = vmatprep.subr.mxu0 0.0
      %3831 = vmatpush2.xpose.msra.mxu0 0.0
      %3832 = vmatprep.subr.mxu0 0.0
      %3833 = vmatpush2.xpose.msra.mxu0 0.0
      %3834 = vmatprep.subr.mxu0 0.0
      %3835 = vmatpush2.xpose.msra.mxu0 0.0
      %3836 = vmatprep.subr.mxu0 0.0
      %3837 = vmatpush2.xpose.msra.mxu0 0.0
      %3838 = vmatprep.subr.mxu0 0.0
      %3839 = vmatpush2.xpose.msra.mxu0 0.0
      %3840 = vmatprep.subr.mxu0 0.0
      %3841 = vmatpush2.xpose.msra.mxu0 0.0
      %3842 = vmatprep.subr.mxu0 0.0
      %3843 = vmatpush2.xpose.msra.mxu0 0.0
      %3844 = vmatprep.subr.mxu0 0.0
      %3845 = vmatpush2.xpose.msra.mxu0 0.0
      %3846 = vmatprep.subr.mxu0 0.0
      %3847 = vmatpush2.xpose.msra.mxu0 0.0
      %3848 = vmatprep.subr.mxu0 0.0
      %3849 = vmatpush2.xpose.msra.mxu0 0.0
      %3850 = vmatprep.subr.mxu0 0.0
      %3851 = vmatpush2.xpose.msra.mxu0 0.0
      %3852 = vmatprep.subr.mxu0 0.0
      %3853 = vmatpush2.xpose.msra.mxu0 0.0
      %3854 = vmatprep.subr.mxu0 0.0
      %3855 = vmatpush2.xpose.msra.mxu0 0.0
      %3856 = vmatprep.mubr.f32.mxu0 0.0
      %3857 = vmatmul.mubr.f32.gmra.mxu0 %v3054
      %v3858 = vpop.f32.mrf.mxu0
      %v3859 = vadd.f32 0.0, %v3858
      %v3860 = vpop.f32.mrf.mxu0
      %3861 = vdwg.mxu0
      %3862 = vmatprep.subr.mxu0 0.0
      %3863 = vmatpush1.xpose.msra.mxu0 0.0
      %3864 = vmatprep.subr.mxu0 0.0
      %3865 = vmatpush1.xpose.msra.mxu0 0.0
      %3866 = vmatprep.subr.mxu0 0.0
      %3867 = vmatpush1.xpose.msra.mxu0 0.0
      %3868 = vmatprep.subr.mxu0 0.0
      %3869 = vmatpush1.xpose.msra.mxu0 0.0
      %3870 = vmatprep.subr.mxu0 0.0
      %3871 = vmatpush1.xpose.msra.mxu0 0.0
      %3872 = vmatprep.subr.mxu0 0.0
      %3873 = vmatpush1.xpose.msra.mxu0 0.0
      %3874 = vmatprep.subr.mxu0 0.0
      %3875 = vmatpush1.xpose.msra.mxu0 0.0
      %3876 = vmatprep.subr.mxu0 0.0
      %3877 = vmatpush1.xpose.msra.mxu0 0.0
      %3878 = vmatprep.subr.mxu0 0.0
      %3879 = vmatpush1.xpose.msra.mxu0 0.0
      %3880 = vmatprep.subr.mxu0 0.0
      %3881 = vmatpush1.xpose.msra.mxu0 0.0
      %3882 = vmatprep.subr.mxu0 0.0
      %3883 = vmatpush1.xpose.msra.mxu0 0.0
      %3884 = vmatprep.subr.mxu0 0.0
      %3885 = vmatpush1.xpose.msra.mxu0 0.0
      %3886 = vmatprep.subr.mxu0 0.0
      %3887 = vmatpush1.xpose.msra.mxu0 0.0
      %3888 = vmatprep.subr.mxu0 0.0
      %3889 = vmatpush1.xpose.msra.mxu0 0.0
      %3890 = vmatprep.subr.mxu0 0.0
      %3891 = vmatpush1.xpose.msra.mxu0 %v3083
      %3892 = vmatprep.subr.mxu0 0.0
      %3893 = vmatpush1.xpose.msra.mxu0 %v3082
      %3894 = vmatprep.subr.mxu0 0.0
      %3895 = vmatpush2.xpose.msra.mxu0 0.0
      %3896 = vmatprep.subr.mxu0 0.0
      %3897 = vmatpush2.xpose.msra.mxu0 0.0
      %3898 = vmatprep.subr.mxu0 0.0
      %3899 = vmatpush2.xpose.msra.mxu0 0.0
      %3900 = vmatprep.subr.mxu0 0.0
      %3901 = vmatpush2.xpose.msra.mxu0 0.0
      %3902 = vmatprep.subr.mxu0 0.0
      %3903 = vmatpush2.xpose.msra.mxu0 0.0
      %3904 = vmatprep.subr.mxu0 0.0
      %3905 = vmatpush2.xpose.msra.mxu0 0.0
      %3906 = vmatprep.subr.mxu0 0.0
      %3907 = vmatpush2.xpose.msra.mxu0 0.0
      %3908 = vmatprep.subr.mxu0 0.0
      %3909 = vmatpush2.xpose.msra.mxu0 0.0
      %3910 = vmatprep.subr.mxu0 0.0
      %3911 = vmatpush2.xpose.msra.mxu0 0.0
      %3912 = vmatprep.subr.mxu0 0.0
      %3913 = vmatpush2.xpose.msra.mxu0 0.0
      %3914 = vmatprep.subr.mxu0 0.0
      %3915 = vmatpush2.xpose.msra.mxu0 0.0
      %3916 = vmatprep.subr.mxu0 0.0
      %3917 = vmatpush2.xpose.msra.mxu0 0.0
      %3918 = vmatprep.subr.mxu0 0.0
      %3919 = vmatpush2.xpose.msra.mxu0 0.0
      %3920 = vmatprep.subr.mxu0 0.0
      %3921 = vmatpush2.xpose.msra.mxu0 0.0
      %3922 = vmatprep.subr.mxu0 0.0
      %3923 = vmatpush2.xpose.msra.mxu0 0.0
      %3924 = vmatprep.subr.mxu0 0.0
      %3925 = vmatpush2.xpose.msra.mxu0 0.0
      %3926 = vmatprep.mubr.f32.mxu0 0.0
      %3927 = vmatmul.mubr.f32.gmra.mxu0 %v3055
      %v3928 = vpop.f32.mrf.mxu0
      %v3929 = vadd.f32 0.0, %v3928
      %v3930 = vpop.f32.mrf.mxu0
      %3931 = vdwg.mxu0
      %3932 = vmatprep.subr.mxu0 0.0
      %3933 = vmatpush1.xpose.msra.mxu0 0.0
      %3934 = vmatprep.subr.mxu0 0.0
      %3935 = vmatpush1.xpose.msra.mxu0 0.0
      %3936 = vmatprep.subr.mxu0 0.0
      %3937 = vmatpush1.xpose.msra.mxu0 0.0
      %3938 = vmatprep.subr.mxu0 0.0
      %3939 = vmatpush1.xpose.msra.mxu0 0.0
      %3940 = vmatprep.subr.mxu0 0.0
      %3941 = vmatpush1.xpose.msra.mxu0 0.0
      %3942 = vmatprep.subr.mxu0 0.0
      %3943 = vmatpush1.xpose.msra.mxu0 0.0
      %3944 = vmatprep.subr.mxu0 0.0
      %3945 = vmatpush1.xpose.msra.mxu0 0.0
      %3946 = vmatprep.subr.mxu0 0.0
      %3947 = vmatpush1.xpose.msra.mxu0 0.0
      %3948 = vmatprep.subr.mxu0 0.0
      %3949 = vmatpush1.xpose.msra.mxu0 0.0
      %3950 = vmatprep.subr.mxu0 0.0
      %3951 = vmatpush1.xpose.msra.mxu0 0.0
      %3952 = vmatprep.subr.mxu0 0.0
      %3953 = vmatpush1.xpose.msra.mxu0 0.0
      %3954 = vmatprep.subr.mxu0 0.0
      %3955 = vmatpush1.xpose.msra.mxu0 0.0
      %3956 = vmatprep.subr.mxu0 0.0
      %3957 = vmatpush1.xpose.msra.mxu0 0.0
      %3958 = vmatprep.subr.mxu0 0.0
      %3959 = vmatpush1.xpose.msra.mxu0 0.0
      %3960 = vmatprep.subr.mxu0 0.0
      %3961 = vmatpush1.xpose.msra.mxu0 %v3085
      %3962 = vmatprep.subr.mxu0 0.0
      %3963 = vmatpush1.xpose.msra.mxu0 %v3084
      %3964 = vmatprep.subr.mxu0 0.0
      %3965 = vmatpush2.xpose.msra.mxu0 0.0
      %3966 = vmatprep.subr.mxu0 0.0
      %3967 = vmatpush2.xpose.msra.mxu0 0.0
      %3968 = vmatprep.subr.mxu0 0.0
      %3969 = vmatpush2.xpose.msra.mxu0 0.0
      %3970 = vmatprep.subr.mxu0 0.0
      %3971 = vmatpush2.xpose.msra.mxu0 0.0
      %3972 = vmatprep.subr.mxu0 0.0
      %3973 = vmatpush2.xpose.msra.mxu0 0.0
      %3974 = vmatprep.subr.mxu0 0.0
      %3975 = vmatpush2.xpose.msra.mxu0 0.0
      %3976 = vmatprep.subr.mxu0 0.0
      %3977 = vmatpush2.xpose.msra.mxu0 0.0
      %3978 = vmatprep.subr.mxu0 0.0
      %3979 = vmatpush2.xpose.msra.mxu0 0.0
      %3980 = vmatprep.subr.mxu0 0.0
      %3981 = vmatpush2.xpose.msra.mxu0 0.0
      %3982 = vmatprep.subr.mxu0 0.0
      %3983 = vmatpush2.xpose.msra.mxu0 0.0
      %3984 = vmatprep.subr.mxu0 0.0
      %3985 = vmatpush2.xpose.msra.mxu0 0.0
      %3986 = vmatprep.subr.mxu0 0.0
      %3987 = vmatpush2.xpose.msra.mxu0 0.0
      %3988 = vmatprep.subr.mxu0 0.0
      %3989 = vmatpush2.xpose.msra.mxu0 0.0
      %3990 = vmatprep.subr.mxu0 0.0
      %3991 = vmatpush2.xpose.msra.mxu0 0.0
      %3992 = vmatprep.subr.mxu0 0.0
      %3993 = vmatpush2.xpose.msra.mxu0 0.0
      %3994 = vmatprep.subr.mxu0 0.0
      %3995 = vmatpush2.xpose.msra.mxu0 0.0
      %3996 = vmatprep.mubr.f32.mxu0 0.0
      %3997 = vmatmul.mubr.f32.gmra.mxu0 %v3056
      %v3998 = vpop.f32.mrf.mxu0
      %v3999 = vadd.f32 0.0, %v3998
      %v4000 = vpop.f32.mrf.mxu0
      %4001 = vdwg.mxu0
      %4002 = vmatprep.subr.mxu0 0.0
      %4003 = vmatpush1.xpose.msra.mxu0 0.0
      %4004 = vmatprep.subr.mxu0 0.0
      %4005 = vmatpush1.xpose.msra.mxu0 0.0
      %4006 = vmatprep.subr.mxu0 0.0
      %4007 = vmatpush1.xpose.msra.mxu0 0.0
      %4008 = vmatprep.subr.mxu0 0.0
      %4009 = vmatpush1.xpose.msra.mxu0 0.0
      %4010 = vmatprep.subr.mxu0 0.0
      %4011 = vmatpush1.xpose.msra.mxu0 0.0
      %4012 = vmatprep.subr.mxu0 0.0
      %4013 = vmatpush1.xpose.msra.mxu0 0.0
      %4014 = vmatprep.subr.mxu0 0.0
      %4015 = vmatpush1.xpose.msra.mxu0 0.0
      %4016 = vmatprep.subr.mxu0 0.0
      %4017 = vmatpush1.xpose.msra.mxu0 0.0
      %4018 = vmatprep.subr.mxu0 0.0
      %4019 = vmatpush1.xpose.msra.mxu0 0.0
      %4020 = vmatprep.subr.mxu0 0.0
      %4021 = vmatpush1.xpose.msra.mxu0 0.0
      %4022 = vmatprep.subr.mxu0 0.0
      %4023 = vmatpush1.xpose.msra.mxu0 0.0
      %4024 = vmatprep.subr.mxu0 0.0
      %4025 = vmatpush1.xpose.msra.mxu0 0.0
      %4026 = vmatprep.subr.mxu0 0.0
      %4027 = vmatpush1.xpose.msra.mxu0 0.0
      %4028 = vmatprep.subr.mxu0 0.0
      %4029 = vmatpush1.xpose.msra.mxu0 0.0
      %4030 = vmatprep.subr.mxu0 0.0
      %4031 = vmatpush1.xpose.msra.mxu0 %v3087
      %4032 = vmatprep.subr.mxu0 0.0
      %4033 = vmatpush1.xpose.msra.mxu0 %v3086
      %4034 = vmatprep.subr.mxu0 0.0
      %4035 = vmatpush2.xpose.msra.mxu0 0.0
      %4036 = vmatprep.subr.mxu0 0.0
      %4037 = vmatpush2.xpose.msra.mxu0 0.0
      %4038 = vmatprep.subr.mxu0 0.0
      %4039 = vmatpush2.xpose.msra.mxu0 0.0
      %4040 = vmatprep.subr.mxu0 0.0
      %4041 = vmatpush2.xpose.msra.mxu0 0.0
      %4042 = vmatprep.subr.mxu0 0.0
      %4043 = vmatpush2.xpose.msra.mxu0 0.0
      %4044 = vmatprep.subr.mxu0 0.0
      %4045 = vmatpush2.xpose.msra.mxu0 0.0
      %4046 = vmatprep.subr.mxu0 0.0
      %4047 = vmatpush2.xpose.msra.mxu0 0.0
      %4048 = vmatprep.subr.mxu0 0.0
      %4049 = vmatpush2.xpose.msra.mxu0 0.0
      %4050 = vmatprep.subr.mxu0 0.0
      %4051 = vmatpush2.xpose.msra.mxu0 0.0
      %4052 = vmatprep.subr.mxu0 0.0
      %4053 = vmatpush2.xpose.msra.mxu0 0.0
      %4054 = vmatprep.subr.mxu0 0.0
      %4055 = vmatpush2.xpose.msra.mxu0 0.0
      %4056 = vmatprep.subr.mxu0 0.0
      %4057 = vmatpush2.xpose.msra.mxu0 0.0
      %4058 = vmatprep.subr.mxu0 0.0
      %4059 = vmatpush2.xpose.msra.mxu0 0.0
      %4060 = vmatprep.subr.mxu0 0.0
      %4061 = vmatpush2.xpose.msra.mxu0 0.0
      %4062 = vmatprep.subr.mxu0 0.0
      %4063 = vmatpush2.xpose.msra.mxu0 0.0
      %4064 = vmatprep.subr.mxu0 0.0
      %4065 = vmatpush2.xpose.msra.mxu0 0.0
      %4066 = vmatprep.mubr.f32.mxu0 0.0
      %4067 = vmatmul.mubr.f32.gmra.mxu0 %v3057
      %v4068 = vpop.f32.mrf.mxu0
      %v4069 = vadd.f32 0.0, %v4068
      %v4070 = vpop.f32.mrf.mxu0
      %4071 = vdwg.mxu0
      %4072 = vmatprep.subr.mxu0 0.0
      %4073 = vmatpush1.xpose.msra.mxu0 0.0
      %4074 = vmatprep.subr.mxu0 0.0
      %4075 = vmatpush1.xpose.msra.mxu0 0.0
      %4076 = vmatprep.subr.mxu0 0.0
      %4077 = vmatpush1.xpose.msra.mxu0 0.0
      %4078 = vmatprep.subr.mxu0 0.0
      %4079 = vmatpush1.xpose.msra.mxu0 0.0
      %4080 = vmatprep.subr.mxu0 0.0
      %4081 = vmatpush1.xpose.msra.mxu0 0.0
      %4082 = vmatprep.subr.mxu0 0.0
      %4083 = vmatpush1.xpose.msra.mxu0 0.0
      %4084 = vmatprep.subr.mxu0 0.0
      %4085 = vmatpush1.xpose.msra.mxu0 0.0
      %4086 = vmatprep.subr.mxu0 0.0
      %4087 = vmatpush1.xpose.msra.mxu0 0.0
      %4088 = vmatprep.subr.mxu0 0.0
      %4089 = vmatpush1.xpose.msra.mxu0 0.0
      %4090 = vmatprep.subr.mxu0 0.0
      %4091 = vmatpush1.xpose.msra.mxu0 0.0
      %4092 = vmatprep.subr.mxu0 0.0
      %4093 = vmatpush1.xpose.msra.mxu0 0.0
      %4094 = vmatprep.subr.mxu0 0.0
      %4095 = vmatpush1.xpose.msra.mxu0 0.0
      %4096 = vmatprep.subr.mxu0 0.0
      %4097 = vmatpush1.xpose.msra.mxu0 0.0
      %4098 = vmatprep.subr.mxu0 0.0
      %4099 = vmatpush1.xpose.msra.mxu0 0.0
      %4100 = vmatprep.subr.mxu0 0.0
      %4101 = vmatpush1.xpose.msra.mxu0 %v3089
      %4102 = vmatprep.subr.mxu0 0.0
      %4103 = vmatpush1.xpose.msra.mxu0 %v3088
      %4104 = vmatprep.subr.mxu0 0.0
      %4105 = vmatpush2.xpose.msra.mxu0 0.0
      %4106 = vmatprep.subr.mxu0 0.0
      %4107 = vmatpush2.xpose.msra.mxu0 0.0
      %4108 = vmatprep.subr.mxu0 0.0
      %4109 = vmatpush2.xpose.msra.mxu0 0.0
      %4110 = vmatprep.subr.mxu0 0.0
      %4111 = vmatpush2.xpose.msra.mxu0 0.0
      %4112 = vmatprep.subr.mxu0 0.0
      %4113 = vmatpush2.xpose.msra.mxu0 0.0
      %4114 = vmatprep.subr.mxu0 0.0
      %4115 = vmatpush2.xpose.msra.mxu0 0.0
      %4116 = vmatprep.subr.mxu0 0.0
      %4117 = vmatpush2.xpose.msra.mxu0 0.0
      %4118 = vmatprep.subr.mxu0 0.0
      %4119 = vmatpush2.xpose.msra.mxu0 0.0
      %4120 = vmatprep.subr.mxu0 0.0
      %4121 = vmatpush2.xpose.msra.mxu0 0.0
      %4122 = vmatprep.subr.mxu0 0.0
      %4123 = vmatpush2.xpose.msra.mxu0 0.0
      %4124 = vmatprep.subr.mxu0 0.0
      %4125 = vmatpush2.xpose.msra.mxu0 0.0
      %4126 = vmatprep.subr.mxu0 0.0
      %4127 = vmatpush2.xpose.msra.mxu0 0.0
      %4128 = vmatprep.subr.mxu0 0.0
      %4129 = vmatpush2.xpose.msra.mxu0 0.0
      %4130 = vmatprep.subr.mxu0 0.0
      %4131 = vmatpush2.xpose.msra.mxu0 0.0
      %4132 = vmatprep.subr.mxu0 0.0
      %4133 = vmatpush2.xpose.msra.mxu0 0.0
      %4134 = vmatprep.subr.mxu0 0.0
      %4135 = vmatpush2.xpose.msra.mxu0 0.0
      %4136 = vmatprep.mubr.f32.mxu0 0.0
      %4137 = vmatmul.mubr.f32.gmra.mxu0 %v3058
      %v4138 = vpop.f32.mrf.mxu0
      %v4139 = vadd.f32 0.0, %v4138
      %v4140 = vpop.f32.mrf.mxu0
      %4141 = vdwg.mxu0
      %4142 = vmatprep.subr.mxu0 0.0
      %4143 = vmatpush1.xpose.msra.mxu0 0.0
      %4144 = vmatprep.subr.mxu0 0.0
      %4145 = vmatpush1.xpose.msra.mxu0 0.0
      %4146 = vmatprep.subr.mxu0 0.0
      %4147 = vmatpush1.xpose.msra.mxu0 0.0
      %4148 = vmatprep.subr.mxu0 0.0
      %4149 = vmatpush1.xpose.msra.mxu0 0.0
      %4150 = vmatprep.subr.mxu0 0.0
      %4151 = vmatpush1.xpose.msra.mxu0 0.0
      %4152 = vmatprep.subr.mxu0 0.0
      %4153 = vmatpush1.xpose.msra.mxu0 0.0
      %4154 = vmatprep.subr.mxu0 0.0
      %4155 = vmatpush1.xpose.msra.mxu0 0.0
      %4156 = vmatprep.subr.mxu0 0.0
      %4157 = vmatpush1.xpose.msra.mxu0 0.0
      %4158 = vmatprep.subr.mxu0 0.0
      %4159 = vmatpush1.xpose.msra.mxu0 0.0
      %4160 = vmatprep.subr.mxu0 0.0
      %4161 = vmatpush1.xpose.msra.mxu0 0.0
      %4162 = vmatprep.subr.mxu0 0.0
      %4163 = vmatpush1.xpose.msra.mxu0 0.0
      %4164 = vmatprep.subr.mxu0 0.0
      %4165 = vmatpush1.xpose.msra.mxu0 0.0
      %4166 = vmatprep.subr.mxu0 0.0
      %4167 = vmatpush1.xpose.msra.mxu0 0.0
      %4168 = vmatprep.subr.mxu0 0.0
      %4169 = vmatpush1.xpose.msra.mxu0 0.0
      %4170 = vmatprep.subr.mxu0 0.0
      %4171 = vmatpush1.xpose.msra.mxu0 %v3091
      %4172 = vmatprep.subr.mxu0 0.0
      %4173 = vmatpush1.xpose.msra.mxu0 %v3090
      %4174 = vmatprep.subr.mxu0 0.0
      %4175 = vmatpush2.xpose.msra.mxu0 0.0
      %4176 = vmatprep.subr.mxu0 0.0
      %4177 = vmatpush2.xpose.msra.mxu0 0.0
      %4178 = vmatprep.subr.mxu0 0.0
      %4179 = vmatpush2.xpose.msra.mxu0 0.0
      %4180 = vmatprep.subr.mxu0 0.0
      %4181 = vmatpush2.xpose.msra.mxu0 0.0
      %4182 = vmatprep.subr.mxu0 0.0
      %4183 = vmatpush2.xpose.msra.mxu0 0.0
      %4184 = vmatprep.subr.mxu0 0.0
      %4185 = vmatpush2.xpose.msra.mxu0 0.0
      %4186 = vmatprep.subr.mxu0 0.0
      %4187 = vmatpush2.xpose.msra.mxu0 0.0
      %4188 = vmatprep.subr.mxu0 0.0
      %4189 = vmatpush2.xpose.msra.mxu0 0.0
      %4190 = vmatprep.subr.mxu0 0.0
      %4191 = vmatpush2.xpose.msra.mxu0 0.0
      %4192 = vmatprep.subr.mxu0 0.0
      %4193 = vmatpush2.xpose.msra.mxu0 0.0
      %4194 = vmatprep.subr.mxu0 0.0
      %4195 = vmatpush2.xpose.msra.mxu0 0.0
      %4196 = vmatprep.subr.mxu0 0.0
      %4197 = vmatpush2.xpose.msra.mxu0 0.0
      %4198 = vmatprep.subr.mxu0 0.0
      %4199 = vmatpush2.xpose.msra.mxu0 0.0
      %4200 = vmatprep.subr.mxu0 0.0
      %4201 = vmatpush2.xpose.msra.mxu0 0.0
      %4202 = vmatprep.subr.mxu0 0.0
      %4203 = vmatpush2.xpose.msra.mxu0 0.0
      %4204 = vmatprep.subr.mxu0 0.0
      %4205 = vmatpush2.xpose.msra.mxu0 0.0
      %4206 = vmatprep.mubr.f32.mxu0 0.0
      %4207 = vmatmul.mubr.f32.gmra.mxu0 %v3059
      %v4208 = vpop.f32.mrf.mxu0
      %v4209 = vadd.f32 0.0, %v4208
      %v4210 = vpop.f32.mrf.mxu0
      %4211 = vdwg.mxu0
      %v4212 = vlaneseq
      %v4213 = vshrl.u32 %v4212, 7
      %v4214 = vstv %s2135
      %v4215 = vadd.s32 %v4213, %v4214
      %v4216 = vlaneseq
      %v4217 = vand.u32 %v4216, 127
      %vm4218 = vcmp.eq.s32.totalorder %v4215, %v4217
      %v4219 = vsel %vm4218, 1, 0
      %vm4220 = vcmp.eq.s32.totalorder %v4219, 1
      %v4221 = vsel %vm4220, -1e+30, %v3159
      %v4222 = vsel %vm4220, -1e+30, %v3229
      %v4223 = vsel %vm4220, -1e+30, %v3299
      %v4224 = vsel %vm4220, -1e+30, %v3369
      %v4225 = vsel %vm4220, -1e+30, %v3439
      %v4226 = vsel %vm4220, -1e+30, %v3509
      %v4227 = vsel %vm4220, -1e+30, %v3579
      %v4228 = vsel %vm4220, -1e+30, %v3649
      %v4229 = vsel %vm4220, -1e+30, %v3719
      %v4230 = vsel %vm4220, -1e+30, %v3789
      %v4231 = vsel %vm4220, -1e+30, %v3859
      %v4232 = vsel %vm4220, -1e+30, %v3929
      %v4233 = vsel %vm4220, -1e+30, %v3999
      %v4234 = vsel %vm4220, -1e+30, %v4069
      %v4235 = vsel %vm4220, -1e+30, %v4139
      %v4236 = vsel %vm4220, -1e+30, %v4209
      %vm4237 = vcmask 130048
      %v4238 = vsel %vm4237, %v2255, -inf
      %4239 = vmax.xlane.f32.xlu0 %v4238
      %v4240 = vpop.xlane.xlu0 %4239
      %v4241 = vsel %vm4237, %v2260, -inf
      %4242 = vmax.xlane.f32.xlu0 %v4241
      %v4243 = vpop.xlane.xlu0 %4242
      %v4244 = vsel %vm4237, %v2330, -inf
      %4245 = vmax.xlane.f32.xlu0 %v4244
      %v4246 = vpop.xlane.xlu0 %4245
      %v4247 = vsel %vm4237, %v2335, -inf
      %4248 = vmax.xlane.f32.xlu0 %v4247
      %v4249 = vpop.xlane.xlu0 %4248
      %v4250 = vsel %vm4237, %v2405, -inf
      %4251 = vmax.xlane.f32.xlu0 %v4250
      %v4252 = vpop.xlane.xlu0 %4251
      %v4253 = vsel %vm4237, %v2410, -inf
      %4254 = vmax.xlane.f32.xlu0 %v4253
      %v4255 = vpop.xlane.xlu0 %4254
      %v4256 = vsel %vm4237, %v2480, -inf
      %4257 = vmax.xlane.f32.xlu0 %v4256
      %v4258 = vpop.xlane.xlu0 %4257
      %v4259 = vsel %vm4237, %v2485, -inf
      %4260 = vmax.xlane.f32.xlu0 %v4259
      %v4261 = vpop.xlane.xlu0 %4260
      %v4262 = vsel %vm4237, %v2555, -inf
      %4263 = vmax.xlane.f32.xlu0 %v4262
      %v4264 = vpop.xlane.xlu0 %4263
      %v4265 = vsel %vm4237, %v2560, -inf
      %4266 = vmax.xlane.f32.xlu0 %v4265
      %v4267 = vpop.xlane.xlu0 %4266
      %v4268 = vsel %vm4237, %v2630, -inf
      %4269 = vmax.xlane.f32.xlu0 %v4268
      %v4270 = vpop.xlane.xlu0 %4269
      %v4271 = vsel %vm4237, %v2635, -inf
      %4272 = vmax.xlane.f32.xlu0 %v4271
      %v4273 = vpop.xlane.xlu0 %4272
      %v4274 = vsel %vm4237, %v2705, -inf
      %4275 = vmax.xlane.f32.xlu0 %v4274
      %v4276 = vpop.xlane.xlu0 %4275
      %v4277 = vsel %vm4237, %v2710, -inf
      %4278 = vmax.xlane.f32.xlu0 %v4277
      %v4279 = vpop.xlane.xlu0 %4278
      %v4280 = vsel %vm4237, %v2780, -inf
      %4281 = vmax.xlane.f32.xlu0 %v4280
      %v4282 = vpop.xlane.xlu0 %4281
      %v4283 = vsel %vm4237, %v2785, -inf
      %4284 = vmax.xlane.f32.xlu0 %v4283
      %v4285 = vpop.xlane.xlu0 %4284
      %v4286 = vsel %vm4237, %v4221, -inf
      %4287 = vmax.xlane.f32.xlu0 %v4286
      %v4288 = vpop.xlane.xlu0 %4287
      %v4289 = vsel %vm4237, %v4222, -inf
      %4290 = vmax.xlane.f32.xlu0 %v4289
      %v4291 = vpop.xlane.xlu0 %4290
      %v4292 = vsel %vm4237, %v4223, -inf
      %4293 = vmax.xlane.f32.xlu0 %v4292
      %v4294 = vpop.xlane.xlu0 %4293
      %v4295 = vsel %vm4237, %v4224, -inf
      %4296 = vmax.xlane.f32.xlu0 %v4295
      %v4297 = vpop.xlane.xlu0 %4296
      %v4298 = vsel %vm4237, %v4225, -inf
      %4299 = vmax.xlane.f32.xlu0 %v4298
      %v4300 = vpop.xlane.xlu0 %4299
      %v4301 = vsel %vm4237, %v4226, -inf
      %4302 = vmax.xlane.f32.xlu0 %v4301
      %v4303 = vpop.xlane.xlu0 %4302
      %v4304 = vsel %vm4237, %v4227, -inf
      %4305 = vmax.xlane.f32.xlu0 %v4304
      %v4306 = vpop.xlane.xlu0 %4305
      %v4307 = vsel %vm4237, %v4228, -inf
      %4308 = vmax.xlane.f32.xlu0 %v4307
      %v4309 = vpop.xlane.xlu0 %4308
      %v4310 = vsel %vm4237, %v4229, -inf
      %4311 = vmax.xlane.f32.xlu0 %v4310
      %v4312 = vpop.xlane.xlu0 %4311
      %v4313 = vsel %vm4237, %v4230, -inf
      %4314 = vmax.xlane.f32.xlu0 %v4313
      %v4315 = vpop.xlane.xlu0 %4314
      %v4316 = vsel %vm4237, %v4231, -inf
      %4317 = vmax.xlane.f32.xlu0 %v4316
      %v4318 = vpop.xlane.xlu0 %4317
      %v4319 = vsel %vm4237, %v4232, -inf
      %4320 = vmax.xlane.f32.xlu0 %v4319
      %v4321 = vpop.xlane.xlu0 %4320
      %v4322 = vsel %vm4237, %v4233, -inf
      %4323 = vmax.xlane.f32.xlu0 %v4322
      %v4324 = vpop.xlane.xlu0 %4323
      %v4325 = vsel %vm4237, %v4234, -inf
      %4326 = vmax.xlane.f32.xlu0 %v4325
      %v4327 = vpop.xlane.xlu0 %4326
      %v4328 = vsel %vm4237, %v4235, -inf
      %4329 = vmax.xlane.f32.xlu0 %v4328
      %v4330 = vpop.xlane.xlu0 %4329
      %v4331 = vsel %vm4237, %v4236, -inf
      %4332 = vmax.xlane.f32.xlu0 %v4331
      %v4333 = vpop.xlane.xlu0 %4332
      %v4350 = vlaneseq
      %v4351 = vshrl.u32 %v4350, 7
      %v4352 = vsub.s32 %v4217, %v4351
      %v4353 = vrot.slane %v4288, %v4352
      %v4354 = vlaneseq
      %v4355 = vshrl.u32 %v4354, 7
      %v4356 = vsub.s32 %v4217, %v4355
      %v4357 = vrot.slane %v4291, %v4356
      %v4358 = vlaneseq
      %v4359 = vshrl.u32 %v4358, 7
      %v4360 = vsub.s32 %v4217, %v4359
      %v4361 = vrot.slane %v4294, %v4360
      %v4362 = vlaneseq
      %v4363 = vshrl.u32 %v4362, 7
      %v4364 = vsub.s32 %v4217, %v4363
      %v4365 = vrot.slane %v4297, %v4364
      %v4366 = vlaneseq
      %v4367 = vshrl.u32 %v4366, 7
      %v4368 = vsub.s32 %v4217, %v4367
      %v4369 = vrot.slane %v4300, %v4368
      %v4370 = vlaneseq
      %v4371 = vshrl.u32 %v4370, 7
      %v4372 = vsub.s32 %v4217, %v4371
      %v4373 = vrot.slane %v4303, %v4372
      %v4374 = vlaneseq
      %v4375 = vshrl.u32 %v4374, 7
      %v4376 = vsub.s32 %v4217, %v4375
      %v4377 = vrot.slane %v4306, %v4376
      %v4378 = vlaneseq
      %v4379 = vshrl.u32 %v4378, 7
      %v4380 = vsub.s32 %v4217, %v4379
      %v4381 = vrot.slane %v4309, %v4380
      %v4382 = vlaneseq
      %v4383 = vshrl.u32 %v4382, 7
      %v4384 = vsub.s32 %v4217, %v4383
      %v4385 = vrot.slane %v4312, %v4384
      %v4386 = vlaneseq
      %v4387 = vshrl.u32 %v4386, 7
      %v4388 = vsub.s32 %v4217, %v4387
      %v4389 = vrot.slane %v4315, %v4388
      %v4390 = vlaneseq
      %v4391 = vshrl.u32 %v4390, 7
      %v4392 = vsub.s32 %v4217, %v4391
      %v4393 = vrot.slane %v4318, %v4392
      %v4394 = vlaneseq
      %v4395 = vshrl.u32 %v4394, 7
      %v4396 = vsub.s32 %v4217, %v4395
      %v4397 = vrot.slane %v4321, %v4396
      %v4398 = vlaneseq
      %v4399 = vshrl.u32 %v4398, 7
      %v4400 = vsub.s32 %v4217, %v4399
      %v4401 = vrot.slane %v4324, %v4400
      %v4402 = vlaneseq
      %v4403 = vshrl.u32 %v4402, 7
      %v4404 = vsub.s32 %v4217, %v4403
      %v4405 = vrot.slane %v4327, %v4404
      %v4406 = vlaneseq
      %v4407 = vshrl.u32 %v4406, 7
      %v4408 = vsub.s32 %v4217, %v4407
      %v4409 = vrot.slane %v4330, %v4408
      %v4410 = vlaneseq
      %v4411 = vshrl.u32 %v4410, 7
      %v4412 = vsub.s32 %v4217, %v4411
      %v4413 = vrot.slane %v4333, %v4412
      %vm4414 = vcmask 1041409
      %v4415 = vsel %vm4414, %v4357, %v4353
      %vm4416 = vcmask 1042434
      %v4417 = vsel %vm4416, %v4361, %v4415
      %vm4418 = vcmask 1043459
      %v4419 = vsel %vm4418, %v4365, %v4417
      %vm4420 = vcmask 1044484
      %v4421 = vsel %vm4420, %v4369, %v4419
      %vm4422 = vcmask 1045509
      %v4423 = vsel %vm4422, %v4373, %v4421
      %vm4424 = vcmask 1046534
      %v4425 = vsel %vm4424, %v4377, %v4423
      %vm4426 = vcmask 1047559
      %v4427 = vsel %vm4426, %v4381, %v4425
      %v4428 = vsel %vm4414, %v4389, %v4385
      %v4429 = vsel %vm4416, %v4393, %v4428
      %v4430 = vsel %vm4418, %v4397, %v4429
      %v4431 = vsel %vm4420, %v4401, %v4430
      %v4432 = vsel %vm4422, %v4405, %v4431
      %v4433 = vsel %vm4424, %v4409, %v4432
      %v4434 = vsel %vm4426, %v4413, %v4433
      %4437 = vxpose.xlu0.b32.start [1/16] %v4427, 128
      %4438 = vxpose.xlu0.b32.cont [2/16] %v4434, 128
      %4439 = vxpose.xlu0.b32.cont [3/16] 0.0, 128
      %4440 = vxpose.xlu0.b32.cont [4/16] 0.0, 128
      %4441 = vxpose.xlu0.b32.cont [5/16] 0.0, 128
      %4442 = vxpose.xlu0.b32.cont [6/16] 0.0, 128
      %4443 = vxpose.xlu0.b32.cont [7/16] 0.0, 128
      %4444 = vxpose.xlu0.b32.cont [8/16] 0.0, 128
      %4445 = vxpose.xlu0.b32.cont [9/16] 0.0, 128
      %4446 = vxpose.xlu0.b32.cont [10/16] 0.0, 128
      %4447 = vxpose.xlu0.b32.cont [11/16] 0.0, 128
      %4448 = vxpose.xlu0.b32.cont [12/16] 0.0, 128
      %4449 = vxpose.xlu0.b32.cont [13/16] 0.0, 128
      %4450 = vxpose.xlu0.b32.cont [14/16] 0.0, 128
      %4451 = vxpose.xlu0.b32.cont [15/16] 0.0, 128
      %4452 = vxpose.xlu0.b32.end [16/16] 0.0, 128
      %v4453 = vpop.trf.xlu0
      %v4454 = vpop.trf.xlu0
      %v4455 = vpop.trf.xlu0
      %v4456 = vpop.trf.xlu0
      %v4457 = vpop.trf.xlu0
      %v4458 = vpop.trf.xlu0
      %v4459 = vpop.trf.xlu0
      %v4460 = vpop.trf.xlu0
      %v4461 = vpop.trf.xlu0
      %v4462 = vpop.trf.xlu0
      %v4463 = vpop.trf.xlu0
      %v4464 = vpop.trf.xlu0
      %v4465 = vpop.trf.xlu0
      %v4466 = vpop.trf.xlu0
      %v4467 = vpop.trf.xlu0
      %v4468 = vpop.trf.xlu0
      %v4470 = vlaneseq
      %v4471 = vshrl.u32 %v4470, 7
      %v4472 = vsub.s32 0, %v4471
      %v4473 = vrot.slane %v4453, %v4472
      %4475 = vbcast.lane.b32.xlu0 %v4473, 256
      %v4476 = vpop.permute.xlu0 %4475
      %s4478 = sor.u32 256, 8
      %4479 = vbcast.lane.b32.xlu0 %v4473, %s4478
      %v4480 = vpop.permute.xlu0 %4479
      %v4481 = vlaneseq
      %v4482 = vshrl.u32 %v4481, 7
      %v4483 = vsub.s32 1, %v4482
      %v4484 = vrot.slane %v4453, %v4483
      %4486 = vbcast.lane.b32.xlu0 %v4484, 256
      %v4487 = vpop.permute.xlu0 %4486
      %s4489 = sor.u32 256, 8
      %4490 = vbcast.lane.b32.xlu0 %v4484, %s4489
      %v4491 = vpop.permute.xlu0 %4490
      %v4492 = vlaneseq
      %v4493 = vshrl.u32 %v4492, 7
      %v4494 = vsub.s32 2, %v4493
      %v4495 = vrot.slane %v4453, %v4494
      %4497 = vbcast.lane.b32.xlu0 %v4495, 256
      %v4498 = vpop.permute.xlu0 %4497
      %s4500 = sor.u32 256, 8
      %4501 = vbcast.lane.b32.xlu0 %v4495, %s4500
      %v4502 = vpop.permute.xlu0 %4501
      %v4503 = vlaneseq
      %v4504 = vshrl.u32 %v4503, 7
      %v4505 = vsub.s32 3, %v4504
      %v4506 = vrot.slane %v4453, %v4505
      %4508 = vbcast.lane.b32.xlu0 %v4506, 256
      %v4509 = vpop.permute.xlu0 %4508
      %s4511 = sor.u32 256, 8
      %4512 = vbcast.lane.b32.xlu0 %v4506, %s4511
      %v4513 = vpop.permute.xlu0 %4512
      %v4514 = vlaneseq
      %v4515 = vshrl.u32 %v4514, 7
      %v4516 = vsub.s32 4, %v4515
      %v4517 = vrot.slane %v4453, %v4516
      %4519 = vbcast.lane.b32.xlu0 %v4517, 256
      %v4520 = vpop.permute.xlu0 %4519
      %s4522 = sor.u32 256, 8
      %4523 = vbcast.lane.b32.xlu0 %v4517, %s4522
      %v4524 = vpop.permute.xlu0 %4523
      %v4525 = vlaneseq
      %v4526 = vshrl.u32 %v4525, 7
      %v4527 = vsub.s32 5, %v4526
      %v4528 = vrot.slane %v4453, %v4527
      %4530 = vbcast.lane.b32.xlu0 %v4528, 256
      %v4531 = vpop.permute.xlu0 %4530
      %s4533 = sor.u32 256, 8
      %4534 = vbcast.lane.b32.xlu0 %v4528, %s4533
      %v4535 = vpop.permute.xlu0 %4534
      %v4536 = vlaneseq
      %v4537 = vshrl.u32 %v4536, 7
      %v4538 = vsub.s32 6, %v4537
      %v4539 = vrot.slane %v4453, %v4538
      %4541 = vbcast.lane.b32.xlu0 %v4539, 256
      %v4542 = vpop.permute.xlu0 %4541
      %s4544 = sor.u32 256, 8
      %4545 = vbcast.lane.b32.xlu0 %v4539, %s4544
      %v4546 = vpop.permute.xlu0 %4545
      %v4547 = vlaneseq
      %v4548 = vshrl.u32 %v4547, 7
      %v4549 = vsub.s32 7, %v4548
      %v4550 = vrot.slane %v4453, %v4549
      %4552 = vbcast.lane.b32.xlu0 %v4550, 256
      %v4553 = vpop.permute.xlu0 %4552
      %s4555 = sor.u32 256, 8
      %4556 = vbcast.lane.b32.xlu0 %v4550, %s4555
      %v4557 = vpop.permute.xlu0 %4556
      %v4574 = vmax.f32 %v4240, %v4476
      %v4575 = vmax.f32 %v4243, %v4480
      %v4576 = vmax.f32 %v4246, %v4487
      %v4577 = vmax.f32 %v4249, %v4491
      %v4578 = vmax.f32 %v4252, %v4498
      %v4579 = vmax.f32 %v4255, %v4502
      %v4580 = vmax.f32 %v4258, %v4509
      %v4581 = vmax.f32 %v4261, %v4513
      %v4582 = vmax.f32 %v4264, %v4520
      %v4583 = vmax.f32 %v4267, %v4524
      %v4584 = vmax.f32 %v4270, %v4531
      %v4585 = vmax.f32 %v4273, %v4535
      %v4586 = vmax.f32 %v4276, %v4542
      %v4587 = vmax.f32 %v4279, %v4546
      %v4588 = vmax.f32 %v4282, %v4553
      %v4589 = vmax.f32 %v4285, %v4557
      %4606 = vset.pattern.permute.xlu0 0
      %4607 = vperm.xlu0 %4606, %v4574
      %v4608 = vpop.permute.xlu0 %4607
      %4609 = vset.pattern.permute.xlu0 0
      %4610 = vperm.xlu0 %4609, %v4575
      %v4611 = vpop.permute.xlu0 %4610
      %4612 = vset.pattern.permute.xlu0 0
      %4613 = vperm.xlu0 %4612, %v4576
      %v4614 = vpop.permute.xlu0 %4613
      %4615 = vset.pattern.permute.xlu0 0
      %4616 = vperm.xlu0 %4615, %v4577
      %v4617 = vpop.permute.xlu0 %4616
      %4618 = vset.pattern.permute.xlu0 0
      %4619 = vperm.xlu0 %4618, %v4578
      %v4620 = vpop.permute.xlu0 %4619
      %4621 = vset.pattern.permute.xlu0 0
      %4622 = vperm.xlu0 %4621, %v4579
      %v4623 = vpop.permute.xlu0 %4622
      %4624 = vset.pattern.permute.xlu0 0
      %4625 = vperm.xlu0 %4624, %v4580
      %v4626 = vpop.permute.xlu0 %4625
      %4627 = vset.pattern.permute.xlu0 0
      %4628 = vperm.xlu0 %4627, %v4581
      %v4629 = vpop.permute.xlu0 %4628
      %4630 = vset.pattern.permute.xlu0 0
      %4631 = vperm.xlu0 %4630, %v4582
      %v4632 = vpop.permute.xlu0 %4631
      %4633 = vset.pattern.permute.xlu0 0
      %4634 = vperm.xlu0 %4633, %v4583
      %v4635 = vpop.permute.xlu0 %4634
      %4636 = vset.pattern.permute.xlu0 0
      %4637 = vperm.xlu0 %4636, %v4584
      %v4638 = vpop.permute.xlu0 %4637
      %4639 = vset.pattern.permute.xlu0 0
      %4640 = vperm.xlu0 %4639, %v4585
      %v4641 = vpop.permute.xlu0 %4640
      %4642 = vset.pattern.permute.xlu0 0
      %4643 = vperm.xlu0 %4642, %v4586
      %v4644 = vpop.permute.xlu0 %4643
      %4645 = vset.pattern.permute.xlu0 0
      %4646 = vperm.xlu0 %4645, %v4587
      %v4647 = vpop.permute.xlu0 %4646
      %4648 = vset.pattern.permute.xlu0 0
      %4649 = vperm.xlu0 %4648, %v4588
      %v4650 = vpop.permute.xlu0 %4649
      %4651 = vset.pattern.permute.xlu0 0
      %4652 = vperm.xlu0 %4651, %v4589
      %v4653 = vpop.permute.xlu0 %4652
      %v4654 = vlaneseq
      %v4655 = vshrl.u32 %v4654, 7
      %v4656 = vsub.s32 %v4217, %v4655
      %v4657 = vrot.slane %v4608, %v4656
      %v4658 = vadd.s32 %v4217, 4294967288
      %v4659 = vlaneseq
      %v4660 = vshrl.u32 %v4659, 7
      %v4661 = vsub.s32 %v4658, %v4660
      %v4662 = vrot.slane %v4611, %v4661
      %vm4663 = vcmask 130112
      %v4664 = vsel %vm4663, %v4662, %v4657
      %v4665 = vlaneseq
      %v4666 = vshrl.u32 %v4665, 7
      %v4667 = vsub.s32 %v4217, %v4666
      %v4668 = vrot.slane %v4614, %v4667
      %v4669 = vlaneseq
      %v4670 = vshrl.u32 %v4669, 7
      %v4671 = vsub.s32 %v4658, %v4670
      %v4672 = vrot.slane %v4617, %v4671
      %v4673 = vsel %vm4663, %v4672, %v4668
      %v4674 = vlaneseq
      %v4675 = vshrl.u32 %v4674, 7
      %v4676 = vsub.s32 %v4217, %v4675
      %v4677 = vrot.slane %v4620, %v4676
      %v4678 = vlaneseq
      %v4679 = vshrl.u32 %v4678, 7
      %v4680 = vsub.s32 %v4658, %v4679
      %v4681 = vrot.slane %v4623, %v4680
      %v4682 = vsel %vm4663, %v4681, %v4677
      %v4683 = vlaneseq
      %v4684 = vshrl.u32 %v4683, 7
      %v4685 = vsub.s32 %v4217, %v4684
      %v4686 = vrot.slane %v4626, %v4685
      %v4687 = vlaneseq
      %v4688 = vshrl.u32 %v4687, 7
      %v4689 = vsub.s32 %v4658, %v4688
      %v4690 = vrot.slane %v4629, %v4689
      %v4691 = vsel %vm4663, %v4690, %v4686
      %v4692 = vlaneseq
      %v4693 = vshrl.u32 %v4692, 7
      %v4694 = vsub.s32 %v4217, %v4693
      %v4695 = vrot.slane %v4632, %v4694
      %v4696 = vlaneseq
      %v4697 = vshrl.u32 %v4696, 7
      %v4698 = vsub.s32 %v4658, %v4697
      %v4699 = vrot.slane %v4635, %v4698
      %v4700 = vsel %vm4663, %v4699, %v4695
      %v4701 = vlaneseq
      %v4702 = vshrl.u32 %v4701, 7
      %v4703 = vsub.s32 %v4217, %v4702
      %v4704 = vrot.slane %v4638, %v4703
      %v4705 = vlaneseq
      %v4706 = vshrl.u32 %v4705, 7
      %v4707 = vsub.s32 %v4658, %v4706
      %v4708 = vrot.slane %v4641, %v4707
      %v4709 = vsel %vm4663, %v4708, %v4704
      %v4710 = vlaneseq
      %v4711 = vshrl.u32 %v4710, 7
      %v4712 = vsub.s32 %v4217, %v4711
      %v4713 = vrot.slane %v4644, %v4712
      %v4714 = vlaneseq
      %v4715 = vshrl.u32 %v4714, 7
      %v4716 = vsub.s32 %v4658, %v4715
      %v4717 = vrot.slane %v4647, %v4716
      %v4718 = vsel %vm4663, %v4717, %v4713
      %v4719 = vlaneseq
      %v4720 = vshrl.u32 %v4719, 7
      %v4721 = vsub.s32 %v4217, %v4720
      %v4722 = vrot.slane %v4650, %v4721
      %v4723 = vlaneseq
      %v4724 = vshrl.u32 %v4723, 7
      %v4725 = vsub.s32 %v4658, %v4724
      %v4726 = vrot.slane %v4653, %v4725
      %v4727 = vsel %vm4663, %v4726, %v4722
      %v4728 = vsel %vm4414, %v4673, %v4664
      %v4729 = vsel %vm4416, %v4682, %v4728
      %v4730 = vsel %vm4418, %v4691, %v4729
      %v4731 = vsel %vm4420, %v4700, %v4730
      %v4732 = vsel %vm4422, %v4709, %v4731
      %v4733 = vsel %vm4424, %v4718, %v4732
      %v4734 = vsel %vm4426, %v4727, %v4733
      %4736 = vxpose.xlu0.b32.start [1/16] %v4734, 128
      %4737 = vxpose.xlu0.b32.cont [2/16] 0.0, 128
      %4738 = vxpose.xlu0.b32.cont [3/16] 0.0, 128
      %4739 = vxpose.xlu0.b32.cont [4/16] 0.0, 128
      %4740 = vxpose.xlu0.b32.cont [5/16] 0.0, 128
      %4741 = vxpose.xlu0.b32.cont [6/16] 0.0, 128
      %4742 = vxpose.xlu0.b32.cont [7/16] 0.0, 128
      %4743 = vxpose.xlu0.b32.cont [8/16] 0.0, 128
      %4744 = vxpose.xlu0.b32.cont [9/16] 0.0, 128
      %4745 = vxpose.xlu0.b32.cont [10/16] 0.0, 128
      %4746 = vxpose.xlu0.b32.cont [11/16] 0.0, 128
      %4747 = vxpose.xlu0.b32.cont [12/16] 0.0, 128
      %4748 = vxpose.xlu0.b32.cont [13/16] 0.0, 128
      %4749 = vxpose.xlu0.b32.cont [14/16] 0.0, 128
      %4750 = vxpose.xlu0.b32.cont [15/16] 0.0, 128
      %4751 = vxpose.xlu0.b32.end [16/16] 0.0, 128
      %v4752 = vpop.trf.xlu0
      %v4753 = vpop.trf.xlu0
      %v4754 = vpop.trf.xlu0
      %v4755 = vpop.trf.xlu0
      %v4756 = vpop.trf.xlu0
      %v4757 = vpop.trf.xlu0
      %v4758 = vpop.trf.xlu0
      %v4759 = vpop.trf.xlu0
      %v4760 = vpop.trf.xlu0
      %v4761 = vpop.trf.xlu0
      %v4762 = vpop.trf.xlu0
      %v4763 = vpop.trf.xlu0
      %v4764 = vpop.trf.xlu0
      %v4765 = vpop.trf.xlu0
      %v4766 = vpop.trf.xlu0
      %v4767 = vpop.trf.xlu0
      %v4784 = vsub.f32 %v2255, %v4608
      %v4785 = vsub.f32 %v2260, %v4611
      %v4786 = vsub.f32 %v2330, %v4614
      %v4787 = vsub.f32 %v2335, %v4617
      %v4788 = vsub.f32 %v2405, %v4620
      %v4789 = vsub.f32 %v2410, %v4623
      %v4790 = vsub.f32 %v2480, %v4626
      %v4791 = vsub.f32 %v2485, %v4629
      %v4792 = vsub.f32 %v2555, %v4632
      %v4793 = vsub.f32 %v2560, %v4635
      %v4794 = vsub.f32 %v2630, %v4638
      %v4795 = vsub.f32 %v2635, %v4641
      %v4796 = vsub.f32 %v2705, %v4644
      %v4797 = vsub.f32 %v2710, %v4647
      %v4798 = vsub.f32 %v2780, %v4650
      %v4799 = vsub.f32 %v2785, %v4653
      %v4800 = vmul.f32 %v4784, 1.442695
      %v4801 = vpow.pop %v4800
      %v4802 = vmul.f32 %v4785, 1.442695
      %v4803 = vpow.pop %v4802
      %v4804 = vmul.f32 %v4786, 1.442695
      %v4805 = vpow.pop %v4804
      %v4806 = vmul.f32 %v4787, 1.442695
      %v4807 = vpow.pop %v4806
      %v4808 = vmul.f32 %v4788, 1.442695
      %v4809 = vpow.pop %v4808
      %v4810 = vmul.f32 %v4789, 1.442695
      %v4811 = vpow.pop %v4810
      %v4812 = vmul.f32 %v4790, 1.442695
      %v4813 = vpow.pop %v4812
      %v4814 = vmul.f32 %v4791, 1.442695
      %v4815 = vpow.pop %v4814
      %v4816 = vmul.f32 %v4792, 1.442695
      %v4817 = vpow.pop %v4816
      %v4818 = vmul.f32 %v4793, 1.442695
      %v4819 = vpow.pop %v4818
      %v4820 = vmul.f32 %v4794, 1.442695
      %v4821 = vpow.pop %v4820
      %v4822 = vmul.f32 %v4795, 1.442695
      %v4823 = vpow.pop %v4822
      %v4824 = vmul.f32 %v4796, 1.442695
      %v4825 = vpow.pop %v4824
      %v4826 = vmul.f32 %v4797, 1.442695
      %v4827 = vpow.pop %v4826
      %v4828 = vmul.f32 %v4798, 1.442695
      %v4829 = vpow.pop %v4828
      %v4830 = vmul.f32 %v4799, 1.442695
      %v4831 = vpow.pop %v4830
      %v4832 = vlaneseq
      %v4833 = vshrl.u32 %v4832, 7
      %v4834 = vsub.s32 0, %v4833
      %v4835 = vrot.slane %v4752, %v4834
      %4837 = vbcast.lane.b32.xlu0 %v4835, 256
      %v4838 = vpop.permute.xlu0 %4837
      %v4839 = vlaneseq
      %v4840 = vshrl.u32 %v4839, 7
      %v4841 = vsub.s32 1, %v4840
      %v4842 = vrot.slane %v4752, %v4841
      %4844 = vbcast.lane.b32.xlu0 %v4842, 256
      %v4845 = vpop.permute.xlu0 %4844
      %v4846 = vlaneseq
      %v4847 = vshrl.u32 %v4846, 7
      %v4848 = vsub.s32 2, %v4847
      %v4849 = vrot.slane %v4752, %v4848
      %4851 = vbcast.lane.b32.xlu0 %v4849, 256
      %v4852 = vpop.permute.xlu0 %4851
      %v4853 = vlaneseq
      %v4854 = vshrl.u32 %v4853, 7
      %v4855 = vsub.s32 3, %v4854
      %v4856 = vrot.slane %v4752, %v4855
      %4858 = vbcast.lane.b32.xlu0 %v4856, 256
      %v4859 = vpop.permute.xlu0 %4858
      %v4860 = vlaneseq
      %v4861 = vshrl.u32 %v4860, 7
      %v4862 = vsub.s32 4, %v4861
      %v4863 = vrot.slane %v4752, %v4862
      %4865 = vbcast.lane.b32.xlu0 %v4863, 256
      %v4866 = vpop.permute.xlu0 %4865
      %v4867 = vlaneseq
      %v4868 = vshrl.u32 %v4867, 7
      %v4869 = vsub.s32 5, %v4868
      %v4870 = vrot.slane %v4752, %v4869
      %4872 = vbcast.lane.b32.xlu0 %v4870, 256
      %v4873 = vpop.permute.xlu0 %4872
      %v4874 = vlaneseq
      %v4875 = vshrl.u32 %v4874, 7
      %v4876 = vsub.s32 6, %v4875
      %v4877 = vrot.slane %v4752, %v4876
      %4879 = vbcast.lane.b32.xlu0 %v4877, 256
      %v4880 = vpop.permute.xlu0 %4879
      %v4881 = vlaneseq
      %v4882 = vshrl.u32 %v4881, 7
      %v4883 = vsub.s32 7, %v4882
      %v4884 = vrot.slane %v4752, %v4883
      %4886 = vbcast.lane.b32.xlu0 %v4884, 256
      %v4887 = vpop.permute.xlu0 %4886
      %v4888 = vlaneseq
      %v4889 = vshrl.u32 %v4888, 7
      %v4890 = vsub.s32 0, %v4889
      %v4891 = vrot.slane %v4753, %v4890
      %4893 = vbcast.lane.b32.xlu0 %v4891, 256
      %v4894 = vpop.permute.xlu0 %4893
      %v4895 = vlaneseq
      %v4896 = vshrl.u32 %v4895, 7
      %v4897 = vsub.s32 1, %v4896
      %v4898 = vrot.slane %v4753, %v4897
      %4900 = vbcast.lane.b32.xlu0 %v4898, 256
      %v4901 = vpop.permute.xlu0 %4900
      %v4902 = vlaneseq
      %v4903 = vshrl.u32 %v4902, 7
      %v4904 = vsub.s32 2, %v4903
      %v4905 = vrot.slane %v4753, %v4904
      %4907 = vbcast.lane.b32.xlu0 %v4905, 256
      %v4908 = vpop.permute.xlu0 %4907
      %v4909 = vlaneseq
      %v4910 = vshrl.u32 %v4909, 7
      %v4911 = vsub.s32 3, %v4910
      %v4912 = vrot.slane %v4753, %v4911
      %4914 = vbcast.lane.b32.xlu0 %v4912, 256
      %v4915 = vpop.permute.xlu0 %4914
      %v4916 = vlaneseq
      %v4917 = vshrl.u32 %v4916, 7
      %v4918 = vsub.s32 4, %v4917
      %v4919 = vrot.slane %v4753, %v4918
      %4921 = vbcast.lane.b32.xlu0 %v4919, 256
      %v4922 = vpop.permute.xlu0 %4921
      %v4923 = vlaneseq
      %v4924 = vshrl.u32 %v4923, 7
      %v4925 = vsub.s32 5, %v4924
      %v4926 = vrot.slane %v4753, %v4925
      %4928 = vbcast.lane.b32.xlu0 %v4926, 256
      %v4929 = vpop.permute.xlu0 %4928
      %v4930 = vlaneseq
      %v4931 = vshrl.u32 %v4930, 7
      %v4932 = vsub.s32 6, %v4931
      %v4933 = vrot.slane %v4753, %v4932
      %4935 = vbcast.lane.b32.xlu0 %v4933, 256
      %v4936 = vpop.permute.xlu0 %4935
      %v4937 = vlaneseq
      %v4938 = vshrl.u32 %v4937, 7
      %v4939 = vsub.s32 7, %v4938
      %v4940 = vrot.slane %v4753, %v4939
      %4942 = vbcast.lane.b32.xlu0 %v4940, 256
      %v4943 = vpop.permute.xlu0 %4942
      %v4944 = vsub.f32 %v4221, %v4838
      %v4945 = vsub.f32 %v4222, %v4845
      %v4946 = vsub.f32 %v4223, %v4852
      %v4947 = vsub.f32 %v4224, %v4859
      %v4948 = vsub.f32 %v4225, %v4866
      %v4949 = vsub.f32 %v4226, %v4873
      %v4950 = vsub.f32 %v4227, %v4880
      %v4951 = vsub.f32 %v4228, %v4887
      %v4952 = vsub.f32 %v4229, %v4894
      %v4953 = vsub.f32 %v4230, %v4901
      %v4954 = vsub.f32 %v4231, %v4908
      %v4955 = vsub.f32 %v4232, %v4915
      %v4956 = vsub.f32 %v4233, %v4922
      %v4957 = vsub.f32 %v4234, %v4929
      %v4958 = vsub.f32 %v4235, %v4936
      %v4959 = vsub.f32 %v4236, %v4943
      %v4960 = vmul.f32 %v4944, 1.442695
      %v4961 = vpow.pop %v4960
      %v4962 = vmul.f32 %v4945, 1.442695
      %v4963 = vpow.pop %v4962
      %v4964 = vmul.f32 %v4946, 1.442695
      %v4965 = vpow.pop %v4964
      %v4966 = vmul.f32 %v4947, 1.442695
      %v4967 = vpow.pop %v4966
      %v4968 = vmul.f32 %v4948, 1.442695
      %v4969 = vpow.pop %v4968
      %v4970 = vmul.f32 %v4949, 1.442695
      %v4971 = vpow.pop %v4970
      %v4972 = vmul.f32 %v4950, 1.442695
      %v4973 = vpow.pop %v4972
      %v4974 = vmul.f32 %v4951, 1.442695
      %v4975 = vpow.pop %v4974
      %v4976 = vmul.f32 %v4952, 1.442695
      %v4977 = vpow.pop %v4976
      %v4978 = vmul.f32 %v4953, 1.442695
      %v4979 = vpow.pop %v4978
      %v4980 = vmul.f32 %v4954, 1.442695
      %v4981 = vpow.pop %v4980
      %v4982 = vmul.f32 %v4955, 1.442695
      %v4983 = vpow.pop %v4982
      %v4984 = vmul.f32 %v4956, 1.442695
      %v4985 = vpow.pop %v4984
      %v4986 = vmul.f32 %v4957, 1.442695
      %v4987 = vpow.pop %v4986
      %v4988 = vmul.f32 %v4958, 1.442695
      %v4989 = vpow.pop %v4988
      %v4990 = vmul.f32 %v4959, 1.442695
      %v4991 = vpow.pop %v4990
      %v4992 = vsel %vm4237, %v4801, 0.0
      %4993 = vadd.xlane.f32.xlu0 %v4992
      %v4994 = vpop.xlane.xlu0 %4993
      %v4995 = vsel %vm4237, %v4803, 0.0
      %4996 = vadd.xlane.f32.xlu0 %v4995
      %v4997 = vpop.xlane.xlu0 %4996
      %v4998 = vsel %vm4237, %v4805, 0.0
      %4999 = vadd.xlane.f32.xlu0 %v4998
      %v5000 = vpop.xlane.xlu0 %4999
      %v5001 = vsel %vm4237, %v4807, 0.0
      %5002 = vadd.xlane.f32.xlu0 %v5001
      %v5003 = vpop.xlane.xlu0 %5002
      %v5004 = vsel %vm4237, %v4809, 0.0
      %5005 = vadd.xlane.f32.xlu0 %v5004
      %v5006 = vpop.xlane.xlu0 %5005
      %v5007 = vsel %vm4237, %v4811, 0.0
      %5008 = vadd.xlane.f32.xlu0 %v5007
      %v5009 = vpop.xlane.xlu0 %5008
      %v5010 = vsel %vm4237, %v4813, 0.0
      %5011 = vadd.xlane.f32.xlu0 %v5010
      %v5012 = vpop.xlane.xlu0 %5011
      %v5013 = vsel %vm4237, %v4815, 0.0
      %5014 = vadd.xlane.f32.xlu0 %v5013
      %v5015 = vpop.xlane.xlu0 %5014
      %v5016 = vsel %vm4237, %v4817, 0.0
      %5017 = vadd.xlane.f32.xlu0 %v5016
      %v5018 = vpop.xlane.xlu0 %5017
      %v5019 = vsel %vm4237, %v4819, 0.0
      %5020 = vadd.xlane.f32.xlu0 %v5019
      %v5021 = vpop.xlane.xlu0 %5020
      %v5022 = vsel %vm4237, %v4821, 0.0
      %5023 = vadd.xlane.f32.xlu0 %v5022
      %v5024 = vpop.xlane.xlu0 %5023
      %v5025 = vsel %vm4237, %v4823, 0.0
      %5026 = vadd.xlane.f32.xlu0 %v5025
      %v5027 = vpop.xlane.xlu0 %5026
      %v5028 = vsel %vm4237, %v4825, 0.0
      %5029 = vadd.xlane.f32.xlu0 %v5028
      %v5030 = vpop.xlane.xlu0 %5029
      %v5031 = vsel %vm4237, %v4827, 0.0
      %5032 = vadd.xlane.f32.xlu0 %v5031
      %v5033 = vpop.xlane.xlu0 %5032
      %v5034 = vsel %vm4237, %v4829, 0.0
      %5035 = vadd.xlane.f32.xlu0 %v5034
      %v5036 = vpop.xlane.xlu0 %5035
      %v5037 = vsel %vm4237, %v4831, 0.0
      %5038 = vadd.xlane.f32.xlu0 %v5037
      %v5039 = vpop.xlane.xlu0 %5038
      %v5040 = vsel %vm4237, %v4961, 0.0
      %5041 = vadd.xlane.f32.xlu0 %v5040
      %v5042 = vpop.xlane.xlu0 %5041
      %v5043 = vsel %vm4237, %v4963, 0.0
      %5044 = vadd.xlane.f32.xlu0 %v5043
      %v5045 = vpop.xlane.xlu0 %5044
      %v5046 = vsel %vm4237, %v4965, 0.0
      %5047 = vadd.xlane.f32.xlu0 %v5046
      %v5048 = vpop.xlane.xlu0 %5047
      %v5049 = vsel %vm4237, %v4967, 0.0
      %5050 = vadd.xlane.f32.xlu0 %v5049
      %v5051 = vpop.xlane.xlu0 %5050
      %v5052 = vsel %vm4237, %v4969, 0.0
      %5053 = vadd.xlane.f32.xlu0 %v5052
      %v5054 = vpop.xlane.xlu0 %5053
      %v5055 = vsel %vm4237, %v4971, 0.0
      %5056 = vadd.xlane.f32.xlu0 %v5055
      %v5057 = vpop.xlane.xlu0 %5056
      %v5058 = vsel %vm4237, %v4973, 0.0
      %5059 = vadd.xlane.f32.xlu0 %v5058
      %v5060 = vpop.xlane.xlu0 %5059
      %v5061 = vsel %vm4237, %v4975, 0.0
      %5062 = vadd.xlane.f32.xlu0 %v5061
      %v5063 = vpop.xlane.xlu0 %5062
      %v5064 = vsel %vm4237, %v4977, 0.0
      %5065 = vadd.xlane.f32.xlu0 %v5064
      %v5066 = vpop.xlane.xlu0 %5065
      %v5067 = vsel %vm4237, %v4979, 0.0
      %5068 = vadd.xlane.f32.xlu0 %v5067
      %v5069 = vpop.xlane.xlu0 %5068
      %v5070 = vsel %vm4237, %v4981, 0.0
      %5071 = vadd.xlane.f32.xlu0 %v5070
      %v5072 = vpop.xlane.xlu0 %5071
      %v5073 = vsel %vm4237, %v4983, 0.0
      %5074 = vadd.xlane.f32.xlu0 %v5073
      %v5075 = vpop.xlane.xlu0 %5074
      %v5076 = vsel %vm4237, %v4985, 0.0
      %5077 = vadd.xlane.f32.xlu0 %v5076
      %v5078 = vpop.xlane.xlu0 %5077
      %v5079 = vsel %vm4237, %v4987, 0.0
      %5080 = vadd.xlane.f32.xlu0 %v5079
      %v5081 = vpop.xlane.xlu0 %5080
      %v5082 = vsel %vm4237, %v4989, 0.0
      %5083 = vadd.xlane.f32.xlu0 %v5082
      %v5084 = vpop.xlane.xlu0 %5083
      %v5085 = vsel %vm4237, %v4991, 0.0
      %5086 = vadd.xlane.f32.xlu0 %v5085
      %v5087 = vpop.xlane.xlu0 %5086
      %v5104 = vlaneseq
      %v5105 = vshrl.u32 %v5104, 7
      %v5106 = vsub.s32 %v4217, %v5105
      %v5107 = vrot.slane %v5042, %v5106
      %v5108 = vlaneseq
      %v5109 = vshrl.u32 %v5108, 7
      %v5110 = vsub.s32 %v4217, %v5109
      %v5111 = vrot.slane %v5045, %v5110
      %v5112 = vlaneseq
      %v5113 = vshrl.u32 %v5112, 7
      %v5114 = vsub.s32 %v4217, %v5113
      %v5115 = vrot.slane %v5048, %v5114
      %v5116 = vlaneseq
      %v5117 = vshrl.u32 %v5116, 7
      %v5118 = vsub.s32 %v4217, %v5117
      %v5119 = vrot.slane %v5051, %v5118
      %v5120 = vlaneseq
      %v5121 = vshrl.u32 %v5120, 7
      %v5122 = vsub.s32 %v4217, %v5121
      %v5123 = vrot.slane %v5054, %v5122
      %v5124 = vlaneseq
      %v5125 = vshrl.u32 %v5124, 7
      %v5126 = vsub.s32 %v4217, %v5125
      %v5127 = vrot.slane %v5057, %v5126
      %v5128 = vlaneseq
      %v5129 = vshrl.u32 %v5128, 7
      %v5130 = vsub.s32 %v4217, %v5129
      %v5131 = vrot.slane %v5060, %v5130
      %v5132 = vlaneseq
      %v5133 = vshrl.u32 %v5132, 7
      %v5134 = vsub.s32 %v4217, %v5133
      %v5135 = vrot.slane %v5063, %v5134
      %v5136 = vlaneseq
      %v5137 = vshrl.u32 %v5136, 7
      %v5138 = vsub.s32 %v4217, %v5137
      %v5139 = vrot.slane %v5066, %v5138
      %v5140 = vlaneseq
      %v5141 = vshrl.u32 %v5140, 7
      %v5142 = vsub.s32 %v4217, %v5141
      %v5143 = vrot.slane %v5069, %v5142
      %v5144 = vlaneseq
      %v5145 = vshrl.u32 %v5144, 7
      %v5146 = vsub.s32 %v4217, %v5145
      %v5147 = vrot.slane %v5072, %v5146
      %v5148 = vlaneseq
      %v5149 = vshrl.u32 %v5148, 7
      %v5150 = vsub.s32 %v4217, %v5149
      %v5151 = vrot.slane %v5075, %v5150
      %v5152 = vlaneseq
      %v5153 = vshrl.u32 %v5152, 7
      %v5154 = vsub.s32 %v4217, %v5153
      %v5155 = vrot.slane %v5078, %v5154
      %v5156 = vlaneseq
      %v5157 = vshrl.u32 %v5156, 7
      %v5158 = vsub.s32 %v4217, %v5157
      %v5159 = vrot.slane %v5081, %v5158
      %v5160 = vlaneseq
      %v5161 = vshrl.u32 %v5160, 7
      %v5162 = vsub.s32 %v4217, %v5161
      %v5163 = vrot.slane %v5084, %v5162
      %v5164 = vlaneseq
      %v5165 = vshrl.u32 %v5164, 7
      %v5166 = vsub.s32 %v4217, %v5165
      %v5167 = vrot.slane %v5087, %v5166
      %v5168 = vsel %vm4414, %v5111, %v5107
      %v5169 = vsel %vm4416, %v5115, %v5168
      %v5170 = vsel %vm4418, %v5119, %v5169
      %v5171 = vsel %vm4420, %v5123, %v5170
      %v5172 = vsel %vm4422, %v5127, %v5171
      %v5173 = vsel %vm4424, %v5131, %v5172
      %v5174 = vsel %vm4426, %v5135, %v5173
      %v5175 = vsel %vm4414, %v5143, %v5139
      %v5176 = vsel %vm4416, %v5147, %v5175
      %v5177 = vsel %vm4418, %v5151, %v5176
      %v5178 = vsel %vm4420, %v5155, %v5177
      %v5179 = vsel %vm4422, %v5159, %v5178
      %v5180 = vsel %vm4424, %v5163, %v5179
      %v5181 = vsel %vm4426, %v5167, %v5180
      %5184 = vxpose.xlu0.b32.start [1/16] %v5174, 128
      %5185 = vxpose.xlu0.b32.cont [2/16] %v5181, 128
      %5186 = vxpose.xlu0.b32.cont [3/16] 0.0, 128
      %5187 = vxpose.xlu0.b32.cont [4/16] 0.0, 128
      %5188 = vxpose.xlu0.b32.cont [5/16] 0.0, 128
      %5189 = vxpose.xlu0.b32.cont [6/16] 0.0, 128
      %5190 = vxpose.xlu0.b32.cont [7/16] 0.0, 128
      %5191 = vxpose.xlu0.b32.cont [8/16] 0.0, 128
      %5192 = vxpose.xlu0.b32.cont [9/16] 0.0, 128
      %5193 = vxpose.xlu0.b32.cont [10/16] 0.0, 128
      %5194 = vxpose.xlu0.b32.cont [11/16] 0.0, 128
      %5195 = vxpose.xlu0.b32.cont [12/16] 0.0, 128
      %5196 = vxpose.xlu0.b32.cont [13/16] 0.0, 128
      %5197 = vxpose.xlu0.b32.cont [14/16] 0.0, 128
      %5198 = vxpose.xlu0.b32.cont [15/16] 0.0, 128
      %5199 = vxpose.xlu0.b32.end [16/16] 0.0, 128
      %v5200 = vpop.trf.xlu0
      %v5201 = vpop.trf.xlu0
      %v5202 = vpop.trf.xlu0
      %v5203 = vpop.trf.xlu0
      %v5204 = vpop.trf.xlu0
      %v5205 = vpop.trf.xlu0
      %v5206 = vpop.trf.xlu0
      %v5207 = vpop.trf.xlu0
      %v5208 = vpop.trf.xlu0
      %v5209 = vpop.trf.xlu0
      %v5210 = vpop.trf.xlu0
      %v5211 = vpop.trf.xlu0
      %v5212 = vpop.trf.xlu0
      %v5213 = vpop.trf.xlu0
      %v5214 = vpop.trf.xlu0
      %v5215 = vpop.trf.xlu0
      %v5217 = vlaneseq
      %v5218 = vshrl.u32 %v5217, 7
      %v5219 = vsub.s32 0, %v5218
      %v5220 = vrot.slane %v5200, %v5219
      %5222 = vbcast.lane.b32.xlu0 %v5220, 256
      %v5223 = vpop.permute.xlu0 %5222
      %s5225 = sor.u32 256, 8
      %5226 = vbcast.lane.b32.xlu0 %v5220, %s5225
      %v5227 = vpop.permute.xlu0 %5226
      %v5228 = vlaneseq
      %v5229 = vshrl.u32 %v5228, 7
      %v5230 = vsub.s32 1, %v5229
      %v5231 = vrot.slane %v5200, %v5230
      %5233 = vbcast.lane.b32.xlu0 %v5231, 256
      %v5234 = vpop.permute.xlu0 %5233
      %s5236 = sor.u32 256, 8
      %5237 = vbcast.lane.b32.xlu0 %v5231, %s5236
      %v5238 = vpop.permute.xlu0 %5237
      %v5239 = vlaneseq
      %v5240 = vshrl.u32 %v5239, 7
      %v5241 = vsub.s32 2, %v5240
      %v5242 = vrot.slane %v5200, %v5241
      %5244 = vbcast.lane.b32.xlu0 %v5242, 256
      %v5245 = vpop.permute.xlu0 %5244
      %s5247 = sor.u32 256, 8
      %5248 = vbcast.lane.b32.xlu0 %v5242, %s5247
      %v5249 = vpop.permute.xlu0 %5248
      %v5250 = vlaneseq
      %v5251 = vshrl.u32 %v5250, 7
      %v5252 = vsub.s32 3, %v5251
      %v5253 = vrot.slane %v5200, %v5252
      %5255 = vbcast.lane.b32.xlu0 %v5253, 256
      %v5256 = vpop.permute.xlu0 %5255
      %s5258 = sor.u32 256, 8
      %5259 = vbcast.lane.b32.xlu0 %v5253, %s5258
      %v5260 = vpop.permute.xlu0 %5259
      %v5261 = vlaneseq
      %v5262 = vshrl.u32 %v5261, 7
      %v5263 = vsub.s32 4, %v5262
      %v5264 = vrot.slane %v5200, %v5263
      %5266 = vbcast.lane.b32.xlu0 %v5264, 256
      %v5267 = vpop.permute.xlu0 %5266
      %s5269 = sor.u32 256, 8
      %5270 = vbcast.lane.b32.xlu0 %v5264, %s5269
      %v5271 = vpop.permute.xlu0 %5270
      %v5272 = vlaneseq
      %v5273 = vshrl.u32 %v5272, 7
      %v5274 = vsub.s32 5, %v5273
      %v5275 = vrot.slane %v5200, %v5274
      %5277 = vbcast.lane.b32.xlu0 %v5275, 256
      %v5278 = vpop.permute.xlu0 %5277
      %s5280 = sor.u32 256, 8
      %5281 = vbcast.lane.b32.xlu0 %v5275, %s5280
      %v5282 = vpop.permute.xlu0 %5281
      %v5283 = vlaneseq
      %v5284 = vshrl.u32 %v5283, 7
      %v5285 = vsub.s32 6, %v5284
      %v5286 = vrot.slane %v5200, %v5285
      %5288 = vbcast.lane.b32.xlu0 %v5286, 256
      %v5289 = vpop.permute.xlu0 %5288
      %s5291 = sor.u32 256, 8
      %5292 = vbcast.lane.b32.xlu0 %v5286, %s5291
      %v5293 = vpop.permute.xlu0 %5292
      %v5294 = vlaneseq
      %v5295 = vshrl.u32 %v5294, 7
      %v5296 = vsub.s32 7, %v5295
      %v5297 = vrot.slane %v5200, %v5296
      %5299 = vbcast.lane.b32.xlu0 %v5297, 256
      %v5300 = vpop.permute.xlu0 %5299
      %s5302 = sor.u32 256, 8
      %5303 = vbcast.lane.b32.xlu0 %v5297, %s5302
      %v5304 = vpop.permute.xlu0 %5303
      %v5321 = vadd.f32 %v4994, %v5223
      %v5322 = vadd.f32 %v4997, %v5227
      %v5323 = vadd.f32 %v5000, %v5234
      %v5324 = vadd.f32 %v5003, %v5238
      %v5325 = vadd.f32 %v5006, %v5245
      %v5326 = vadd.f32 %v5009, %v5249
      %v5327 = vadd.f32 %v5012, %v5256
      %v5328 = vadd.f32 %v5015, %v5260
      %v5329 = vadd.f32 %v5018, %v5267
      %v5330 = vadd.f32 %v5021, %v5271
      %v5331 = vadd.f32 %v5024, %v5278
      %v5332 = vadd.f32 %v5027, %v5282
      %v5333 = vadd.f32 %v5030, %v5289
      %v5334 = vadd.f32 %v5033, %v5293
      %v5335 = vadd.f32 %v5036, %v5300
      %v5336 = vadd.f32 %v5039, %v5304
      %v5337 = vmul.f32 %v5321, 0.03125
      %v5338 = vmul.f32 %v5322, 0.03125
      %v5339 = vmul.f32 %v5323, 0.03125
      %v5340 = vmul.f32 %v5324, 0.03125
      %v5341 = vmul.f32 %v5325, 0.03125
      %v5342 = vmul.f32 %v5326, 0.03125
      %v5343 = vmul.f32 %v5327, 0.03125
      %v5344 = vmul.f32 %v5328, 0.03125
      %v5345 = vmul.f32 %v5329, 0.03125
      %v5346 = vmul.f32 %v5330, 0.03125
      %v5347 = vmul.f32 %v5331, 0.03125
      %v5348 = vmul.f32 %v5332, 0.03125
      %v5349 = vmul.f32 %v5333, 0.03125
      %v5350 = vmul.f32 %v5334, 0.03125
      %v5351 = vmul.f32 %v5335, 0.03125
      %v5352 = vmul.f32 %v5336, 0.03125
      %v5353 = vrcp.pop %v5321
      %v5354 = vrcp.pop %v5322
      %v5355 = vrcp.pop %v5323
      %v5356 = vrcp.pop %v5324
      %v5357 = vrcp.pop %v5325
      %v5358 = vrcp.pop %v5326
      %v5359 = vrcp.pop %v5327
      %v5360 = vrcp.pop %v5328
      %v5361 = vrcp.pop %v5329
      %v5362 = vrcp.pop %v5330
      %v5363 = vrcp.pop %v5331
      %v5364 = vrcp.pop %v5332
      %v5365 = vrcp.pop %v5333
      %v5366 = vrcp.pop %v5334
      %v5367 = vrcp.pop %v5335
      %v5368 = vrcp.pop %v5336
      %5370 = vset.pattern.permute.xlu0 0
      %5371 = vperm.xlu0 %5370, %v5337
      %v5372 = vpop.permute.xlu0 %5371
      %5375 = vset.pattern.permute.xlu0 0
      %5376 = vperm.xlu0 %5375, %v5338
      %v5377 = vpop.permute.xlu0 %5376
      %5380 = vset.pattern.permute.xlu0 0
      %5381 = vperm.xlu0 %5380, %v5339
      %v5382 = vpop.permute.xlu0 %5381
      %5385 = vset.pattern.permute.xlu0 0
      %5386 = vperm.xlu0 %5385, %v5340
      %v5387 = vpop.permute.xlu0 %5386
      %5390 = vset.pattern.permute.xlu0 0
      %5391 = vperm.xlu0 %5390, %v5341
      %v5392 = vpop.permute.xlu0 %5391
      %5395 = vset.pattern.permute.xlu0 0
      %5396 = vperm.xlu0 %5395, %v5342
      %v5397 = vpop.permute.xlu0 %5396
      %5400 = vset.pattern.permute.xlu0 0
      %5401 = vperm.xlu0 %5400, %v5343
      %v5402 = vpop.permute.xlu0 %5401
      %5405 = vset.pattern.permute.xlu0 0
      %5406 = vperm.xlu0 %5405, %v5344
      %v5407 = vpop.permute.xlu0 %5406
      %5410 = vset.pattern.permute.xlu0 0
      %5411 = vperm.xlu0 %5410, %v5345
      %v5412 = vpop.permute.xlu0 %5411
      %5415 = vset.pattern.permute.xlu0 0
      %5416 = vperm.xlu0 %5415, %v5346
      %v5417 = vpop.permute.xlu0 %5416
      %5420 = vset.pattern.permute.xlu0 0
      %5421 = vperm.xlu0 %5420, %v5347
      %v5422 = vpop.permute.xlu0 %5421
      %5425 = vset.pattern.permute.xlu0 0
      %5426 = vperm.xlu0 %5425, %v5348
      %v5427 = vpop.permute.xlu0 %5426
      %5430 = vset.pattern.permute.xlu0 0
      %5431 = vperm.xlu0 %5430, %v5349
      %v5432 = vpop.permute.xlu0 %5431
      %5435 = vset.pattern.permute.xlu0 0
      %5436 = vperm.xlu0 %5435, %v5350
      %v5437 = vpop.permute.xlu0 %5436
      %5440 = vset.pattern.permute.xlu0 0
      %5441 = vperm.xlu0 %5440, %v5351
      %v5442 = vpop.permute.xlu0 %5441
      %5445 = vset.pattern.permute.xlu0 0
      %5446 = vperm.xlu0 %5445, %v5352
      %v5447 = vpop.permute.xlu0 %5446
      %vm5449 = vcmp.gt.f32.partialorder %v4801, %v5372
      %vm5450 = vcmp.gt.f32.partialorder %v4803, %v5377
      %vm5451 = vcmp.gt.f32.partialorder %v4805, %v5382
      %vm5452 = vcmp.gt.f32.partialorder %v4807, %v5387
      %vm5453 = vcmp.gt.f32.partialorder %v4809, %v5392
      %vm5454 = vcmp.gt.f32.partialorder %v4811, %v5397
      %vm5455 = vcmp.gt.f32.partialorder %v4813, %v5402
      %vm5456 = vcmp.gt.f32.partialorder %v4815, %v5407
      %vm5457 = vcmp.gt.f32.partialorder %v4817, %v5412
      %vm5458 = vcmp.gt.f32.partialorder %v4819, %v5417
      %vm5459 = vcmp.gt.f32.partialorder %v4821, %v5422
      %vm5460 = vcmp.gt.f32.partialorder %v4823, %v5427
      %vm5461 = vcmp.gt.f32.partialorder %v4825, %v5432
      %vm5462 = vcmp.gt.f32.partialorder %v4827, %v5437
      %vm5463 = vcmp.gt.f32.partialorder %v4829, %v5442
      %vm5464 = vcmp.gt.f32.partialorder %v4831, %v5447
      %5466 = vset.pattern.permute.xlu0 0
      %5467 = vperm.xlu0 %5466, %v5353
      %v5468 = vpop.permute.xlu0 %5467
      %5471 = vset.pattern.permute.xlu0 0
      %5472 = vperm.xlu0 %5471, %v5354
      %v5473 = vpop.permute.xlu0 %5472
      %5476 = vset.pattern.permute.xlu0 0
      %5477 = vperm.xlu0 %5476, %v5355
      %v5478 = vpop.permute.xlu0 %5477
      %5481 = vset.pattern.permute.xlu0 0
      %5482 = vperm.xlu0 %5481, %v5356
      %v5483 = vpop.permute.xlu0 %5482
      %5486 = vset.pattern.permute.xlu0 0
      %5487 = vperm.xlu0 %5486, %v5357
      %v5488 = vpop.permute.xlu0 %5487
      %5491 = vset.pattern.permute.xlu0 0
      %5492 = vperm.xlu0 %5491, %v5358
      %v5493 = vpop.permute.xlu0 %5492
      %5496 = vset.pattern.permute.xlu0 0
      %5497 = vperm.xlu0 %5496, %v5359
      %v5498 = vpop.permute.xlu0 %5497
      %5501 = vset.pattern.permute.xlu0 0
      %5502 = vperm.xlu0 %5501, %v5360
      %v5503 = vpop.permute.xlu0 %5502
      %5506 = vset.pattern.permute.xlu0 0
      %5507 = vperm.xlu0 %5506, %v5361
      %v5508 = vpop.permute.xlu0 %5507
      %5511 = vset.pattern.permute.xlu0 0
      %5512 = vperm.xlu0 %5511, %v5362
      %v5513 = vpop.permute.xlu0 %5512
      %5516 = vset.pattern.permute.xlu0 0
      %5517 = vperm.xlu0 %5516, %v5363
      %v5518 = vpop.permute.xlu0 %5517
      %5521 = vset.pattern.permute.xlu0 0
      %5522 = vperm.xlu0 %5521, %v5364
      %v5523 = vpop.permute.xlu0 %5522
      %5526 = vset.pattern.permute.xlu0 0
      %5527 = vperm.xlu0 %5526, %v5365
      %v5528 = vpop.permute.xlu0 %5527
      %5531 = vset.pattern.permute.xlu0 0
      %5532 = vperm.xlu0 %5531, %v5366
      %v5533 = vpop.permute.xlu0 %5532
      %5536 = vset.pattern.permute.xlu0 0
      %5537 = vperm.xlu0 %5536, %v5367
      %v5538 = vpop.permute.xlu0 %5537
      %5541 = vset.pattern.permute.xlu0 0
      %5542 = vperm.xlu0 %5541, %v5368
      %v5543 = vpop.permute.xlu0 %5542
      %v5545 = vmul.f32 %v4801, %v5468
      %v5546 = vmul.f32 %v4803, %v5473
      %v5547 = vmul.f32 %v4805, %v5478
      %v5548 = vmul.f32 %v4807, %v5483
      %v5549 = vmul.f32 %v4809, %v5488
      %v5550 = vmul.f32 %v4811, %v5493
      %v5551 = vmul.f32 %v4813, %v5498
      %v5552 = vmul.f32 %v4815, %v5503
      %v5553 = vmul.f32 %v4817, %v5508
      %v5554 = vmul.f32 %v4819, %v5513
      %v5555 = vmul.f32 %v4821, %v5518
      %v5556 = vmul.f32 %v4823, %v5523
      %v5557 = vmul.f32 %v4825, %v5528
      %v5558 = vmul.f32 %v4827, %v5533
      %v5559 = vmul.f32 %v4829, %v5538
      %v5560 = vmul.f32 %v4831, %v5543
      %v5561 = vsel %vm5449, %v5545, 0.0
      %v5562 = vsel %vm5450, %v5546, 0.0
      %v5563 = vsel %vm5451, %v5547, 0.0
      %v5564 = vsel %vm5452, %v5548, 0.0
      %v5565 = vsel %vm5453, %v5549, 0.0
      %v5566 = vsel %vm5454, %v5550, 0.0
      %v5567 = vsel %vm5455, %v5551, 0.0
      %v5568 = vsel %vm5456, %v5552, 0.0
      %v5569 = vsel %vm5457, %v5553, 0.0
      %v5570 = vsel %vm5458, %v5554, 0.0
      %v5571 = vsel %vm5459, %v5555, 0.0
      %v5572 = vsel %vm5460, %v5556, 0.0
      %v5573 = vsel %vm5461, %v5557, 0.0
      %v5574 = vsel %vm5462, %v5558, 0.0
      %v5575 = vsel %vm5463, %v5559, 0.0
      %v5576 = vsel %vm5464, %v5560, 0.0
      %v5577 = vlaneseq
      %v5578 = vshrl.u32 %v5577, 7
      %v5579 = vsub.s32 %v4217, %v5578
      %v5580 = vrot.slane %v5372, %v5579
      %v5581 = vlaneseq
      %v5582 = vshrl.u32 %v5581, 7
      %v5583 = vsub.s32 %v4658, %v5582
      %v5584 = vrot.slane %v5377, %v5583
      %v5585 = vsel %vm4663, %v5584, %v5580
      %v5586 = vlaneseq
      %v5587 = vshrl.u32 %v5586, 7
      %v5588 = vsub.s32 %v4217, %v5587
      %v5589 = vrot.slane %v5382, %v5588
      %v5590 = vlaneseq
      %v5591 = vshrl.u32 %v5590, 7
      %v5592 = vsub.s32 %v4658, %v5591
      %v5593 = vrot.slane %v5387, %v5592
      %v5594 = vsel %vm4663, %v5593, %v5589
      %v5595 = vlaneseq
      %v5596 = vshrl.u32 %v5595, 7
      %v5597 = vsub.s32 %v4217, %v5596
      %v5598 = vrot.slane %v5392, %v5597
      %v5599 = vlaneseq
      %v5600 = vshrl.u32 %v5599, 7
      %v5601 = vsub.s32 %v4658, %v5600
      %v5602 = vrot.slane %v5397, %v5601
      %v5603 = vsel %vm4663, %v5602, %v5598
      %v5604 = vlaneseq
      %v5605 = vshrl.u32 %v5604, 7
      %v5606 = vsub.s32 %v4217, %v5605
      %v5607 = vrot.slane %v5402, %v5606
      %v5608 = vlaneseq
      %v5609 = vshrl.u32 %v5608, 7
      %v5610 = vsub.s32 %v4658, %v5609
      %v5611 = vrot.slane %v5407, %v5610
      %v5612 = vsel %vm4663, %v5611, %v5607
      %v5613 = vlaneseq
      %v5614 = vshrl.u32 %v5613, 7
      %v5615 = vsub.s32 %v4217, %v5614
      %v5616 = vrot.slane %v5412, %v5615
      %v5617 = vlaneseq
      %v5618 = vshrl.u32 %v5617, 7
      %v5619 = vsub.s32 %v4658, %v5618
      %v5620 = vrot.slane %v5417, %v5619
      %v5621 = vsel %vm4663, %v5620, %v5616
      %v5622 = vlaneseq
      %v5623 = vshrl.u32 %v5622, 7
      %v5624 = vsub.s32 %v4217, %v5623
      %v5625 = vrot.slane %v5422, %v5624
      %v5626 = vlaneseq
      %v5627 = vshrl.u32 %v5626, 7
      %v5628 = vsub.s32 %v4658, %v5627
      %v5629 = vrot.slane %v5427, %v5628
      %v5630 = vsel %vm4663, %v5629, %v5625
      %v5631 = vlaneseq
      %v5632 = vshrl.u32 %v5631, 7
      %v5633 = vsub.s32 %v4217, %v5632
      %v5634 = vrot.slane %v5432, %v5633
      %v5635 = vlaneseq
      %v5636 = vshrl.u32 %v5635, 7
      %v5637 = vsub.s32 %v4658, %v5636
      %v5638 = vrot.slane %v5437, %v5637
      %v5639 = vsel %vm4663, %v5638, %v5634
      %v5640 = vlaneseq
      %v5641 = vshrl.u32 %v5640, 7
      %v5642 = vsub.s32 %v4217, %v5641
      %v5643 = vrot.slane %v5442, %v5642
      %v5644 = vlaneseq
      %v5645 = vshrl.u32 %v5644, 7
      %v5646 = vsub.s32 %v4658, %v5645
      %v5647 = vrot.slane %v5447, %v5646
      %v5648 = vsel %vm4663, %v5647, %v5643
      %v5649 = vsel %vm4414, %v5594, %v5585
      %v5650 = vsel %vm4416, %v5603, %v5649
      %v5651 = vsel %vm4418, %v5612, %v5650
      %v5652 = vsel %vm4420, %v5621, %v5651
      %v5653 = vsel %vm4422, %v5630, %v5652
      %v5654 = vsel %vm4424, %v5639, %v5653
      %v5655 = vsel %vm4426, %v5648, %v5654
      %5657 = vxpose.xlu0.b32.start [1/16] %v5655, 128
      %5658 = vxpose.xlu0.b32.cont [2/16] 0.0, 128
      %5659 = vxpose.xlu0.b32.cont [3/16] 0.0, 128
      %5660 = vxpose.xlu0.b32.cont [4/16] 0.0, 128
      %5661 = vxpose.xlu0.b32.cont [5/16] 0.0, 128
      %5662 = vxpose.xlu0.b32.cont [6/16] 0.0, 128
      %5663 = vxpose.xlu0.b32.cont [7/16] 0.0, 128
      %5664 = vxpose.xlu0.b32.cont [8/16] 0.0, 128
      %5665 = vxpose.xlu0.b32.cont [9/16] 0.0, 128
      %5666 = vxpose.xlu0.b32.cont [10/16] 0.0, 128
      %5667 = vxpose.xlu0.b32.cont [11/16] 0.0, 128
      %5668 = vxpose.xlu0.b32.cont [12/16] 0.0, 128
      %5669 = vxpose.xlu0.b32.cont [13/16] 0.0, 128
      %5670 = vxpose.xlu0.b32.cont [14/16] 0.0, 128
      %5671 = vxpose.xlu0.b32.cont [15/16] 0.0, 128
      %5672 = vxpose.xlu0.b32.end [16/16] 0.0, 128
      %v5673 = vpop.trf.xlu0
      %v5674 = vpop.trf.xlu0
      %v5675 = vpop.trf.xlu0
      %v5676 = vpop.trf.xlu0
      %v5677 = vpop.trf.xlu0
      %v5678 = vpop.trf.xlu0
      %v5679 = vpop.trf.xlu0
      %v5680 = vpop.trf.xlu0
      %v5681 = vpop.trf.xlu0
      %v5682 = vpop.trf.xlu0
      %v5683 = vpop.trf.xlu0
      %v5684 = vpop.trf.xlu0
      %v5685 = vpop.trf.xlu0
      %v5686 = vpop.trf.xlu0
      %v5687 = vpop.trf.xlu0
      %v5688 = vpop.trf.xlu0
      %v5689 = vlaneseq
      %v5690 = vshrl.u32 %v5689, 7
      %v5691 = vsub.s32 0, %v5690
      %v5692 = vrot.slane %v5673, %v5691
      %5694 = vbcast.lane.b32.xlu0 %v5692, 256
      %v5695 = vpop.permute.xlu0 %5694
      %v5696 = vlaneseq
      %v5697 = vshrl.u32 %v5696, 7
      %v5698 = vsub.s32 1, %v5697
      %v5699 = vrot.slane %v5673, %v5698
      %5701 = vbcast.lane.b32.xlu0 %v5699, 256
      %v5702 = vpop.permute.xlu0 %5701
      %v5703 = vlaneseq
      %v5704 = vshrl.u32 %v5703, 7
      %v5705 = vsub.s32 2, %v5704
      %v5706 = vrot.slane %v5673, %v5705
      %5708 = vbcast.lane.b32.xlu0 %v5706, 256
      %v5709 = vpop.permute.xlu0 %5708
      %v5710 = vlaneseq
      %v5711 = vshrl.u32 %v5710, 7
      %v5712 = vsub.s32 3, %v5711
      %v5713 = vrot.slane %v5673, %v5712
      %5715 = vbcast.lane.b32.xlu0 %v5713, 256
      %v5716 = vpop.permute.xlu0 %5715
      %v5717 = vlaneseq
      %v5718 = vshrl.u32 %v5717, 7
      %v5719 = vsub.s32 4, %v5718
      %v5720 = vrot.slane %v5673, %v5719
      %5722 = vbcast.lane.b32.xlu0 %v5720, 256
      %v5723 = vpop.permute.xlu0 %5722
      %v5724 = vlaneseq
      %v5725 = vshrl.u32 %v5724, 7
      %v5726 = vsub.s32 5, %v5725
      %v5727 = vrot.slane %v5673, %v5726
      %5729 = vbcast.lane.b32.xlu0 %v5727, 256
      %v5730 = vpop.permute.xlu0 %5729
      %v5731 = vlaneseq
      %v5732 = vshrl.u32 %v5731, 7
      %v5733 = vsub.s32 6, %v5732
      %v5734 = vrot.slane %v5673, %v5733
      %5736 = vbcast.lane.b32.xlu0 %v5734, 256
      %v5737 = vpop.permute.xlu0 %5736
      %v5738 = vlaneseq
      %v5739 = vshrl.u32 %v5738, 7
      %v5740 = vsub.s32 7, %v5739
      %v5741 = vrot.slane %v5673, %v5740
      %5743 = vbcast.lane.b32.xlu0 %v5741, 256
      %v5744 = vpop.permute.xlu0 %5743
      %v5745 = vlaneseq
      %v5746 = vshrl.u32 %v5745, 7
      %v5747 = vsub.s32 0, %v5746
      %v5748 = vrot.slane %v5674, %v5747
      %5750 = vbcast.lane.b32.xlu0 %v5748, 256
      %v5751 = vpop.permute.xlu0 %5750
      %v5752 = vlaneseq
      %v5753 = vshrl.u32 %v5752, 7
      %v5754 = vsub.s32 1, %v5753
      %v5755 = vrot.slane %v5674, %v5754
      %5757 = vbcast.lane.b32.xlu0 %v5755, 256
      %v5758 = vpop.permute.xlu0 %5757
      %v5759 = vlaneseq
      %v5760 = vshrl.u32 %v5759, 7
      %v5761 = vsub.s32 2, %v5760
      %v5762 = vrot.slane %v5674, %v5761
      %5764 = vbcast.lane.b32.xlu0 %v5762, 256
      %v5765 = vpop.permute.xlu0 %5764
      %v5766 = vlaneseq
      %v5767 = vshrl.u32 %v5766, 7
      %v5768 = vsub.s32 3, %v5767
      %v5769 = vrot.slane %v5674, %v5768
      %5771 = vbcast.lane.b32.xlu0 %v5769, 256
      %v5772 = vpop.permute.xlu0 %5771
      %v5773 = vlaneseq
      %v5774 = vshrl.u32 %v5773, 7
      %v5775 = vsub.s32 4, %v5774
      %v5776 = vrot.slane %v5674, %v5775
      %5778 = vbcast.lane.b32.xlu0 %v5776, 256
      %v5779 = vpop.permute.xlu0 %5778
      %v5780 = vlaneseq
      %v5781 = vshrl.u32 %v5780, 7
      %v5782 = vsub.s32 5, %v5781
      %v5783 = vrot.slane %v5674, %v5782
      %5785 = vbcast.lane.b32.xlu0 %v5783, 256
      %v5786 = vpop.permute.xlu0 %5785
      %v5787 = vlaneseq
      %v5788 = vshrl.u32 %v5787, 7
      %v5789 = vsub.s32 6, %v5788
      %v5790 = vrot.slane %v5674, %v5789
      %5792 = vbcast.lane.b32.xlu0 %v5790, 256
      %v5793 = vpop.permute.xlu0 %5792
      %v5794 = vlaneseq
      %v5795 = vshrl.u32 %v5794, 7
      %v5796 = vsub.s32 7, %v5795
      %v5797 = vrot.slane %v5674, %v5796
      %5799 = vbcast.lane.b32.xlu0 %v5797, 256
      %v5800 = vpop.permute.xlu0 %5799
      %vm5801 = vcmp.gt.f32.partialorder %v4961, %v5695
      %vm5802 = vcmp.gt.f32.partialorder %v4963, %v5702
      %vm5803 = vcmp.gt.f32.partialorder %v4965, %v5709
      %vm5804 = vcmp.gt.f32.partialorder %v4967, %v5716
      %vm5805 = vcmp.gt.f32.partialorder %v4969, %v5723
      %vm5806 = vcmp.gt.f32.partialorder %v4971, %v5730
      %vm5807 = vcmp.gt.f32.partialorder %v4973, %v5737
      %vm5808 = vcmp.gt.f32.partialorder %v4975, %v5744
      %vm5809 = vcmp.gt.f32.partialorder %v4977, %v5751
      %vm5810 = vcmp.gt.f32.partialorder %v4979, %v5758
      %vm5811 = vcmp.gt.f32.partialorder %v4981, %v5765
      %vm5812 = vcmp.gt.f32.partialorder %v4983, %v5772
      %vm5813 = vcmp.gt.f32.partialorder %v4985, %v5779
      %vm5814 = vcmp.gt.f32.partialorder %v4987, %v5786
      %vm5815 = vcmp.gt.f32.partialorder %v4989, %v5793
      %vm5816 = vcmp.gt.f32.partialorder %v4991, %v5800
      %v5817 = vlaneseq
      %v5818 = vshrl.u32 %v5817, 7
      %v5819 = vsub.s32 %v4217, %v5818
      %v5820 = vrot.slane %v5468, %v5819
      %v5821 = vlaneseq
      %v5822 = vshrl.u32 %v5821, 7
      %v5823 = vsub.s32 %v4658, %v5822
      %v5824 = vrot.slane %v5473, %v5823
      %v5825 = vsel %vm4663, %v5824, %v5820
      %v5826 = vlaneseq
      %v5827 = vshrl.u32 %v5826, 7
      %v5828 = vsub.s32 %v4217, %v5827
      %v5829 = vrot.slane %v5478, %v5828
      %v5830 = vlaneseq
      %v5831 = vshrl.u32 %v5830, 7
      %v5832 = vsub.s32 %v4658, %v5831
      %v5833 = vrot.slane %v5483, %v5832
      %v5834 = vsel %vm4663, %v5833, %v5829
      %v5835 = vlaneseq
      %v5836 = vshrl.u32 %v5835, 7
      %v5837 = vsub.s32 %v4217, %v5836
      %v5838 = vrot.slane %v5488, %v5837
      %v5839 = vlaneseq
      %v5840 = vshrl.u32 %v5839, 7
      %v5841 = vsub.s32 %v4658, %v5840
      %v5842 = vrot.slane %v5493, %v5841
      %v5843 = vsel %vm4663, %v5842, %v5838
      %v5844 = vlaneseq
      %v5845 = vshrl.u32 %v5844, 7
      %v5846 = vsub.s32 %v4217, %v5845
      %v5847 = vrot.slane %v5498, %v5846
      %v5848 = vlaneseq
      %v5849 = vshrl.u32 %v5848, 7
      %v5850 = vsub.s32 %v4658, %v5849
      %v5851 = vrot.slane %v5503, %v5850
      %v5852 = vsel %vm4663, %v5851, %v5847
      %v5853 = vlaneseq
      %v5854 = vshrl.u32 %v5853, 7
      %v5855 = vsub.s32 %v4217, %v5854
      %v5856 = vrot.slane %v5508, %v5855
      %v5857 = vlaneseq
      %v5858 = vshrl.u32 %v5857, 7
      %v5859 = vsub.s32 %v4658, %v5858
      %v5860 = vrot.slane %v5513, %v5859
      %v5861 = vsel %vm4663, %v5860, %v5856
      %v5862 = vlaneseq
      %v5863 = vshrl.u32 %v5862, 7
      %v5864 = vsub.s32 %v4217, %v5863
      %v5865 = vrot.slane %v5518, %v5864
      %v5866 = vlaneseq
      %v5867 = vshrl.u32 %v5866, 7
      %v5868 = vsub.s32 %v4658, %v5867
      %v5869 = vrot.slane %v5523, %v5868
      %v5870 = vsel %vm4663, %v5869, %v5865
      %v5871 = vlaneseq
      %v5872 = vshrl.u32 %v5871, 7
      %v5873 = vsub.s32 %v4217, %v5872
      %v5874 = vrot.slane %v5528, %v5873
      %v5875 = vlaneseq
      %v5876 = vshrl.u32 %v5875, 7
      %v5877 = vsub.s32 %v4658, %v5876
      %v5878 = vrot.slane %v5533, %v5877
      %v5879 = vsel %vm4663, %v5878, %v5874
      %v5880 = vlaneseq
      %v5881 = vshrl.u32 %v5880, 7
      %v5882 = vsub.s32 %v4217, %v5881
      %v5883 = vrot.slane %v5538, %v5882
      %v5884 = vlaneseq
      %v5885 = vshrl.u32 %v5884, 7
      %v5886 = vsub.s32 %v4658, %v5885
      %v5887 = vrot.slane %v5543, %v5886
      %v5888 = vsel %vm4663, %v5887, %v5883
      %v5889 = vsel %vm4414, %v5834, %v5825
      %v5890 = vsel %vm4416, %v5843, %v5889
      %v5891 = vsel %vm4418, %v5852, %v5890
      %v5892 = vsel %vm4420, %v5861, %v5891
      %v5893 = vsel %vm4422, %v5870, %v5892
      %v5894 = vsel %vm4424, %v5879, %v5893
      %v5895 = vsel %vm4426, %v5888, %v5894
      %5897 = vxpose.xlu0.b32.start [1/16] %v5895, 128
      %5898 = vxpose.xlu0.b32.cont [2/16] 0.0, 128
      %5899 = vxpose.xlu0.b32.cont [3/16] 0.0, 128
      %5900 = vxpose.xlu0.b32.cont [4/16] 0.0, 128
      %5901 = vxpose.xlu0.b32.cont [5/16] 0.0, 128
      %5902 = vxpose.xlu0.b32.cont [6/16] 0.0, 128
      %5903 = vxpose.xlu0.b32.cont [7/16] 0.0, 128
      %5904 = vxpose.xlu0.b32.cont [8/16] 0.0, 128
      %5905 = vxpose.xlu0.b32.cont [9/16] 0.0, 128
      %5906 = vxpose.xlu0.b32.cont [10/16] 0.0, 128
      %5907 = vxpose.xlu0.b32.cont [11/16] 0.0, 128
      %5908 = vxpose.xlu0.b32.cont [12/16] 0.0, 128
      %5909 = vxpose.xlu0.b32.cont [13/16] 0.0, 128
      %5910 = vxpose.xlu0.b32.cont [14/16] 0.0, 128
      %5911 = vxpose.xlu0.b32.cont [15/16] 0.0, 128
      %5912 = vxpose.xlu0.b32.end [16/16] 0.0, 128
      %v5913 = vpop.trf.xlu0
      %v5914 = vpop.trf.xlu0
      %v5915 = vpop.trf.xlu0
      %v5916 = vpop.trf.xlu0
      %v5917 = vpop.trf.xlu0
      %v5918 = vpop.trf.xlu0
      %v5919 = vpop.trf.xlu0
      %v5920 = vpop.trf.xlu0
      %v5921 = vpop.trf.xlu0
      %v5922 = vpop.trf.xlu0
      %v5923 = vpop.trf.xlu0
      %v5924 = vpop.trf.xlu0
      %v5925 = vpop.trf.xlu0
      %v5926 = vpop.trf.xlu0
      %v5927 = vpop.trf.xlu0
      %v5928 = vpop.trf.xlu0
      %v5929 = vlaneseq
      %v5930 = vshrl.u32 %v5929, 7
      %v5931 = vsub.s32 0, %v5930
      %v5932 = vrot.slane %v5913, %v5931
      %5934 = vbcast.lane.b32.xlu0 %v5932, 256
      %v5935 = vpop.permute.xlu0 %5934
      %v5936 = vlaneseq
      %v5937 = vshrl.u32 %v5936, 7
      %v5938 = vsub.s32 1, %v5937
      %v5939 = vrot.slane %v5913, %v5938
      %5941 = vbcast.lane.b32.xlu0 %v5939, 256
      %v5942 = vpop.permute.xlu0 %5941
      %v5943 = vlaneseq
      %v5944 = vshrl.u32 %v5943, 7
      %v5945 = vsub.s32 2, %v5944
      %v5946 = vrot.slane %v5913, %v5945
      %5948 = vbcast.lane.b32.xlu0 %v5946, 256
      %v5949 = vpop.permute.xlu0 %5948
      %v5950 = vlaneseq
      %v5951 = vshrl.u32 %v5950, 7
      %v5952 = vsub.s32 3, %v5951
      %v5953 = vrot.slane %v5913, %v5952
      %5955 = vbcast.lane.b32.xlu0 %v5953, 256
      %v5956 = vpop.permute.xlu0 %5955
      %v5957 = vlaneseq
      %v5958 = vshrl.u32 %v5957, 7
      %v5959 = vsub.s32 4, %v5958
      %v5960 = vrot.slane %v5913, %v5959
      %5962 = vbcast.lane.b32.xlu0 %v5960, 256
      %v5963 = vpop.permute.xlu0 %5962
      %v5964 = vlaneseq
      %v5965 = vshrl.u32 %v5964, 7
      %v5966 = vsub.s32 5, %v5965
      %v5967 = vrot.slane %v5913, %v5966
      %5969 = vbcast.lane.b32.xlu0 %v5967, 256
      %v5970 = vpop.permute.xlu0 %5969
      %v5971 = vlaneseq
      %v5972 = vshrl.u32 %v5971, 7
      %v5973 = vsub.s32 6, %v5972
      %v5974 = vrot.slane %v5913, %v5973
      %5976 = vbcast.lane.b32.xlu0 %v5974, 256
      %v5977 = vpop.permute.xlu0 %5976
      %v5978 = vlaneseq
      %v5979 = vshrl.u32 %v5978, 7
      %v5980 = vsub.s32 7, %v5979
      %v5981 = vrot.slane %v5913, %v5980
      %5983 = vbcast.lane.b32.xlu0 %v5981, 256
      %v5984 = vpop.permute.xlu0 %5983
      %v5985 = vlaneseq
      %v5986 = vshrl.u32 %v5985, 7
      %v5987 = vsub.s32 0, %v5986
      %v5988 = vrot.slane %v5914, %v5987
      %5990 = vbcast.lane.b32.xlu0 %v5988, 256
      %v5991 = vpop.permute.xlu0 %5990
      %v5992 = vlaneseq
      %v5993 = vshrl.u32 %v5992, 7
      %v5994 = vsub.s32 1, %v5993
      %v5995 = vrot.slane %v5914, %v5994
      %5997 = vbcast.lane.b32.xlu0 %v5995, 256
      %v5998 = vpop.permute.xlu0 %5997
      %v5999 = vlaneseq
      %v6000 = vshrl.u32 %v5999, 7
      %v6001 = vsub.s32 2, %v6000
      %v6002 = vrot.slane %v5914, %v6001
      %6004 = vbcast.lane.b32.xlu0 %v6002, 256
      %v6005 = vpop.permute.xlu0 %6004
      %v6006 = vlaneseq
      %v6007 = vshrl.u32 %v6006, 7
      %v6008 = vsub.s32 3, %v6007
      %v6009 = vrot.slane %v5914, %v6008
      %6011 = vbcast.lane.b32.xlu0 %v6009, 256
      %v6012 = vpop.permute.xlu0 %6011
      %v6013 = vlaneseq
      %v6014 = vshrl.u32 %v6013, 7
      %v6015 = vsub.s32 4, %v6014
      %v6016 = vrot.slane %v5914, %v6015
      %6018 = vbcast.lane.b32.xlu0 %v6016, 256
      %v6019 = vpop.permute.xlu0 %6018
      %v6020 = vlaneseq
      %v6021 = vshrl.u32 %v6020, 7
      %v6022 = vsub.s32 5, %v6021
      %v6023 = vrot.slane %v5914, %v6022
      %6025 = vbcast.lane.b32.xlu0 %v6023, 256
      %v6026 = vpop.permute.xlu0 %6025
      %v6027 = vlaneseq
      %v6028 = vshrl.u32 %v6027, 7
      %v6029 = vsub.s32 6, %v6028
      %v6030 = vrot.slane %v5914, %v6029
      %6032 = vbcast.lane.b32.xlu0 %v6030, 256
      %v6033 = vpop.permute.xlu0 %6032
      %v6034 = vlaneseq
      %v6035 = vshrl.u32 %v6034, 7
      %v6036 = vsub.s32 7, %v6035
      %v6037 = vrot.slane %v5914, %v6036
      %6039 = vbcast.lane.b32.xlu0 %v6037, 256
      %v6040 = vpop.permute.xlu0 %6039
      %v6041 = vmul.f32 %v4961, %v5935
      %v6042 = vmul.f32 %v4963, %v5942
      %v6043 = vmul.f32 %v4965, %v5949
      %v6044 = vmul.f32 %v4967, %v5956
      %v6045 = vmul.f32 %v4969, %v5963
      %v6046 = vmul.f32 %v4971, %v5970
      %v6047 = vmul.f32 %v4973, %v5977
      %v6048 = vmul.f32 %v4975, %v5984
      %v6049 = vmul.f32 %v4977, %v5991
      %v6050 = vmul.f32 %v4979, %v5998
      %v6051 = vmul.f32 %v4981, %v6005
      %v6052 = vmul.f32 %v4983, %v6012
      %v6053 = vmul.f32 %v4985, %v6019
      %v6054 = vmul.f32 %v4987, %v6026
      %v6055 = vmul.f32 %v4989, %v6033
      %v6056 = vmul.f32 %v4991, %v6040
      %v6057 = vsel %vm5801, %v6041, 0.0
      %v6058 = vsel %vm5802, %v6042, 0.0
      %v6059 = vsel %vm5803, %v6043, 0.0
      %v6060 = vsel %vm5804, %v6044, 0.0
      %v6061 = vsel %vm5805, %v6045, 0.0
      %v6062 = vsel %vm5806, %v6046, 0.0
      %v6063 = vsel %vm5807, %v6047, 0.0
      %v6064 = vsel %vm5808, %v6048, 0.0
      %v6065 = vsel %vm5809, %v6049, 0.0
      %v6066 = vsel %vm5810, %v6050, 0.0
      %v6067 = vsel %vm5811, %v6051, 0.0
      %v6068 = vsel %vm5812, %v6052, 0.0
      %v6069 = vsel %vm5813, %v6053, 0.0
      %v6070 = vsel %vm5814, %v6054, 0.0
      %v6071 = vsel %vm5815, %v6055, 0.0
      %v6072 = vsel %vm5816, %v6056, 0.0
      %v6073 = vld [vmem:[#allocation6] sm:$0xff]
      %v6074 = vld [vmem:[#allocation6 + $0x8] sm:$0xff]
      %v6075 = vld [vmem:[#allocation6 + $0x10] sm:$0xff]
      %v6076 = vld [vmem:[#allocation6 + $0x18] sm:$0xff]
      %v6077 = vld [vmem:[#allocation6 + $0x20] sm:$0xff]
      %v6078 = vld [vmem:[#allocation6 + $0x28] sm:$0xff]
      %v6079 = vld [vmem:[#allocation6 + $0x30] sm:$0xff]
      %v6080 = vld [vmem:[#allocation6 + $0x38] sm:$0xff]
      %v6081 = vld [vmem:[#allocation6 + $0x40] sm:$0xff]
      %v6082 = vld [vmem:[#allocation6 + $0x48] sm:$0xff]
      %v6083 = vld [vmem:[#allocation6 + $0x50] sm:$0xff]
      %v6084 = vld [vmem:[#allocation6 + $0x58] sm:$0xff]
      %v6085 = vld [vmem:[#allocation6 + $0x60] sm:$0xff]
      %v6086 = vld [vmem:[#allocation6 + $0x68] sm:$0xff]
      %v6087 = vld [vmem:[#allocation6 + $0x70] sm:$0xff]
      %v6088 = vld [vmem:[#allocation6 + $0x78] sm:$0xff]
      %v6089 = vld [vmem:[#allocation6 + $0x80] sm:$0xff]
      %v6090 = vld [vmem:[#allocation6 + $0x88] sm:$0xff]
      %v6091 = vld [vmem:[#allocation6 + $0x90] sm:$0xff]
      %v6092 = vld [vmem:[#allocation6 + $0x98] sm:$0xff]
      %v6093 = vld [vmem:[#allocation6 + $0xa0] sm:$0xff]
      %v6094 = vld [vmem:[#allocation6 + $0xa8] sm:$0xff]
      %v6095 = vld [vmem:[#allocation6 + $0xb0] sm:$0xff]
      %v6096 = vld [vmem:[#allocation6 + $0xb8] sm:$0xff]
      %v6097 = vld [vmem:[#allocation6 + $0xc0] sm:$0xff]
      %v6098 = vld [vmem:[#allocation6 + $0xc8] sm:$0xff]
      %v6099 = vld [vmem:[#allocation6 + $0xd0] sm:$0xff]
      %v6100 = vld [vmem:[#allocation6 + $0xd8] sm:$0xff]
      %v6101 = vld [vmem:[#allocation6 + $0xe0] sm:$0xff]
      %v6102 = vld [vmem:[#allocation6 + $0xe8] sm:$0xff]
      %v6103 = vld [vmem:[#allocation6 + $0xf0] sm:$0xff]
      %v6104 = vld [vmem:[#allocation6 + $0xf8] sm:$0xff]
      %v6106 = vsel %vm4237, %v6057, 0
      %6108 = vmatprep.subr.mxu0 0.0
      %6109 = vmatpush1.msra.mxu0 0.0
      %6110 = vmatprep.subr.mxu0 0.0
      %6111 = vmatpush1.msra.mxu0 0.0
      %6112 = vmatprep.subr.mxu0 0.0
      %6113 = vmatpush1.msra.mxu0 0.0
      %6114 = vmatprep.subr.mxu0 0.0
      %6115 = vmatpush1.msra.mxu0 0.0
      %6116 = vmatprep.subr.mxu0 0.0
      %6117 = vmatpush1.msra.mxu0 0.0
      %6118 = vmatprep.subr.mxu0 0.0
      %6119 = vmatpush1.msra.mxu0 0.0
      %6120 = vmatprep.subr.mxu0 0.0
      %6121 = vmatpush1.msra.mxu0 0.0
      %6122 = vmatprep.subr.mxu0 0.0
      %6123 = vmatpush1.msra.mxu0 0.0
      %6124 = vmatprep.subr.mxu0 0.0
      %6125 = vmatpush1.msra.mxu0 0.0
      %6126 = vmatprep.subr.mxu0 0.0
      %6127 = vmatpush1.msra.mxu0 0.0
      %6128 = vmatprep.subr.mxu0 0.0
      %6129 = vmatpush1.msra.mxu0 0.0
      %6130 = vmatprep.subr.mxu0 0.0
      %6131 = vmatpush1.msra.mxu0 0.0
      %6132 = vmatprep.subr.mxu0 0.0
      %6133 = vmatpush1.msra.mxu0 0.0
      %6134 = vmatprep.subr.mxu0 0.0
      %6135 = vmatpush1.msra.mxu0 0.0
      %6136 = vmatprep.subr.mxu0 0.0
      %6137 = vmatpush1.msra.mxu0 %v6074
      %6138 = vmatprep.subr.mxu0 0.0
      %6139 = vmatpush1.msra.mxu0 %v6073
      %6140 = vmatprep.subr.mxu0 0.0
      %6141 = vmatpush2.msra.mxu0 0.0
      %6142 = vmatprep.subr.mxu0 0.0
      %6143 = vmatpush2.msra.mxu0 0.0
      %6144 = vmatprep.subr.mxu0 0.0
      %6145 = vmatpush2.msra.mxu0 0.0
      %6146 = vmatprep.subr.mxu0 0.0
      %6147 = vmatpush2.msra.mxu0 0.0
      %6148 = vmatprep.subr.mxu0 0.0
      %6149 = vmatpush2.msra.mxu0 0.0
      %6150 = vmatprep.subr.mxu0 0.0
      %6151 = vmatpush2.msra.mxu0 0.0
      %6152 = vmatprep.subr.mxu0 0.0
      %6153 = vmatpush2.msra.mxu0 0.0
      %6154 = vmatprep.subr.mxu0 0.0
      %6155 = vmatpush2.msra.mxu0 0.0
      %6156 = vmatprep.subr.mxu0 0.0
      %6157 = vmatpush2.msra.mxu0 0.0
      %6158 = vmatprep.subr.mxu0 0.0
      %6159 = vmatpush2.msra.mxu0 0.0
      %6160 = vmatprep.subr.mxu0 0.0
      %6161 = vmatpush2.msra.mxu0 0.0
      %6162 = vmatprep.subr.mxu0 0.0
      %6163 = vmatpush2.msra.mxu0 0.0
      %6164 = vmatprep.subr.mxu0 0.0
      %6165 = vmatpush2.msra.mxu0 0.0
      %6166 = vmatprep.subr.mxu0 0.0
      %6167 = vmatpush2.msra.mxu0 0.0
      %6168 = vmatprep.subr.mxu0 0.0
      %6169 = vmatpush2.msra.mxu0 0.0
      %6170 = vmatprep.subr.mxu0 0.0
      %6171 = vmatpush2.msra.mxu0 0.0
      %6172 = vmatprep.mubr.f32.mxu0 0.0
      %6173 = vmatmul.mubr.f32.gmra.mxu0 %v6106
      %v6174 = vpop.f32.mrf.mxu0
      %v6175 = vadd.f32 0.0, %v6174
      %v6176 = vpop.f32.mrf.mxu0
      %6177 = vdwg.mxu0
      %v6179 = vsel %vm4237, %v6058, 0
      %6181 = vmatprep.subr.mxu0 0.0
      %6182 = vmatpush1.msra.mxu0 0.0
      %6183 = vmatprep.subr.mxu0 0.0
      %6184 = vmatpush1.msra.mxu0 0.0
      %6185 = vmatprep.subr.mxu0 0.0
      %6186 = vmatpush1.msra.mxu0 0.0
      %6187 = vmatprep.subr.mxu0 0.0
      %6188 = vmatpush1.msra.mxu0 0.0
      %6189 = vmatprep.subr.mxu0 0.0
      %6190 = vmatpush1.msra.mxu0 0.0
      %6191 = vmatprep.subr.mxu0 0.0
      %6192 = vmatpush1.msra.mxu0 0.0
      %6193 = vmatprep.subr.mxu0 0.0
      %6194 = vmatpush1.msra.mxu0 0.0
      %6195 = vmatprep.subr.mxu0 0.0
      %6196 = vmatpush1.msra.mxu0 0.0
      %6197 = vmatprep.subr.mxu0 0.0
      %6198 = vmatpush1.msra.mxu0 0.0
      %6199 = vmatprep.subr.mxu0 0.0
      %6200 = vmatpush1.msra.mxu0 0.0
      %6201 = vmatprep.subr.mxu0 0.0
      %6202 = vmatpush1.msra.mxu0 0.0
      %6203 = vmatprep.subr.mxu0 0.0
      %6204 = vmatpush1.msra.mxu0 0.0
      %6205 = vmatprep.subr.mxu0 0.0
      %6206 = vmatpush1.msra.mxu0 0.0
      %6207 = vmatprep.subr.mxu0 0.0
      %6208 = vmatpush1.msra.mxu0 0.0
      %6209 = vmatprep.subr.mxu0 0.0
      %6210 = vmatpush1.msra.mxu0 %v6076
      %6211 = vmatprep.subr.mxu0 0.0
      %6212 = vmatpush1.msra.mxu0 %v6075
      %6213 = vmatprep.subr.mxu0 0.0
      %6214 = vmatpush2.msra.mxu0 0.0
      %6215 = vmatprep.subr.mxu0 0.0
      %6216 = vmatpush2.msra.mxu0 0.0
      %6217 = vmatprep.subr.mxu0 0.0
      %6218 = vmatpush2.msra.mxu0 0.0
      %6219 = vmatprep.subr.mxu0 0.0
      %6220 = vmatpush2.msra.mxu0 0.0
      %6221 = vmatprep.subr.mxu0 0.0
      %6222 = vmatpush2.msra.mxu0 0.0
      %6223 = vmatprep.subr.mxu0 0.0
      %6224 = vmatpush2.msra.mxu0 0.0
      %6225 = vmatprep.subr.mxu0 0.0
      %6226 = vmatpush2.msra.mxu0 0.0
      %6227 = vmatprep.subr.mxu0 0.0
      %6228 = vmatpush2.msra.mxu0 0.0
      %6229 = vmatprep.subr.mxu0 0.0
      %6230 = vmatpush2.msra.mxu0 0.0
      %6231 = vmatprep.subr.mxu0 0.0
      %6232 = vmatpush2.msra.mxu0 0.0
      %6233 = vmatprep.subr.mxu0 0.0
      %6234 = vmatpush2.msra.mxu0 0.0
      %6235 = vmatprep.subr.mxu0 0.0
      %6236 = vmatpush2.msra.mxu0 0.0
      %6237 = vmatprep.subr.mxu0 0.0
      %6238 = vmatpush2.msra.mxu0 0.0
      %6239 = vmatprep.subr.mxu0 0.0
      %6240 = vmatpush2.msra.mxu0 0.0
      %6241 = vmatprep.subr.mxu0 0.0
      %6242 = vmatpush2.msra.mxu0 0.0
      %6243 = vmatprep.subr.mxu0 0.0
      %6244 = vmatpush2.msra.mxu0 0.0
      %6245 = vmatprep.mubr.f32.mxu0 0.0
      %6246 = vmatmul.mubr.f32.gmra.mxu0 %v6179
      %v6247 = vpop.f32.mrf.mxu0
      %v6248 = vadd.f32 0.0, %v6247
      %v6249 = vpop.f32.mrf.mxu0
      %6250 = vdwg.mxu0
      %v6252 = vsel %vm4237, %v6059, 0
      %6254 = vmatprep.subr.mxu0 0.0
      %6255 = vmatpush1.msra.mxu0 0.0
      %6256 = vmatprep.subr.mxu0 0.0
      %6257 = vmatpush1.msra.mxu0 0.0
      %6258 = vmatprep.subr.mxu0 0.0
      %6259 = vmatpush1.msra.mxu0 0.0
      %6260 = vmatprep.subr.mxu0 0.0
      %6261 = vmatpush1.msra.mxu0 0.0
      %6262 = vmatprep.subr.mxu0 0.0
      %6263 = vmatpush1.msra.mxu0 0.0
      %6264 = vmatprep.subr.mxu0 0.0
      %6265 = vmatpush1.msra.mxu0 0.0
      %6266 = vmatprep.subr.mxu0 0.0
      %6267 = vmatpush1.msra.mxu0 0.0
      %6268 = vmatprep.subr.mxu0 0.0
      %6269 = vmatpush1.msra.mxu0 0.0
      %6270 = vmatprep.subr.mxu0 0.0
      %6271 = vmatpush1.msra.mxu0 0.0
      %6272 = vmatprep.subr.mxu0 0.0
      %6273 = vmatpush1.msra.mxu0 0.0
      %6274 = vmatprep.subr.mxu0 0.0
      %6275 = vmatpush1.msra.mxu0 0.0
      %6276 = vmatprep.subr.mxu0 0.0
      %6277 = vmatpush1.msra.mxu0 0.0
      %6278 = vmatprep.subr.mxu0 0.0
      %6279 = vmatpush1.msra.mxu0 0.0
      %6280 = vmatprep.subr.mxu0 0.0
      %6281 = vmatpush1.msra.mxu0 0.0
      %6282 = vmatprep.subr.mxu0 0.0
      %6283 = vmatpush1.msra.mxu0 %v6078
      %6284 = vmatprep.subr.mxu0 0.0
      %6285 = vmatpush1.msra.mxu0 %v6077
      %6286 = vmatprep.subr.mxu0 0.0
      %6287 = vmatpush2.msra.mxu0 0.0
      %6288 = vmatprep.subr.mxu0 0.0
      %6289 = vmatpush2.msra.mxu0 0.0
      %6290 = vmatprep.subr.mxu0 0.0
      %6291 = vmatpush2.msra.mxu0 0.0
      %6292 = vmatprep.subr.mxu0 0.0
      %6293 = vmatpush2.msra.mxu0 0.0
      %6294 = vmatprep.subr.mxu0 0.0
      %6295 = vmatpush2.msra.mxu0 0.0
      %6296 = vmatprep.subr.mxu0 0.0
      %6297 = vmatpush2.msra.mxu0 0.0
      %6298 = vmatprep.subr.mxu0 0.0
      %6299 = vmatpush2.msra.mxu0 0.0
      %6300 = vmatprep.subr.mxu0 0.0
      %6301 = vmatpush2.msra.mxu0 0.0
      %6302 = vmatprep.subr.mxu0 0.0
      %6303 = vmatpush2.msra.mxu0 0.0
      %6304 = vmatprep.subr.mxu0 0.0
      %6305 = vmatpush2.msra.mxu0 0.0
      %6306 = vmatprep.subr.mxu0 0.0
      %6307 = vmatpush2.msra.mxu0 0.0
      %6308 = vmatprep.subr.mxu0 0.0
      %6309 = vmatpush2.msra.mxu0 0.0
      %6310 = vmatprep.subr.mxu0 0.0
      %6311 = vmatpush2.msra.mxu0 0.0
      %6312 = vmatprep.subr.mxu0 0.0
      %6313 = vmatpush2.msra.mxu0 0.0
      %6314 = vmatprep.subr.mxu0 0.0
      %6315 = vmatpush2.msra.mxu0 0.0
      %6316 = vmatprep.subr.mxu0 0.0
      %6317 = vmatpush2.msra.mxu0 0.0
      %6318 = vmatprep.mubr.f32.mxu0 0.0
      %6319 = vmatmul.mubr.f32.gmra.mxu0 %v6252
      %v6320 = vpop.f32.mrf.mxu0
      %v6321 = vadd.f32 0.0, %v6320
      %v6322 = vpop.f32.mrf.mxu0
      %6323 = vdwg.mxu0
      %v6325 = vsel %vm4237, %v6060, 0
      %6327 = vmatprep.subr.mxu0 0.0
      %6328 = vmatpush1.msra.mxu0 0.0
      %6329 = vmatprep.subr.mxu0 0.0
      %6330 = vmatpush1.msra.mxu0 0.0
      %6331 = vmatprep.subr.mxu0 0.0
      %6332 = vmatpush1.msra.mxu0 0.0
      %6333 = vmatprep.subr.mxu0 0.0
      %6334 = vmatpush1.msra.mxu0 0.0
      %6335 = vmatprep.subr.mxu0 0.0
      %6336 = vmatpush1.msra.mxu0 0.0
      %6337 = vmatprep.subr.mxu0 0.0
      %6338 = vmatpush1.msra.mxu0 0.0
      %6339 = vmatprep.subr.mxu0 0.0
      %6340 = vmatpush1.msra.mxu0 0.0
      %6341 = vmatprep.subr.mxu0 0.0
      %6342 = vmatpush1.msra.mxu0 0.0
      %6343 = vmatprep.subr.mxu0 0.0
      %6344 = vmatpush1.msra.mxu0 0.0
      %6345 = vmatprep.subr.mxu0 0.0
      %6346 = vmatpush1.msra.mxu0 0.0
      %6347 = vmatprep.subr.mxu0 0.0
      %6348 = vmatpush1.msra.mxu0 0.0
      %6349 = vmatprep.subr.mxu0 0.0
      %6350 = vmatpush1.msra.mxu0 0.0
      %6351 = vmatprep.subr.mxu0 0.0
      %6352 = vmatpush1.msra.mxu0 0.0
      %6353 = vmatprep.subr.mxu0 0.0
      %6354 = vmatpush1.msra.mxu0 0.0
      %6355 = vmatprep.subr.mxu0 0.0
      %6356 = vmatpush1.msra.mxu0 %v6080
      %6357 = vmatprep.subr.mxu0 0.0
      %6358 = vmatpush1.msra.mxu0 %v6079
      %6359 = vmatprep.subr.mxu0 0.0
      %6360 = vmatpush2.msra.mxu0 0.0
      %6361 = vmatprep.subr.mxu0 0.0
      %6362 = vmatpush2.msra.mxu0 0.0
      %6363 = vmatprep.subr.mxu0 0.0
      %6364 = vmatpush2.msra.mxu0 0.0
      %6365 = vmatprep.subr.mxu0 0.0
      %6366 = vmatpush2.msra.mxu0 0.0
      %6367 = vmatprep.subr.mxu0 0.0
      %6368 = vmatpush2.msra.mxu0 0.0
      %6369 = vmatprep.subr.mxu0 0.0
      %6370 = vmatpush2.msra.mxu0 0.0
      %6371 = vmatprep.subr.mxu0 0.0
      %6372 = vmatpush2.msra.mxu0 0.0
      %6373 = vmatprep.subr.mxu0 0.0
      %6374 = vmatpush2.msra.mxu0 0.0
      %6375 = vmatprep.subr.mxu0 0.0
      %6376 = vmatpush2.msra.mxu0 0.0
      %6377 = vmatprep.subr.mxu0 0.0
      %6378 = vmatpush2.msra.mxu0 0.0
      %6379 = vmatprep.subr.mxu0 0.0
      %6380 = vmatpush2.msra.mxu0 0.0
      %6381 = vmatprep.subr.mxu0 0.0
      %6382 = vmatpush2.msra.mxu0 0.0
      %6383 = vmatprep.subr.mxu0 0.0
      %6384 = vmatpush2.msra.mxu0 0.0
      %6385 = vmatprep.subr.mxu0 0.0
      %6386 = vmatpush2.msra.mxu0 0.0
      %6387 = vmatprep.subr.mxu0 0.0
      %6388 = vmatpush2.msra.mxu0 0.0
      %6389 = vmatprep.subr.mxu0 0.0
      %6390 = vmatpush2.msra.mxu0 0.0
      %6391 = vmatprep.mubr.f32.mxu0 0.0
      %6392 = vmatmul.mubr.f32.gmra.mxu0 %v6325
      %v6393 = vpop.f32.mrf.mxu0
      %v6394 = vadd.f32 0.0, %v6393
      %v6395 = vpop.f32.mrf.mxu0
      %6396 = vdwg.mxu0
      %v6398 = vsel %vm4237, %v6061, 0
      %6400 = vmatprep.subr.mxu0 0.0
      %6401 = vmatpush1.msra.mxu0 0.0
      %6402 = vmatprep.subr.mxu0 0.0
      %6403 = vmatpush1.msra.mxu0 0.0
      %6404 = vmatprep.subr.mxu0 0.0
      %6405 = vmatpush1.msra.mxu0 0.0
      %6406 = vmatprep.subr.mxu0 0.0
      %6407 = vmatpush1.msra.mxu0 0.0
      %6408 = vmatprep.subr.mxu0 0.0
      %6409 = vmatpush1.msra.mxu0 0.0
      %6410 = vmatprep.subr.mxu0 0.0
      %6411 = vmatpush1.msra.mxu0 0.0
      %6412 = vmatprep.subr.mxu0 0.0
      %6413 = vmatpush1.msra.mxu0 0.0
      %6414 = vmatprep.subr.mxu0 0.0
      %6415 = vmatpush1.msra.mxu0 0.0
      %6416 = vmatprep.subr.mxu0 0.0
      %6417 = vmatpush1.msra.mxu0 0.0
      %6418 = vmatprep.subr.mxu0 0.0
      %6419 = vmatpush1.msra.mxu0 0.0
      %6420 = vmatprep.subr.mxu0 0.0
      %6421 = vmatpush1.msra.mxu0 0.0
      %6422 = vmatprep.subr.mxu0 0.0
      %6423 = vmatpush1.msra.mxu0 0.0
      %6424 = vmatprep.subr.mxu0 0.0
      %6425 = vmatpush1.msra.mxu0 0.0
      %6426 = vmatprep.subr.mxu0 0.0
      %6427 = vmatpush1.msra.mxu0 0.0
      %6428 = vmatprep.subr.mxu0 0.0
      %6429 = vmatpush1.msra.mxu0 %v6082
      %6430 = vmatprep.subr.mxu0 0.0
      %6431 = vmatpush1.msra.mxu0 %v6081
      %6432 = vmatprep.subr.mxu0 0.0
      %6433 = vmatpush2.msra.mxu0 0.0
      %6434 = vmatprep.subr.mxu0 0.0
      %6435 = vmatpush2.msra.mxu0 0.0
      %6436 = vmatprep.subr.mxu0 0.0
      %6437 = vmatpush2.msra.mxu0 0.0
      %6438 = vmatprep.subr.mxu0 0.0
      %6439 = vmatpush2.msra.mxu0 0.0
      %6440 = vmatprep.subr.mxu0 0.0
      %6441 = vmatpush2.msra.mxu0 0.0
      %6442 = vmatprep.subr.mxu0 0.0
      %6443 = vmatpush2.msra.mxu0 0.0
      %6444 = vmatprep.subr.mxu0 0.0
      %6445 = vmatpush2.msra.mxu0 0.0
      %6446 = vmatprep.subr.mxu0 0.0
      %6447 = vmatpush2.msra.mxu0 0.0
      %6448 = vmatprep.subr.mxu0 0.0
      %6449 = vmatpush2.msra.mxu0 0.0
      %6450 = vmatprep.subr.mxu0 0.0
      %6451 = vmatpush2.msra.mxu0 0.0
      %6452 = vmatprep.subr.mxu0 0.0
      %6453 = vmatpush2.msra.mxu0 0.0
      %6454 = vmatprep.subr.mxu0 0.0
      %6455 = vmatpush2.msra.mxu0 0.0
      %6456 = vmatprep.subr.mxu0 0.0
      %6457 = vmatpush2.msra.mxu0 0.0
      %6458 = vmatprep.subr.mxu0 0.0
      %6459 = vmatpush2.msra.mxu0 0.0
      %6460 = vmatprep.subr.mxu0 0.0
      %6461 = vmatpush2.msra.mxu0 0.0
      %6462 = vmatprep.subr.mxu0 0.0
      %6463 = vmatpush2.msra.mxu0 0.0
      %6464 = vmatprep.mubr.f32.mxu0 0.0
      %6465 = vmatmul.mubr.f32.gmra.mxu0 %v6398
      %v6466 = vpop.f32.mrf.mxu0
      %v6467 = vadd.f32 0.0, %v6466
      %v6468 = vpop.f32.mrf.mxu0
      %6469 = vdwg.mxu0
      %v6471 = vsel %vm4237, %v6062, 0
      %6473 = vmatprep.subr.mxu0 0.0
      %6474 = vmatpush1.msra.mxu0 0.0
      %6475 = vmatprep.subr.mxu0 0.0
      %6476 = vmatpush1.msra.mxu0 0.0
      %6477 = vmatprep.subr.mxu0 0.0
      %6478 = vmatpush1.msra.mxu0 0.0
      %6479 = vmatprep.subr.mxu0 0.0
      %6480 = vmatpush1.msra.mxu0 0.0
      %6481 = vmatprep.subr.mxu0 0.0
      %6482 = vmatpush1.msra.mxu0 0.0
      %6483 = vmatprep.subr.mxu0 0.0
      %6484 = vmatpush1.msra.mxu0 0.0
      %6485 = vmatprep.subr.mxu0 0.0
      %6486 = vmatpush1.msra.mxu0 0.0
      %6487 = vmatprep.subr.mxu0 0.0
      %6488 = vmatpush1.msra.mxu0 0.0
      %6489 = vmatprep.subr.mxu0 0.0
      %6490 = vmatpush1.msra.mxu0 0.0
      %6491 = vmatprep.subr.mxu0 0.0
      %6492 = vmatpush1.msra.mxu0 0.0
      %6493 = vmatprep.subr.mxu0 0.0
      %6494 = vmatpush1.msra.mxu0 0.0
      %6495 = vmatprep.subr.mxu0 0.0
      %6496 = vmatpush1.msra.mxu0 0.0
      %6497 = vmatprep.subr.mxu0 0.0
      %6498 = vmatpush1.msra.mxu0 0.0
      %6499 = vmatprep.subr.mxu0 0.0
      %6500 = vmatpush1.msra.mxu0 0.0
      %6501 = vmatprep.subr.mxu0 0.0
      %6502 = vmatpush1.msra.mxu0 %v6084
      %6503 = vmatprep.subr.mxu0 0.0
      %6504 = vmatpush1.msra.mxu0 %v6083
      %6505 = vmatprep.subr.mxu0 0.0
      %6506 = vmatpush2.msra.mxu0 0.0
      %6507 = vmatprep.subr.mxu0 0.0
      %6508 = vmatpush2.msra.mxu0 0.0
      %6509 = vmatprep.subr.mxu0 0.0
      %6510 = vmatpush2.msra.mxu0 0.0
      %6511 = vmatprep.subr.mxu0 0.0
      %6512 = vmatpush2.msra.mxu0 0.0
      %6513 = vmatprep.subr.mxu0 0.0
      %6514 = vmatpush2.msra.mxu0 0.0
      %6515 = vmatprep.subr.mxu0 0.0
      %6516 = vmatpush2.msra.mxu0 0.0
      %6517 = vmatprep.subr.mxu0 0.0
      %6518 = vmatpush2.msra.mxu0 0.0
      %6519 = vmatprep.subr.mxu0 0.0
      %6520 = vmatpush2.msra.mxu0 0.0
      %6521 = vmatprep.subr.mxu0 0.0
      %6522 = vmatpush2.msra.mxu0 0.0
      %6523 = vmatprep.subr.mxu0 0.0
      %6524 = vmatpush2.msra.mxu0 0.0
      %6525 = vmatprep.subr.mxu0 0.0
      %6526 = vmatpush2.msra.mxu0 0.0
      %6527 = vmatprep.subr.mxu0 0.0
      %6528 = vmatpush2.msra.mxu0 0.0
      %6529 = vmatprep.subr.mxu0 0.0
      %6530 = vmatpush2.msra.mxu0 0.0
      %6531 = vmatprep.subr.mxu0 0.0
      %6532 = vmatpush2.msra.mxu0 0.0
      %6533 = vmatprep.subr.mxu0 0.0
      %6534 = vmatpush2.msra.mxu0 0.0
      %6535 = vmatprep.subr.mxu0 0.0
      %6536 = vmatpush2.msra.mxu0 0.0
      %6537 = vmatprep.mubr.f32.mxu0 0.0
      %6538 = vmatmul.mubr.f32.gmra.mxu0 %v6471
      %v6539 = vpop.f32.mrf.mxu0
      %v6540 = vadd.f32 0.0, %v6539
      %v6541 = vpop.f32.mrf.mxu0
      %6542 = vdwg.mxu0
      %v6544 = vsel %vm4237, %v6063, 0
      %6546 = vmatprep.subr.mxu0 0.0
      %6547 = vmatpush1.msra.mxu0 0.0
      %6548 = vmatprep.subr.mxu0 0.0
      %6549 = vmatpush1.msra.mxu0 0.0
      %6550 = vmatprep.subr.mxu0 0.0
      %6551 = vmatpush1.msra.mxu0 0.0
      %6552 = vmatprep.subr.mxu0 0.0
      %6553 = vmatpush1.msra.mxu0 0.0
      %6554 = vmatprep.subr.mxu0 0.0
      %6555 = vmatpush1.msra.mxu0 0.0
      %6556 = vmatprep.subr.mxu0 0.0
      %6557 = vmatpush1.msra.mxu0 0.0
      %6558 = vmatprep.subr.mxu0 0.0
      %6559 = vmatpush1.msra.mxu0 0.0
      %6560 = vmatprep.subr.mxu0 0.0
      %6561 = vmatpush1.msra.mxu0 0.0
      %6562 = vmatprep.subr.mxu0 0.0
      %6563 = vmatpush1.msra.mxu0 0.0
      %6564 = vmatprep.subr.mxu0 0.0
      %6565 = vmatpush1.msra.mxu0 0.0
      %6566 = vmatprep.subr.mxu0 0.0
      %6567 = vmatpush1.msra.mxu0 0.0
      %6568 = vmatprep.subr.mxu0 0.0
      %6569 = vmatpush1.msra.mxu0 0.0
      %6570 = vmatprep.subr.mxu0 0.0
      %6571 = vmatpush1.msra.mxu0 0.0
      %6572 = vmatprep.subr.mxu0 0.0
      %6573 = vmatpush1.msra.mxu0 0.0
      %6574 = vmatprep.subr.mxu0 0.0
      %6575 = vmatpush1.msra.mxu0 %v6086
      %6576 = vmatprep.subr.mxu0 0.0
      %6577 = vmatpush1.msra.mxu0 %v6085
      %6578 = vmatprep.subr.mxu0 0.0
      %6579 = vmatpush2.msra.mxu0 0.0
      %6580 = vmatprep.subr.mxu0 0.0
      %6581 = vmatpush2.msra.mxu0 0.0
      %6582 = vmatprep.subr.mxu0 0.0
      %6583 = vmatpush2.msra.mxu0 0.0
      %6584 = vmatprep.subr.mxu0 0.0
      %6585 = vmatpush2.msra.mxu0 0.0
      %6586 = vmatprep.subr.mxu0 0.0
      %6587 = vmatpush2.msra.mxu0 0.0
      %6588 = vmatprep.subr.mxu0 0.0
      %6589 = vmatpush2.msra.mxu0 0.0
      %6590 = vmatprep.subr.mxu0 0.0
      %6591 = vmatpush2.msra.mxu0 0.0
      %6592 = vmatprep.subr.mxu0 0.0
      %6593 = vmatpush2.msra.mxu0 0.0
      %6594 = vmatprep.subr.mxu0 0.0
      %6595 = vmatpush2.msra.mxu0 0.0
      %6596 = vmatprep.subr.mxu0 0.0
      %6597 = vmatpush2.msra.mxu0 0.0
      %6598 = vmatprep.subr.mxu0 0.0
      %6599 = vmatpush2.msra.mxu0 0.0
      %6600 = vmatprep.subr.mxu0 0.0
      %6601 = vmatpush2.msra.mxu0 0.0
      %6602 = vmatprep.subr.mxu0 0.0
      %6603 = vmatpush2.msra.mxu0 0.0
      %6604 = vmatprep.subr.mxu0 0.0
      %6605 = vmatpush2.msra.mxu0 0.0
      %6606 = vmatprep.subr.mxu0 0.0
      %6607 = vmatpush2.msra.mxu0 0.0
      %6608 = vmatprep.subr.mxu0 0.0
      %6609 = vmatpush2.msra.mxu0 0.0
      %6610 = vmatprep.mubr.f32.mxu0 0.0
      %6611 = vmatmul.mubr.f32.gmra.mxu0 %v6544
      %v6612 = vpop.f32.mrf.mxu0
      %v6613 = vadd.f32 0.0, %v6612
      %v6614 = vpop.f32.mrf.mxu0
      %6615 = vdwg.mxu0
      %v6617 = vsel %vm4237, %v6064, 0
      %6619 = vmatprep.subr.mxu0 0.0
      %6620 = vmatpush1.msra.mxu0 0.0
      %6621 = vmatprep.subr.mxu0 0.0
      %6622 = vmatpush1.msra.mxu0 0.0
      %6623 = vmatprep.subr.mxu0 0.0
      %6624 = vmatpush1.msra.mxu0 0.0
      %6625 = vmatprep.subr.mxu0 0.0
      %6626 = vmatpush1.msra.mxu0 0.0
      %6627 = vmatprep.subr.mxu0 0.0
      %6628 = vmatpush1.msra.mxu0 0.0
      %6629 = vmatprep.subr.mxu0 0.0
      %6630 = vmatpush1.msra.mxu0 0.0
      %6631 = vmatprep.subr.mxu0 0.0
      %6632 = vmatpush1.msra.mxu0 0.0
      %6633 = vmatprep.subr.mxu0 0.0
      %6634 = vmatpush1.msra.mxu0 0.0
      %6635 = vmatprep.subr.mxu0 0.0
      %6636 = vmatpush1.msra.mxu0 0.0
      %6637 = vmatprep.subr.mxu0 0.0
      %6638 = vmatpush1.msra.mxu0 0.0
      %6639 = vmatprep.subr.mxu0 0.0
      %6640 = vmatpush1.msra.mxu0 0.0
      %6641 = vmatprep.subr.mxu0 0.0
      %6642 = vmatpush1.msra.mxu0 0.0
      %6643 = vmatprep.subr.mxu0 0.0
      %6644 = vmatpush1.msra.mxu0 0.0
      %6645 = vmatprep.subr.mxu0 0.0
      %6646 = vmatpush1.msra.mxu0 0.0
      %6647 = vmatprep.subr.mxu0 0.0
      %6648 = vmatpush1.msra.mxu0 %v6088
      %6649 = vmatprep.subr.mxu0 0.0
      %6650 = vmatpush1.msra.mxu0 %v6087
      %6651 = vmatprep.subr.mxu0 0.0
      %6652 = vmatpush2.msra.mxu0 0.0
      %6653 = vmatprep.subr.mxu0 0.0
      %6654 = vmatpush2.msra.mxu0 0.0
      %6655 = vmatprep.subr.mxu0 0.0
      %6656 = vmatpush2.msra.mxu0 0.0
      %6657 = vmatprep.subr.mxu0 0.0
      %6658 = vmatpush2.msra.mxu0 0.0
      %6659 = vmatprep.subr.mxu0 0.0
      %6660 = vmatpush2.msra.mxu0 0.0
      %6661 = vmatprep.subr.mxu0 0.0
      %6662 = vmatpush2.msra.mxu0 0.0
      %6663 = vmatprep.subr.mxu0 0.0
      %6664 = vmatpush2.msra.mxu0 0.0
      %6665 = vmatprep.subr.mxu0 0.0
      %6666 = vmatpush2.msra.mxu0 0.0
      %6667 = vmatprep.subr.mxu0 0.0
      %6668 = vmatpush2.msra.mxu0 0.0
      %6669 = vmatprep.subr.mxu0 0.0
      %6670 = vmatpush2.msra.mxu0 0.0
      %6671 = vmatprep.subr.mxu0 0.0
      %6672 = vmatpush2.msra.mxu0 0.0
      %6673 = vmatprep.subr.mxu0 0.0
      %6674 = vmatpush2.msra.mxu0 0.0
      %6675 = vmatprep.subr.mxu0 0.0
      %6676 = vmatpush2.msra.mxu0 0.0
      %6677 = vmatprep.subr.mxu0 0.0
      %6678 = vmatpush2.msra.mxu0 0.0
      %6679 = vmatprep.subr.mxu0 0.0
      %6680 = vmatpush2.msra.mxu0 0.0
      %6681 = vmatprep.subr.mxu0 0.0
      %6682 = vmatpush2.msra.mxu0 0.0
      %6683 = vmatprep.mubr.f32.mxu0 0.0
      %6684 = vmatmul.mubr.f32.gmra.mxu0 %v6617
      %v6685 = vpop.f32.mrf.mxu0
      %v6686 = vadd.f32 0.0, %v6685
      %v6687 = vpop.f32.mrf.mxu0
      %6688 = vdwg.mxu0
      %v6690 = vsel %vm4237, %v6065, 0
      %6692 = vmatprep.subr.mxu0 0.0
      %6693 = vmatpush1.msra.mxu0 0.0
      %6694 = vmatprep.subr.mxu0 0.0
      %6695 = vmatpush1.msra.mxu0 0.0
      %6696 = vmatprep.subr.mxu0 0.0
      %6697 = vmatpush1.msra.mxu0 0.0
      %6698 = vmatprep.subr.mxu0 0.0
      %6699 = vmatpush1.msra.mxu0 0.0
      %6700 = vmatprep.subr.mxu0 0.0
      %6701 = vmatpush1.msra.mxu0 0.0
      %6702 = vmatprep.subr.mxu0 0.0
      %6703 = vmatpush1.msra.mxu0 0.0
      %6704 = vmatprep.subr.mxu0 0.0
      %6705 = vmatpush1.msra.mxu0 0.0
      %6706 = vmatprep.subr.mxu0 0.0
      %6707 = vmatpush1.msra.mxu0 0.0
      %6708 = vmatprep.subr.mxu0 0.0
      %6709 = vmatpush1.msra.mxu0 0.0
      %6710 = vmatprep.subr.mxu0 0.0
      %6711 = vmatpush1.msra.mxu0 0.0
      %6712 = vmatprep.subr.mxu0 0.0
      %6713 = vmatpush1.msra.mxu0 0.0
      %6714 = vmatprep.subr.mxu0 0.0
      %6715 = vmatpush1.msra.mxu0 0.0
      %6716 = vmatprep.subr.mxu0 0.0
      %6717 = vmatpush1.msra.mxu0 0.0
      %6718 = vmatprep.subr.mxu0 0.0
      %6719 = vmatpush1.msra.mxu0 0.0
      %6720 = vmatprep.subr.mxu0 0.0
      %6721 = vmatpush1.msra.mxu0 %v6090
      %6722 = vmatprep.subr.mxu0 0.0
      %6723 = vmatpush1.msra.mxu0 %v6089
      %6724 = vmatprep.subr.mxu0 0.0
      %6725 = vmatpush2.msra.mxu0 0.0
      %6726 = vmatprep.subr.mxu0 0.0
      %6727 = vmatpush2.msra.mxu0 0.0
      %6728 = vmatprep.subr.mxu0 0.0
      %6729 = vmatpush2.msra.mxu0 0.0
      %6730 = vmatprep.subr.mxu0 0.0
      %6731 = vmatpush2.msra.mxu0 0.0
      %6732 = vmatprep.subr.mxu0 0.0
      %6733 = vmatpush2.msra.mxu0 0.0
      %6734 = vmatprep.subr.mxu0 0.0
      %6735 = vmatpush2.msra.mxu0 0.0
      %6736 = vmatprep.subr.mxu0 0.0
      %6737 = vmatpush2.msra.mxu0 0.0
      %6738 = vmatprep.subr.mxu0 0.0
      %6739 = vmatpush2.msra.mxu0 0.0
      %6740 = vmatprep.subr.mxu0 0.0
      %6741 = vmatpush2.msra.mxu0 0.0
      %6742 = vmatprep.subr.mxu0 0.0
      %6743 = vmatpush2.msra.mxu0 0.0
      %6744 = vmatprep.subr.mxu0 0.0
      %6745 = vmatpush2.msra.mxu0 0.0
      %6746 = vmatprep.subr.mxu0 0.0
      %6747 = vmatpush2.msra.mxu0 0.0
      %6748 = vmatprep.subr.mxu0 0.0
      %6749 = vmatpush2.msra.mxu0 0.0
      %6750 = vmatprep.subr.mxu0 0.0
      %6751 = vmatpush2.msra.mxu0 0.0
      %6752 = vmatprep.subr.mxu0 0.0
      %6753 = vmatpush2.msra.mxu0 0.0
      %6754 = vmatprep.subr.mxu0 0.0
      %6755 = vmatpush2.msra.mxu0 0.0
      %6756 = vmatprep.mubr.f32.mxu0 0.0
      %6757 = vmatmul.mubr.f32.gmra.mxu0 %v6690
      %v6758 = vpop.f32.mrf.mxu0
      %v6759 = vadd.f32 0.0, %v6758
      %v6760 = vpop.f32.mrf.mxu0
      %6761 = vdwg.mxu0
      %v6763 = vsel %vm4237, %v6066, 0
      %6765 = vmatprep.subr.mxu0 0.0
      %6766 = vmatpush1.msra.mxu0 0.0
      %6767 = vmatprep.subr.mxu0 0.0
      %6768 = vmatpush1.msra.mxu0 0.0
      %6769 = vmatprep.subr.mxu0 0.0
      %6770 = vmatpush1.msra.mxu0 0.0
      %6771 = vmatprep.subr.mxu0 0.0
      %6772 = vmatpush1.msra.mxu0 0.0
      %6773 = vmatprep.subr.mxu0 0.0
      %6774 = vmatpush1.msra.mxu0 0.0
      %6775 = vmatprep.subr.mxu0 0.0
      %6776 = vmatpush1.msra.mxu0 0.0
      %6777 = vmatprep.subr.mxu0 0.0
      %6778 = vmatpush1.msra.mxu0 0.0
      %6779 = vmatprep.subr.mxu0 0.0
      %6780 = vmatpush1.msra.mxu0 0.0
      %6781 = vmatprep.subr.mxu0 0.0
      %6782 = vmatpush1.msra.mxu0 0.0
      %6783 = vmatprep.subr.mxu0 0.0
      %6784 = vmatpush1.msra.mxu0 0.0
      %6785 = vmatprep.subr.mxu0 0.0
      %6786 = vmatpush1.msra.mxu0 0.0
      %6787 = vmatprep.subr.mxu0 0.0
      %6788 = vmatpush1.msra.mxu0 0.0
      %6789 = vmatprep.subr.mxu0 0.0
      %6790 = vmatpush1.msra.mxu0 0.0
      %6791 = vmatprep.subr.mxu0 0.0
      %6792 = vmatpush1.msra.mxu0 0.0
      %6793 = vmatprep.subr.mxu0 0.0
      %6794 = vmatpush1.msra.mxu0 %v6092
      %6795 = vmatprep.subr.mxu0 0.0
      %6796 = vmatpush1.msra.mxu0 %v6091
      %6797 = vmatprep.subr.mxu0 0.0
      %6798 = vmatpush2.msra.mxu0 0.0
      %6799 = vmatprep.subr.mxu0 0.0
      %6800 = vmatpush2.msra.mxu0 0.0
      %6801 = vmatprep.subr.mxu0 0.0
      %6802 = vmatpush2.msra.mxu0 0.0
      %6803 = vmatprep.subr.mxu0 0.0
      %6804 = vmatpush2.msra.mxu0 0.0
      %6805 = vmatprep.subr.mxu0 0.0
      %6806 = vmatpush2.msra.mxu0 0.0
      %6807 = vmatprep.subr.mxu0 0.0
      %6808 = vmatpush2.msra.mxu0 0.0
      %6809 = vmatprep.subr.mxu0 0.0
      %6810 = vmatpush2.msra.mxu0 0.0
      %6811 = vmatprep.subr.mxu0 0.0
      %6812 = vmatpush2.msra.mxu0 0.0
      %6813 = vmatprep.subr.mxu0 0.0
      %6814 = vmatpush2.msra.mxu0 0.0
      %6815 = vmatprep.subr.mxu0 0.0
      %6816 = vmatpush2.msra.mxu0 0.0
      %6817 = vmatprep.subr.mxu0 0.0
      %6818 = vmatpush2.msra.mxu0 0.0
      %6819 = vmatprep.subr.mxu0 0.0
      %6820 = vmatpush2.msra.mxu0 0.0
      %6821 = vmatprep.subr.mxu0 0.0
      %6822 = vmatpush2.msra.mxu0 0.0
      %6823 = vmatprep.subr.mxu0 0.0
      %6824 = vmatpush2.msra.mxu0 0.0
      %6825 = vmatprep.subr.mxu0 0.0
      %6826 = vmatpush2.msra.mxu0 0.0
      %6827 = vmatprep.subr.mxu0 0.0
      %6828 = vmatpush2.msra.mxu0 0.0
      %6829 = vmatprep.mubr.f32.mxu0 0.0
      %6830 = vmatmul.mubr.f32.gmra.mxu0 %v6763
      %v6831 = vpop.f32.mrf.mxu0
      %v6832 = vadd.f32 0.0, %v6831
      %v6833 = vpop.f32.mrf.mxu0
      %6834 = vdwg.mxu0
      %v6836 = vsel %vm4237, %v6067, 0
      %6838 = vmatprep.subr.mxu0 0.0
      %6839 = vmatpush1.msra.mxu0 0.0
      %6840 = vmatprep.subr.mxu0 0.0
      %6841 = vmatpush1.msra.mxu0 0.0
      %6842 = vmatprep.subr.mxu0 0.0
      %6843 = vmatpush1.msra.mxu0 0.0
      %6844 = vmatprep.subr.mxu0 0.0
      %6845 = vmatpush1.msra.mxu0 0.0
      %6846 = vmatprep.subr.mxu0 0.0
      %6847 = vmatpush1.msra.mxu0 0.0
      %6848 = vmatprep.subr.mxu0 0.0
      %6849 = vmatpush1.msra.mxu0 0.0
      %6850 = vmatprep.subr.mxu0 0.0
      %6851 = vmatpush1.msra.mxu0 0.0
      %6852 = vmatprep.subr.mxu0 0.0
      %6853 = vmatpush1.msra.mxu0 0.0
      %6854 = vmatprep.subr.mxu0 0.0
      %6855 = vmatpush1.msra.mxu0 0.0
      %6856 = vmatprep.subr.mxu0 0.0
      %6857 = vmatpush1.msra.mxu0 0.0
      %6858 = vmatprep.subr.mxu0 0.0
      %6859 = vmatpush1.msra.mxu0 0.0
      %6860 = vmatprep.subr.mxu0 0.0
      %6861 = vmatpush1.msra.mxu0 0.0
      %6862 = vmatprep.subr.mxu0 0.0
      %6863 = vmatpush1.msra.mxu0 0.0
      %6864 = vmatprep.subr.mxu0 0.0
      %6865 = vmatpush1.msra.mxu0 0.0
      %6866 = vmatprep.subr.mxu0 0.0
      %6867 = vmatpush1.msra.mxu0 %v6094
      %6868 = vmatprep.subr.mxu0 0.0
      %6869 = vmatpush1.msra.mxu0 %v6093
      %6870 = vmatprep.subr.mxu0 0.0
      %6871 = vmatpush2.msra.mxu0 0.0
      %6872 = vmatprep.subr.mxu0 0.0
      %6873 = vmatpush2.msra.mxu0 0.0
      %6874 = vmatprep.subr.mxu0 0.0
      %6875 = vmatpush2.msra.mxu0 0.0
      %6876 = vmatprep.subr.mxu0 0.0
      %6877 = vmatpush2.msra.mxu0 0.0
      %6878 = vmatprep.subr.mxu0 0.0
      %6879 = vmatpush2.msra.mxu0 0.0
      %6880 = vmatprep.subr.mxu0 0.0
      %6881 = vmatpush2.msra.mxu0 0.0
      %6882 = vmatprep.subr.mxu0 0.0
      %6883 = vmatpush2.msra.mxu0 0.0
      %6884 = vmatprep.subr.mxu0 0.0
      %6885 = vmatpush2.msra.mxu0 0.0
      %6886 = vmatprep.subr.mxu0 0.0
      %6887 = vmatpush2.msra.mxu0 0.0
      %6888 = vmatprep.subr.mxu0 0.0
      %6889 = vmatpush2.msra.mxu0 0.0
      %6890 = vmatprep.subr.mxu0 0.0
      %6891 = vmatpush2.msra.mxu0 0.0
      %6892 = vmatprep.subr.mxu0 0.0
      %6893 = vmatpush2.msra.mxu0 0.0
      %6894 = vmatprep.subr.mxu0 0.0
      %6895 = vmatpush2.msra.mxu0 0.0
      %6896 = vmatprep.subr.mxu0 0.0
      %6897 = vmatpush2.msra.mxu0 0.0
      %6898 = vmatprep.subr.mxu0 0.0
      %6899 = vmatpush2.msra.mxu0 0.0
      %6900 = vmatprep.subr.mxu0 0.0
      %6901 = vmatpush2.msra.mxu0 0.0
      %6902 = vmatprep.mubr.f32.mxu0 0.0
      %6903 = vmatmul.mubr.f32.gmra.mxu0 %v6836
      %v6904 = vpop.f32.mrf.mxu0
      %v6905 = vadd.f32 0.0, %v6904
      %v6906 = vpop.f32.mrf.mxu0
      %6907 = vdwg.mxu0
      %v6909 = vsel %vm4237, %v6068, 0
      %6911 = vmatprep.subr.mxu0 0.0
      %6912 = vmatpush1.msra.mxu0 0.0
      %6913 = vmatprep.subr.mxu0 0.0
      %6914 = vmatpush1.msra.mxu0 0.0
      %6915 = vmatprep.subr.mxu0 0.0
      %6916 = vmatpush1.msra.mxu0 0.0
      %6917 = vmatprep.subr.mxu0 0.0
      %6918 = vmatpush1.msra.mxu0 0.0
      %6919 = vmatprep.subr.mxu0 0.0
      %6920 = vmatpush1.msra.mxu0 0.0
      %6921 = vmatprep.subr.mxu0 0.0
      %6922 = vmatpush1.msra.mxu0 0.0
      %6923 = vmatprep.subr.mxu0 0.0
      %6924 = vmatpush1.msra.mxu0 0.0
      %6925 = vmatprep.subr.mxu0 0.0
      %6926 = vmatpush1.msra.mxu0 0.0
      %6927 = vmatprep.subr.mxu0 0.0
      %6928 = vmatpush1.msra.mxu0 0.0
      %6929 = vmatprep.subr.mxu0 0.0
      %6930 = vmatpush1.msra.mxu0 0.0
      %6931 = vmatprep.subr.mxu0 0.0
      %6932 = vmatpush1.msra.mxu0 0.0
      %6933 = vmatprep.subr.mxu0 0.0
      %6934 = vmatpush1.msra.mxu0 0.0
      %6935 = vmatprep.subr.mxu0 0.0
      %6936 = vmatpush1.msra.mxu0 0.0
      %6937 = vmatprep.subr.mxu0 0.0
      %6938 = vmatpush1.msra.mxu0 0.0
      %6939 = vmatprep.subr.mxu0 0.0
      %6940 = vmatpush1.msra.mxu0 %v6096
      %6941 = vmatprep.subr.mxu0 0.0
      %6942 = vmatpush1.msra.mxu0 %v6095
      %6943 = vmatprep.subr.mxu0 0.0
      %6944 = vmatpush2.msra.mxu0 0.0
      %6945 = vmatprep.subr.mxu0 0.0
      %6946 = vmatpush2.msra.mxu0 0.0
      %6947 = vmatprep.subr.mxu0 0.0
      %6948 = vmatpush2.msra.mxu0 0.0
      %6949 = vmatprep.subr.mxu0 0.0
      %6950 = vmatpush2.msra.mxu0 0.0
      %6951 = vmatprep.subr.mxu0 0.0
      %6952 = vmatpush2.msra.mxu0 0.0
      %6953 = vmatprep.subr.mxu0 0.0
      %6954 = vmatpush2.msra.mxu0 0.0
      %6955 = vmatprep.subr.mxu0 0.0
      %6956 = vmatpush2.msra.mxu0 0.0
      %6957 = vmatprep.subr.mxu0 0.0
      %6958 = vmatpush2.msra.mxu0 0.0
      %6959 = vmatprep.subr.mxu0 0.0
      %6960 = vmatpush2.msra.mxu0 0.0
      %6961 = vmatprep.subr.mxu0 0.0
      %6962 = vmatpush2.msra.mxu0 0.0
      %6963 = vmatprep.subr.mxu0 0.0
      %6964 = vmatpush2.msra.mxu0 0.0
      %6965 = vmatprep.subr.mxu0 0.0
      %6966 = vmatpush2.msra.mxu0 0.0
      %6967 = vmatprep.subr.mxu0 0.0
      %6968 = vmatpush2.msra.mxu0 0.0
      %6969 = vmatprep.subr.mxu0 0.0
      %6970 = vmatpush2.msra.mxu0 0.0
      %6971 = vmatprep.subr.mxu0 0.0
      %6972 = vmatpush2.msra.mxu0 0.0
      %6973 = vmatprep.subr.mxu0 0.0
      %6974 = vmatpush2.msra.mxu0 0.0
      %6975 = vmatprep.mubr.f32.mxu0 0.0
      %6976 = vmatmul.mubr.f32.gmra.mxu0 %v6909
      %v6977 = vpop.f32.mrf.mxu0
      %v6978 = vadd.f32 0.0, %v6977
      %v6979 = vpop.f32.mrf.mxu0
      %6980 = vdwg.mxu0
      %v6982 = vsel %vm4237, %v6069, 0
      %6984 = vmatprep.subr.mxu0 0.0
      %6985 = vmatpush1.msra.mxu0 0.0
      %6986 = vmatprep.subr.mxu0 0.0
      %6987 = vmatpush1.msra.mxu0 0.0
      %6988 = vmatprep.subr.mxu0 0.0
      %6989 = vmatpush1.msra.mxu0 0.0
      %6990 = vmatprep.subr.mxu0 0.0
      %6991 = vmatpush1.msra.mxu0 0.0
      %6992 = vmatprep.subr.mxu0 0.0
      %6993 = vmatpush1.msra.mxu0 0.0
      %6994 = vmatprep.subr.mxu0 0.0
      %6995 = vmatpush1.msra.mxu0 0.0
      %6996 = vmatprep.subr.mxu0 0.0
      %6997 = vmatpush1.msra.mxu0 0.0
      %6998 = vmatprep.subr.mxu0 0.0
      %6999 = vmatpush1.msra.mxu0 0.0
      %7000 = vmatprep.subr.mxu0 0.0
      %7001 = vmatpush1.msra.mxu0 0.0
      %7002 = vmatprep.subr.mxu0 0.0
      %7003 = vmatpush1.msra.mxu0 0.0
      %7004 = vmatprep.subr.mxu0 0.0
      %7005 = vmatpush1.msra.mxu0 0.0
      %7006 = vmatprep.subr.mxu0 0.0
      %7007 = vmatpush1.msra.mxu0 0.0
      %7008 = vmatprep.subr.mxu0 0.0
      %7009 = vmatpush1.msra.mxu0 0.0
      %7010 = vmatprep.subr.mxu0 0.0
      %7011 = vmatpush1.msra.mxu0 0.0
      %7012 = vmatprep.subr.mxu0 0.0
      %7013 = vmatpush1.msra.mxu0 %v6098
      %7014 = vmatprep.subr.mxu0 0.0
      %7015 = vmatpush1.msra.mxu0 %v6097
      %7016 = vmatprep.subr.mxu0 0.0
      %7017 = vmatpush2.msra.mxu0 0.0
      %7018 = vmatprep.subr.mxu0 0.0
      %7019 = vmatpush2.msra.mxu0 0.0
      %7020 = vmatprep.subr.mxu0 0.0
      %7021 = vmatpush2.msra.mxu0 0.0
      %7022 = vmatprep.subr.mxu0 0.0
      %7023 = vmatpush2.msra.mxu0 0.0
      %7024 = vmatprep.subr.mxu0 0.0
      %7025 = vmatpush2.msra.mxu0 0.0
      %7026 = vmatprep.subr.mxu0 0.0
      %7027 = vmatpush2.msra.mxu0 0.0
      %7028 = vmatprep.subr.mxu0 0.0
      %7029 = vmatpush2.msra.mxu0 0.0
      %7030 = vmatprep.subr.mxu0 0.0
      %7031 = vmatpush2.msra.mxu0 0.0
      %7032 = vmatprep.subr.mxu0 0.0
      %7033 = vmatpush2.msra.mxu0 0.0
      %7034 = vmatprep.subr.mxu0 0.0
      %7035 = vmatpush2.msra.mxu0 0.0
      %7036 = vmatprep.subr.mxu0 0.0
      %7037 = vmatpush2.msra.mxu0 0.0
      %7038 = vmatprep.subr.mxu0 0.0
      %7039 = vmatpush2.msra.mxu0 0.0
      %7040 = vmatprep.subr.mxu0 0.0
      %7041 = vmatpush2.msra.mxu0 0.0
      %7042 = vmatprep.subr.mxu0 0.0
      %7043 = vmatpush2.msra.mxu0 0.0
      %7044 = vmatprep.subr.mxu0 0.0
      %7045 = vmatpush2.msra.mxu0 0.0
      %7046 = vmatprep.subr.mxu0 0.0
      %7047 = vmatpush2.msra.mxu0 0.0
      %7048 = vmatprep.mubr.f32.mxu0 0.0
      %7049 = vmatmul.mubr.f32.gmra.mxu0 %v6982
      %v7050 = vpop.f32.mrf.mxu0
      %v7051 = vadd.f32 0.0, %v7050
      %v7052 = vpop.f32.mrf.mxu0
      %7053 = vdwg.mxu0
      %v7055 = vsel %vm4237, %v6070, 0
      %7057 = vmatprep.subr.mxu0 0.0
      %7058 = vmatpush1.msra.mxu0 0.0
      %7059 = vmatprep.subr.mxu0 0.0
      %7060 = vmatpush1.msra.mxu0 0.0
      %7061 = vmatprep.subr.mxu0 0.0
      %7062 = vmatpush1.msra.mxu0 0.0
      %7063 = vmatprep.subr.mxu0 0.0
      %7064 = vmatpush1.msra.mxu0 0.0
      %7065 = vmatprep.subr.mxu0 0.0
      %7066 = vmatpush1.msra.mxu0 0.0
      %7067 = vmatprep.subr.mxu0 0.0
      %7068 = vmatpush1.msra.mxu0 0.0
      %7069 = vmatprep.subr.mxu0 0.0
      %7070 = vmatpush1.msra.mxu0 0.0
      %7071 = vmatprep.subr.mxu0 0.0
      %7072 = vmatpush1.msra.mxu0 0.0
      %7073 = vmatprep.subr.mxu0 0.0
      %7074 = vmatpush1.msra.mxu0 0.0
      %7075 = vmatprep.subr.mxu0 0.0
      %7076 = vmatpush1.msra.mxu0 0.0
      %7077 = vmatprep.subr.mxu0 0.0
      %7078 = vmatpush1.msra.mxu0 0.0
      %7079 = vmatprep.subr.mxu0 0.0
      %7080 = vmatpush1.msra.mxu0 0.0
      %7081 = vmatprep.subr.mxu0 0.0
      %7082 = vmatpush1.msra.mxu0 0.0
      %7083 = vmatprep.subr.mxu0 0.0
      %7084 = vmatpush1.msra.mxu0 0.0
      %7085 = vmatprep.subr.mxu0 0.0
      %7086 = vmatpush1.msra.mxu0 %v6100
      %7087 = vmatprep.subr.mxu0 0.0
      %7088 = vmatpush1.msra.mxu0 %v6099
      %7089 = vmatprep.subr.mxu0 0.0
      %7090 = vmatpush2.msra.mxu0 0.0
      %7091 = vmatprep.subr.mxu0 0.0
      %7092 = vmatpush2.msra.mxu0 0.0
      %7093 = vmatprep.subr.mxu0 0.0
      %7094 = vmatpush2.msra.mxu0 0.0
      %7095 = vmatprep.subr.mxu0 0.0
      %7096 = vmatpush2.msra.mxu0 0.0
      %7097 = vmatprep.subr.mxu0 0.0
      %7098 = vmatpush2.msra.mxu0 0.0
      %7099 = vmatprep.subr.mxu0 0.0
      %7100 = vmatpush2.msra.mxu0 0.0
      %7101 = vmatprep.subr.mxu0 0.0
      %7102 = vmatpush2.msra.mxu0 0.0
      %7103 = vmatprep.subr.mxu0 0.0
      %7104 = vmatpush2.msra.mxu0 0.0
      %7105 = vmatprep.subr.mxu0 0.0
      %7106 = vmatpush2.msra.mxu0 0.0
      %7107 = vmatprep.subr.mxu0 0.0
      %7108 = vmatpush2.msra.mxu0 0.0
      %7109 = vmatprep.subr.mxu0 0.0
      %7110 = vmatpush2.msra.mxu0 0.0
      %7111 = vmatprep.subr.mxu0 0.0
      %7112 = vmatpush2.msra.mxu0 0.0
      %7113 = vmatprep.subr.mxu0 0.0
      %7114 = vmatpush2.msra.mxu0 0.0
      %7115 = vmatprep.subr.mxu0 0.0
      %7116 = vmatpush2.msra.mxu0 0.0
      %7117 = vmatprep.subr.mxu0 0.0
      %7118 = vmatpush2.msra.mxu0 0.0
      %7119 = vmatprep.subr.mxu0 0.0
      %7120 = vmatpush2.msra.mxu0 0.0
      %7121 = vmatprep.mubr.f32.mxu0 0.0
      %7122 = vmatmul.mubr.f32.gmra.mxu0 %v7055
      %v7123 = vpop.f32.mrf.mxu0
      %v7124 = vadd.f32 0.0, %v7123
      %v7125 = vpop.f32.mrf.mxu0
      %7126 = vdwg.mxu0
      %v7128 = vsel %vm4237, %v6071, 0
      %7130 = vmatprep.subr.mxu0 0.0
      %7131 = vmatpush1.msra.mxu0 0.0
      %7132 = vmatprep.subr.mxu0 0.0
      %7133 = vmatpush1.msra.mxu0 0.0
      %7134 = vmatprep.subr.mxu0 0.0
      %7135 = vmatpush1.msra.mxu0 0.0
      %7136 = vmatprep.subr.mxu0 0.0
      %7137 = vmatpush1.msra.mxu0 0.0
      %7138 = vmatprep.subr.mxu0 0.0
      %7139 = vmatpush1.msra.mxu0 0.0
      %7140 = vmatprep.subr.mxu0 0.0
      %7141 = vmatpush1.msra.mxu0 0.0
      %7142 = vmatprep.subr.mxu0 0.0
      %7143 = vmatpush1.msra.mxu0 0.0
      %7144 = vmatprep.subr.mxu0 0.0
      %7145 = vmatpush1.msra.mxu0 0.0
      %7146 = vmatprep.subr.mxu0 0.0
      %7147 = vmatpush1.msra.mxu0 0.0
      %7148 = vmatprep.subr.mxu0 0.0
      %7149 = vmatpush1.msra.mxu0 0.0
      %7150 = vmatprep.subr.mxu0 0.0
      %7151 = vmatpush1.msra.mxu0 0.0
      %7152 = vmatprep.subr.mxu0 0.0
      %7153 = vmatpush1.msra.mxu0 0.0
      %7154 = vmatprep.subr.mxu0 0.0
      %7155 = vmatpush1.msra.mxu0 0.0
      %7156 = vmatprep.subr.mxu0 0.0
      %7157 = vmatpush1.msra.mxu0 0.0
      %7158 = vmatprep.subr.mxu0 0.0
      %7159 = vmatpush1.msra.mxu0 %v6102
      %7160 = vmatprep.subr.mxu0 0.0
      %7161 = vmatpush1.msra.mxu0 %v6101
      %7162 = vmatprep.subr.mxu0 0.0
      %7163 = vmatpush2.msra.mxu0 0.0
      %7164 = vmatprep.subr.mxu0 0.0
      %7165 = vmatpush2.msra.mxu0 0.0
      %7166 = vmatprep.subr.mxu0 0.0
      %7167 = vmatpush2.msra.mxu0 0.0
      %7168 = vmatprep.subr.mxu0 0.0
      %7169 = vmatpush2.msra.mxu0 0.0
      %7170 = vmatprep.subr.mxu0 0.0
      %7171 = vmatpush2.msra.mxu0 0.0
      %7172 = vmatprep.subr.mxu0 0.0
      %7173 = vmatpush2.msra.mxu0 0.0
      %7174 = vmatprep.subr.mxu0 0.0
      %7175 = vmatpush2.msra.mxu0 0.0
      %7176 = vmatprep.subr.mxu0 0.0
      %7177 = vmatpush2.msra.mxu0 0.0
      %7178 = vmatprep.subr.mxu0 0.0
      %7179 = vmatpush2.msra.mxu0 0.0
      %7180 = vmatprep.subr.mxu0 0.0
      %7181 = vmatpush2.msra.mxu0 0.0
      %7182 = vmatprep.subr.mxu0 0.0
      %7183 = vmatpush2.msra.mxu0 0.0
      %7184 = vmatprep.subr.mxu0 0.0
      %7185 = vmatpush2.msra.mxu0 0.0
      %7186 = vmatprep.subr.mxu0 0.0
      %7187 = vmatpush2.msra.mxu0 0.0
      %7188 = vmatprep.subr.mxu0 0.0
      %7189 = vmatpush2.msra.mxu0 0.0
      %7190 = vmatprep.subr.mxu0 0.0
      %7191 = vmatpush2.msra.mxu0 0.0
      %7192 = vmatprep.subr.mxu0 0.0
      %7193 = vmatpush2.msra.mxu0 0.0
      %7194 = vmatprep.mubr.f32.mxu0 0.0
      %7195 = vmatmul.mubr.f32.gmra.mxu0 %v7128
      %v7196 = vpop.f32.mrf.mxu0
      %v7197 = vadd.f32 0.0, %v7196
      %v7198 = vpop.f32.mrf.mxu0
      %7199 = vdwg.mxu0
      %v7201 = vsel %vm4237, %v6072, 0
      %7203 = vmatprep.subr.mxu0 0.0
      %7204 = vmatpush1.msra.mxu0 0.0
      %7205 = vmatprep.subr.mxu0 0.0
      %7206 = vmatpush1.msra.mxu0 0.0
      %7207 = vmatprep.subr.mxu0 0.0
      %7208 = vmatpush1.msra.mxu0 0.0
      %7209 = vmatprep.subr.mxu0 0.0
      %7210 = vmatpush1.msra.mxu0 0.0
      %7211 = vmatprep.subr.mxu0 0.0
      %7212 = vmatpush1.msra.mxu0 0.0
      %7213 = vmatprep.subr.mxu0 0.0
      %7214 = vmatpush1.msra.mxu0 0.0
      %7215 = vmatprep.subr.mxu0 0.0
      %7216 = vmatpush1.msra.mxu0 0.0
      %7217 = vmatprep.subr.mxu0 0.0
      %7218 = vmatpush1.msra.mxu0 0.0
      %7219 = vmatprep.subr.mxu0 0.0
      %7220 = vmatpush1.msra.mxu0 0.0
      %7221 = vmatprep.subr.mxu0 0.0
      %7222 = vmatpush1.msra.mxu0 0.0
      %7223 = vmatprep.subr.mxu0 0.0
      %7224 = vmatpush1.msra.mxu0 0.0
      %7225 = vmatprep.subr.mxu0 0.0
      %7226 = vmatpush1.msra.mxu0 0.0
      %7227 = vmatprep.subr.mxu0 0.0
      %7228 = vmatpush1.msra.mxu0 0.0
      %7229 = vmatprep.subr.mxu0 0.0
      %7230 = vmatpush1.msra.mxu0 0.0
      %7231 = vmatprep.subr.mxu0 0.0
      %7232 = vmatpush1.msra.mxu0 %v6104
      %7233 = vmatprep.subr.mxu0 0.0
      %7234 = vmatpush1.msra.mxu0 %v6103
      %7235 = vmatprep.subr.mxu0 0.0
      %7236 = vmatpush2.msra.mxu0 0.0
      %7237 = vmatprep.subr.mxu0 0.0
      %7238 = vmatpush2.msra.mxu0 0.0
      %7239 = vmatprep.subr.mxu0 0.0
      %7240 = vmatpush2.msra.mxu0 0.0
      %7241 = vmatprep.subr.mxu0 0.0
      %7242 = vmatpush2.msra.mxu0 0.0
      %7243 = vmatprep.subr.mxu0 0.0
      %7244 = vmatpush2.msra.mxu0 0.0
      %7245 = vmatprep.subr.mxu0 0.0
      %7246 = vmatpush2.msra.mxu0 0.0
      %7247 = vmatprep.subr.mxu0 0.0
      %7248 = vmatpush2.msra.mxu0 0.0
      %7249 = vmatprep.subr.mxu0 0.0
      %7250 = vmatpush2.msra.mxu0 0.0
      %7251 = vmatprep.subr.mxu0 0.0
      %7252 = vmatpush2.msra.mxu0 0.0
      %7253 = vmatprep.subr.mxu0 0.0
      %7254 = vmatpush2.msra.mxu0 0.0
      %7255 = vmatprep.subr.mxu0 0.0
      %7256 = vmatpush2.msra.mxu0 0.0
      %7257 = vmatprep.subr.mxu0 0.0
      %7258 = vmatpush2.msra.mxu0 0.0
      %7259 = vmatprep.subr.mxu0 0.0
      %7260 = vmatpush2.msra.mxu0 0.0
      %7261 = vmatprep.subr.mxu0 0.0
      %7262 = vmatpush2.msra.mxu0 0.0
      %7263 = vmatprep.subr.mxu0 0.0
      %7264 = vmatpush2.msra.mxu0 0.0
      %7265 = vmatprep.subr.mxu0 0.0
      %7266 = vmatpush2.msra.mxu0 0.0
      %7267 = vmatprep.mubr.f32.mxu0 0.0
      %7268 = vmatmul.mubr.f32.gmra.mxu0 %v7201
      %v7269 = vpop.f32.mrf.mxu0
      %v7270 = vadd.f32 0.0, %v7269
      %v7271 = vpop.f32.mrf.mxu0
      %7272 = vdwg.mxu0
      %v7273 = vcombine.low %v6175, %v6321
      %v7274 = vcombine.high %v6175, %v6321
      %v7276 = vunpack.c.l.s4 1983009808
      %v7277 = vunpack.c.0.s8 %v7276
      %v7278 = vlaneseq
      %v7279 = vshrl.u32 %v7278, 7
      %v7280 = vsub.s32 %v7277, %v7279
      %v7281 = vrot.slane %v7273, %v7280
      %v7283 = vunpack.c.l.s4 1983009808
      %v7284 = vunpack.c.0.s8 %v7283
      %v7285 = vlaneseq
      %v7286 = vshrl.u32 %v7285, 7
      %v7287 = vsub.s32 %v7284, %v7286
      %v7288 = vrot.slane %v7274, %v7287
      %v7289 = vcombine.low %v6248, %v6394
      %v7290 = vcombine.high %v6248, %v6394
      %v7292 = vunpack.c.l.s4 1983009808
      %v7293 = vunpack.c.0.s8 %v7292
      %v7294 = vlaneseq
      %v7295 = vshrl.u32 %v7294, 7
      %v7296 = vsub.s32 %v7293, %v7295
      %v7297 = vrot.slane %v7289, %v7296
      %v7299 = vunpack.c.l.s4 1983009808
      %v7300 = vunpack.c.0.s8 %v7299
      %v7301 = vlaneseq
      %v7302 = vshrl.u32 %v7301, 7
      %v7303 = vsub.s32 %v7300, %v7302
      %v7304 = vrot.slane %v7290, %v7303
      %v7305 = vcombine.low %v6467, %v6613
      %v7306 = vcombine.high %v6467, %v6613
      %v7308 = vunpack.c.l.s4 1983009808
      %v7309 = vunpack.c.0.s8 %v7308
      %v7310 = vlaneseq
      %v7311 = vshrl.u32 %v7310, 7
      %v7312 = vsub.s32 %v7309, %v7311
      %v7313 = vrot.slane %v7305, %v7312
      %v7315 = vunpack.c.l.s4 1983009808
      %v7316 = vunpack.c.0.s8 %v7315
      %v7317 = vlaneseq
      %v7318 = vshrl.u32 %v7317, 7
      %v7319 = vsub.s32 %v7316, %v7318
      %v7320 = vrot.slane %v7306, %v7319
      %v7321 = vcombine.low %v6540, %v6686
      %v7322 = vcombine.high %v6540, %v6686
      %v7324 = vunpack.c.l.s4 1983009808
      %v7325 = vunpack.c.0.s8 %v7324
      %v7326 = vlaneseq
      %v7327 = vshrl.u32 %v7326, 7
      %v7328 = vsub.s32 %v7325, %v7327
      %v7329 = vrot.slane %v7321, %v7328
      %v7331 = vunpack.c.l.s4 1983009808
      %v7332 = vunpack.c.0.s8 %v7331
      %v7333 = vlaneseq
      %v7334 = vshrl.u32 %v7333, 7
      %v7335 = vsub.s32 %v7332, %v7334
      %v7336 = vrot.slane %v7322, %v7335
      %v7337 = vcombine.low %v7281, %v7297
      %v7338 = vcombine.high %v7281, %v7297
      %v7340 = vunpack.c.l.s4 1934713408
      %v7341 = vunpack.c.0.s8 %v7340
      %v7342 = vlaneseq
      %v7343 = vshrl.u32 %v7342, 7
      %v7344 = vsub.s32 %v7341, %v7343
      %v7345 = vrot.slane %v7337, %v7344
      %v7347 = vunpack.c.l.s4 1934713408
      %v7348 = vunpack.c.0.s8 %v7347
      %v7349 = vlaneseq
      %v7350 = vshrl.u32 %v7349, 7
      %v7351 = vsub.s32 %v7348, %v7350
      %v7352 = vrot.slane %v7338, %v7351
      %v7353 = vcombine.low %v7288, %v7304
      %v7354 = vcombine.high %v7288, %v7304
      %v7356 = vunpack.c.l.s4 1934713408
      %v7357 = vunpack.c.0.s8 %v7356
      %v7358 = vlaneseq
      %v7359 = vshrl.u32 %v7358, 7
      %v7360 = vsub.s32 %v7357, %v7359
      %v7361 = vrot.slane %v7353, %v7360
      %v7363 = vunpack.c.l.s4 1934713408
      %v7364 = vunpack.c.0.s8 %v7363
      %v7365 = vlaneseq
      %v7366 = vshrl.u32 %v7365, 7
      %v7367 = vsub.s32 %v7364, %v7366
      %v7368 = vrot.slane %v7354, %v7367
      %v7369 = vcombine.low %v7313, %v7329
      %v7370 = vcombine.high %v7313, %v7329
      %v7372 = vunpack.c.l.s4 1934713408
      %v7373 = vunpack.c.0.s8 %v7372
      %v7374 = vlaneseq
      %v7375 = vshrl.u32 %v7374, 7
      %v7376 = vsub.s32 %v7373, %v7375
      %v7377 = vrot.slane %v7369, %v7376
      %v7379 = vunpack.c.l.s4 1934713408
      %v7380 = vunpack.c.0.s8 %v7379
      %v7381 = vlaneseq
      %v7382 = vshrl.u32 %v7381, 7
      %v7383 = vsub.s32 %v7380, %v7382
      %v7384 = vrot.slane %v7370, %v7383
      %v7385 = vcombine.low %v7320, %v7336
      %v7386 = vcombine.high %v7320, %v7336
      %v7388 = vunpack.c.l.s4 1934713408
      %v7389 = vunpack.c.0.s8 %v7388
      %v7390 = vlaneseq
      %v7391 = vshrl.u32 %v7390, 7
      %v7392 = vsub.s32 %v7389, %v7391
      %v7393 = vrot.slane %v7385, %v7392
      %v7395 = vunpack.c.l.s4 1934713408
      %v7396 = vunpack.c.0.s8 %v7395
      %v7397 = vlaneseq
      %v7398 = vshrl.u32 %v7397, 7
      %v7399 = vsub.s32 %v7396, %v7398
      %v7400 = vrot.slane %v7386, %v7399
      %v7401 = vcombine.low %v7345, %v7377
      %v7402 = vcombine.high %v7345, %v7377
      %v7403 = vcombine.low %v7352, %v7384
      %v7404 = vcombine.high %v7352, %v7384
      %v7405 = vcombine.low %v7361, %v7393
      %v7406 = vcombine.high %v7361, %v7393
      %v7407 = vcombine.low %v7368, %v7400
      %v7408 = vcombine.high %v7368, %v7400
      %v7409 = vcombine.low %v6759, %v6905
      %v7410 = vcombine.high %v6759, %v6905
      %v7412 = vunpack.c.l.s4 1983009808
      %v7413 = vunpack.c.0.s8 %v7412
      %v7414 = vlaneseq
      %v7415 = vshrl.u32 %v7414, 7
      %v7416 = vsub.s32 %v7413, %v7415
      %v7417 = vrot.slane %v7409, %v7416
      %v7419 = vunpack.c.l.s4 1983009808
      %v7420 = vunpack.c.0.s8 %v7419
      %v7421 = vlaneseq
      %v7422 = vshrl.u32 %v7421, 7
      %v7423 = vsub.s32 %v7420, %v7422
      %v7424 = vrot.slane %v7410, %v7423
      %v7425 = vcombine.low %v6832, %v6978
      %v7426 = vcombine.high %v6832, %v6978
      %v7428 = vunpack.c.l.s4 1983009808
      %v7429 = vunpack.c.0.s8 %v7428
      %v7430 = vlaneseq
      %v7431 = vshrl.u32 %v7430, 7
      %v7432 = vsub.s32 %v7429, %v7431
      %v7433 = vrot.slane %v7425, %v7432
      %v7435 = vunpack.c.l.s4 1983009808
      %v7436 = vunpack.c.0.s8 %v7435
      %v7437 = vlaneseq
      %v7438 = vshrl.u32 %v7437, 7
      %v7439 = vsub.s32 %v7436, %v7438
      %v7440 = vrot.slane %v7426, %v7439
      %v7441 = vcombine.low %v7051, %v7197
      %v7442 = vcombine.high %v7051, %v7197
      %v7444 = vunpack.c.l.s4 1983009808
      %v7445 = vunpack.c.0.s8 %v7444
      %v7446 = vlaneseq
      %v7447 = vshrl.u32 %v7446, 7
      %v7448 = vsub.s32 %v7445, %v7447
      %v7449 = vrot.slane %v7441, %v7448
      %v7451 = vunpack.c.l.s4 1983009808
      %v7452 = vunpack.c.0.s8 %v7451
      %v7453 = vlaneseq
      %v7454 = vshrl.u32 %v7453, 7
      %v7455 = vsub.s32 %v7452, %v7454
      %v7456 = vrot.slane %v7442, %v7455
      %v7457 = vcombine.low %v7124, %v7270
      %v7458 = vcombine.high %v7124, %v7270
      %v7460 = vunpack.c.l.s4 1983009808
      %v7461 = vunpack.c.0.s8 %v7460
      %v7462 = vlaneseq
      %v7463 = vshrl.u32 %v7462, 7
      %v7464 = vsub.s32 %v7461, %v7463
      %v7465 = vrot.slane %v7457, %v7464
      %v7467 = vunpack.c.l.s4 1983009808
      %v7468 = vunpack.c.0.s8 %v7467
      %v7469 = vlaneseq
      %v7470 = vshrl.u32 %v7469, 7
      %v7471 = vsub.s32 %v7468, %v7470
      %v7472 = vrot.slane %v7458, %v7471
      %v7473 = vcombine.low %v7417, %v7433
      %v7474 = vcombine.high %v7417, %v7433
      %v7476 = vunpack.c.l.s4 1934713408
      %v7477 = vunpack.c.0.s8 %v7476
      %v7478 = vlaneseq
      %v7479 = vshrl.u32 %v7478, 7
      %v7480 = vsub.s32 %v7477, %v7479
      %v7481 = vrot.slane %v7473, %v7480
      %v7483 = vunpack.c.l.s4 1934713408
      %v7484 = vunpack.c.0.s8 %v7483
      %v7485 = vlaneseq
      %v7486 = vshrl.u32 %v7485, 7
      %v7487 = vsub.s32 %v7484, %v7486
      %v7488 = vrot.slane %v7474, %v7487
      %v7489 = vcombine.low %v7424, %v7440
      %v7490 = vcombine.high %v7424, %v7440
      %v7492 = vunpack.c.l.s4 1934713408
      %v7493 = vunpack.c.0.s8 %v7492
      %v7494 = vlaneseq
      %v7495 = vshrl.u32 %v7494, 7
      %v7496 = vsub.s32 %v7493, %v7495
      %v7497 = vrot.slane %v7489, %v7496
      %v7499 = vunpack.c.l.s4 1934713408
      %v7500 = vunpack.c.0.s8 %v7499
      %v7501 = vlaneseq
      %v7502 = vshrl.u32 %v7501, 7
      %v7503 = vsub.s32 %v7500, %v7502
      %v7504 = vrot.slane %v7490, %v7503
      %v7505 = vcombine.low %v7449, %v7465
      %v7506 = vcombine.high %v7449, %v7465
      %v7508 = vunpack.c.l.s4 1934713408
      %v7509 = vunpack.c.0.s8 %v7508
      %v7510 = vlaneseq
      %v7511 = vshrl.u32 %v7510, 7
      %v7512 = vsub.s32 %v7509, %v7511
      %v7513 = vrot.slane %v7505, %v7512
      %v7515 = vunpack.c.l.s4 1934713408
      %v7516 = vunpack.c.0.s8 %v7515
      %v7517 = vlaneseq
      %v7518 = vshrl.u32 %v7517, 7
      %v7519 = vsub.s32 %v7516, %v7518
      %v7520 = vrot.slane %v7506, %v7519
      %v7521 = vcombine.low %v7456, %v7472
      %v7522 = vcombine.high %v7456, %v7472
      %v7524 = vunpack.c.l.s4 1934713408
      %v7525 = vunpack.c.0.s8 %v7524
      %v7526 = vlaneseq
      %v7527 = vshrl.u32 %v7526, 7
      %v7528 = vsub.s32 %v7525, %v7527
      %v7529 = vrot.slane %v7521, %v7528
      %v7531 = vunpack.c.l.s4 1934713408
      %v7532 = vunpack.c.0.s8 %v7531
      %v7533 = vlaneseq
      %v7534 = vshrl.u32 %v7533, 7
      %v7535 = vsub.s32 %v7532, %v7534
      %v7536 = vrot.slane %v7522, %v7535
      %v7537 = vcombine.low %v7481, %v7513
      %v7538 = vcombine.high %v7481, %v7513
      %v7539 = vcombine.low %v7488, %v7520
      %v7540 = vcombine.high %v7488, %v7520
      %v7541 = vcombine.low %v7497, %v7529
      %v7542 = vcombine.high %v7497, %v7529
      %v7543 = vcombine.low %v7504, %v7536
      %v7544 = vcombine.high %v7504, %v7536
      %v7546 = vsel %vm4237, %v5561, 0
      %v7549 = vsel %vm4237, %v5562, 0
      %7551 = vmatprep.subr.mxu0 0.0
      %7552 = vmatpush1.msra.mxu0 0.0
      %7553 = vmatprep.subr.mxu0 0.0
      %7554 = vmatpush1.msra.mxu0 0.0
      %7555 = vmatprep.subr.mxu0 0.0
      %7556 = vmatpush1.msra.mxu0 0.0
      %7557 = vmatprep.subr.mxu0 0.0
      %7558 = vmatpush1.msra.mxu0 0.0
      %7559 = vmatprep.subr.mxu0 0.0
      %7560 = vmatpush1.msra.mxu0 0.0
      %7561 = vmatprep.subr.mxu0 0.0
      %7562 = vmatpush1.msra.mxu0 0.0
      %7563 = vmatprep.subr.mxu0 0.0
      %7564 = vmatpush1.msra.mxu0 0.0
      %7565 = vmatprep.subr.mxu0 0.0
      %7566 = vmatpush1.msra.mxu0 0.0
      %7567 = vmatprep.subr.mxu0 0.0
      %7568 = vmatpush1.msra.mxu0 0.0
      %7569 = vmatprep.subr.mxu0 0.0
      %7570 = vmatpush1.msra.mxu0 0.0
      %7571 = vmatprep.subr.mxu0 0.0
      %7572 = vmatpush1.msra.mxu0 0.0
      %7573 = vmatprep.subr.mxu0 0.0
      %7574 = vmatpush1.msra.mxu0 0.0
      %7575 = vmatprep.subr.mxu0 0.0
      %7576 = vmatpush1.msra.mxu0 0.0
      %7577 = vmatprep.subr.mxu0 0.0
      %7578 = vmatpush1.msra.mxu0 0.0
      %7579 = vmatprep.subr.mxu0 0.0
      %7580 = vmatpush1.msra.mxu0 %v2173
      %7581 = vmatprep.subr.mxu0 0.0
      %7582 = vmatpush1.msra.mxu0 %v2172
      %7583 = vmatprep.subr.mxu0 0.0
      %7584 = vmatpush2.msra.mxu0 0.0
      %7585 = vmatprep.subr.mxu0 0.0
      %7586 = vmatpush2.msra.mxu0 0.0
      %7587 = vmatprep.subr.mxu0 0.0
      %7588 = vmatpush2.msra.mxu0 0.0
      %7589 = vmatprep.subr.mxu0 0.0
      %7590 = vmatpush2.msra.mxu0 0.0
      %7591 = vmatprep.subr.mxu0 0.0
      %7592 = vmatpush2.msra.mxu0 0.0
      %7593 = vmatprep.subr.mxu0 0.0
      %7594 = vmatpush2.msra.mxu0 0.0
      %7595 = vmatprep.subr.mxu0 0.0
      %7596 = vmatpush2.msra.mxu0 0.0
      %7597 = vmatprep.subr.mxu0 0.0
      %7598 = vmatpush2.msra.mxu0 0.0
      %7599 = vmatprep.subr.mxu0 0.0
      %7600 = vmatpush2.msra.mxu0 0.0
      %7601 = vmatprep.subr.mxu0 0.0
      %7602 = vmatpush2.msra.mxu0 0.0
      %7603 = vmatprep.subr.mxu0 0.0
      %7604 = vmatpush2.msra.mxu0 0.0
      %7605 = vmatprep.subr.mxu0 0.0
      %7606 = vmatpush2.msra.mxu0 0.0
      %7607 = vmatprep.subr.mxu0 0.0
      %7608 = vmatpush2.msra.mxu0 0.0
      %7609 = vmatprep.subr.mxu0 0.0
      %7610 = vmatpush2.msra.mxu0 0.0
      %7611 = vmatprep.subr.mxu0 0.0
      %7612 = vmatpush2.msra.mxu0 0.0
      %7613 = vmatprep.subr.mxu0 0.0
      %7614 = vmatpush2.msra.mxu0 0.0
      %7615 = vmatprep.mubr.f32.mxu0 0.0
      %7616 = vmatmul.mubr.f32.gmra.mxu0 %v7546
      %v7617 = vpop.f32.mrf.mxu0
      %v7618 = vadd.f32 %v7401, %v7617
      %v7619 = vpop.f32.mrf.mxu0
      %7620 = vmatprep.mubr.f32.mxu0 0.0
      %7621 = vmatmul.mubr.f32.gmra.mxu0 %v7549
      %v7622 = vpop.f32.mrf.mxu0
      %v7623 = vadd.f32 %v7537, %v7622
      %v7624 = vpop.f32.mrf.mxu0
      %7625 = vdwg.mxu0
      %v7627 = vsel %vm4237, %v5563, 0
      %v7630 = vsel %vm4237, %v5564, 0
      %7632 = vmatprep.subr.mxu0 0.0
      %7633 = vmatpush1.msra.mxu0 0.0
      %7634 = vmatprep.subr.mxu0 0.0
      %7635 = vmatpush1.msra.mxu0 0.0
      %7636 = vmatprep.subr.mxu0 0.0
      %7637 = vmatpush1.msra.mxu0 0.0
      %7638 = vmatprep.subr.mxu0 0.0
      %7639 = vmatpush1.msra.mxu0 0.0
      %7640 = vmatprep.subr.mxu0 0.0
      %7641 = vmatpush1.msra.mxu0 0.0
      %7642 = vmatprep.subr.mxu0 0.0
      %7643 = vmatpush1.msra.mxu0 0.0
      %7644 = vmatprep.subr.mxu0 0.0
      %7645 = vmatpush1.msra.mxu0 0.0
      %7646 = vmatprep.subr.mxu0 0.0
      %7647 = vmatpush1.msra.mxu0 0.0
      %7648 = vmatprep.subr.mxu0 0.0
      %7649 = vmatpush1.msra.mxu0 0.0
      %7650 = vmatprep.subr.mxu0 0.0
      %7651 = vmatpush1.msra.mxu0 0.0
      %7652 = vmatprep.subr.mxu0 0.0
      %7653 = vmatpush1.msra.mxu0 0.0
      %7654 = vmatprep.subr.mxu0 0.0
      %7655 = vmatpush1.msra.mxu0 0.0
      %7656 = vmatprep.subr.mxu0 0.0
      %7657 = vmatpush1.msra.mxu0 0.0
      %7658 = vmatprep.subr.mxu0 0.0
      %7659 = vmatpush1.msra.mxu0 0.0
      %7660 = vmatprep.subr.mxu0 0.0
      %7661 = vmatpush1.msra.mxu0 %v2175
      %7662 = vmatprep.subr.mxu0 0.0
      %7663 = vmatpush1.msra.mxu0 %v2174
      %7664 = vmatprep.subr.mxu0 0.0
      %7665 = vmatpush2.msra.mxu0 0.0
      %7666 = vmatprep.subr.mxu0 0.0
      %7667 = vmatpush2.msra.mxu0 0.0
      %7668 = vmatprep.subr.mxu0 0.0
      %7669 = vmatpush2.msra.mxu0 0.0
      %7670 = vmatprep.subr.mxu0 0.0
      %7671 = vmatpush2.msra.mxu0 0.0
      %7672 = vmatprep.subr.mxu0 0.0
      %7673 = vmatpush2.msra.mxu0 0.0
      %7674 = vmatprep.subr.mxu0 0.0
      %7675 = vmatpush2.msra.mxu0 0.0
      %7676 = vmatprep.subr.mxu0 0.0
      %7677 = vmatpush2.msra.mxu0 0.0
      %7678 = vmatprep.subr.mxu0 0.0
      %7679 = vmatpush2.msra.mxu0 0.0
      %7680 = vmatprep.subr.mxu0 0.0
      %7681 = vmatpush2.msra.mxu0 0.0
      %7682 = vmatprep.subr.mxu0 0.0
      %7683 = vmatpush2.msra.mxu0 0.0
      %7684 = vmatprep.subr.mxu0 0.0
      %7685 = vmatpush2.msra.mxu0 0.0
      %7686 = vmatprep.subr.mxu0 0.0
      %7687 = vmatpush2.msra.mxu0 0.0
      %7688 = vmatprep.subr.mxu0 0.0
      %7689 = vmatpush2.msra.mxu0 0.0
      %7690 = vmatprep.subr.mxu0 0.0
      %7691 = vmatpush2.msra.mxu0 0.0
      %7692 = vmatprep.subr.mxu0 0.0
      %7693 = vmatpush2.msra.mxu0 0.0
      %7694 = vmatprep.subr.mxu0 0.0
      %7695 = vmatpush2.msra.mxu0 0.0
      %7696 = vmatprep.mubr.f32.mxu0 0.0
      %7697 = vmatmul.mubr.f32.gmra.mxu0 %v7627
      %v7698 = vpop.f32.mrf.mxu0
      %v7699 = vadd.f32 %v7402, %v7698
      %v7700 = vpop.f32.mrf.mxu0
      %7701 = vmatprep.mubr.f32.mxu0 0.0
      %7702 = vmatmul.mubr.f32.gmra.mxu0 %v7630
      %v7703 = vpop.f32.mrf.mxu0
      %v7704 = vadd.f32 %v7538, %v7703
      %v7705 = vpop.f32.mrf.mxu0
      %7706 = vdwg.mxu0
      %v7708 = vsel %vm4237, %v5565, 0
      %v7711 = vsel %vm4237, %v5566, 0
      %7713 = vmatprep.subr.mxu0 0.0
      %7714 = vmatpush1.msra.mxu0 0.0
      %7715 = vmatprep.subr.mxu0 0.0
      %7716 = vmatpush1.msra.mxu0 0.0
      %7717 = vmatprep.subr.mxu0 0.0
      %7718 = vmatpush1.msra.mxu0 0.0
      %7719 = vmatprep.subr.mxu0 0.0
      %7720 = vmatpush1.msra.mxu0 0.0
      %7721 = vmatprep.subr.mxu0 0.0
      %7722 = vmatpush1.msra.mxu0 0.0
      %7723 = vmatprep.subr.mxu0 0.0
      %7724 = vmatpush1.msra.mxu0 0.0
      %7725 = vmatprep.subr.mxu0 0.0
      %7726 = vmatpush1.msra.mxu0 0.0
      %7727 = vmatprep.subr.mxu0 0.0
      %7728 = vmatpush1.msra.mxu0 0.0
      %7729 = vmatprep.subr.mxu0 0.0
      %7730 = vmatpush1.msra.mxu0 0.0
      %7731 = vmatprep.subr.mxu0 0.0
      %7732 = vmatpush1.msra.mxu0 0.0
      %7733 = vmatprep.subr.mxu0 0.0
      %7734 = vmatpush1.msra.mxu0 0.0
      %7735 = vmatprep.subr.mxu0 0.0
      %7736 = vmatpush1.msra.mxu0 0.0
      %7737 = vmatprep.subr.mxu0 0.0
      %7738 = vmatpush1.msra.mxu0 0.0
      %7739 = vmatprep.subr.mxu0 0.0
      %7740 = vmatpush1.msra.mxu0 0.0
      %7741 = vmatprep.subr.mxu0 0.0
      %7742 = vmatpush1.msra.mxu0 %v2177
      %7743 = vmatprep.subr.mxu0 0.0
      %7744 = vmatpush1.msra.mxu0 %v2176
      %7745 = vmatprep.subr.mxu0 0.0
      %7746 = vmatpush2.msra.mxu0 0.0
      %7747 = vmatprep.subr.mxu0 0.0
      %7748 = vmatpush2.msra.mxu0 0.0
      %7749 = vmatprep.subr.mxu0 0.0
      %7750 = vmatpush2.msra.mxu0 0.0
      %7751 = vmatprep.subr.mxu0 0.0
      %7752 = vmatpush2.msra.mxu0 0.0
      %7753 = vmatprep.subr.mxu0 0.0
      %7754 = vmatpush2.msra.mxu0 0.0
      %7755 = vmatprep.subr.mxu0 0.0
      %7756 = vmatpush2.msra.mxu0 0.0
      %7757 = vmatprep.subr.mxu0 0.0
      %7758 = vmatpush2.msra.mxu0 0.0
      %7759 = vmatprep.subr.mxu0 0.0
      %7760 = vmatpush2.msra.mxu0 0.0
      %7761 = vmatprep.subr.mxu0 0.0
      %7762 = vmatpush2.msra.mxu0 0.0
      %7763 = vmatprep.subr.mxu0 0.0
      %7764 = vmatpush2.msra.mxu0 0.0
      %7765 = vmatprep.subr.mxu0 0.0
      %7766 = vmatpush2.msra.mxu0 0.0
      %7767 = vmatprep.subr.mxu0 0.0
      %7768 = vmatpush2.msra.mxu0 0.0
      %7769 = vmatprep.subr.mxu0 0.0
      %7770 = vmatpush2.msra.mxu0 0.0
      %7771 = vmatprep.subr.mxu0 0.0
      %7772 = vmatpush2.msra.mxu0 0.0
      %7773 = vmatprep.subr.mxu0 0.0
      %7774 = vmatpush2.msra.mxu0 0.0
      %7775 = vmatprep.subr.mxu0 0.0
      %7776 = vmatpush2.msra.mxu0 0.0
      %7777 = vmatprep.mubr.f32.mxu0 0.0
      %7778 = vmatmul.mubr.f32.gmra.mxu0 %v7708
      %v7779 = vpop.f32.mrf.mxu0
      %v7780 = vadd.f32 %v7403, %v7779
      %v7781 = vpop.f32.mrf.mxu0
      %7782 = vmatprep.mubr.f32.mxu0 0.0
      %7783 = vmatmul.mubr.f32.gmra.mxu0 %v7711
      %v7784 = vpop.f32.mrf.mxu0
      %v7785 = vadd.f32 %v7539, %v7784
      %v7786 = vpop.f32.mrf.mxu0
      %7787 = vdwg.mxu0
      %v7789 = vsel %vm4237, %v5567, 0
      %v7792 = vsel %vm4237, %v5568, 0
      %7794 = vmatprep.subr.mxu0 0.0
      %7795 = vmatpush1.msra.mxu0 0.0
      %7796 = vmatprep.subr.mxu0 0.0
      %7797 = vmatpush1.msra.mxu0 0.0
      %7798 = vmatprep.subr.mxu0 0.0
      %7799 = vmatpush1.msra.mxu0 0.0
      %7800 = vmatprep.subr.mxu0 0.0
      %7801 = vmatpush1.msra.mxu0 0.0
      %7802 = vmatprep.subr.mxu0 0.0
      %7803 = vmatpush1.msra.mxu0 0.0
      %7804 = vmatprep.subr.mxu0 0.0
      %7805 = vmatpush1.msra.mxu0 0.0
      %7806 = vmatprep.subr.mxu0 0.0
      %7807 = vmatpush1.msra.mxu0 0.0
      %7808 = vmatprep.subr.mxu0 0.0
      %7809 = vmatpush1.msra.mxu0 0.0
      %7810 = vmatprep.subr.mxu0 0.0
      %7811 = vmatpush1.msra.mxu0 0.0
      %7812 = vmatprep.subr.mxu0 0.0
      %7813 = vmatpush1.msra.mxu0 0.0
      %7814 = vmatprep.subr.mxu0 0.0
      %7815 = vmatpush1.msra.mxu0 0.0
      %7816 = vmatprep.subr.mxu0 0.0
      %7817 = vmatpush1.msra.mxu0 0.0
      %7818 = vmatprep.subr.mxu0 0.0
      %7819 = vmatpush1.msra.mxu0 0.0
      %7820 = vmatprep.subr.mxu0 0.0
      %7821 = vmatpush1.msra.mxu0 0.0
      %7822 = vmatprep.subr.mxu0 0.0
      %7823 = vmatpush1.msra.mxu0 %v2179
      %7824 = vmatprep.subr.mxu0 0.0
      %7825 = vmatpush1.msra.mxu0 %v2178
      %7826 = vmatprep.subr.mxu0 0.0
      %7827 = vmatpush2.msra.mxu0 0.0
      %7828 = vmatprep.subr.mxu0 0.0
      %7829 = vmatpush2.msra.mxu0 0.0
      %7830 = vmatprep.subr.mxu0 0.0
      %7831 = vmatpush2.msra.mxu0 0.0
      %7832 = vmatprep.subr.mxu0 0.0
      %7833 = vmatpush2.msra.mxu0 0.0
      %7834 = vmatprep.subr.mxu0 0.0
      %7835 = vmatpush2.msra.mxu0 0.0
      %7836 = vmatprep.subr.mxu0 0.0
      %7837 = vmatpush2.msra.mxu0 0.0
      %7838 = vmatprep.subr.mxu0 0.0
      %7839 = vmatpush2.msra.mxu0 0.0
      %7840 = vmatprep.subr.mxu0 0.0
      %7841 = vmatpush2.msra.mxu0 0.0
      %7842 = vmatprep.subr.mxu0 0.0
      %7843 = vmatpush2.msra.mxu0 0.0
      %7844 = vmatprep.subr.mxu0 0.0
      %7845 = vmatpush2.msra.mxu0 0.0
      %7846 = vmatprep.subr.mxu0 0.0
      %7847 = vmatpush2.msra.mxu0 0.0
      %7848 = vmatprep.subr.mxu0 0.0
      %7849 = vmatpush2.msra.mxu0 0.0
      %7850 = vmatprep.subr.mxu0 0.0
      %7851 = vmatpush2.msra.mxu0 0.0
      %7852 = vmatprep.subr.mxu0 0.0
      %7853 = vmatpush2.msra.mxu0 0.0
      %7854 = vmatprep.subr.mxu0 0.0
      %7855 = vmatpush2.msra.mxu0 0.0
      %7856 = vmatprep.subr.mxu0 0.0
      %7857 = vmatpush2.msra.mxu0 0.0
      %7858 = vmatprep.mubr.f32.mxu0 0.0
      %7859 = vmatmul.mubr.f32.gmra.mxu0 %v7789
      %v7860 = vpop.f32.mrf.mxu0
      %v7861 = vadd.f32 %v7404, %v7860
      %v7862 = vpop.f32.mrf.mxu0
      %7863 = vmatprep.mubr.f32.mxu0 0.0
      %7864 = vmatmul.mubr.f32.gmra.mxu0 %v7792
      %v7865 = vpop.f32.mrf.mxu0
      %v7866 = vadd.f32 %v7540, %v7865
      %v7867 = vpop.f32.mrf.mxu0
      %7868 = vdwg.mxu0
      %v7870 = vsel %vm4237, %v5569, 0
      %v7873 = vsel %vm4237, %v5570, 0
      %7875 = vmatprep.subr.mxu0 0.0
      %7876 = vmatpush1.msra.mxu0 0.0
      %7877 = vmatprep.subr.mxu0 0.0
      %7878 = vmatpush1.msra.mxu0 0.0
      %7879 = vmatprep.subr.mxu0 0.0
      %7880 = vmatpush1.msra.mxu0 0.0
      %7881 = vmatprep.subr.mxu0 0.0
      %7882 = vmatpush1.msra.mxu0 0.0
      %7883 = vmatprep.subr.mxu0 0.0
      %7884 = vmatpush1.msra.mxu0 0.0
      %7885 = vmatprep.subr.mxu0 0.0
      %7886 = vmatpush1.msra.mxu0 0.0
      %7887 = vmatprep.subr.mxu0 0.0
      %7888 = vmatpush1.msra.mxu0 0.0
      %7889 = vmatprep.subr.mxu0 0.0
      %7890 = vmatpush1.msra.mxu0 0.0
      %7891 = vmatprep.subr.mxu0 0.0
      %7892 = vmatpush1.msra.mxu0 0.0
      %7893 = vmatprep.subr.mxu0 0.0
      %7894 = vmatpush1.msra.mxu0 0.0
      %7895 = vmatprep.subr.mxu0 0.0
      %7896 = vmatpush1.msra.mxu0 0.0
      %7897 = vmatprep.subr.mxu0 0.0
      %7898 = vmatpush1.msra.mxu0 0.0
      %7899 = vmatprep.subr.mxu0 0.0
      %7900 = vmatpush1.msra.mxu0 0.0
      %7901 = vmatprep.subr.mxu0 0.0
      %7902 = vmatpush1.msra.mxu0 0.0
      %7903 = vmatprep.subr.mxu0 0.0
      %7904 = vmatpush1.msra.mxu0 %v2181
      %7905 = vmatprep.subr.mxu0 0.0
      %7906 = vmatpush1.msra.mxu0 %v2180
      %7907 = vmatprep.subr.mxu0 0.0
      %7908 = vmatpush2.msra.mxu0 0.0
      %7909 = vmatprep.subr.mxu0 0.0
      %7910 = vmatpush2.msra.mxu0 0.0
      %7911 = vmatprep.subr.mxu0 0.0
      %7912 = vmatpush2.msra.mxu0 0.0
      %7913 = vmatprep.subr.mxu0 0.0
      %7914 = vmatpush2.msra.mxu0 0.0
      %7915 = vmatprep.subr.mxu0 0.0
      %7916 = vmatpush2.msra.mxu0 0.0
      %7917 = vmatprep.subr.mxu0 0.0
      %7918 = vmatpush2.msra.mxu0 0.0
      %7919 = vmatprep.subr.mxu0 0.0
      %7920 = vmatpush2.msra.mxu0 0.0
      %7921 = vmatprep.subr.mxu0 0.0
      %7922 = vmatpush2.msra.mxu0 0.0
      %7923 = vmatprep.subr.mxu0 0.0
      %7924 = vmatpush2.msra.mxu0 0.0
      %7925 = vmatprep.subr.mxu0 0.0
      %7926 = vmatpush2.msra.mxu0 0.0
      %7927 = vmatprep.subr.mxu0 0.0
      %7928 = vmatpush2.msra.mxu0 0.0
      %7929 = vmatprep.subr.mxu0 0.0
      %7930 = vmatpush2.msra.mxu0 0.0
      %7931 = vmatprep.subr.mxu0 0.0
      %7932 = vmatpush2.msra.mxu0 0.0
      %7933 = vmatprep.subr.mxu0 0.0
      %7934 = vmatpush2.msra.mxu0 0.0
      %7935 = vmatprep.subr.mxu0 0.0
      %7936 = vmatpush2.msra.mxu0 0.0
      %7937 = vmatprep.subr.mxu0 0.0
      %7938 = vmatpush2.msra.mxu0 0.0
      %7939 = vmatprep.mubr.f32.mxu0 0.0
      %7940 = vmatmul.mubr.f32.gmra.mxu0 %v7870
      %v7941 = vpop.f32.mrf.mxu0
      %v7942 = vadd.f32 %v7405, %v7941
      %v7943 = vpop.f32.mrf.mxu0
      %7944 = vmatprep.mubr.f32.mxu0 0.0
      %7945 = vmatmul.mubr.f32.gmra.mxu0 %v7873
      %v7946 = vpop.f32.mrf.mxu0
      %v7947 = vadd.f32 %v7541, %v7946
      %v7948 = vpop.f32.mrf.mxu0
      %7949 = vdwg.mxu0
      %v7951 = vsel %vm4237, %v5571, 0
      %v7954 = vsel %vm4237, %v5572, 0
      %7956 = vmatprep.subr.mxu0 0.0
      %7957 = vmatpush1.msra.mxu0 0.0
      %7958 = vmatprep.subr.mxu0 0.0
      %7959 = vmatpush1.msra.mxu0 0.0
      %7960 = vmatprep.subr.mxu0 0.0
      %7961 = vmatpush1.msra.mxu0 0.0
      %7962 = vmatprep.subr.mxu0 0.0
      %7963 = vmatpush1.msra.mxu0 0.0
      %7964 = vmatprep.subr.mxu0 0.0
      %7965 = vmatpush1.msra.mxu0 0.0
      %7966 = vmatprep.subr.mxu0 0.0
      %7967 = vmatpush1.msra.mxu0 0.0
      %7968 = vmatprep.subr.mxu0 0.0
      %7969 = vmatpush1.msra.mxu0 0.0
      %7970 = vmatprep.subr.mxu0 0.0
      %7971 = vmatpush1.msra.mxu0 0.0
      %7972 = vmatprep.subr.mxu0 0.0
      %7973 = vmatpush1.msra.mxu0 0.0
      %7974 = vmatprep.subr.mxu0 0.0
      %7975 = vmatpush1.msra.mxu0 0.0
      %7976 = vmatprep.subr.mxu0 0.0
      %7977 = vmatpush1.msra.mxu0 0.0
      %7978 = vmatprep.subr.mxu0 0.0
      %7979 = vmatpush1.msra.mxu0 0.0
      %7980 = vmatprep.subr.mxu0 0.0
      %7981 = vmatpush1.msra.mxu0 0.0
      %7982 = vmatprep.subr.mxu0 0.0
      %7983 = vmatpush1.msra.mxu0 0.0
      %7984 = vmatprep.subr.mxu0 0.0
      %7985 = vmatpush1.msra.mxu0 %v2183
      %7986 = vmatprep.subr.mxu0 0.0
      %7987 = vmatpush1.msra.mxu0 %v2182
      %7988 = vmatprep.subr.mxu0 0.0
      %7989 = vmatpush2.msra.mxu0 0.0
      %7990 = vmatprep.subr.mxu0 0.0
      %7991 = vmatpush2.msra.mxu0 0.0
      %7992 = vmatprep.subr.mxu0 0.0
      %7993 = vmatpush2.msra.mxu0 0.0
      %7994 = vmatprep.subr.mxu0 0.0
      %7995 = vmatpush2.msra.mxu0 0.0
      %7996 = vmatprep.subr.mxu0 0.0
      %7997 = vmatpush2.msra.mxu0 0.0
      %7998 = vmatprep.subr.mxu0 0.0
      %7999 = vmatpush2.msra.mxu0 0.0
      %8000 = vmatprep.subr.mxu0 0.0
      %8001 = vmatpush2.msra.mxu0 0.0
      %8002 = vmatprep.subr.mxu0 0.0
      %8003 = vmatpush2.msra.mxu0 0.0
      %8004 = vmatprep.subr.mxu0 0.0
      %8005 = vmatpush2.msra.mxu0 0.0
      %8006 = vmatprep.subr.mxu0 0.0
      %8007 = vmatpush2.msra.mxu0 0.0
      %8008 = vmatprep.subr.mxu0 0.0
      %8009 = vmatpush2.msra.mxu0 0.0
      %8010 = vmatprep.subr.mxu0 0.0
      %8011 = vmatpush2.msra.mxu0 0.0
      %8012 = vmatprep.subr.mxu0 0.0
      %8013 = vmatpush2.msra.mxu0 0.0
      %8014 = vmatprep.subr.mxu0 0.0
      %8015 = vmatpush2.msra.mxu0 0.0
      %8016 = vmatprep.subr.mxu0 0.0
      %8017 = vmatpush2.msra.mxu0 0.0
      %8018 = vmatprep.subr.mxu0 0.0
      %8019 = vmatpush2.msra.mxu0 0.0
      %8020 = vmatprep.mubr.f32.mxu0 0.0
      %8021 = vmatmul.mubr.f32.gmra.mxu0 %v7951
      %v8022 = vpop.f32.mrf.mxu0
      %v8023 = vadd.f32 %v7406, %v8022
      %v8024 = vpop.f32.mrf.mxu0
      %8025 = vmatprep.mubr.f32.mxu0 0.0
      %8026 = vmatmul.mubr.f32.gmra.mxu0 %v7954
      %v8027 = vpop.f32.mrf.mxu0
      %v8028 = vadd.f32 %v7542, %v8027
      %v8029 = vpop.f32.mrf.mxu0
      %8030 = vdwg.mxu0
      %v8032 = vsel %vm4237, %v5573, 0
      %v8035 = vsel %vm4237, %v5574, 0
      %8037 = vmatprep.subr.mxu0 0.0
      %8038 = vmatpush1.msra.mxu0 0.0
      %8039 = vmatprep.subr.mxu0 0.0
      %8040 = vmatpush1.msra.mxu0 0.0
      %8041 = vmatprep.subr.mxu0 0.0
      %8042 = vmatpush1.msra.mxu0 0.0
      %8043 = vmatprep.subr.mxu0 0.0
      %8044 = vmatpush1.msra.mxu0 0.0
      %8045 = vmatprep.subr.mxu0 0.0
      %8046 = vmatpush1.msra.mxu0 0.0
      %8047 = vmatprep.subr.mxu0 0.0
      %8048 = vmatpush1.msra.mxu0 0.0
      %8049 = vmatprep.subr.mxu0 0.0
      %8050 = vmatpush1.msra.mxu0 0.0
      %8051 = vmatprep.subr.mxu0 0.0
      %8052 = vmatpush1.msra.mxu0 0.0
      %8053 = vmatprep.subr.mxu0 0.0
      %8054 = vmatpush1.msra.mxu0 0.0
      %8055 = vmatprep.subr.mxu0 0.0
      %8056 = vmatpush1.msra.mxu0 0.0
      %8057 = vmatprep.subr.mxu0 0.0
      %8058 = vmatpush1.msra.mxu0 0.0
      %8059 = vmatprep.subr.mxu0 0.0
      %8060 = vmatpush1.msra.mxu0 0.0
      %8061 = vmatprep.subr.mxu0 0.0
      %8062 = vmatpush1.msra.mxu0 0.0
      %8063 = vmatprep.subr.mxu0 0.0
      %8064 = vmatpush1.msra.mxu0 0.0
      %8065 = vmatprep.subr.mxu0 0.0
      %8066 = vmatpush1.msra.mxu0 %v2185
      %8067 = vmatprep.subr.mxu0 0.0
      %8068 = vmatpush1.msra.mxu0 %v2184
      %8069 = vmatprep.subr.mxu0 0.0
      %8070 = vmatpush2.msra.mxu0 0.0
      %8071 = vmatprep.subr.mxu0 0.0
      %8072 = vmatpush2.msra.mxu0 0.0
      %8073 = vmatprep.subr.mxu0 0.0
      %8074 = vmatpush2.msra.mxu0 0.0
      %8075 = vmatprep.subr.mxu0 0.0
      %8076 = vmatpush2.msra.mxu0 0.0
      %8077 = vmatprep.subr.mxu0 0.0
      %8078 = vmatpush2.msra.mxu0 0.0
      %8079 = vmatprep.subr.mxu0 0.0
      %8080 = vmatpush2.msra.mxu0 0.0
      %8081 = vmatprep.subr.mxu0 0.0
      %8082 = vmatpush2.msra.mxu0 0.0
      %8083 = vmatprep.subr.mxu0 0.0
      %8084 = vmatpush2.msra.mxu0 0.0
      %8085 = vmatprep.subr.mxu0 0.0
      %8086 = vmatpush2.msra.mxu0 0.0
      %8087 = vmatprep.subr.mxu0 0.0
      %8088 = vmatpush2.msra.mxu0 0.0
      %8089 = vmatprep.subr.mxu0 0.0
      %8090 = vmatpush2.msra.mxu0 0.0
      %8091 = vmatprep.subr.mxu0 0.0
      %8092 = vmatpush2.msra.mxu0 0.0
      %8093 = vmatprep.subr.mxu0 0.0
      %8094 = vmatpush2.msra.mxu0 0.0
      %8095 = vmatprep.subr.mxu0 0.0
      %8096 = vmatpush2.msra.mxu0 0.0
      %8097 = vmatprep.subr.mxu0 0.0
      %8098 = vmatpush2.msra.mxu0 0.0
      %8099 = vmatprep.subr.mxu0 0.0
      %8100 = vmatpush2.msra.mxu0 0.0
      %8101 = vmatprep.mubr.f32.mxu0 0.0
      %8102 = vmatmul.mubr.f32.gmra.mxu0 %v8032
      %v8103 = vpop.f32.mrf.mxu0
      %v8104 = vadd.f32 %v7407, %v8103
      %v8105 = vpop.f32.mrf.mxu0
      %8106 = vmatprep.mubr.f32.mxu0 0.0
      %8107 = vmatmul.mubr.f32.gmra.mxu0 %v8035
      %v8108 = vpop.f32.mrf.mxu0
      %v8109 = vadd.f32 %v7543, %v8108
      %v8110 = vpop.f32.mrf.mxu0
      %8111 = vdwg.mxu0
      %v8113 = vsel %vm4237, %v5575, 0
      %v8116 = vsel %vm4237, %v5576, 0
      %8118 = vmatprep.subr.mxu0 0.0
      %8119 = vmatpush1.msra.mxu0 0.0
      %8120 = vmatprep.subr.mxu0 0.0
      %8121 = vmatpush1.msra.mxu0 0.0
      %8122 = vmatprep.subr.mxu0 0.0
      %8123 = vmatpush1.msra.mxu0 0.0
      %8124 = vmatprep.subr.mxu0 0.0
      %8125 = vmatpush1.msra.mxu0 0.0
      %8126 = vmatprep.subr.mxu0 0.0
      %8127 = vmatpush1.msra.mxu0 0.0
      %8128 = vmatprep.subr.mxu0 0.0
      %8129 = vmatpush1.msra.mxu0 0.0
      %8130 = vmatprep.subr.mxu0 0.0
      %8131 = vmatpush1.msra.mxu0 0.0
      %8132 = vmatprep.subr.mxu0 0.0
      %8133 = vmatpush1.msra.mxu0 0.0
      %8134 = vmatprep.subr.mxu0 0.0
      %8135 = vmatpush1.msra.mxu0 0.0
      %8136 = vmatprep.subr.mxu0 0.0
      %8137 = vmatpush1.msra.mxu0 0.0
      %8138 = vmatprep.subr.mxu0 0.0
      %8139 = vmatpush1.msra.mxu0 0.0
      %8140 = vmatprep.subr.mxu0 0.0
      %8141 = vmatpush1.msra.mxu0 0.0
      %8142 = vmatprep.subr.mxu0 0.0
      %8143 = vmatpush1.msra.mxu0 0.0
      %8144 = vmatprep.subr.mxu0 0.0
      %8145 = vmatpush1.msra.mxu0 0.0
      %8146 = vmatprep.subr.mxu0 0.0
      %8147 = vmatpush1.msra.mxu0 %v2187
      %8148 = vmatprep.subr.mxu0 0.0
      %8149 = vmatpush1.msra.mxu0 %v2186
      %8150 = vmatprep.subr.mxu0 0.0
      %8151 = vmatpush2.msra.mxu0 0.0
      %8152 = vmatprep.subr.mxu0 0.0
      %8153 = vmatpush2.msra.mxu0 0.0
      %8154 = vmatprep.subr.mxu0 0.0
      %8155 = vmatpush2.msra.mxu0 0.0
      %8156 = vmatprep.subr.mxu0 0.0
      %8157 = vmatpush2.msra.mxu0 0.0
      %8158 = vmatprep.subr.mxu0 0.0
      %8159 = vmatpush2.msra.mxu0 0.0
      %8160 = vmatprep.subr.mxu0 0.0
      %8161 = vmatpush2.msra.mxu0 0.0
      %8162 = vmatprep.subr.mxu0 0.0
      %8163 = vmatpush2.msra.mxu0 0.0
      %8164 = vmatprep.subr.mxu0 0.0
      %8165 = vmatpush2.msra.mxu0 0.0
      %8166 = vmatprep.subr.mxu0 0.0
      %8167 = vmatpush2.msra.mxu0 0.0
      %8168 = vmatprep.subr.mxu0 0.0
      %8169 = vmatpush2.msra.mxu0 0.0
      %8170 = vmatprep.subr.mxu0 0.0
      %8171 = vmatpush2.msra.mxu0 0.0
      %8172 = vmatprep.subr.mxu0 0.0
      %8173 = vmatpush2.msra.mxu0 0.0
      %8174 = vmatprep.subr.mxu0 0.0
      %8175 = vmatpush2.msra.mxu0 0.0
      %8176 = vmatprep.subr.mxu0 0.0
      %8177 = vmatpush2.msra.mxu0 0.0
      %8178 = vmatprep.subr.mxu0 0.0
      %8179 = vmatpush2.msra.mxu0 0.0
      %8180 = vmatprep.subr.mxu0 0.0
      %8181 = vmatpush2.msra.mxu0 0.0
      %8182 = vmatprep.mubr.f32.mxu0 0.0
      %8183 = vmatmul.mubr.f32.gmra.mxu0 %v8113
      %v8184 = vpop.f32.mrf.mxu0
      %v8185 = vadd.f32 %v7408, %v8184
      %v8186 = vpop.f32.mrf.mxu0
      %8187 = vmatprep.mubr.f32.mxu0 0.0
      %8188 = vmatmul.mubr.f32.gmra.mxu0 %v8116
      %v8189 = vpop.f32.mrf.mxu0
      %v8190 = vadd.f32 %v7544, %v8189
      %v8191 = vpop.f32.mrf.mxu0
      %8192 = vdwg.mxu0
      %vm8193 = vcmask 64512
      %8194 = vst.msk [vmem:[%s248] sm:$0xff] %vm8193, %v7618
      %8195 = vst.msk [vmem:[%s248 + $0x8] sm:$0xff] %vm8193, %v7623
      %8196 = vst.msk [vmem:[%s248 + $0x10] sm:$0xff] %vm8193, %v7699
      %8197 = vst.msk [vmem:[%s248 + $0x18] sm:$0xff] %vm8193, %v7704
      %8198 = vst.msk [vmem:[%s248 + $0x20] sm:$0xff] %vm8193, %v7780
      %8199 = vst.msk [vmem:[%s248 + $0x28] sm:$0xff] %vm8193, %v7785
      %8200 = vst.msk [vmem:[%s248 + $0x30] sm:$0xff] %vm8193, %v7861
      %8201 = vst.msk [vmem:[%s248 + $0x38] sm:$0xff] %vm8193, %v7866
      %8202 = vst.msk [vmem:[%s248 + $0x40] sm:$0xff] %vm8193, %v7942
      %8203 = vst.msk [vmem:[%s248 + $0x48] sm:$0xff] %vm8193, %v7947
      %8204 = vst.msk [vmem:[%s248 + $0x50] sm:$0xff] %vm8193, %v8023
      %8205 = vst.msk [vmem:[%s248 + $0x58] sm:$0xff] %vm8193, %v8028
      %8206 = vst.msk [vmem:[%s248 + $0x60] sm:$0xff] %vm8193, %v8104
      %8207 = vst.msk [vmem:[%s248 + $0x68] sm:$0xff] %vm8193, %v8109
      %8208 = vst.msk [vmem:[%s248 + $0x70] sm:$0xff] %vm8193, %v8185
      %8209 = vst.msk [vmem:[%s248 + $0x78] sm:$0xff] %vm8193, %v8190
      %s8210 = smul.u32 8, %s21
      %p8211 = scmp.lt.s32.totalorder %s20, 1
      %s8212 = scalar_select %p8211, %s20, 1
      %p8213 = scmp.lt.s32.totalorder %s8210, 15
      %s8214 = scalar_select %p8213, %s8210, 15
      %s8215 = smul.addr %s8214, 2
      %s8216 = smul.addr %s8212, 32
      %s8217 = sadd.s32 %s8215, %s8216
      %s8218 = smul.addr %s8217, 8
      %s8219 = scalar_lea.vmem %s5, %s8218
      // Predicated region
      $region45: #{tpu_custom_call.1} parent=39 // pred_check
        %p8220 = pneg %p158
      $region46: #{tpu_custom_call.1} parent=39 // pred_check_branch
        %8222 = sbr.rel (%p8220) target = $region48
      $region47: #{tpu_custom_call.1} parent=39 // pred_region
        %s8223 = smul.u32 8, %s21
      $region48: #{tpu_custom_call.1} parent=39 // pred_fallthru
        _
    $region40: #{tpu_custom_call.1} parent=5 // pred_fallthru
      _
    %p8224 = scmp.le.s32.totalorder 2, %s11
    // Predicated region
    $region49: #{tpu_custom_call.1} parent=5 // pred_check
      %p8225 = pneg %p8224
    $region50: #{tpu_custom_call.1} parent=5 // pred_check_branch
      %8227 = sbr.rel (%p8225) target = $region52
    $region51: #{tpu_custom_call.1} parent=5 // pred_region
      %s8228 = ssub.s32 %s11, 2
      // Predicated region
      $region53: #{tpu_custom_call.1} parent=51 // pred_check
        %p8229 = pneg %p164
      $region54: #{tpu_custom_call.1} parent=51 // pred_check_branch
        %8231 = sbr.rel (%p8229) target = $region56
      $region55: #{tpu_custom_call.1} parent=51 // pred_region
        %s8232 = smul.u32 8, %s23
        %p8233 = scmp.lt.s32.totalorder %s22, 1
        %s8234 = scalar_select %p8233, %s22, 1
        %p8235 = scmp.lt.s32.totalorder %s8232, 15
        %s8236 = scalar_select %p8235, %s8232, 15
        %s8237 = smul.addr %s8236, 2
        %s8238 = smul.addr %s8234, 32
        %s8239 = sadd.s32 %s8237, %s8238
        %s8240 = smul.addr %s8239, 8
        %s8241 = scalar_lea.vmem %s5, %s8240
      $region56: #{tpu_custom_call.1} parent=51 // pred_fallthru
        _
    $region52: #{tpu_custom_call.1} parent=5 // pred_fallthru
      _
  $region6: #{tpu_custom_call.1} parent=0 // loop_footer
    %s15 = sadd.s32 1, %s11
  $region7: #{tpu_custom_call.1} parent=0 // loop_footer_branch
    %10 = sbr.rel target = $region3
  $region8: #{tpu_custom_call.1} parent=0 // loop_exit
    _

</llo_original>
